<compile_context>
chip_gen: v6e
topology: v6e:2x2x1
jax: 0.10.0
libtpu: 0.0.40
codegen_flags: <defaults>
</compile_context>

<pallas_src>
import functools

import jax
import jax.numpy as jnp
from jax import lax
from jax.experimental import pallas as pl
from jax.experimental.pallas import tpu as pltpu


# ---------------------------------------------------------------------------
# Fused BasicBlock kernel (one invocation = one batch image)
# ---------------------------------------------------------------------------

def _block_kernel(al_ref, xprep_ref, w1_ref, w2_ref, *rest,
                  tap_tbl, OH, OW, C, P, has_proj):
    # Ref order: [alphas (scalar-prefetch, SMEM)], xprep, w1, w2, [wsc], b1,
    #            b2, out, y1pad (VMEM scratch).
    if has_proj:
        wsc_ref, b1_ref, b2_ref, out_ref, y1pad_ref = rest
    else:
        b1_ref, b2_ref, out_ref, y1pad_ref = rest
        wsc_ref = None

    MB = OH * OW

    # ---- conv1: 9 shifted bf16 matmuls, f32 accumulation -------------------
    acc1 = jnp.zeros((MB, P), jnp.float32)
    for t, (ph, hi, wi) in enumerate(tap_tbl):
        slab = xprep_ref[0, ph, hi:hi + OH, wi:wi + OW, :].reshape(MB, C)
        acc1 = acc1 + jnp.dot(slab, w1_ref[t],
                              preferred_element_type=jnp.float32)

    # TReLU(y) = relu(y - a) + a == max(y, a)  (single VPU max)
    y1 = jnp.maximum(acc1 + b1_ref[...], al_ref[0])

    # ---- y1 padded into a VMEM scratch (halo for conv2), bf16 --------------
    y1pad_ref[...] = jnp.zeros(y1pad_ref.shape, y1pad_ref.dtype)
    y1pad_ref[1:OH + 1, 1:OW + 1, :] = (
        y1.astype(jnp.bfloat16).reshape(OH, OW, P))

    # ---- conv2: 9 shifted matmuls from VMEM ---------------------------------
    acc2 = jnp.zeros((MB, P), jnp.float32)
    for t in range(9):
        di, dj = t // 3, t % 3
        slab = y1pad_ref[di:di + OH, dj:dj + OW, :].reshape(MB, P)
        acc2 = acc2 + jnp.dot(slab, w2_ref[t],
                              preferred_element_type=jnp.float32)

    # ---- shortcut: identity add or fused 1x1 projection matmul --------------
    # A 1x1 stride-s pad-0 conv reads exactly the centre tap of the 3x3 window.
    ph, hi, wi = tap_tbl[4]
    csl = xprep_ref[0, ph, hi:hi + OH, wi:wi + OW, :].reshape(MB, C)
    if has_proj:
        acc2 = acc2 + jnp.dot(csl, wsc_ref[...],
                              preferred_element_type=jnp.float32)
    else:
        acc2 = acc2 + csl.astype(jnp.float32)

    out = jnp.maximum(acc2 + b2_ref[...], al_ref[1])        # TReLU2
    out_ref[...] = out.reshape(1, OH, OW, P).astype(out_ref.dtype)


# ---------------------------------------------------------------------------
# Input preparation (pad + space-to-depth for stride 2), tap table
# ---------------------------------------------------------------------------

def _prep_input(x_nhwc, stride):
    """bf16, zero-pad by 1, and (for stride 2) split into 4 phase images so
    every conv tap becomes a contiguous slice inside the kernel.
    Returns (B, NP, PH, PW, C)."""
    x = x_nhwc.astype(jnp.bfloat16)
    xp = jnp.pad(x, ((0, 0), (1, 1), (1, 1), (0, 0)))
    if stride == 1:
        return xp[:, None]                                   # (B, 1, H+2, W+2, C)
    # stride 2: phase decomposition (space-to-depth); total bytes == input bytes
    B, Hp, Wp, Cc = xp.shape
    xp = jnp.pad(xp, ((0, 0), (0, Hp % 2), (0, Wp % 2), (0, 0)))
    phases = [xp[:, p0::2, p1::2, :] for p0 in range(2) for p1 in range(2)]
    return jnp.stack(phases, axis=1)                          # (B, 4, ~, ~, C)


def _tap_table(stride):
    """For each 3x3 tap (di, dj): (phase index, row start, col start) into the
    prepared input, such that slice[oh, ow] == x_pad[stride*oh+di, stride*ow+dj]."""
    tbl = []
    for di in range(3):
        for dj in range(3):
            if stride == 1:
                tbl.append((0, di, dj))
            else:
                tbl.append((2 * (di % 2) + (dj % 2), di // 2, dj // 2))
    return tuple(tbl)


# ---------------------------------------------------------------------------
# Block forward (one pallas_call per block)
# ---------------------------------------------------------------------------

def basic_block_nhwc(x, packed):
    """BasicBlock forward, NHWC in / NHWC out."""
    stride = packed['stride']
    assert stride in (1, 2)
    P = packed['planes']
    B, H, W, C = x.shape
    if not packed['has_proj']:
        assert C == P
    OH = (H + 2 - 3) // stride + 1
    OW = (W + 2 - 3) // stride + 1

    xprep = _prep_input(x, stride)                     # (B, NP, PH, PW, C) bf16
    _, NP, PH, PW, _ = xprep.shape
    tap_tbl = _tap_table(stride)

    in_specs = [
        pl.BlockSpec((1, NP, PH, PW, C), lambda b, al: (b, 0, 0, 0, 0)),
        pl.BlockSpec((9, C, P), lambda b, al: (0, 0, 0)),
        pl.BlockSpec((9, P, P), lambda b, al: (0, 0, 0)),
    ]
    args = [xprep, packed['w1'], packed['w2']]
    if packed['has_proj']:
        in_specs.append(pl.BlockSpec((C, P), lambda b, al: (0, 0)))
        args.append(packed['wsc'])
    in_specs += [
        pl.BlockSpec((1, P), lambda b, al: (0, 0)),
        pl.BlockSpec((1, P), lambda b, al: (0, 0)),
    ]
    args += [packed['b1'], packed['b2c']]

    kernel = functools.partial(_block_kernel, tap_tbl=tap_tbl, OH=OH, OW=OW,
                               C=C, P=P, has_proj=packed['has_proj'])

    return pl.pallas_call(
        kernel,
        out_shape=jax.ShapeDtypeStruct((B, OH, OW, P), jnp.float32),
        grid_spec=pltpu.PrefetchScalarGridSpec(
            num_scalar_prefetch=1,                     # alphas -> SMEM
            grid=(B,),
            in_specs=in_specs,
            out_specs=pl.BlockSpec((1, OH, OW, P), lambda b, al: (b, 0, 0, 0)),
            scratch_shapes=[pltpu.VMEM((OH + 2, OW + 2, P), jnp.bfloat16)],
        ),
        compiler_params=pltpu.CompilerParams(
            dimension_semantics=("parallel",)),
    )(packed['alphas'], *args)


def basic_block_nchw(x_nchw, packed):
    """PyTorch-layout wrapper (transpose only at the block boundary)."""
    y = basic_block_nhwc(jnp.transpose(x_nchw, (0, 2, 3, 1)), packed)
    return jnp.transpose(y, (0, 3, 1, 2))


# ---------------------------------------------------------------------------
# Weight-norm folding + one-time weight packing (outside the hot path)
# ---------------------------------------------------------------------------

def fold_weight_norm(v, g):
    # PyTorch weight_norm (dim=0): w = g * v / ||v||, norm over all dims != 0.
    norm = jnp.sqrt(jnp.sum(v * v, axis=tuple(range(1, v.ndim)), keepdims=True))
    return g.reshape((-1,) + (1,) * (v.ndim - 1)) * v / norm


def pack_conv3x3(v, g):
    """(OC, C, 3, 3) weight-normed weight -> (9, C, OC), tap index t = 3*di+dj."""
    w = fold_weight_norm(v, g)
    OC, C, KH, KW = w.shape
    return jnp.transpose(w, (2, 3, 1, 0)).reshape(KH * KW, C, OC)


def pack_block_params(raw, in_planes, planes, stride):
    has_proj = 'sc_v' in raw
    p = {'planes': planes, 'stride': stride, 'has_proj': has_proj}
    p['w1'] = pack_conv3x3(raw['conv1_v'], raw['conv1_g']).astype(jnp.bfloat16)
    p['w2'] = pack_conv3x3(raw['conv2_v'], raw['conv2_g']).astype(jnp.bfloat16)
    p['b1'] = raw['conv1_b'].reshape(1, planes).astype(jnp.float32)
    b2 = raw['conv2_b']
    if has_proj:
        wsc = fold_weight_norm(raw['sc_v'], raw['sc_g'])      # (P, Cin, 1, 1)
        p['wsc'] = wsc.reshape(planes, in_planes).T.astype(jnp.bfloat16)
        b2 = b2 + raw['sc_b']                                 # fold shortcut bias
    p['b2c'] = b2.reshape(1, planes).astype(jnp.float32)
    p['alphas'] = jnp.array([raw['alpha1'], raw['alpha2']], jnp.float32)
    return p


# ---------------------------------------------------------------------------
# Pure-JAX f32 reference (PyTorch semantics) for correctness checking
# ---------------------------------------------------------------------------

def _trelu(x, a):
    return jnp.maximum(x - a, 0.0) + a


def _conv_ref(x, v, g, b, stride, pad):
    w = fold_weight_norm(v, g)
    y = lax.conv_general_dilated(x, w, (stride, stride),
                                 ((pad, pad), (pad, pad)),
                                 dimension_numbers=('NCHW', 'OIHW', 'NCHW'))
    return y + b[None, :, None, None]


def basic_block_ref(x, raw, stride):
    out = _trelu(_conv_ref(x, raw['conv1_v'], raw['conv1_g'], raw['conv1_b'],
                           stride, 1), raw['alpha1'])
    out = _conv_ref(out, raw['conv2_v'], raw['conv2_g'], raw['conv2_b'], 1, 1)
    if 'sc_v' in raw:
        sc = _conv_ref(x, raw['sc_v'], raw['sc_g'], raw['sc_b'], stride, 0)
    else:
        sc = x
    return _trelu(out + sc, raw['alpha2'])


# ---------------------------------------------------------------------------
# Deterministic parameter init
# ---------------------------------------------------------------------------

def init_block_params(key, in_planes, planes, stride):
    keys = jax.random.split(key, 12)
    ki = iter(keys)

    def conv_wn(oc, ic, k):
        v = 0.1 * jax.random.normal(next(ki), (oc, ic, k, k), jnp.float32)
        g = 1.0 + 0.1 * jax.random.normal(next(ki), (oc,), jnp.float32)
        b = 0.05 * jax.random.normal(next(ki), (oc,), jnp.float32)
        return v, g, b

    raw = {}
    raw['conv1_v'], raw['conv1_g'], raw['conv1_b'] = conv_wn(planes, in_planes, 3)
    raw['conv2_v'], raw['conv2_g'], raw['conv2_b'] = conv_wn(planes, planes, 3)
    if stride != 1 or in_planes != planes:
        raw['sc_v'], raw['sc_g'], raw['sc_b'] = conv_wn(planes, in_planes, 1)
    raw['alpha1'] = 0.05
    raw['alpha2'] = -0.05
    return raw


# ---------------------------------------------------------------------------
# Test
# ---------------------------------------------------------------------------

if __name__ == "__main__":
    B, H, W = 2, 16, 16
    in_planes = planes = 64

    key = jax.random.PRNGKey(0)
    kA, kB, kx = jax.random.split(key, 3)

    # Block A: stride-2 (1x1 projection shortcut).  Block B: stride-1 identity.
    rawA = init_block_params(kA, in_planes, planes, stride=2)
    rawB = init_block_params(kB, planes, planes, stride=1)
    packedA = pack_block_params(rawA, in_planes, planes, stride=2)
    packedB = pack_block_params(rawB, planes, planes, stride=1)

    x = jax.random.normal(kx, (B, in_planes, H, W), jnp.float32)

    @jax.jit
    def fwd(x_nchw):
        xh = jnp.transpose(x_nchw, (0, 2, 3, 1))        # NCHW -> NHWC once
        y = basic_block_nhwc(xh, packedA)
        y = basic_block_nhwc(y, packedB)
        return jnp.transpose(y, (0, 3, 1, 2))           # NHWC -> NCHW once

    out = jax.block_until_ready(fwd(x))
    assert out.shape == (B, planes, H // 2, W // 2), out.shape

    ref = basic_block_ref(x, rawA, 2)
    ref = jax.block_until_ready(basic_block_ref(ref, rawB, 1))

    # bf16 MXU operands / activations (f32 accumulation) vs f32 reference.
    err_max = float(jnp.max(jnp.abs(out - ref)) / (jnp.max(jnp.abs(ref)) + 1e-6))
    err_mean = float(jnp.mean(jnp.abs(out - ref)) /
                     (jnp.mean(jnp.abs(ref)) + 1e-6))
    assert err_max < 5e-2, f"max relative-to-max error too large: {err_max}"
    assert err_mean < 2e-2, f"mean relative error too large: {err_mean}"

    print("KERNEL_OK")
</pallas_src>

<mosaic_0001>
module attributes {stable_mosaic.version = 11 : i64} {
  func.func @_block_kernel(%arg0: i32, %arg1: memref<2xf32, #tpu.memory_space<smem>>, %arg2: memref<1x4x9x9x64xbf16, #tpu.memory_space<vmem>>, %arg3: memref<9x64x64xbf16, #tpu.memory_space<vmem>>, %arg4: memref<9x64x64xbf16, #tpu.memory_space<vmem>>, %arg5: memref<64x64xbf16, #tpu.memory_space<vmem>>, %arg6: memref<1x64xf32, #tpu.memory_space<vmem>>, %arg7: memref<1x64xf32, #tpu.memory_space<vmem>>, %arg8: memref<1x8x8x64xf32, #tpu.memory_space<vmem>>, %arg9: memref<10x10x64xbf16, #tpu.memory_space<vmem>>) attributes {dimension_semantics = [#tpu.dimension_semantics<parallel>], iteration_bounds = array<i64: 2>, scalar_prefetch = 1 : i64, scratch_operands = 1 : i64, tpu.core_type = #tpu.core_type<tc>, window_params = [{transform_indices = @transform_0, window_bounds = array<i64: 1, 4, 9, 9, 64>}, {pipeline_mode = #tpu.pipeline_mode<synchronous>, transform_indices = @transform_1, window_bounds = array<i64: 9, 64, 64>}, {pipeline_mode = #tpu.pipeline_mode<synchronous>, transform_indices = @transform_2, window_bounds = array<i64: 9, 64, 64>}, {pipeline_mode = #tpu.pipeline_mode<synchronous>, transform_indices = @transform_3, window_bounds = array<i64: 64, 64>}, {pipeline_mode = #tpu.pipeline_mode<synchronous>, transform_indices = @transform_4, window_bounds = array<i64: 1, 64>}, {pipeline_mode = #tpu.pipeline_mode<synchronous>, transform_indices = @transform_5, window_bounds = array<i64: 1, 64>}, {transform_indices = @transform_6, window_bounds = array<i64: 1, 8, 8, 64>}]} {
    %cst = arith.constant 0.000000e+00 : f32
    %0 = vector.broadcast %cst : f32 to vector<64x64xf32>
    %c0 = arith.constant 0 : index
    %c0_0 = arith.constant 0 : index
    %c0_1 = arith.constant 0 : index
    %c0_2 = arith.constant 0 : index
    %c0_3 = arith.constant 0 : index
    %1 = vector.load %arg2[%c0, %c0_0, %c0_1, %c0_2, %c0_3] : memref<1x4x9x9x64xbf16, #tpu.memory_space<vmem>>, vector<1x1x8x8x64xbf16>
    %2 = vector.shape_cast %1 : vector<1x1x8x8x64xbf16> to vector<8x8x64xbf16>
    %3 = vector.shape_cast %2 : vector<8x8x64xbf16> to vector<64x64xbf16>
    %c0_4 = arith.constant 0 : index
    %c0_5 = arith.constant 0 : index
    %c0_6 = arith.constant 0 : index
    %4 = vector.load %arg3[%c0_4, %c0_5, %c0_6] : memref<9x64x64xbf16, #tpu.memory_space<vmem>>, vector<1x64x64xbf16>
    %5 = vector.shape_cast %4 : vector<1x64x64xbf16> to vector<64x64xbf16>
    %cst_7 = arith.constant dense<0.000000e+00> : vector<64x64xf32>
    %6 = tpu.matmul %3, %5, %cst_7 {dimension_numbers = #tpu.dot_dimension_numbers<[1], [0], [0], [1], [0, 0, 1, 1], [], []>} : vector<64x64xbf16>, vector<64x64xbf16>, vector<64x64xf32> -> vector<64x64xf32>
    %7 = arith.addf %0, %6 : vector<64x64xf32>
    %c0_8 = arith.constant 0 : index
    %c1 = arith.constant 1 : index
    %c0_9 = arith.constant 0 : index
    %c0_10 = arith.constant 0 : index
    %c0_11 = arith.constant 0 : index
    %8 = vector.load %arg2[%c0_8, %c1, %c0_9, %c0_10, %c0_11] : memref<1x4x9x9x64xbf16, #tpu.memory_space<vmem>>, vector<1x1x8x8x64xbf16>
    %9 = vector.shape_cast %8 : vector<1x1x8x8x64xbf16> to vector<8x8x64xbf16>
    %10 = vector.shape_cast %9 : vector<8x8x64xbf16> to vector<64x64xbf16>
    %c1_12 = arith.constant 1 : index
    %c0_13 = arith.constant 0 : index
    %c0_14 = arith.constant 0 : index
    %11 = vector.load %arg3[%c1_12, %c0_13, %c0_14] : memref<9x64x64xbf16, #tpu.memory_space<vmem>>, vector<1x64x64xbf16>
    %12 = vector.shape_cast %11 : vector<1x64x64xbf16> to vector<64x64xbf16>
    %cst_15 = arith.constant dense<0.000000e+00> : vector<64x64xf32>
    %13 = tpu.matmul %10, %12, %cst_15 {dimension_numbers = #tpu.dot_dimension_numbers<[1], [0], [0], [1], [0, 0, 1, 1], [], []>} : vector<64x64xbf16>, vector<64x64xbf16>, vector<64x64xf32> -> vector<64x64xf32>
    %14 = arith.addf %7, %13 : vector<64x64xf32>
    %c0_16 = arith.constant 0 : index
    %c0_17 = arith.constant 0 : index
    %c0_18 = arith.constant 0 : index
    %c1_19 = arith.constant 1 : index
    %c0_20 = arith.constant 0 : index
    %15 = vector.load %arg2[%c0_16, %c0_17, %c0_18, %c1_19, %c0_20] : memref<1x4x9x9x64xbf16, #tpu.memory_space<vmem>>, vector<1x1x8x8x64xbf16>
    %16 = vector.shape_cast %15 : vector<1x1x8x8x64xbf16> to vector<8x8x64xbf16>
    %17 = vector.shape_cast %16 : vector<8x8x64xbf16> to vector<64x64xbf16>
    %c2 = arith.constant 2 : index
    %c0_21 = arith.constant 0 : index
    %c0_22 = arith.constant 0 : index
    %18 = vector.load %arg3[%c2, %c0_21, %c0_22] : memref<9x64x64xbf16, #tpu.memory_space<vmem>>, vector<1x64x64xbf16>
    %19 = vector.shape_cast %18 : vector<1x64x64xbf16> to vector<64x64xbf16>
    %cst_23 = arith.constant dense<0.000000e+00> : vector<64x64xf32>
    %20 = tpu.matmul %17, %19, %cst_23 {dimension_numbers = #tpu.dot_dimension_numbers<[1], [0], [0], [1], [0, 0, 1, 1], [], []>} : vector<64x64xbf16>, vector<64x64xbf16>, vector<64x64xf32> -> vector<64x64xf32>
    %21 = arith.addf %14, %20 : vector<64x64xf32>
    %c0_24 = arith.constant 0 : index
    %c2_25 = arith.constant 2 : index
    %c0_26 = arith.constant 0 : index
    %c0_27 = arith.constant 0 : index
    %c0_28 = arith.constant 0 : index
    %22 = vector.load %arg2[%c0_24, %c2_25, %c0_26, %c0_27, %c0_28] : memref<1x4x9x9x64xbf16, #tpu.memory_space<vmem>>, vector<1x1x8x8x64xbf16>
    %23 = vector.shape_cast %22 : vector<1x1x8x8x64xbf16> to vector<8x8x64xbf16>
    %24 = vector.shape_cast %23 : vector<8x8x64xbf16> to vector<64x64xbf16>
    %c3 = arith.constant 3 : index
    %c0_29 = arith.constant 0 : index
    %c0_30 = arith.constant 0 : index
    %25 = vector.load %arg3[%c3, %c0_29, %c0_30] : memref<9x64x64xbf16, #tpu.memory_space<vmem>>, vector<1x64x64xbf16>
    %26 = vector.shape_cast %25 : vector<1x64x64xbf16> to vector<64x64xbf16>
    %cst_31 = arith.constant dense<0.000000e+00> : vector<64x64xf32>
    %27 = tpu.matmul %24, %26, %cst_31 {dimension_numbers = #tpu.dot_dimension_numbers<[1], [0], [0], [1], [0, 0, 1, 1], [], []>} : vector<64x64xbf16>, vector<64x64xbf16>, vector<64x64xf32> -> vector<64x64xf32>
    %28 = arith.addf %21, %27 : vector<64x64xf32>
    %c0_32 = arith.constant 0 : index
    %c3_33 = arith.constant 3 : index
    %c0_34 = arith.constant 0 : index
    %c0_35 = arith.constant 0 : index
    %c0_36 = arith.constant 0 : index
    %29 = vector.load %arg2[%c0_32, %c3_33, %c0_34, %c0_35, %c0_36] : memref<1x4x9x9x64xbf16, #tpu.memory_space<vmem>>, vector<1x1x8x8x64xbf16>
    %30 = vector.shape_cast %29 : vector<1x1x8x8x64xbf16> to vector<8x8x64xbf16>
    %31 = vector.shape_cast %30 : vector<8x8x64xbf16> to vector<64x64xbf16>
    %c4 = arith.constant 4 : index
    %c0_37 = arith.constant 0 : index
    %c0_38 = arith.constant 0 : index
    %32 = vector.load %arg3[%c4, %c0_37, %c0_38] : memref<9x64x64xbf16, #tpu.memory_space<vmem>>, vector<1x64x64xbf16>
    %33 = vector.shape_cast %32 : vector<1x64x64xbf16> to vector<64x64xbf16>
    %cst_39 = arith.constant dense<0.000000e+00> : vector<64x64xf32>
    %34 = tpu.matmul %31, %33, %cst_39 {dimension_numbers = #tpu.dot_dimension_numbers<[1], [0], [0], [1], [0, 0, 1, 1], [], []>} : vector<64x64xbf16>, vector<64x64xbf16>, vector<64x64xf32> -> vector<64x64xf32>
    %35 = arith.addf %28, %34 : vector<64x64xf32>
    %c0_40 = arith.constant 0 : index
    %c2_41 = arith.constant 2 : index
    %c0_42 = arith.constant 0 : index
    %c1_43 = arith.constant 1 : index
    %c0_44 = arith.constant 0 : index
    %36 = vector.load %arg2[%c0_40, %c2_41, %c0_42, %c1_43, %c0_44] : memref<1x4x9x9x64xbf16, #tpu.memory_space<vmem>>, vector<1x1x8x8x64xbf16>
    %37 = vector.shape_cast %36 : vector<1x1x8x8x64xbf16> to vector<8x8x64xbf16>
    %38 = vector.shape_cast %37 : vector<8x8x64xbf16> to vector<64x64xbf16>
    %c5 = arith.constant 5 : index
    %c0_45 = arith.constant 0 : index
    %c0_46 = arith.constant 0 : index
    %39 = vector.load %arg3[%c5, %c0_45, %c0_46] : memref<9x64x64xbf16, #tpu.memory_space<vmem>>, vector<1x64x64xbf16>
    %40 = vector.shape_cast %39 : vector<1x64x64xbf16> to vector<64x64xbf16>
    %cst_47 = arith.constant dense<0.000000e+00> : vector<64x64xf32>
    %41 = tpu.matmul %38, %40, %cst_47 {dimension_numbers = #tpu.dot_dimension_numbers<[1], [0], [0], [1], [0, 0, 1, 1], [], []>} : vector<64x64xbf16>, vector<64x64xbf16>, vector<64x64xf32> -> vector<64x64xf32>
    %42 = arith.addf %35, %41 : vector<64x64xf32>
    %c0_48 = arith.constant 0 : index
    %c0_49 = arith.constant 0 : index
    %c1_50 = arith.constant 1 : index
    %c0_51 = arith.constant 0 : index
    %c0_52 = arith.constant 0 : index
    %43 = vector.load %arg2[%c0_48, %c0_49, %c1_50, %c0_51, %c0_52] : memref<1x4x9x9x64xbf16, #tpu.memory_space<vmem>>, vector<1x1x8x8x64xbf16>
    %44 = vector.shape_cast %43 : vector<1x1x8x8x64xbf16> to vector<8x8x64xbf16>
    %45 = vector.shape_cast %44 : vector<8x8x64xbf16> to vector<64x64xbf16>
    %c6 = arith.constant 6 : index
    %c0_53 = arith.constant 0 : index
    %c0_54 = arith.constant 0 : index
    %46 = vector.load %arg3[%c6, %c0_53, %c0_54] : memref<9x64x64xbf16, #tpu.memory_space<vmem>>, vector<1x64x64xbf16>
    %47 = vector.shape_cast %46 : vector<1x64x64xbf16> to vector<64x64xbf16>
    %cst_55 = arith.constant dense<0.000000e+00> : vector<64x64xf32>
    %48 = tpu.matmul %45, %47, %cst_55 {dimension_numbers = #tpu.dot_dimension_numbers<[1], [0], [0], [1], [0, 0, 1, 1], [], []>} : vector<64x64xbf16>, vector<64x64xbf16>, vector<64x64xf32> -> vector<64x64xf32>
    %49 = arith.addf %42, %48 : vector<64x64xf32>
    %c0_56 = arith.constant 0 : index
    %c1_57 = arith.constant 1 : index
    %c1_58 = arith.constant 1 : index
    %c0_59 = arith.constant 0 : index
    %c0_60 = arith.constant 0 : index
    %50 = vector.load %arg2[%c0_56, %c1_57, %c1_58, %c0_59, %c0_60] : memref<1x4x9x9x64xbf16, #tpu.memory_space<vmem>>, vector<1x1x8x8x64xbf16>
    %51 = vector.shape_cast %50 : vector<1x1x8x8x64xbf16> to vector<8x8x64xbf16>
    %52 = vector.shape_cast %51 : vector<8x8x64xbf16> to vector<64x64xbf16>
    %c7 = arith.constant 7 : index
    %c0_61 = arith.constant 0 : index
    %c0_62 = arith.constant 0 : index
    %53 = vector.load %arg3[%c7, %c0_61, %c0_62] : memref<9x64x64xbf16, #tpu.memory_space<vmem>>, vector<1x64x64xbf16>
    %54 = vector.shape_cast %53 : vector<1x64x64xbf16> to vector<64x64xbf16>
    %cst_63 = arith.constant dense<0.000000e+00> : vector<64x64xf32>
    %55 = tpu.matmul %52, %54, %cst_63 {dimension_numbers = #tpu.dot_dimension_numbers<[1], [0], [0], [1], [0, 0, 1, 1], [], []>} : vector<64x64xbf16>, vector<64x64xbf16>, vector<64x64xf32> -> vector<64x64xf32>
    %56 = arith.addf %49, %55 : vector<64x64xf32>
    %c0_64 = arith.constant 0 : index
    %c0_65 = arith.constant 0 : index
    %c1_66 = arith.constant 1 : index
    %c1_67 = arith.constant 1 : index
    %c0_68 = arith.constant 0 : index
    %57 = vector.load %arg2[%c0_64, %c0_65, %c1_66, %c1_67, %c0_68] : memref<1x4x9x9x64xbf16, #tpu.memory_space<vmem>>, vector<1x1x8x8x64xbf16>
    %58 = vector.shape_cast %57 : vector<1x1x8x8x64xbf16> to vector<8x8x64xbf16>
    %59 = vector.shape_cast %58 : vector<8x8x64xbf16> to vector<64x64xbf16>
    %c8 = arith.constant 8 : index
    %c0_69 = arith.constant 0 : index
    %c0_70 = arith.constant 0 : index
    %60 = vector.load %arg3[%c8, %c0_69, %c0_70] : memref<9x64x64xbf16, #tpu.memory_space<vmem>>, vector<1x64x64xbf16>
    %61 = vector.shape_cast %60 : vector<1x64x64xbf16> to vector<64x64xbf16>
    %cst_71 = arith.constant dense<0.000000e+00> : vector<64x64xf32>
    %62 = tpu.matmul %59, %61, %cst_71 {dimension_numbers = #tpu.dot_dimension_numbers<[1], [0], [0], [1], [0, 0, 1, 1], [], []>} : vector<64x64xbf16>, vector<64x64xbf16>, vector<64x64xf32> -> vector<64x64xf32>
    %63 = arith.addf %56, %62 : vector<64x64xf32>
    %c0_72 = arith.constant 0 : index
    %c0_73 = arith.constant 0 : index
    %64 = vector.load %arg6[%c0_72, %c0_73] : memref<1x64xf32, #tpu.memory_space<vmem>>, vector<1x64xf32>
    %65 = vector.broadcast %64 : vector<1x64xf32> to vector<64x64xf32>
    %66 = arith.addf %63, %65 : vector<64x64xf32>
    %c0_74 = arith.constant 0 : index
    %67 = memref.load %arg1[%c0_74] : memref<2xf32, #tpu.memory_space<smem>>
    %68 = vector.broadcast %67 : f32 to vector<64x64xf32>
    %69 = arith.maximumf %66, %68 : vector<64x64xf32>
    %cst_75 = arith.constant 0.000000e+00 : bf16
    %70 = vector.broadcast %cst_75 : bf16 to vector<10x10x64xbf16>
    %c0_76 = arith.constant 0 : index
    %c0_77 = arith.constant 0 : index
    %c0_78 = arith.constant 0 : index
    %71 = vector.load %arg9[%c0_76, %c0_77, %c0_78] : memref<10x10x64xbf16, #tpu.memory_space<vmem>>, vector<10x10x64xbf16>
    tpu.vector_store %arg9[%c0_76, %c0_77, %c0_78], %70 {strides = array<i32>} : memref<10x10x64xbf16, #tpu.memory_space<vmem>>, vector<10x10x64xbf16>,
    %72 = arith.truncf %69 : vector<64x64xf32> to vector<64x64xbf16>
    %73 = vector.shape_cast %72 : vector<64x64xbf16> to vector<8x8x64xbf16>
    %c1_79 = arith.constant 1 : index
    %c1_80 = arith.constant 1 : index
    %c0_81 = arith.constant 0 : index
    %74 = vector.load %arg9[%c1_79, %c1_80, %c0_81] : memref<10x10x64xbf16, #tpu.memory_space<vmem>>, vector<8x8x64xbf16>
    tpu.vector_store %arg9[%c1_79, %c1_80, %c0_81], %73 {strides = array<i32>} : memref<10x10x64xbf16, #tpu.memory_space<vmem>>, vector<8x8x64xbf16>,
    %cst_82 = arith.constant 0.000000e+00 : f32
    %75 = vector.broadcast %cst_82 : f32 to vector<64x64xf32>
    %c0_83 = arith.constant 0 : index
    %c0_84 = arith.constant 0 : index
    %c0_85 = arith.constant 0 : index
    %76 = vector.load %arg9[%c0_83, %c0_84, %c0_85] : memref<10x10x64xbf16, #tpu.memory_space<vmem>>, vector<8x8x64xbf16>
    %77 = vector.shape_cast %76 : vector<8x8x64xbf16> to vector<64x64xbf16>
    %c0_86 = arith.constant 0 : index
    %c0_87 = arith.constant 0 : index
    %c0_88 = arith.constant 0 : index
    %78 = vector.load %arg4[%c0_86, %c0_87, %c0_88] : memref<9x64x64xbf16, #tpu.memory_space<vmem>>, vector<1x64x64xbf16>
    %79 = vector.shape_cast %78 : vector<1x64x64xbf16> to vector<64x64xbf16>
    %cst_89 = arith.constant dense<0.000000e+00> : vector<64x64xf32>
    %80 = tpu.matmul %77, %79, %cst_89 {dimension_numbers = #tpu.dot_dimension_numbers<[1], [0], [0], [1], [0, 0, 1, 1], [], []>} : vector<64x64xbf16>, vector<64x64xbf16>, vector<64x64xf32> -> vector<64x64xf32>
    %81 = arith.addf %75, %80 : vector<64x64xf32>
    %c0_90 = arith.constant 0 : index
    %c1_91 = arith.constant 1 : index
    %c0_92 = arith.constant 0 : index
    %82 = vector.load %arg9[%c0_90, %c1_91, %c0_92] : memref<10x10x64xbf16, #tpu.memory_space<vmem>>, vector<8x8x64xbf16>
    %83 = vector.shape_cast %82 : vector<8x8x64xbf16> to vector<64x64xbf16>
    %c1_93 = arith.constant 1 : index
    %c0_94 = arith.constant 0 : index
    %c0_95 = arith.constant 0 : index
    %84 = vector.load %arg4[%c1_93, %c0_94, %c0_95] : memref<9x64x64xbf16, #tpu.memory_space<vmem>>, vector<1x64x64xbf16>
    %85 = vector.shape_cast %84 : vector<1x64x64xbf16> to vector<64x64xbf16>
    %cst_96 = arith.constant dense<0.000000e+00> : vector<64x64xf32>
    %86 = tpu.matmul %83, %85, %cst_96 {dimension_numbers = #tpu.dot_dimension_numbers<[1], [0], [0], [1], [0, 0, 1, 1], [], []>} : vector<64x64xbf16>, vector<64x64xbf16>, vector<64x64xf32> -> vector<64x64xf32>
    %87 = arith.addf %81, %86 : vector<64x64xf32>
    %c0_97 = arith.constant 0 : index
    %c2_98 = arith.constant 2 : index
    %c0_99 = arith.constant 0 : index
    %88 = vector.load %arg9[%c0_97, %c2_98, %c0_99] : memref<10x10x64xbf16, #tpu.memory_space<vmem>>, vector<8x8x64xbf16>
    %89 = vector.shape_cast %88 : vector<8x8x64xbf16> to vector<64x64xbf16>
    %c2_100 = arith.constant 2 : index
    %c0_101 = arith.constant 0 : index
    %c0_102 = arith.constant 0 : index
    %90 = vector.load %arg4[%c2_100, %c0_101, %c0_102] : memref<9x64x64xbf16, #tpu.memory_space<vmem>>, vector<1x64x64xbf16>
    %91 = vector.shape_cast %90 : vector<1x64x64xbf16> to vector<64x64xbf16>
    %cst_103 = arith.constant dense<0.000000e+00> : vector<64x64xf32>
    %92 = tpu.matmul %89, %91, %cst_103 {dimension_numbers = #tpu.dot_dimension_numbers<[1], [0], [0], [1], [0, 0, 1, 1], [], []>} : vector<64x64xbf16>, vector<64x64xbf16>, vector<64x64xf32> -> vector<64x64xf32>
    %93 = arith.addf %87, %92 : vector<64x64xf32>
    %c1_104 = arith.constant 1 : index
    %c0_105 = arith.constant 0 : index
    %c0_106 = arith.constant 0 : index
    %94 = vector.load %arg9[%c1_104, %c0_105, %c0_106] : memref<10x10x64xbf16, #tpu.memory_space<vmem>>, vector<8x8x64xbf16>
    %95 = vector.shape_cast %94 : vector<8x8x64xbf16> to vector<64x64xbf16>
    %c3_107 = arith.constant 3 : index
    %c0_108 = arith.constant 0 : index
    %c0_109 = arith.constant 0 : index
    %96 = vector.load %arg4[%c3_107, %c0_108, %c0_109] : memref<9x64x64xbf16, #tpu.memory_space<vmem>>, vector<1x64x64xbf16>
    %97 = vector.shape_cast %96 : vector<1x64x64xbf16> to vector<64x64xbf16>
    %cst_110 = arith.constant dense<0.000000e+00> : vector<64x64xf32>
    %98 = tpu.matmul %95, %97, %cst_110 {dimension_numbers = #tpu.dot_dimension_numbers<[1], [0], [0], [1], [0, 0, 1, 1], [], []>} : vector<64x64xbf16>, vector<64x64xbf16>, vector<64x64xf32> -> vector<64x64xf32>
    %99 = arith.addf %93, %98 : vector<64x64xf32>
    %c1_111 = arith.constant 1 : index
    %c1_112 = arith.constant 1 : index
    %c0_113 = arith.constant 0 : index
    %100 = vector.load %arg9[%c1_111, %c1_112, %c0_113] : memref<10x10x64xbf16, #tpu.memory_space<vmem>>, vector<8x8x64xbf16>
    %101 = vector.shape_cast %100 : vector<8x8x64xbf16> to vector<64x64xbf16>
    %c4_114 = arith.constant 4 : index
    %c0_115 = arith.constant 0 : index
    %c0_116 = arith.constant 0 : index
    %102 = vector.load %arg4[%c4_114, %c0_115, %c0_116] : memref<9x64x64xbf16, #tpu.memory_space<vmem>>, vector<1x64x64xbf16>
    %103 = vector.shape_cast %102 : vector<1x64x64xbf16> to vector<64x64xbf16>
    %cst_117 = arith.constant dense<0.000000e+00> : vector<64x64xf32>
    %104 = tpu.matmul %101, %103, %cst_117 {dimension_numbers = #tpu.dot_dimension_numbers<[1], [0], [0], [1], [0, 0, 1, 1], [], []>} : vector<64x64xbf16>, vector<64x64xbf16>, vector<64x64xf32> -> vector<64x64xf32>
    %105 = arith.addf %99, %104 : vector<64x64xf32>
    %c1_118 = arith.constant 1 : index
    %c2_119 = arith.constant 2 : index
    %c0_120 = arith.constant 0 : index
    %106 = vector.load %arg9[%c1_118, %c2_119, %c0_120] : memref<10x10x64xbf16, #tpu.memory_space<vmem>>, vector<8x8x64xbf16>
    %107 = vector.shape_cast %106 : vector<8x8x64xbf16> to vector<64x64xbf16>
    %c5_121 = arith.constant 5 : index
    %c0_122 = arith.constant 0 : index
    %c0_123 = arith.constant 0 : index
    %108 = vector.load %arg4[%c5_121, %c0_122, %c0_123] : memref<9x64x64xbf16, #tpu.memory_space<vmem>>, vector<1x64x64xbf16>
    %109 = vector.shape_cast %108 : vector<1x64x64xbf16> to vector<64x64xbf16>
    %cst_124 = arith.constant dense<0.000000e+00> : vector<64x64xf32>
    %110 = tpu.matmul %107, %109, %cst_124 {dimension_numbers = #tpu.dot_dimension_numbers<[1], [0], [0], [1], [0, 0, 1, 1], [], []>} : vector<64x64xbf16>, vector<64x64xbf16>, vector<64x64xf32> -> vector<64x64xf32>
    %111 = arith.addf %105, %110 : vector<64x64xf32>
    %c2_125 = arith.constant 2 : index
    %c0_126 = arith.constant 0 : index
    %c0_127 = arith.constant 0 : index
    %112 = vector.load %arg9[%c2_125, %c0_126, %c0_127] : memref<10x10x64xbf16, #tpu.memory_space<vmem>>, vector<8x8x64xbf16>
    %113 = vector.shape_cast %112 : vector<8x8x64xbf16> to vector<64x64xbf16>
    %c6_128 = arith.constant 6 : index
    %c0_129 = arith.constant 0 : index
    %c0_130 = arith.constant 0 : index
    %114 = vector.load %arg4[%c6_128, %c0_129, %c0_130] : memref<9x64x64xbf16, #tpu.memory_space<vmem>>, vector<1x64x64xbf16>
    %115 = vector.shape_cast %114 : vector<1x64x64xbf16> to vector<64x64xbf16>
    %cst_131 = arith.constant dense<0.000000e+00> : vector<64x64xf32>
    %116 = tpu.matmul %113, %115, %cst_131 {dimension_numbers = #tpu.dot_dimension_numbers<[1], [0], [0], [1], [0, 0, 1, 1], [], []>} : vector<64x64xbf16>, vector<64x64xbf16>, vector<64x64xf32> -> vector<64x64xf32>
    %117 = arith.addf %111, %116 : vector<64x64xf32>
    %c2_132 = arith.constant 2 : index
    %c1_133 = arith.constant 1 : index
    %c0_134 = arith.constant 0 : index
    %118 = vector.load %arg9[%c2_132, %c1_133, %c0_134] : memref<10x10x64xbf16, #tpu.memory_space<vmem>>, vector<8x8x64xbf16>
    %119 = vector.shape_cast %118 : vector<8x8x64xbf16> to vector<64x64xbf16>
    %c7_135 = arith.constant 7 : index
    %c0_136 = arith.constant 0 : index
    %c0_137 = arith.constant 0 : index
    %120 = vector.load %arg4[%c7_135, %c0_136, %c0_137] : memref<9x64x64xbf16, #tpu.memory_space<vmem>>, vector<1x64x64xbf16>
    %121 = vector.shape_cast %120 : vector<1x64x64xbf16> to vector<64x64xbf16>
    %cst_138 = arith.constant dense<0.000000e+00> : vector<64x64xf32>
    %122 = tpu.matmul %119, %121, %cst_138 {dimension_numbers = #tpu.dot_dimension_numbers<[1], [0], [0], [1], [0, 0, 1, 1], [], []>} : vector<64x64xbf16>, vector<64x64xbf16>, vector<64x64xf32> -> vector<64x64xf32>
    %123 = arith.addf %117, %122 : vector<64x64xf32>
    %c2_139 = arith.constant 2 : index
    %c2_140 = arith.constant 2 : index
    %c0_141 = arith.constant 0 : index
    %124 = vector.load %arg9[%c2_139, %c2_140, %c0_141] : memref<10x10x64xbf16, #tpu.memory_space<vmem>>, vector<8x8x64xbf16>
    %125 = vector.shape_cast %124 : vector<8x8x64xbf16> to vector<64x64xbf16>
    %c8_142 = arith.constant 8 : index
    %c0_143 = arith.constant 0 : index
    %c0_144 = arith.constant 0 : index
    %126 = vector.load %arg4[%c8_142, %c0_143, %c0_144] : memref<9x64x64xbf16, #tpu.memory_space<vmem>>, vector<1x64x64xbf16>
    %127 = vector.shape_cast %126 : vector<1x64x64xbf16> to vector<64x64xbf16>
    %cst_145 = arith.constant dense<0.000000e+00> : vector<64x64xf32>
    %128 = tpu.matmul %125, %127, %cst_145 {dimension_numbers = #tpu.dot_dimension_numbers<[1], [0], [0], [1], [0, 0, 1, 1], [], []>} : vector<64x64xbf16>, vector<64x64xbf16>, vector<64x64xf32> -> vector<64x64xf32>
    %129 = arith.addf %123, %128 : vector<64x64xf32>
    %c0_146 = arith.constant 0 : index
    %c3_147 = arith.constant 3 : index
    %c0_148 = arith.constant 0 : index
    %c0_149 = arith.constant 0 : index
    %c0_150 = arith.constant 0 : index
    %130 = vector.load %arg2[%c0_146, %c3_147, %c0_148, %c0_149, %c0_150] : memref<1x4x9x9x64xbf16, #tpu.memory_space<vmem>>, vector<1x1x8x8x64xbf16>
    %131 = vector.shape_cast %130 : vector<1x1x8x8x64xbf16> to vector<8x8x64xbf16>
    %132 = vector.shape_cast %131 : vector<8x8x64xbf16> to vector<64x64xbf16>
    %c0_151 = arith.constant 0 : index
    %c0_152 = arith.constant 0 : index
    %133 = vector.load %arg5[%c0_151, %c0_152] : memref<64x64xbf16, #tpu.memory_space<vmem>>, vector<64x64xbf16>
    %cst_153 = arith.constant dense<0.000000e+00> : vector<64x64xf32>
    %134 = tpu.matmul %132, %133, %cst_153 {dimension_numbers = #tpu.dot_dimension_numbers<[1], [0], [0], [1], [0, 0, 1, 1], [], []>} : vector<64x64xbf16>, vector<64x64xbf16>, vector<64x64xf32> -> vector<64x64xf32>
    %135 = arith.addf %129, %134 : vector<64x64xf32>
    %c0_154 = arith.constant 0 : index
    %c0_155 = arith.constant 0 : index
    %136 = vector.load %arg7[%c0_154, %c0_155] : memref<1x64xf32, #tpu.memory_space<vmem>>, vector<1x64xf32>
    %137 = vector.broadcast %136 : vector<1x64xf32> to vector<64x64xf32>
    %138 = arith.addf %135, %137 : vector<64x64xf32>
    %c1_156 = arith.constant 1 : index
    %139 = memref.load %arg1[%c1_156] : memref<2xf32, #tpu.memory_space<smem>>
    %140 = vector.broadcast %139 : f32 to vector<64x64xf32>
    %141 = arith.maximumf %138, %140 : vector<64x64xf32>
    %142 = vector.shape_cast %141 : vector<64x64xf32> to vector<1x8x8x64xf32>
    %c0_157 = arith.constant 0 : index
    %c0_158 = arith.constant 0 : index
    %c0_159 = arith.constant 0 : index
    %c0_160 = arith.constant 0 : index
    %143 = vector.load %arg8[%c0_157, %c0_158, %c0_159, %c0_160] : memref<1x8x8x64xf32, #tpu.memory_space<vmem>>, vector<1x8x8x64xf32>
    tpu.vector_store %arg8[%c0_157, %c0_158, %c0_159, %c0_160], %142 {strides = array<i32>} : memref<1x8x8x64xf32, #tpu.memory_space<vmem>>, vector<1x8x8x64xf32>,
    return
  }
  func.func @transform_0(%arg0: i32, %arg1: memref<2xf32, #tpu.memory_space<smem>>) -> (i32, i32, i32, i32, i32) {
    %c0_i32 = arith.constant 0 : i32
    %c0_i32_0 = arith.constant 0 : i32
    %c0_i32_1 = arith.constant 0 : i32
    %c0_i32_2 = arith.constant 0 : i32
    %c0_i32_3 = arith.constant 0 : i32
    return %arg0, %c0_i32, %c0_i32_0, %c0_i32_1, %c0_i32_2 : i32, i32, i32, i32, i32
  }
  func.func @transform_1(%arg0: i32, %arg1: memref<2xf32, #tpu.memory_space<smem>>) -> (i32, i32, i32) {
    %c0_i32 = arith.constant 0 : i32
    %c0_i32_0 = arith.constant 0 : i32
    %c0_i32_1 = arith.constant 0 : i32
    %c0_i32_2 = arith.constant 0 : i32
    return %c0_i32, %c0_i32_0, %c0_i32_1 : i32, i32, i32
  }
  func.func @transform_2(%arg0: i32, %arg1: memref<2xf32, #tpu.memory_space<smem>>) -> (i32, i32, i32) {
    %c0_i32 = arith.constant 0 : i32
    %c0_i32_0 = arith.constant 0 : i32
    %c0_i32_1 = arith.constant 0 : i32
    %c0_i32_2 = arith.constant 0 : i32
    return %c0_i32, %c0_i32_0, %c0_i32_1 : i32, i32, i32
  }
  func.func @transform_3(%arg0: i32, %arg1: memref<2xf32, #tpu.memory_space<smem>>) -> (i32, i32) {
    %c0_i32 = arith.constant 0 : i32
    %c0_i32_0 = arith.constant 0 : i32
    %c0_i32_1 = arith.constant 0 : i32
    return %c0_i32, %c0_i32_0 : i32, i32
  }
  func.func @transform_4(%arg0: i32, %arg1: memref<2xf32, #tpu.memory_space<smem>>) -> (i32, i32) {
    %c0_i32 = arith.constant 0 : i32
    %c0_i32_0 = arith.constant 0 : i32
    %c0_i32_1 = arith.constant 0 : i32
    return %c0_i32, %c0_i32_0 : i32, i32
  }
  func.func @transform_5(%arg0: i32, %arg1: memref<2xf32, #tpu.memory_space<smem>>) -> (i32, i32) {
    %c0_i32 = arith.constant 0 : i32
    %c0_i32_0 = arith.constant 0 : i32
    %c0_i32_1 = arith.constant 0 : i32
    return %c0_i32, %c0_i32_0 : i32, i32
  }
  func.func @transform_6(%arg0: i32, %arg1: memref<2xf32, #tpu.memory_space<smem>>) -> (i32, i32, i32, i32) {
    %c0_i32 = arith.constant 0 : i32
    %c0_i32_0 = arith.constant 0 : i32
    %c0_i32_1 = arith.constant 0 : i32
    %c0_i32_2 = arith.constant 0 : i32
    return %arg0, %c0_i32, %c0_i32_0, %c0_i32_1 : i32, i32, i32, i32
  }
}

module attributes {stable_mosaic.version = 11 : i64} {
  func.func @_block_kernel(%arg0: i32, %arg1: memref<2xf32, #tpu.memory_space<smem>>, %arg2: memref<1x1x10x10x64xbf16, #tpu.memory_space<vmem>>, %arg3: memref<9x64x64xbf16, #tpu.memory_space<vmem>>, %arg4: memref<9x64x64xbf16, #tpu.memory_space<vmem>>, %arg5: memref<1x64xf32, #tpu.memory_space<vmem>>, %arg6: memref<1x64xf32, #tpu.memory_space<vmem>>, %arg7: memref<1x8x8x64xf32, #tpu.memory_space<vmem>>, %arg8: memref<10x10x64xbf16, #tpu.memory_space<vmem>>) attributes {dimension_semantics = [#tpu.dimension_semantics<parallel>], iteration_bounds = array<i64: 2>, scalar_prefetch = 1 : i64, scratch_operands = 1 : i64, tpu.core_type = #tpu.core_type<tc>, window_params = [{transform_indices = @transform_0, window_bounds = array<i64: 1, 1, 10, 10, 64>}, {pipeline_mode = #tpu.pipeline_mode<synchronous>, transform_indices = @transform_1, window_bounds = array<i64: 9, 64, 64>}, {pipeline_mode = #tpu.pipeline_mode<synchronous>, transform_indices = @transform_2, window_bounds = array<i64: 9, 64, 64>}, {pipeline_mode = #tpu.pipeline_mode<synchronous>, transform_indices = @transform_3, window_bounds = array<i64: 1, 64>}, {pipeline_mode = #tpu.pipeline_mode<synchronous>, transform_indices = @transform_4, window_bounds = array<i64: 1, 64>}, {transform_indices = @transform_5, window_bounds = array<i64: 1, 8, 8, 64>}]} {
    %cst = arith.constant 0.000000e+00 : f32
    %0 = vector.broadcast %cst : f32 to vector<64x64xf32>
    %c0 = arith.constant 0 : index
    %c0_0 = arith.constant 0 : index
    %c0_1 = arith.constant 0 : index
    %c0_2 = arith.constant 0 : index
    %c0_3 = arith.constant 0 : index
    %1 = vector.load %arg2[%c0, %c0_0, %c0_1, %c0_2, %c0_3] : memref<1x1x10x10x64xbf16, #tpu.memory_space<vmem>>, vector<1x1x8x8x64xbf16>
    %2 = vector.shape_cast %1 : vector<1x1x8x8x64xbf16> to vector<8x8x64xbf16>
    %3 = vector.shape_cast %2 : vector<8x8x64xbf16> to vector<64x64xbf16>
    %c0_4 = arith.constant 0 : index
    %c0_5 = arith.constant 0 : index
    %c0_6 = arith.constant 0 : index
    %4 = vector.load %arg3[%c0_4, %c0_5, %c0_6] : memref<9x64x64xbf16, #tpu.memory_space<vmem>>, vector<1x64x64xbf16>
    %5 = vector.shape_cast %4 : vector<1x64x64xbf16> to vector<64x64xbf16>
    %cst_7 = arith.constant dense<0.000000e+00> : vector<64x64xf32>
    %6 = tpu.matmul %3, %5, %cst_7 {dimension_numbers = #tpu.dot_dimension_numbers<[1], [0], [0], [1], [0, 0, 1, 1], [], []>} : vector<64x64xbf16>, vector<64x64xbf16>, vector<64x64xf32> -> vector<64x64xf32>
    %7 = arith.addf %0, %6 : vector<64x64xf32>
    %c0_8 = arith.constant 0 : index
    %c0_9 = arith.constant 0 : index
    %c0_10 = arith.constant 0 : index
    %c1 = arith.constant 1 : index
    %c0_11 = arith.constant 0 : index
    %8 = vector.load %arg2[%c0_8, %c0_9, %c0_10, %c1, %c0_11] : memref<1x1x10x10x64xbf16, #tpu.memory_space<vmem>>, vector<1x1x8x8x64xbf16>
    %9 = vector.shape_cast %8 : vector<1x1x8x8x64xbf16> to vector<8x8x64xbf16>
    %10 = vector.shape_cast %9 : vector<8x8x64xbf16> to vector<64x64xbf16>
    %c1_12 = arith.constant 1 : index
    %c0_13 = arith.constant 0 : index
    %c0_14 = arith.constant 0 : index
    %11 = vector.load %arg3[%c1_12, %c0_13, %c0_14] : memref<9x64x64xbf16, #tpu.memory_space<vmem>>, vector<1x64x64xbf16>
    %12 = vector.shape_cast %11 : vector<1x64x64xbf16> to vector<64x64xbf16>
    %cst_15 = arith.constant dense<0.000000e+00> : vector<64x64xf32>
    %13 = tpu.matmul %10, %12, %cst_15 {dimension_numbers = #tpu.dot_dimension_numbers<[1], [0], [0], [1], [0, 0, 1, 1], [], []>} : vector<64x64xbf16>, vector<64x64xbf16>, vector<64x64xf32> -> vector<64x64xf32>
    %14 = arith.addf %7, %13 : vector<64x64xf32>
    %c0_16 = arith.constant 0 : index
    %c0_17 = arith.constant 0 : index
    %c0_18 = arith.constant 0 : index
    %c2 = arith.constant 2 : index
    %c0_19 = arith.constant 0 : index
    %15 = vector.load %arg2[%c0_16, %c0_17, %c0_18, %c2, %c0_19] : memref<1x1x10x10x64xbf16, #tpu.memory_space<vmem>>, vector<1x1x8x8x64xbf16>
    %16 = vector.shape_cast %15 : vector<1x1x8x8x64xbf16> to vector<8x8x64xbf16>
    %17 = vector.shape_cast %16 : vector<8x8x64xbf16> to vector<64x64xbf16>
    %c2_20 = arith.constant 2 : index
    %c0_21 = arith.constant 0 : index
    %c0_22 = arith.constant 0 : index
    %18 = vector.load %arg3[%c2_20, %c0_21, %c0_22] : memref<9x64x64xbf16, #tpu.memory_space<vmem>>, vector<1x64x64xbf16>
    %19 = vector.shape_cast %18 : vector<1x64x64xbf16> to vector<64x64xbf16>
    %cst_23 = arith.constant dense<0.000000e+00> : vector<64x64xf32>
    %20 = tpu.matmul %17, %19, %cst_23 {dimension_numbers = #tpu.dot_dimension_numbers<[1], [0], [0], [1], [0, 0, 1, 1], [], []>} : vector<64x64xbf16>, vector<64x64xbf16>, vector<64x64xf32> -> vector<64x64xf32>
    %21 = arith.addf %14, %20 : vector<64x64xf32>
    %c0_24 = arith.constant 0 : index
    %c0_25 = arith.constant 0 : index
    %c1_26 = arith.constant 1 : index
    %c0_27 = arith.constant 0 : index
    %c0_28 = arith.constant 0 : index
    %22 = vector.load %arg2[%c0_24, %c0_25, %c1_26, %c0_27, %c0_28] : memref<1x1x10x10x64xbf16, #tpu.memory_space<vmem>>, vector<1x1x8x8x64xbf16>
    %23 = vector.shape_cast %22 : vector<1x1x8x8x64xbf16> to vector<8x8x64xbf16>
    %24 = vector.shape_cast %23 : vector<8x8x64xbf16> to vector<64x64xbf16>
    %c3 = arith.constant 3 : index
    %c0_29 = arith.constant 0 : index
    %c0_30 = arith.constant 0 : index
    %25 = vector.load %arg3[%c3, %c0_29, %c0_30] : memref<9x64x64xbf16, #tpu.memory_space<vmem>>, vector<1x64x64xbf16>
    %26 = vector.shape_cast %25 : vector<1x64x64xbf16> to vector<64x64xbf16>
    %cst_31 = arith.constant dense<0.000000e+00> : vector<64x64xf32>
    %27 = tpu.matmul %24, %26, %cst_31 {dimension_numbers = #tpu.dot_dimension_numbers<[1], [0], [0], [1], [0, 0, 1, 1], [], []>} : vector<64x64xbf16>, vector<64x64xbf16>, vector<64x64xf32> -> vector<64x64xf32>
    %28 = arith.addf %21, %27 : vector<64x64xf32>
    %c0_32 = arith.constant 0 : index
    %c0_33 = arith.constant 0 : index
    %c1_34 = arith.constant 1 : index
    %c1_35 = arith.constant 1 : index
    %c0_36 = arith.constant 0 : index
    %29 = vector.load %arg2[%c0_32, %c0_33, %c1_34, %c1_35, %c0_36] : memref<1x1x10x10x64xbf16, #tpu.memory_space<vmem>>, vector<1x1x8x8x64xbf16>
    %30 = vector.shape_cast %29 : vector<1x1x8x8x64xbf16> to vector<8x8x64xbf16>
    %31 = vector.shape_cast %30 : vector<8x8x64xbf16> to vector<64x64xbf16>
    %c4 = arith.constant 4 : index
    %c0_37 = arith.constant 0 : index
    %c0_38 = arith.constant 0 : index
    %32 = vector.load %arg3[%c4, %c0_37, %c0_38] : memref<9x64x64xbf16, #tpu.memory_space<vmem>>, vector<1x64x64xbf16>
    %33 = vector.shape_cast %32 : vector<1x64x64xbf16> to vector<64x64xbf16>
    %cst_39 = arith.constant dense<0.000000e+00> : vector<64x64xf32>
    %34 = tpu.matmul %31, %33, %cst_39 {dimension_numbers = #tpu.dot_dimension_numbers<[1], [0], [0], [1], [0, 0, 1, 1], [], []>} : vector<64x64xbf16>, vector<64x64xbf16>, vector<64x64xf32> -> vector<64x64xf32>
    %35 = arith.addf %28, %34 : vector<64x64xf32>
    %c0_40 = arith.constant 0 : index
    %c0_41 = arith.constant 0 : index
    %c1_42 = arith.constant 1 : index
    %c2_43 = arith.constant 2 : index
    %c0_44 = arith.constant 0 : index
    %36 = vector.load %arg2[%c0_40, %c0_41, %c1_42, %c2_43, %c0_44] : memref<1x1x10x10x64xbf16, #tpu.memory_space<vmem>>, vector<1x1x8x8x64xbf16>
    %37 = vector.shape_cast %36 : vector<1x1x8x8x64xbf16> to vector<8x8x64xbf16>
    %38 = vector.shape_cast %37 : vector<8x8x64xbf16> to vector<64x64xbf16>
    %c5 = arith.constant 5 : index
    %c0_45 = arith.constant 0 : index
    %c0_46 = arith.constant 0 : index
    %39 = vector.load %arg3[%c5, %c0_45, %c0_46] : memref<9x64x64xbf16, #tpu.memory_space<vmem>>, vector<1x64x64xbf16>
    %40 = vector.shape_cast %39 : vector<1x64x64xbf16> to vector<64x64xbf16>
    %cst_47 = arith.constant dense<0.000000e+00> : vector<64x64xf32>
    %41 = tpu.matmul %38, %40, %cst_47 {dimension_numbers = #tpu.dot_dimension_numbers<[1], [0], [0], [1], [0, 0, 1, 1], [], []>} : vector<64x64xbf16>, vector<64x64xbf16>, vector<64x64xf32> -> vector<64x64xf32>
    %42 = arith.addf %35, %41 : vector<64x64xf32>
    %c0_48 = arith.constant 0 : index
    %c0_49 = arith.constant 0 : index
    %c2_50 = arith.constant 2 : index
    %c0_51 = arith.constant 0 : index
    %c0_52 = arith.constant 0 : index
    %43 = vector.load %arg2[%c0_48, %c0_49, %c2_50, %c0_51, %c0_52] : memref<1x1x10x10x64xbf16, #tpu.memory_space<vmem>>, vector<1x1x8x8x64xbf16>
    %44 = vector.shape_cast %43 : vector<1x1x8x8x64xbf16> to vector<8x8x64xbf16>
    %45 = vector.shape_cast %44 : vector<8x8x64xbf16> to vector<64x64xbf16>
    %c6 = arith.constant 6 : index
    %c0_53 = arith.constant 0 : index
    %c0_54 = arith.constant 0 : index
    %46 = vector.load %arg3[%c6, %c0_53, %c0_54] : memref<9x64x64xbf16, #tpu.memory_space<vmem>>, vector<1x64x64xbf16>
    %47 = vector.shape_cast %46 : vector<1x64x64xbf16> to vector<64x64xbf16>
    %cst_55 = arith.constant dense<0.000000e+00> : vector<64x64xf32>
    %48 = tpu.matmul %45, %47, %cst_55 {dimension_numbers = #tpu.dot_dimension_numbers<[1], [0], [0], [1], [0, 0, 1, 1], [], []>} : vector<64x64xbf16>, vector<64x64xbf16>, vector<64x64xf32> -> vector<64x64xf32>
    %49 = arith.addf %42, %48 : vector<64x64xf32>
    %c0_56 = arith.constant 0 : index
    %c0_57 = arith.constant 0 : index
    %c2_58 = arith.constant 2 : index
    %c1_59 = arith.constant 1 : index
    %c0_60 = arith.constant 0 : index
    %50 = vector.load %arg2[%c0_56, %c0_57, %c2_58, %c1_59, %c0_60] : memref<1x1x10x10x64xbf16, #tpu.memory_space<vmem>>, vector<1x1x8x8x64xbf16>
    %51 = vector.shape_cast %50 : vector<1x1x8x8x64xbf16> to vector<8x8x64xbf16>
    %52 = vector.shape_cast %51 : vector<8x8x64xbf16> to vector<64x64xbf16>
    %c7 = arith.constant 7 : index
    %c0_61 = arith.constant 0 : index
    %c0_62 = arith.constant 0 : index
    %53 = vector.load %arg3[%c7, %c0_61, %c0_62] : memref<9x64x64xbf16, #tpu.memory_space<vmem>>, vector<1x64x64xbf16>
    %54 = vector.shape_cast %53 : vector<1x64x64xbf16> to vector<64x64xbf16>
    %cst_63 = arith.constant dense<0.000000e+00> : vector<64x64xf32>
    %55 = tpu.matmul %52, %54, %cst_63 {dimension_numbers = #tpu.dot_dimension_numbers<[1], [0], [0], [1], [0, 0, 1, 1], [], []>} : vector<64x64xbf16>, vector<64x64xbf16>, vector<64x64xf32> -> vector<64x64xf32>
    %56 = arith.addf %49, %55 : vector<64x64xf32>
    %c0_64 = arith.constant 0 : index
    %c0_65 = arith.constant 0 : index
    %c2_66 = arith.constant 2 : index
    %c2_67 = arith.constant 2 : index
    %c0_68 = arith.constant 0 : index
    %57 = vector.load %arg2[%c0_64, %c0_65, %c2_66, %c2_67, %c0_68] : memref<1x1x10x10x64xbf16, #tpu.memory_space<vmem>>, vector<1x1x8x8x64xbf16>
    %58 = vector.shape_cast %57 : vector<1x1x8x8x64xbf16> to vector<8x8x64xbf16>
    %59 = vector.shape_cast %58 : vector<8x8x64xbf16> to vector<64x64xbf16>
    %c8 = arith.constant 8 : index
    %c0_69 = arith.constant 0 : index
    %c0_70 = arith.constant 0 : index
    %60 = vector.load %arg3[%c8, %c0_69, %c0_70] : memref<9x64x64xbf16, #tpu.memory_space<vmem>>, vector<1x64x64xbf16>
    %61 = vector.shape_cast %60 : vector<1x64x64xbf16> to vector<64x64xbf16>
    %cst_71 = arith.constant dense<0.000000e+00> : vector<64x64xf32>
    %62 = tpu.matmul %59, %61, %cst_71 {dimension_numbers = #tpu.dot_dimension_numbers<[1], [0], [0], [1], [0, 0, 1, 1], [], []>} : vector<64x64xbf16>, vector<64x64xbf16>, vector<64x64xf32> -> vector<64x64xf32>
    %63 = arith.addf %56, %62 : vector<64x64xf32>
    %c0_72 = arith.constant 0 : index
    %c0_73 = arith.constant 0 : index
    %64 = vector.load %arg5[%c0_72, %c0_73] : memref<1x64xf32, #tpu.memory_space<vmem>>, vector<1x64xf32>
    %65 = vector.broadcast %64 : vector<1x64xf32> to vector<64x64xf32>
    %66 = arith.addf %63, %65 : vector<64x64xf32>
    %c0_74 = arith.constant 0 : index
    %67 = memref.load %arg1[%c0_74] : memref<2xf32, #tpu.memory_space<smem>>
    %68 = vector.broadcast %67 : f32 to vector<64x64xf32>
    %69 = arith.maximumf %66, %68 : vector<64x64xf32>
    %cst_75 = arith.constant 0.000000e+00 : bf16
    %70 = vector.broadcast %cst_75 : bf16 to vector<10x10x64xbf16>
    %c0_76 = arith.constant 0 : index
    %c0_77 = arith.constant 0 : index
    %c0_78 = arith.constant 0 : index
    %71 = vector.load %arg8[%c0_76, %c0_77, %c0_78] : memref<10x10x64xbf16, #tpu.memory_space<vmem>>, vector<10x10x64xbf16>
    tpu.vector_store %arg8[%c0_76, %c0_77, %c0_78], %70 {strides = array<i32>} : memref<10x10x64xbf16, #tpu.memory_space<vmem>>, vector<10x10x64xbf16>,
    %72 = arith.truncf %69 : vector<64x64xf32> to vector<64x64xbf16>
    %73 = vector.shape_cast %72 : vector<64x64xbf16> to vector<8x8x64xbf16>
    %c1_79 = arith.constant 1 : index
    %c1_80 = arith.constant 1 : index
    %c0_81 = arith.constant 0 : index
    %74 = vector.load %arg8[%c1_79, %c1_80, %c0_81] : memref<10x10x64xbf16, #tpu.memory_space<vmem>>, vector<8x8x64xbf16>
    tpu.vector_store %arg8[%c1_79, %c1_80, %c0_81], %73 {strides = array<i32>} : memref<10x10x64xbf16, #tpu.memory_space<vmem>>, vector<8x8x64xbf16>,
    %cst_82 = arith.constant 0.000000e+00 : f32
    %75 = vector.broadcast %cst_82 : f32 to vector<64x64xf32>
    %c0_83 = arith.constant 0 : index
    %c0_84 = arith.constant 0 : index
    %c0_85 = arith.constant 0 : index
    %76 = vector.load %arg8[%c0_83, %c0_84, %c0_85] : memref<10x10x64xbf16, #tpu.memory_space<vmem>>, vector<8x8x64xbf16>
    %77 = vector.shape_cast %76 : vector<8x8x64xbf16> to vector<64x64xbf16>
    %c0_86 = arith.constant 0 : index
    %c0_87 = arith.constant 0 : index
    %c0_88 = arith.constant 0 : index
    %78 = vector.load %arg4[%c0_86, %c0_87, %c0_88] : memref<9x64x64xbf16, #tpu.memory_space<vmem>>, vector<1x64x64xbf16>
    %79 = vector.shape_cast %78 : vector<1x64x64xbf16> to vector<64x64xbf16>
    %cst_89 = arith.constant dense<0.000000e+00> : vector<64x64xf32>
    %80 = tpu.matmul %77, %79, %cst_89 {dimension_numbers = #tpu.dot_dimension_numbers<[1], [0], [0], [1], [0, 0, 1, 1], [], []>} : vector<64x64xbf16>, vector<64x64xbf16>, vector<64x64xf32> -> vector<64x64xf32>
    %81 = arith.addf %75, %80 : vector<64x64xf32>
    %c0_90 = arith.constant 0 : index
    %c1_91 = arith.constant 1 : index
    %c0_92 = arith.constant 0 : index
    %82 = vector.load %arg8[%c0_90, %c1_91, %c0_92] : memref<10x10x64xbf16, #tpu.memory_space<vmem>>, vector<8x8x64xbf16>
    %83 = vector.shape_cast %82 : vector<8x8x64xbf16> to vector<64x64xbf16>
    %c1_93 = arith.constant 1 : index
    %c0_94 = arith.constant 0 : index
    %c0_95 = arith.constant 0 : index
    %84 = vector.load %arg4[%c1_93, %c0_94, %c0_95] : memref<9x64x64xbf16, #tpu.memory_space<vmem>>, vector<1x64x64xbf16>
    %85 = vector.shape_cast %84 : vector<1x64x64xbf16> to vector<64x64xbf16>
    %cst_96 = arith.constant dense<0.000000e+00> : vector<64x64xf32>
    %86 = tpu.matmul %83, %85, %cst_96 {dimension_numbers = #tpu.dot_dimension_numbers<[1], [0], [0], [1], [0, 0, 1, 1], [], []>} : vector<64x64xbf16>, vector<64x64xbf16>, vector<64x64xf32> -> vector<64x64xf32>
    %87 = arith.addf %81, %86 : vector<64x64xf32>
    %c0_97 = arith.constant 0 : index
    %c2_98 = arith.constant 2 : index
    %c0_99 = arith.constant 0 : index
    %88 = vector.load %arg8[%c0_97, %c2_98, %c0_99] : memref<10x10x64xbf16, #tpu.memory_space<vmem>>, vector<8x8x64xbf16>
    %89 = vector.shape_cast %88 : vector<8x8x64xbf16> to vector<64x64xbf16>
    %c2_100 = arith.constant 2 : index
    %c0_101 = arith.constant 0 : index
    %c0_102 = arith.constant 0 : index
    %90 = vector.load %arg4[%c2_100, %c0_101, %c0_102] : memref<9x64x64xbf16, #tpu.memory_space<vmem>>, vector<1x64x64xbf16>
    %91 = vector.shape_cast %90 : vector<1x64x64xbf16> to vector<64x64xbf16>
    %cst_103 = arith.constant dense<0.000000e+00> : vector<64x64xf32>
    %92 = tpu.matmul %89, %91, %cst_103 {dimension_numbers = #tpu.dot_dimension_numbers<[1], [0], [0], [1], [0, 0, 1, 1], [], []>} : vector<64x64xbf16>, vector<64x64xbf16>, vector<64x64xf32> -> vector<64x64xf32>
    %93 = arith.addf %87, %92 : vector<64x64xf32>
    %c1_104 = arith.constant 1 : index
    %c0_105 = arith.constant 0 : index
    %c0_106 = arith.constant 0 : index
    %94 = vector.load %arg8[%c1_104, %c0_105, %c0_106] : memref<10x10x64xbf16, #tpu.memory_space<vmem>>, vector<8x8x64xbf16>
    %95 = vector.shape_cast %94 : vector<8x8x64xbf16> to vector<64x64xbf16>
    %c3_107 = arith.constant 3 : index
    %c0_108 = arith.constant 0 : index
    %c0_109 = arith.constant 0 : index
    %96 = vector.load %arg4[%c3_107, %c0_108, %c0_109] : memref<9x64x64xbf16, #tpu.memory_space<vmem>>, vector<1x64x64xbf16>
    %97 = vector.shape_cast %96 : vector<1x64x64xbf16> to vector<64x64xbf16>
    %cst_110 = arith.constant dense<0.000000e+00> : vector<64x64xf32>
    %98 = tpu.matmul %95, %97, %cst_110 {dimension_numbers = #tpu.dot_dimension_numbers<[1], [0], [0], [1], [0, 0, 1, 1], [], []>} : vector<64x64xbf16>, vector<64x64xbf16>, vector<64x64xf32> -> vector<64x64xf32>
    %99 = arith.addf %93, %98 : vector<64x64xf32>
    %c1_111 = arith.constant 1 : index
    %c1_112 = arith.constant 1 : index
    %c0_113 = arith.constant 0 : index
    %100 = vector.load %arg8[%c1_111, %c1_112, %c0_113] : memref<10x10x64xbf16, #tpu.memory_space<vmem>>, vector<8x8x64xbf16>
    %101 = vector.shape_cast %100 : vector<8x8x64xbf16> to vector<64x64xbf16>
    %c4_114 = arith.constant 4 : index
    %c0_115 = arith.constant 0 : index
    %c0_116 = arith.constant 0 : index
    %102 = vector.load %arg4[%c4_114, %c0_115, %c0_116] : memref<9x64x64xbf16, #tpu.memory_space<vmem>>, vector<1x64x64xbf16>
    %103 = vector.shape_cast %102 : vector<1x64x64xbf16> to vector<64x64xbf16>
    %cst_117 = arith.constant dense<0.000000e+00> : vector<64x64xf32>
    %104 = tpu.matmul %101, %103, %cst_117 {dimension_numbers = #tpu.dot_dimension_numbers<[1], [0], [0], [1], [0, 0, 1, 1], [], []>} : vector<64x64xbf16>, vector<64x64xbf16>, vector<64x64xf32> -> vector<64x64xf32>
    %105 = arith.addf %99, %104 : vector<64x64xf32>
    %c1_118 = arith.constant 1 : index
    %c2_119 = arith.constant 2 : index
    %c0_120 = arith.constant 0 : index
    %106 = vector.load %arg8[%c1_118, %c2_119, %c0_120] : memref<10x10x64xbf16, #tpu.memory_space<vmem>>, vector<8x8x64xbf16>
    %107 = vector.shape_cast %106 : vector<8x8x64xbf16> to vector<64x64xbf16>
    %c5_121 = arith.constant 5 : index
    %c0_122 = arith.constant 0 : index
    %c0_123 = arith.constant 0 : index
    %108 = vector.load %arg4[%c5_121, %c0_122, %c0_123] : memref<9x64x64xbf16, #tpu.memory_space<vmem>>, vector<1x64x64xbf16>
    %109 = vector.shape_cast %108 : vector<1x64x64xbf16> to vector<64x64xbf16>
    %cst_124 = arith.constant dense<0.000000e+00> : vector<64x64xf32>
    %110 = tpu.matmul %107, %109, %cst_124 {dimension_numbers = #tpu.dot_dimension_numbers<[1], [0], [0], [1], [0, 0, 1, 1], [], []>} : vector<64x64xbf16>, vector<64x64xbf16>, vector<64x64xf32> -> vector<64x64xf32>
    %111 = arith.addf %105, %110 : vector<64x64xf32>
    %c2_125 = arith.constant 2 : index
    %c0_126 = arith.constant 0 : index
    %c0_127 = arith.constant 0 : index
    %112 = vector.load %arg8[%c2_125, %c0_126, %c0_127] : memref<10x10x64xbf16, #tpu.memory_space<vmem>>, vector<8x8x64xbf16>
    %113 = vector.shape_cast %112 : vector<8x8x64xbf16> to vector<64x64xbf16>
    %c6_128 = arith.constant 6 : index
    %c0_129 = arith.constant 0 : index
    %c0_130 = arith.constant 0 : index
    %114 = vector.load %arg4[%c6_128, %c0_129, %c0_130] : memref<9x64x64xbf16, #tpu.memory_space<vmem>>, vector<1x64x64xbf16>
    %115 = vector.shape_cast %114 : vector<1x64x64xbf16> to vector<64x64xbf16>
    %cst_131 = arith.constant dense<0.000000e+00> : vector<64x64xf32>
    %116 = tpu.matmul %113, %115, %cst_131 {dimension_numbers = #tpu.dot_dimension_numbers<[1], [0], [0], [1], [0, 0, 1, 1], [], []>} : vector<64x64xbf16>, vector<64x64xbf16>, vector<64x64xf32> -> vector<64x64xf32>
    %117 = arith.addf %111, %116 : vector<64x64xf32>
    %c2_132 = arith.constant 2 : index
    %c1_133 = arith.constant 1 : index
    %c0_134 = arith.constant 0 : index
    %118 = vector.load %arg8[%c2_132, %c1_133, %c0_134] : memref<10x10x64xbf16, #tpu.memory_space<vmem>>, vector<8x8x64xbf16>
    %119 = vector.shape_cast %118 : vector<8x8x64xbf16> to vector<64x64xbf16>
    %c7_135 = arith.constant 7 : index
    %c0_136 = arith.constant 0 : index
    %c0_137 = arith.constant 0 : index
    %120 = vector.load %arg4[%c7_135, %c0_136, %c0_137] : memref<9x64x64xbf16, #tpu.memory_space<vmem>>, vector<1x64x64xbf16>
    %121 = vector.shape_cast %120 : vector<1x64x64xbf16> to vector<64x64xbf16>
    %cst_138 = arith.constant dense<0.000000e+00> : vector<64x64xf32>
    %122 = tpu.matmul %119, %121, %cst_138 {dimension_numbers = #tpu.dot_dimension_numbers<[1], [0], [0], [1], [0, 0, 1, 1], [], []>} : vector<64x64xbf16>, vector<64x64xbf16>, vector<64x64xf32> -> vector<64x64xf32>
    %123 = arith.addf %117, %122 : vector<64x64xf32>
    %c2_139 = arith.constant 2 : index
    %c2_140 = arith.constant 2 : index
    %c0_141 = arith.constant 0 : index
    %124 = vector.load %arg8[%c2_139, %c2_140, %c0_141] : memref<10x10x64xbf16, #tpu.memory_space<vmem>>, vector<8x8x64xbf16>
    %125 = vector.shape_cast %124 : vector<8x8x64xbf16> to vector<64x64xbf16>
    %c8_142 = arith.constant 8 : index
    %c0_143 = arith.constant 0 : index
    %c0_144 = arith.constant 0 : index
    %126 = vector.load %arg4[%c8_142, %c0_143, %c0_144] : memref<9x64x64xbf16, #tpu.memory_space<vmem>>, vector<1x64x64xbf16>
    %127 = vector.shape_cast %126 : vector<1x64x64xbf16> to vector<64x64xbf16>
    %cst_145 = arith.constant dense<0.000000e+00> : vector<64x64xf32>
    %128 = tpu.matmul %125, %127, %cst_145 {dimension_numbers = #tpu.dot_dimension_numbers<[1], [0], [0], [1], [0, 0, 1, 1], [], []>} : vector<64x64xbf16>, vector<64x64xbf16>, vector<64x64xf32> -> vector<64x64xf32>
    %129 = arith.addf %123, %128 : vector<64x64xf32>
    %c0_146 = arith.constant 0 : index
    %c0_147 = arith.constant 0 : index
    %c1_148 = arith.constant 1 : index
    %c1_149 = arith.constant 1 : index
    %c0_150 = arith.constant 0 : index
    %130 = vector.load %arg2[%c0_146, %c0_147, %c1_148, %c1_149, %c0_150] : memref<1x1x10x10x64xbf16, #tpu.memory_space<vmem>>, vector<1x1x8x8x64xbf16>
    %131 = vector.shape_cast %130 : vector<1x1x8x8x64xbf16> to vector<8x8x64xbf16>
    %132 = vector.shape_cast %131 : vector<8x8x64xbf16> to vector<64x64xbf16>
    %133 = arith.extf %132 : vector<64x64xbf16> to vector<64x64xf32>
    %134 = arith.addf %129, %133 : vector<64x64xf32>
    %c0_151 = arith.constant 0 : index
    %c0_152 = arith.constant 0 : index
    %135 = vector.load %arg6[%c0_151, %c0_152] : memref<1x64xf32, #tpu.memory_space<vmem>>, vector<1x64xf32>
    %136 = vector.broadcast %135 : vector<1x64xf32> to vector<64x64xf32>
    %137 = arith.addf %134, %136 : vector<64x64xf32>
    %c1_153 = arith.constant 1 : index
    %138 = memref.load %arg1[%c1_153] : memref<2xf32, #tpu.memory_space<smem>>
    %139 = vector.broadcast %138 : f32 to vector<64x64xf32>
    %140 = arith.maximumf %137, %139 : vector<64x64xf32>
    %141 = vector.shape_cast %140 : vector<64x64xf32> to vector<1x8x8x64xf32>
    %c0_154 = arith.constant 0 : index
    %c0_155 = arith.constant 0 : index
    %c0_156 = arith.constant 0 : index
    %c0_157 = arith.constant 0 : index
    %142 = vector.load %arg7[%c0_154, %c0_155, %c0_156, %c0_157] : memref<1x8x8x64xf32, #tpu.memory_space<vmem>>, vector<1x8x8x64xf32>
    tpu.vector_store %arg7[%c0_154, %c0_155, %c0_156, %c0_157], %141 {strides = array<i32>} : memref<1x8x8x64xf32, #tpu.memory_space<vmem>>, vector<1x8x8x64xf32>,
    return
  }
  func.func @transform_0(%arg0: i32, %arg1: memref<2xf32, #tpu.memory_space<smem>>) -> (i32, i32, i32, i32, i32) {
    %c0_i32 = arith.constant 0 : i32
    %c0_i32_0 = arith.constant 0 : i32
    %c0_i32_1 = arith.constant 0 : i32
    %c0_i32_2 = arith.constant 0 : i32
    %c0_i32_3 = arith.constant 0 : i32
    return %arg0, %c0_i32, %c0_i32_0, %c0_i32_1, %c0_i32_2 : i32, i32, i32, i32, i32
  }
  func.func @transform_1(%arg0: i32, %arg1: memref<2xf32, #tpu.memory_space<smem>>) -> (i32, i32, i32) {
    %c0_i32 = arith.constant 0 : i32
    %c0_i32_0 = arith.constant 0 : i32
    %c0_i32_1 = arith.constant 0 : i32
    %c0_i32_2 = arith.constant 0 : i32
    return %c0_i32, %c0_i32_0, %c0_i32_1 : i32, i32, i32
  }
  func.func @transform_2(%arg0: i32, %arg1: memref<2xf32, #tpu.memory_space<smem>>) -> (i32, i32, i32) {
    %c0_i32 = arith.constant 0 : i32
    %c0_i32_0 = arith.constant 0 : i32
    %c0_i32_1 = arith.constant 0 : i32
    %c0_i32_2 = arith.constant 0 : i32
    return %c0_i32, %c0_i32_0, %c0_i32_1 : i32, i32, i32
  }
  func.func @transform_3(%arg0: i32, %arg1: memref<2xf32, #tpu.memory_space<smem>>) -> (i32, i32) {
    %c0_i32 = arith.constant 0 : i32
    %c0_i32_0 = arith.constant 0 : i32
    %c0_i32_1 = arith.constant 0 : i32
    return %c0_i32, %c0_i32_0 : i32, i32
  }
  func.func @transform_4(%arg0: i32, %arg1: memref<2xf32, #tpu.memory_space<smem>>) -> (i32, i32) {
    %c0_i32 = arith.constant 0 : i32
    %c0_i32_0 = arith.constant 0 : i32
    %c0_i32_1 = arith.constant 0 : i32
    return %c0_i32, %c0_i32_0 : i32, i32
  }
  func.func @transform_5(%arg0: i32, %arg1: memref<2xf32, #tpu.memory_space<smem>>) -> (i32, i32, i32, i32) {
    %c0_i32 = arith.constant 0 : i32
    %c0_i32_0 = arith.constant 0 : i32
    %c0_i32_1 = arith.constant 0 : i32
    %c0_i32_2 = arith.constant 0 : i32
    return %arg0, %c0_i32, %c0_i32_0, %c0_i32_1 : i32, i32, i32, i32
  }
}

</mosaic_0001>

<llo_original>
// kernel: fwd.3
$region0: #{fwd.3}
  #allocation0 [shape = 'u32[]', space=smem, size = 0x4, offset = 0x4, fixed_abs, tag = 'smem constant byte address 0x4 - core index']
  #allocation1 [shape = 'u32[144,128]{1,0:T(1,128)}', space=vmem, size = 0x12000, scoped, tag = 'internal scratch']
  #allocation2 [shape = 'bf16[10,10,64]{2,1,0:T(8,128)(2,1)}', space=vmem, size = 0xa000, scoped, tag = 'scratch operand']
  #allocation3 [shape = 's32[1]{0}', space=sflag, size = 0x4, scoped, tag = 'scoped memory for fwd.3']
  #allocation4 [shape = 'u8[512]{0}', space=smem, size = 0x200, scoped, tag = 'prefetched SMEM operand 0']
  %s0 = inlined_call_operand.vmem [shape: f32[2], index: 0, kind: input, shape index: {}]
  %s1 = inlined_call_operand.vmem [shape: bf16[2,1,10,10,64], index: 1, kind: input, shape index: {}]
  %s2 = inlined_call_operand.vmem [shape: bf16[9,64,64], index: 2, kind: input, shape index: {}]
  %s3 = inlined_call_operand.vmem [shape: bf16[9,64,64], index: 3, kind: input, shape index: {}]
  %s4 = inlined_call_operand.vmem [shape: f32[1,64], index: 4, kind: input, shape index: {}]
  %s5 = inlined_call_operand.vmem [shape: f32[1,64], index: 5, kind: input, shape index: {}]
  %s6 = inlined_call_operand.hbm [shape: f32[2,8,8,64], index: 6, kind: output, shape index: {}]
  %s7 = sld [smem:[#allocation0]]
  $region53: #{fwd.3} parent=0
    _
  %s9 = ssub.s32 1, %s7
  %s10 = scalar_select 0, %s9, %s7
  %s11 = sshll.u32 %s0, 4
  %s12 = int_to_ptr.vmem [resolvable:$true] %s11
  %14 = dma.vmem_to_smem %s12, 16, [#allocation4], [#allocation3]
  %15 = dma.done [#allocation3], 16
  %16 = sfence
  $region1: #{fwd.3} parent=0
    #allocation5 [shape = 'u8[65536]{0}', space=vmem, size = 0x10000, scoped, tag = 'output window, operand 0']
    #allocation6 [shape = 's32[2]{0}', space=sflag, size = 0x8, scoped, tag = 'scoped memory for fwd.3']
    %17 = vsyncpa [#allocation6], 0
    %s18 = scalar_lea.sflag [#allocation6], 1
    %19 = vsyncpa %s18, 0
    loop: start=0, step=1, limit=4
    $region2: #{fwd.3} parent=1 // loop_pre_header
      _
    $region3: #{fwd.3} parent=1 // loop_header
      %s21 = sphi 0, %s25
      %p22 = scmp.ge.s32.totalorder %s21, 4
      %s31 = sphi 0, %s33
      %s34 = sphi 0, %s31
      %s35 = sphi 0, %s34
      %s51 = sphi 0, %s35
      %s55 = sphi 0, %s55
      %s57 = sphi 0, %s55
      %s58 = sphi 0, %s57
      %s72 = sphi 0, %s58
      %s76 = sphi 0, %s76
      %s78 = sphi 0, %s76
      %s79 = sphi 0, %s78
      %s93 = sphi 0, %s79
      %s97 = sphi 0, %s97
      %s99 = sphi 0, %s97
      %s100 = sphi 0, %s99
      %s114 = sphi 0, %s100
      %s118 = sphi 0, %s118
      %s120 = sphi 0, %s118
      %s121 = sphi 0, %s120
      %s135 = sphi 0, %s121
      %s141 = sphi 0, %s143
      %s144 = sphi 0, %s141
      %s145 = sphi 0, %s144
      %s161 = sphi 0, %s145
    $region4: #{fwd.3} parent=1 // loop_header_branch
      %24 = sbr.rel (%p22) target = $region8
    $region5: #{fwd.3} parent=1 // loop_body
      %s26 = ssub.s32 %s21, 1
      %s27 = ssub.s32 %s21, 2
      %s28 = sadd.s32 %s21, 1
      %s29 = ssub.s32 %s21, %s28
      %p30 = scmp.eq.s32.totalorder %s29, 0
      %s32 = sadd.s32 %s31, 1
      %s33 = scalar_select %p30, %s31, %s32
      %p36 = pneg %p30
      %p37 = scmp.eq.s32.totalorder %s21, 1
      %p38 = por %p36, %p37
      %p39 = scmp.ne.s32.totalorder %s31, %s34
      %p40 = scmp.eq.s32.totalorder %s21, 0
      %p41 = por %p39, %p40
      %p42 = scmp.ne.s32.totalorder %s31, %s34
      %p43 = scmp.eq.s32.totalorder %s26, 1
      %p44 = por %p42, %p43
      %p45 = scmp.ne.s32.totalorder %s34, %s35
      %p46 = scmp.eq.s32.totalorder %s26, 0
      %p47 = por %p45, %p46
      %p48 = scmp.ne.s32.totalorder %s34, %s35
      %p49 = scmp.eq.s32.totalorder %s27, 1
      %p50 = por %p48, %p49
      %p52 = scmp.ne.s32.totalorder %s35, %s51
      %p53 = scmp.eq.s32.totalorder %s27, 0
      %p54 = por %p52, %p53
      %s56 = sadd.s32 %s55, 1
      %p59 = scmp.eq.s32.totalorder %s21, 1
      %p60 = scmp.ne.s32.totalorder %s55, %s57
      %p61 = scmp.eq.s32.totalorder %s21, 0
      %p62 = por %p60, %p61
      %p63 = scmp.ne.s32.totalorder %s55, %s57
      %p64 = scmp.eq.s32.totalorder %s26, 1
      %p65 = por %p63, %p64
      %p66 = scmp.ne.s32.totalorder %s57, %s58
      %p67 = scmp.eq.s32.totalorder %s26, 0
      %p68 = por %p66, %p67
      %p69 = scmp.ne.s32.totalorder %s57, %s58
      %p70 = scmp.eq.s32.totalorder %s27, 1
      %p71 = por %p69, %p70
      %p73 = scmp.ne.s32.totalorder %s58, %s72
      %p74 = scmp.eq.s32.totalorder %s27, 0
      %p75 = por %p73, %p74
      %s77 = sadd.s32 %s76, 1
      %p80 = scmp.eq.s32.totalorder %s21, 1
      %p81 = scmp.ne.s32.totalorder %s76, %s78
      %p82 = scmp.eq.s32.totalorder %s21, 0
      %p83 = por %p81, %p82
      %p84 = scmp.ne.s32.totalorder %s76, %s78
      %p85 = scmp.eq.s32.totalorder %s26, 1
      %p86 = por %p84, %p85
      %p87 = scmp.ne.s32.totalorder %s78, %s79
      %p88 = scmp.eq.s32.totalorder %s26, 0
      %p89 = por %p87, %p88
      %p90 = scmp.ne.s32.totalorder %s78, %s79
      %p91 = scmp.eq.s32.totalorder %s27, 1
      %p92 = por %p90, %p91
      %p94 = scmp.ne.s32.totalorder %s79, %s93
      %p95 = scmp.eq.s32.totalorder %s27, 0
      %p96 = por %p94, %p95
      %s98 = sadd.s32 %s97, 1
      %p101 = scmp.eq.s32.totalorder %s21, 1
      %p102 = scmp.ne.s32.totalorder %s97, %s99
      %p103 = scmp.eq.s32.totalorder %s21, 0
      %p104 = por %p102, %p103
      %p105 = scmp.ne.s32.totalorder %s97, %s99
      %p106 = scmp.eq.s32.totalorder %s26, 1
      %p107 = por %p105, %p106
      %p108 = scmp.ne.s32.totalorder %s99, %s100
      %p109 = scmp.eq.s32.totalorder %s26, 0
      %p110 = por %p108, %p109
      %p111 = scmp.ne.s32.totalorder %s99, %s100
      %p112 = scmp.eq.s32.totalorder %s27, 1
      %p113 = por %p111, %p112
      %p115 = scmp.ne.s32.totalorder %s100, %s114
      %p116 = scmp.eq.s32.totalorder %s27, 0
      %p117 = por %p115, %p116
      %s119 = sadd.s32 %s118, 1
      %p122 = scmp.eq.s32.totalorder %s21, 1
      %p123 = scmp.ne.s32.totalorder %s118, %s120
      %p124 = scmp.eq.s32.totalorder %s21, 0
      %p125 = por %p123, %p124
      %p126 = scmp.ne.s32.totalorder %s118, %s120
      %p127 = scmp.eq.s32.totalorder %s26, 1
      %p128 = por %p126, %p127
      %p129 = scmp.ne.s32.totalorder %s120, %s121
      %p130 = scmp.eq.s32.totalorder %s26, 0
      %p131 = por %p129, %p130
      %p132 = scmp.ne.s32.totalorder %s120, %s121
      %p133 = scmp.eq.s32.totalorder %s27, 1
      %p134 = por %p132, %p133
      %p136 = scmp.ne.s32.totalorder %s121, %s135
      %p137 = scmp.eq.s32.totalorder %s27, 0
      %p138 = por %p136, %p137
      %s139 = ssub.s32 %s21, %s28
      %p140 = scmp.eq.s32.totalorder %s139, 0
      %s142 = sadd.s32 %s141, 1
      %s143 = scalar_select %p140, %s141, %s142
      %p146 = pneg %p140
      %p147 = scmp.eq.s32.totalorder %s21, 1
      %p148 = por %p146, %p147
      %p149 = scmp.ne.s32.totalorder %s141, %s144
      %p150 = scmp.eq.s32.totalorder %s21, 0
      %p151 = por %p149, %p150
      %p152 = scmp.ne.s32.totalorder %s141, %s144
      %p153 = scmp.eq.s32.totalorder %s26, 1
      %p154 = por %p152, %p153
      %p155 = scmp.ne.s32.totalorder %s144, %s145
      %p156 = scmp.eq.s32.totalorder %s26, 0
      %p157 = por %p155, %p156
      %p158 = scmp.ne.s32.totalorder %s144, %s145
      %p159 = scmp.eq.s32.totalorder %s27, 1
      %p160 = por %p158, %p159
      %p162 = scmp.ne.s32.totalorder %s145, %s161
      %p163 = scmp.eq.s32.totalorder %s27, 0
      %p164 = por %p162, %p163
      %p165 = scmp.le.s32.totalorder 1, %s21
      %p166 = scmp.lt.s32.totalorder %s21, 3
      %p167 = pnand %p165, %p166
      %p168 = pneg %p167
      // Predicated region
      $region9: #{fwd.3} parent=5 // pred_check
        _
      $region10: #{fwd.3} parent=5 // pred_check_branch
        %170 = sbr.rel (%p167) target = $region12
      $region11: #{fwd.3} parent=5 // pred_region
        %s171 = ssub.s32 %s21, 1
        // Predicated region
        $region13: #{fwd.3} parent=11 // pred_check
          %p172 = pneg %p68
        $region14: #{fwd.3} parent=11 // pred_check_branch
          %174 = sbr.rel (%p172) target = $region16
        $region15: #{fwd.3} parent=11 // pred_region
          _
        $region16: #{fwd.3} parent=11 // pred_fallthru
          _
        // Predicated region
        $region17: #{fwd.3} parent=11 // pred_check
          %p175 = pneg %p89
        $region18: #{fwd.3} parent=11 // pred_check_branch
          %177 = sbr.rel (%p175) target = $region20
        $region19: #{fwd.3} parent=11 // pred_region
          _
        $region20: #{fwd.3} parent=11 // pred_fallthru
          _
        // Predicated region
        $region21: #{fwd.3} parent=11 // pred_check
          %p178 = pneg %p110
        $region22: #{fwd.3} parent=11 // pred_check_branch
          %180 = sbr.rel (%p178) target = $region24
        $region23: #{fwd.3} parent=11 // pred_region
          _
        $region24: #{fwd.3} parent=11 // pred_fallthru
          _
        // Predicated region
        $region25: #{fwd.3} parent=11 // pred_check
          %p181 = pneg %p131
        $region26: #{fwd.3} parent=11 // pred_check_branch
          %183 = sbr.rel (%p181) target = $region28
        $region27: #{fwd.3} parent=11 // pred_region
          _
        $region28: #{fwd.3} parent=11 // pred_fallthru
          _
      $region12: #{fwd.3} parent=5 // pred_fallthru
        _
      %p184 = scmp.lt.s32.totalorder %s21, 2
      // Predicated region
      $region29: #{fwd.3} parent=5 // pred_check
        %p185 = pneg %p184
      $region30: #{fwd.3} parent=5 // pred_check_branch
        %187 = sbr.rel (%p185) target = $region32
      $region31: #{fwd.3} parent=5 // pred_region
        // Predicated region
        $region33: #{fwd.3} parent=31 // pred_check
          %p188 = pneg %p41
        $region34: #{fwd.3} parent=31 // pred_check_branch
          %190 = sbr.rel (%p188) target = $region36
        $region35: #{fwd.3} parent=31 // pred_region
          %p191 = scmp.lt.s32.totalorder %s21, 1
          %s192 = scalar_select %p191, %s21, 1
          %s193 = smul.addr %s192, 20
          %s194 = smul.addr %s193, 4
          %s195 = scalar_lea.vmem %s1, %s194
        $region36: #{fwd.3} parent=31 // pred_fallthru
          _
      $region32: #{fwd.3} parent=5 // pred_fallthru
        _
      %p196 = scmp.le.s32.totalorder 1, %s21
      %p197 = scmp.lt.s32.totalorder %s21, 3
      %p198 = pnand %p196, %p197
      %p199 = pneg %p198
      // Predicated region
      $region37: #{fwd.3} parent=5 // pred_check
        _
      $region38: #{fwd.3} parent=5 // pred_check_branch
        %201 = sbr.rel (%p198) target = $region40
      $region39: #{fwd.3} parent=5 // pred_region
        %s202 = ssub.s32 %s21, 1
        %p203 = scmp.lt.s32.totalorder %s26, 1
        %s204 = scalar_select %p203, %s26, 1
        %s205 = smul.addr %s204, 20
        %s206 = smul.addr %s205, 4
        %s207 = scalar_lea.vmem %s1, %s206
        %p208 = pneg %p47
        %p209 = pneg %p44
        %p210 = pneg %p68
        %p211 = pneg %p65
        %p212 = pneg %p89
        %p213 = pneg %p86
        %p214 = pneg %p110
        %p215 = pneg %p107
        %p216 = pneg %p131
        %p217 = pneg %p128
        %p218 = pneg %p157
        %p219 = pneg %p154
        %s220 = sand.u32 %s144, 1
        %s221 = scalar_lea.sflag [#allocation6], %s220
        %s222 = sand.u32 %s144, 1
        %s223 = smul.addr %s222, 64
        %s224 = scalar_lea.vmem [#allocation5], %s223
        %p225 = scmp.lt.s32.totalorder %s26, 1
        %s226 = scalar_select %p225, %s26, 1
        %s227 = smul.addr %s226, 20
        %s228 = smul.addr %s227, 4
        %s229 = scalar_lea.vmem %s1, %s228
        %v231 = vld [vmem:[%s229] sm:$0xf]
        %v232 = vld [vmem:[%s229 + $0x8] sm:$0xf]
        %v233 = vld [vmem:[%s229 + $0x10] sm:$0xf]
        %v234 = vld [vmem:[%s229 + $0x18] sm:$0xf]
        %v235 = vld [vmem:[%s229 + $0x20] sm:$0xf]
        %v236 = vld [vmem:[%s229 + $0x28] sm:$0xf]
        %v237 = vld [vmem:[%s229 + $0x30] sm:$0xf]
        %v238 = vld [vmem:[%s229 + $0x38] sm:$0xf]
        %v239 = vld [vmem:[%s2] sm:$0xf]
        %v240 = vld [vmem:[%s2 + $0x4] sm:$0xf]
        %v241 = vld [vmem:[%s2 + $0x8] sm:$0xf]
        %v242 = vld [vmem:[%s2 + $0xc] sm:$0xf]
        %v243 = vld [vmem:[%s2 + $0x10] sm:$0xf]
        %v244 = vld [vmem:[%s2 + $0x14] sm:$0xf]
        %v245 = vld [vmem:[%s2 + $0x18] sm:$0xf]
        %v246 = vld [vmem:[%s2 + $0x1c] sm:$0xf]
        %v247 = vld [vmem:[%s229 + $0x4] sm:$0x1]
        %v248 = vld [vmem:[%s229 + $0xc] sm:$0x1]
        %v249 = vld [vmem:[%s229 + $0x14] sm:$0x1]
        %v250 = vld [vmem:[%s229 + $0x1c] sm:$0x1]
        %v251 = vld [vmem:[%s229 + $0x24] sm:$0x1]
        %v252 = vld [vmem:[%s229 + $0x2c] sm:$0x1]
        %v253 = vld [vmem:[%s229 + $0x34] sm:$0x1]
        %v254 = vld [vmem:[%s229 + $0x3c] sm:$0x1]
        %vm255 = vsmask.f32 3328
        %vm256 = vsmask.f32 7440
        %vm257 = vmor %vm255, %vm256
        %v259 = vshrl.u32 %v231, 16
        %v261 = vrot.slane %v259, 4
        %v262 = vshll.u32 %v231, 16
        %v264 = vrot.slane %v262, 5
        %v265 = vor.u32 %v261, %v264
        %v266 = vrot.slane %v265, 4
        %v268 = vshll.u32 %v247, 16
        %v270 = vrot.slane %v268, 5
        %v271 = vsel %vm257, %v266, %v270
        %v273 = vshrl.u32 %v232, 16
        %v275 = vrot.slane %v273, 4
        %v276 = vshll.u32 %v232, 16
        %v278 = vrot.slane %v276, 5
        %v279 = vor.u32 %v275, %v278
        %v280 = vrot.slane %v279, 4
        %v282 = vshll.u32 %v248, 16
        %v284 = vrot.slane %v282, 5
        %v285 = vsel %vm257, %v280, %v284
        %v287 = vshrl.u32 %v233, 16
        %v289 = vrot.slane %v287, 4
        %v290 = vshll.u32 %v233, 16
        %v292 = vrot.slane %v290, 5
        %v293 = vor.u32 %v289, %v292
        %v294 = vrot.slane %v293, 4
        %v296 = vshll.u32 %v249, 16
        %v298 = vrot.slane %v296, 5
        %v299 = vsel %vm257, %v294, %v298
        %v301 = vshrl.u32 %v234, 16
        %v303 = vrot.slane %v301, 4
        %v304 = vshll.u32 %v234, 16
        %v306 = vrot.slane %v304, 5
        %v307 = vor.u32 %v303, %v306
        %v308 = vrot.slane %v307, 4
        %v310 = vshll.u32 %v250, 16
        %v312 = vrot.slane %v310, 5
        %v313 = vsel %vm257, %v308, %v312
        %v315 = vshrl.u32 %v235, 16
        %v317 = vrot.slane %v315, 4
        %v318 = vshll.u32 %v235, 16
        %v320 = vrot.slane %v318, 5
        %v321 = vor.u32 %v317, %v320
        %v322 = vrot.slane %v321, 4
        %v324 = vshll.u32 %v251, 16
        %v326 = vrot.slane %v324, 5
        %v327 = vsel %vm257, %v322, %v326
        %v329 = vshrl.u32 %v236, 16
        %v331 = vrot.slane %v329, 4
        %v332 = vshll.u32 %v236, 16
        %v334 = vrot.slane %v332, 5
        %v335 = vor.u32 %v331, %v334
        %v336 = vrot.slane %v335, 4
        %v338 = vshll.u32 %v252, 16
        %v340 = vrot.slane %v338, 5
        %v341 = vsel %vm257, %v336, %v340
        %v343 = vshrl.u32 %v237, 16
        %v345 = vrot.slane %v343, 4
        %v346 = vshll.u32 %v237, 16
        %v348 = vrot.slane %v346, 5
        %v349 = vor.u32 %v345, %v348
        %v350 = vrot.slane %v349, 4
        %v352 = vshll.u32 %v253, 16
        %v354 = vrot.slane %v352, 5
        %v355 = vsel %vm257, %v350, %v354
        %v357 = vshrl.u32 %v238, 16
        %v359 = vrot.slane %v357, 4
        %v360 = vshll.u32 %v238, 16
        %v362 = vrot.slane %v360, 5
        %v363 = vor.u32 %v359, %v362
        %v364 = vrot.slane %v363, 4
        %v366 = vshll.u32 %v254, 16
        %v368 = vrot.slane %v366, 5
        %v369 = vsel %vm257, %v364, %v368
        %s370 = scalar_lea.vmem %s2, 32
        %v371 = vld [vmem:[%s370] sm:$0xf]
        %v372 = vld [vmem:[%s370 + $0x4] sm:$0xf]
        %v373 = vld [vmem:[%s370 + $0x8] sm:$0xf]
        %v374 = vld [vmem:[%s370 + $0xc] sm:$0xf]
        %v375 = vld [vmem:[%s370 + $0x10] sm:$0xf]
        %v376 = vld [vmem:[%s370 + $0x14] sm:$0xf]
        %v377 = vld [vmem:[%s370 + $0x18] sm:$0xf]
        %v378 = vld [vmem:[%s370 + $0x1c] sm:$0xf]
        %v379 = vunpack.c.l.b16 %v271
        %v380 = vunpack.c.l.b16 %v285
        %v381 = vunpack.c.l.b16 %v299
        %v382 = vunpack.c.l.b16 %v313
        %v383 = vunpack.c.l.b16 %v327
        %v384 = vunpack.c.l.b16 %v341
        %v385 = vunpack.c.l.b16 %v355
        %v386 = vunpack.c.l.b16 %v369
        %v387 = vpack.c.b16 %v380, %v379
        %v388 = vpack.c.b16 %v382, %v381
        %v389 = vpack.c.b16 %v384, %v383
        %v390 = vpack.c.b16 %v386, %v385
        %v399 = vunpack.c.l.b16 %v371
        %v400 = vunpack.c.l.b16 %v372
        %v401 = vunpack.c.l.b16 %v373
        %v402 = vunpack.c.l.b16 %v374
        %v403 = vunpack.c.l.b16 %v375
        %v404 = vunpack.c.l.b16 %v376
        %v405 = vunpack.c.l.b16 %v377
        %v406 = vunpack.c.l.b16 %v378
        %v407 = vpack.c.b16 %v400, %v399
        %v408 = vpack.c.b16 %v402, %v401
        %v409 = vpack.c.b16 %v404, %v403
        %v410 = vpack.c.b16 %v406, %v405
        %vm415 = vcmask 523264
        %v417 = vsel %vm415, %v387, 0
        %v420 = vsel %vm415, %v388, 0
        %v423 = vsel %vm415, %v389, 0
        %v426 = vsel %vm415, %v390, 0
        %428 = vmatprep.subr.bf16.mxu0 0
        %429 = vmatpush1.bf16.msra.mxu0 0
        %430 = vmatprep.subr.bf16.mxu0 0
        %431 = vmatpush1.bf16.msra.mxu0 0
        %432 = vmatprep.subr.bf16.mxu0 0
        %433 = vmatpush1.bf16.msra.mxu0 0
        %434 = vmatprep.subr.bf16.mxu0 0
        %435 = vmatpush1.bf16.msra.mxu0 0
        %436 = vmatprep.subr.bf16.mxu0 0
        %437 = vmatpush1.bf16.msra.mxu0 %v410
        %438 = vmatprep.subr.bf16.mxu0 0
        %439 = vmatpush1.bf16.msra.mxu0 %v409
        %440 = vmatprep.subr.bf16.mxu0 0
        %441 = vmatpush1.bf16.msra.mxu0 %v408
        %442 = vmatprep.subr.bf16.mxu0 0
        %443 = vmatpush1.bf16.msra.mxu0 %v407
        %444 = vmatprep.subr.bf16.mxu0 0
        %445 = vmatpush2.bf16.msra.mxu0 0
        %446 = vmatprep.subr.bf16.mxu0 0
        %447 = vmatpush2.bf16.msra.mxu0 0
        %448 = vmatprep.subr.bf16.mxu0 0
        %449 = vmatpush2.bf16.msra.mxu0 0
        %450 = vmatprep.subr.bf16.mxu0 0
        %451 = vmatpush2.bf16.msra.mxu0 0
        %452 = vmatprep.subr.bf16.mxu0 0
        %453 = vmatpush2.bf16.msra.mxu0 0
        %454 = vmatprep.subr.bf16.mxu0 0
        %455 = vmatpush2.bf16.msra.mxu0 0
        %456 = vmatprep.subr.bf16.mxu0 0
        %457 = vmatpush2.bf16.msra.mxu0 0
        %458 = vmatprep.subr.bf16.mxu0 0
        %459 = vmatpush2.bf16.msra.mxu0 0
        %460 = vmatprep.mubr.bf16.mxu0 0
        %461 = vmatmul.mubr.bf16.gmra.mxu0 %v417
        %v462 = vpop.f32.mrf.mxu0
        %v463 = vadd.f32 0.0, %v462
        %v464 = vpop.f32.mrf.mxu0
        %v465 = vpop.f32.mrf.mxu0
        %v466 = vadd.f32 0.0, %v465
        %v467 = vpop.f32.mrf.mxu0
        %468 = vmatprep.mubr.bf16.mxu0 0
        %469 = vmatmul.mubr.bf16.gmra.mxu0 %v420
        %v470 = vpop.f32.mrf.mxu0
        %v471 = vadd.f32 0.0, %v470
        %v472 = vpop.f32.mrf.mxu0
        %v473 = vpop.f32.mrf.mxu0
        %v474 = vadd.f32 0.0, %v473
        %v475 = vpop.f32.mrf.mxu0
        %476 = vmatprep.mubr.bf16.mxu0 0
        %477 = vmatmul.mubr.bf16.gmra.mxu0 %v423
        %v478 = vpop.f32.mrf.mxu0
        %v479 = vadd.f32 0.0, %v478
        %v480 = vpop.f32.mrf.mxu0
        %v481 = vpop.f32.mrf.mxu0
        %v482 = vadd.f32 0.0, %v481
        %v483 = vpop.f32.mrf.mxu0
        %484 = vmatprep.mubr.bf16.mxu0 0
        %485 = vmatmul.mubr.bf16.gmra.mxu0 %v426
        %v486 = vpop.f32.mrf.mxu0
        %v487 = vadd.f32 0.0, %v486
        %v488 = vpop.f32.mrf.mxu0
        %v489 = vpop.f32.mrf.mxu0
        %v490 = vadd.f32 0.0, %v489
        %v491 = vpop.f32.mrf.mxu0
        %492 = vdwg.mxu0
        %v501 = vunpack.c.l.b16 %v231
        %v502 = vunpack.c.l.b16 %v232
        %v503 = vunpack.c.l.b16 %v233
        %v504 = vunpack.c.l.b16 %v234
        %v505 = vunpack.c.l.b16 %v235
        %v506 = vunpack.c.l.b16 %v236
        %v507 = vunpack.c.l.b16 %v237
        %v508 = vunpack.c.l.b16 %v238
        %v509 = vpack.c.b16 %v502, %v501
        %v510 = vpack.c.b16 %v504, %v503
        %v511 = vpack.c.b16 %v506, %v505
        %v512 = vpack.c.b16 %v508, %v507
        %v521 = vunpack.c.l.b16 %v239
        %v522 = vunpack.c.l.b16 %v240
        %v523 = vunpack.c.l.b16 %v241
        %v524 = vunpack.c.l.b16 %v242
        %v525 = vunpack.c.l.b16 %v243
        %v526 = vunpack.c.l.b16 %v244
        %v527 = vunpack.c.l.b16 %v245
        %v528 = vunpack.c.l.b16 %v246
        %v529 = vpack.c.b16 %v522, %v521
        %v530 = vpack.c.b16 %v524, %v523
        %v531 = vpack.c.b16 %v526, %v525
        %v532 = vpack.c.b16 %v528, %v527
        %v538 = vsel %vm415, %v509, 0
        %v541 = vsel %vm415, %v510, 0
        %v544 = vsel %vm415, %v511, 0
        %v547 = vsel %vm415, %v512, 0
        %549 = vmatprep.subr.bf16.mxu0 0
        %550 = vmatpush1.bf16.msra.mxu0 0
        %551 = vmatprep.subr.bf16.mxu0 0
        %552 = vmatpush1.bf16.msra.mxu0 0
        %553 = vmatprep.subr.bf16.mxu0 0
        %554 = vmatpush1.bf16.msra.mxu0 0
        %555 = vmatprep.subr.bf16.mxu0 0
        %556 = vmatpush1.bf16.msra.mxu0 0
        %557 = vmatprep.subr.bf16.mxu0 0
        %558 = vmatpush1.bf16.msra.mxu0 %v532
        %559 = vmatprep.subr.bf16.mxu0 0
        %560 = vmatpush1.bf16.msra.mxu0 %v531
        %561 = vmatprep.subr.bf16.mxu0 0
        %562 = vmatpush1.bf16.msra.mxu0 %v530
        %563 = vmatprep.subr.bf16.mxu0 0
        %564 = vmatpush1.bf16.msra.mxu0 %v529
        %565 = vmatprep.subr.bf16.mxu0 0
        %566 = vmatpush2.bf16.msra.mxu0 0
        %567 = vmatprep.subr.bf16.mxu0 0
        %568 = vmatpush2.bf16.msra.mxu0 0
        %569 = vmatprep.subr.bf16.mxu0 0
        %570 = vmatpush2.bf16.msra.mxu0 0
        %571 = vmatprep.subr.bf16.mxu0 0
        %572 = vmatpush2.bf16.msra.mxu0 0
        %573 = vmatprep.subr.bf16.mxu0 0
        %574 = vmatpush2.bf16.msra.mxu0 0
        %575 = vmatprep.subr.bf16.mxu0 0
        %576 = vmatpush2.bf16.msra.mxu0 0
        %577 = vmatprep.subr.bf16.mxu0 0
        %578 = vmatpush2.bf16.msra.mxu0 0
        %579 = vmatprep.subr.bf16.mxu0 0
        %580 = vmatpush2.bf16.msra.mxu0 0
        %581 = vmatprep.mubr.bf16.mxu0 0
        %582 = vmatmul.mubr.bf16.gmra.mxu0 %v538
        %v583 = vpop.f32.mrf.mxu0
        %v584 = vadd.f32 %v463, %v583
        %v585 = vpop.f32.mrf.mxu0
        %v586 = vpop.f32.mrf.mxu0
        %v587 = vadd.f32 %v466, %v586
        %v588 = vpop.f32.mrf.mxu0
        %589 = vmatprep.mubr.bf16.mxu0 0
        %590 = vmatmul.mubr.bf16.gmra.mxu0 %v541
        %v591 = vpop.f32.mrf.mxu0
        %v592 = vadd.f32 %v471, %v591
        %v593 = vpop.f32.mrf.mxu0
        %v594 = vpop.f32.mrf.mxu0
        %v595 = vadd.f32 %v474, %v594
        %v596 = vpop.f32.mrf.mxu0
        %597 = vmatprep.mubr.bf16.mxu0 0
        %598 = vmatmul.mubr.bf16.gmra.mxu0 %v544
        %v599 = vpop.f32.mrf.mxu0
        %v600 = vadd.f32 %v479, %v599
        %v601 = vpop.f32.mrf.mxu0
        %v602 = vpop.f32.mrf.mxu0
        %v603 = vadd.f32 %v482, %v602
        %v604 = vpop.f32.mrf.mxu0
        %605 = vmatprep.mubr.bf16.mxu0 0
        %606 = vmatmul.mubr.bf16.gmra.mxu0 %v547
        %v607 = vpop.f32.mrf.mxu0
        %v608 = vadd.f32 %v487, %v607
        %v609 = vpop.f32.mrf.mxu0
        %v610 = vpop.f32.mrf.mxu0
        %v611 = vadd.f32 %v490, %v610
        %v612 = vpop.f32.mrf.mxu0
        %613 = vdwg.mxu0
        %v614 = vld [vmem:[%s229] sm:$0xe]
        %v615 = vld [vmem:[%s229 + $0x8] sm:$0xe]
        %v616 = vld [vmem:[%s229 + $0x10] sm:$0xe]
        %v617 = vld [vmem:[%s229 + $0x18] sm:$0xe]
        %v618 = vld [vmem:[%s229 + $0x20] sm:$0xe]
        %v619 = vld [vmem:[%s229 + $0x28] sm:$0xe]
        %v620 = vld [vmem:[%s229 + $0x30] sm:$0xe]
        %v621 = vld [vmem:[%s229 + $0x38] sm:$0xe]
        %vm638 = vcmask 1042432
        %vm639 = vcmask 1046532
        %vm640 = vmor %vm638, %vm639
        %v641 = vrot.slane %v614, 5
        %v642 = vrot.slane %v641, 4
        %v643 = vrot.slane %v247, 5
        %v644 = vsel %vm640, %v642, %v643
        %v645 = vrot.slane %v615, 5
        %v646 = vrot.slane %v645, 4
        %v647 = vrot.slane %v248, 5
        %v648 = vsel %vm640, %v646, %v647
        %v649 = vrot.slane %v616, 5
        %v650 = vrot.slane %v649, 4
        %v651 = vrot.slane %v249, 5
        %v652 = vsel %vm640, %v650, %v651
        %v653 = vrot.slane %v617, 5
        %v654 = vrot.slane %v653, 4
        %v655 = vrot.slane %v250, 5
        %v656 = vsel %vm640, %v654, %v655
        %v657 = vrot.slane %v618, 5
        %v658 = vrot.slane %v657, 4
        %v659 = vrot.slane %v251, 5
        %v660 = vsel %vm640, %v658, %v659
        %v661 = vrot.slane %v619, 5
        %v662 = vrot.slane %v661, 4
        %v663 = vrot.slane %v252, 5
        %v664 = vsel %vm640, %v662, %v663
        %v665 = vrot.slane %v620, 5
        %v666 = vrot.slane %v665, 4
        %v667 = vrot.slane %v253, 5
        %v668 = vsel %vm640, %v666, %v667
        %v669 = vrot.slane %v621, 5
        %v670 = vrot.slane %v669, 4
        %v671 = vrot.slane %v254, 5
        %v672 = vsel %vm640, %v670, %v671
        %s673 = scalar_lea.vmem %s2, 64
        %v674 = vld [vmem:[%s673] sm:$0xf]
        %v675 = vld [vmem:[%s673 + $0x4] sm:$0xf]
        %v676 = vld [vmem:[%s673 + $0x8] sm:$0xf]
        %v677 = vld [vmem:[%s673 + $0xc] sm:$0xf]
        %v678 = vld [vmem:[%s673 + $0x10] sm:$0xf]
        %v679 = vld [vmem:[%s673 + $0x14] sm:$0xf]
        %v680 = vld [vmem:[%s673 + $0x18] sm:$0xf]
        %v681 = vld [vmem:[%s673 + $0x1c] sm:$0xf]
        %v682 = vunpack.c.l.b16 %v644
        %v683 = vunpack.c.l.b16 %v648
        %v684 = vunpack.c.l.b16 %v652
        %v685 = vunpack.c.l.b16 %v656
        %v686 = vunpack.c.l.b16 %v660
        %v687 = vunpack.c.l.b16 %v664
        %v688 = vunpack.c.l.b16 %v668
        %v689 = vunpack.c.l.b16 %v672
        %v690 = vpack.c.b16 %v683, %v682
        %v691 = vpack.c.b16 %v685, %v684
        %v692 = vpack.c.b16 %v687, %v686
        %v693 = vpack.c.b16 %v689, %v688
        %v702 = vunpack.c.l.b16 %v674
        %v703 = vunpack.c.l.b16 %v675
        %v704 = vunpack.c.l.b16 %v676
        %v705 = vunpack.c.l.b16 %v677
        %v706 = vunpack.c.l.b16 %v678
        %v707 = vunpack.c.l.b16 %v679
        %v708 = vunpack.c.l.b16 %v680
        %v709 = vunpack.c.l.b16 %v681
        %v710 = vpack.c.b16 %v703, %v702
        %v711 = vpack.c.b16 %v705, %v704
        %v712 = vpack.c.b16 %v707, %v706
        %v713 = vpack.c.b16 %v709, %v708
        %v719 = vsel %vm415, %v690, 0
        %v722 = vsel %vm415, %v691, 0
        %v725 = vsel %vm415, %v692, 0
        %v728 = vsel %vm415, %v693, 0
        %730 = vmatprep.subr.bf16.mxu0 0
        %731 = vmatpush1.bf16.msra.mxu0 0
        %732 = vmatprep.subr.bf16.mxu0 0
        %733 = vmatpush1.bf16.msra.mxu0 0
        %734 = vmatprep.subr.bf16.mxu0 0
        %735 = vmatpush1.bf16.msra.mxu0 0
        %736 = vmatprep.subr.bf16.mxu0 0
        %737 = vmatpush1.bf16.msra.mxu0 0
        %738 = vmatprep.subr.bf16.mxu0 0
        %739 = vmatpush1.bf16.msra.mxu0 %v713
        %740 = vmatprep.subr.bf16.mxu0 0
        %741 = vmatpush1.bf16.msra.mxu0 %v712
        %742 = vmatprep.subr.bf16.mxu0 0
        %743 = vmatpush1.bf16.msra.mxu0 %v711
        %744 = vmatprep.subr.bf16.mxu0 0
        %745 = vmatpush1.bf16.msra.mxu0 %v710
        %746 = vmatprep.subr.bf16.mxu0 0
        %747 = vmatpush2.bf16.msra.mxu0 0
        %748 = vmatprep.subr.bf16.mxu0 0
        %749 = vmatpush2.bf16.msra.mxu0 0
        %750 = vmatprep.subr.bf16.mxu0 0
        %751 = vmatpush2.bf16.msra.mxu0 0
        %752 = vmatprep.subr.bf16.mxu0 0
        %753 = vmatpush2.bf16.msra.mxu0 0
        %754 = vmatprep.subr.bf16.mxu0 0
        %755 = vmatpush2.bf16.msra.mxu0 0
        %756 = vmatprep.subr.bf16.mxu0 0
        %757 = vmatpush2.bf16.msra.mxu0 0
        %758 = vmatprep.subr.bf16.mxu0 0
        %759 = vmatpush2.bf16.msra.mxu0 0
        %760 = vmatprep.subr.bf16.mxu0 0
        %761 = vmatpush2.bf16.msra.mxu0 0
        %762 = vmatprep.mubr.bf16.mxu0 0
        %763 = vmatmul.mubr.bf16.gmra.mxu0 %v719
        %v764 = vpop.f32.mrf.mxu0
        %v765 = vadd.f32 0.0, %v764
        %v766 = vpop.f32.mrf.mxu0
        %v767 = vpop.f32.mrf.mxu0
        %v768 = vadd.f32 0.0, %v767
        %v769 = vpop.f32.mrf.mxu0
        %770 = vmatprep.mubr.bf16.mxu0 0
        %771 = vmatmul.mubr.bf16.gmra.mxu0 %v722
        %v772 = vpop.f32.mrf.mxu0
        %v773 = vadd.f32 0.0, %v772
        %v774 = vpop.f32.mrf.mxu0
        %v775 = vpop.f32.mrf.mxu0
        %v776 = vadd.f32 0.0, %v775
        %v777 = vpop.f32.mrf.mxu0
        %778 = vmatprep.mubr.bf16.mxu0 0
        %779 = vmatmul.mubr.bf16.gmra.mxu0 %v725
        %v780 = vpop.f32.mrf.mxu0
        %v781 = vadd.f32 0.0, %v780
        %v782 = vpop.f32.mrf.mxu0
        %v783 = vpop.f32.mrf.mxu0
        %v784 = vadd.f32 0.0, %v783
        %v785 = vpop.f32.mrf.mxu0
        %786 = vmatprep.mubr.bf16.mxu0 0
        %787 = vmatmul.mubr.bf16.gmra.mxu0 %v728
        %v788 = vpop.f32.mrf.mxu0
        %v789 = vadd.f32 0.0, %v788
        %v790 = vpop.f32.mrf.mxu0
        %v791 = vpop.f32.mrf.mxu0
        %v792 = vadd.f32 0.0, %v791
        %v793 = vpop.f32.mrf.mxu0
        %794 = vdwg.mxu0
        %v795 = vadd.f32 %v584, %v765
        %v796 = vadd.f32 %v587, %v768
        %v797 = vadd.f32 %v592, %v773
        %v798 = vadd.f32 %v595, %v776
        %v799 = vadd.f32 %v600, %v781
        %v800 = vadd.f32 %v603, %v784
        %v801 = vadd.f32 %v608, %v789
        %v802 = vadd.f32 %v611, %v792
        %s803 = scalar_lea.vmem %s229, 8
        %v804 = vld [vmem:[%s803] sm:$0xf]
        %v805 = vld [vmem:[%s803 + $0x8] sm:$0xf]
        %v806 = vld [vmem:[%s803 + $0x10] sm:$0xf]
        %v807 = vld [vmem:[%s803 + $0x18] sm:$0xf]
        %v808 = vld [vmem:[%s803 + $0x20] sm:$0xf]
        %v809 = vld [vmem:[%s803 + $0x28] sm:$0xf]
        %v810 = vld [vmem:[%s803 + $0x30] sm:$0xf]
        %v811 = vld [vmem:[%s803 + $0x38] sm:$0xf]
        %s812 = scalar_lea.vmem %s2, 96
        %v813 = vld [vmem:[%s812] sm:$0xf]
        %v814 = vld [vmem:[%s812 + $0x4] sm:$0xf]
        %v815 = vld [vmem:[%s812 + $0x8] sm:$0xf]
        %v816 = vld [vmem:[%s812 + $0xc] sm:$0xf]
        %v817 = vld [vmem:[%s812 + $0x10] sm:$0xf]
        %v818 = vld [vmem:[%s812 + $0x14] sm:$0xf]
        %v819 = vld [vmem:[%s812 + $0x18] sm:$0xf]
        %v820 = vld [vmem:[%s812 + $0x1c] sm:$0xf]
        %v829 = vunpack.c.l.b16 %v804
        %v830 = vunpack.c.l.b16 %v805
        %v831 = vunpack.c.l.b16 %v806
        %v832 = vunpack.c.l.b16 %v807
        %v833 = vunpack.c.l.b16 %v808
        %v834 = vunpack.c.l.b16 %v809
        %v835 = vunpack.c.l.b16 %v810
        %v836 = vunpack.c.l.b16 %v811
        %v837 = vpack.c.b16 %v830, %v829
        %v838 = vpack.c.b16 %v832, %v831
        %v839 = vpack.c.b16 %v834, %v833
        %v840 = vpack.c.b16 %v836, %v835
        %v849 = vunpack.c.l.b16 %v813
        %v850 = vunpack.c.l.b16 %v814
        %v851 = vunpack.c.l.b16 %v815
        %v852 = vunpack.c.l.b16 %v816
        %v853 = vunpack.c.l.b16 %v817
        %v854 = vunpack.c.l.b16 %v818
        %v855 = vunpack.c.l.b16 %v819
        %v856 = vunpack.c.l.b16 %v820
        %v857 = vpack.c.b16 %v850, %v849
        %v858 = vpack.c.b16 %v852, %v851
        %v859 = vpack.c.b16 %v854, %v853
        %v860 = vpack.c.b16 %v856, %v855
        %v866 = vsel %vm415, %v837, 0
        %v869 = vsel %vm415, %v838, 0
        %v872 = vsel %vm415, %v839, 0
        %v875 = vsel %vm415, %v840, 0
        %877 = vmatprep.subr.bf16.mxu0 0
        %878 = vmatpush1.bf16.msra.mxu0 0
        %879 = vmatprep.subr.bf16.mxu0 0
        %880 = vmatpush1.bf16.msra.mxu0 0
        %881 = vmatprep.subr.bf16.mxu0 0
        %882 = vmatpush1.bf16.msra.mxu0 0
        %883 = vmatprep.subr.bf16.mxu0 0
        %884 = vmatpush1.bf16.msra.mxu0 0
        %885 = vmatprep.subr.bf16.mxu0 0
        %886 = vmatpush1.bf16.msra.mxu0 %v860
        %887 = vmatprep.subr.bf16.mxu0 0
        %888 = vmatpush1.bf16.msra.mxu0 %v859
        %889 = vmatprep.subr.bf16.mxu0 0
        %890 = vmatpush1.bf16.msra.mxu0 %v858
        %891 = vmatprep.subr.bf16.mxu0 0
        %892 = vmatpush1.bf16.msra.mxu0 %v857
        %893 = vmatprep.subr.bf16.mxu0 0
        %894 = vmatpush2.bf16.msra.mxu0 0
        %895 = vmatprep.subr.bf16.mxu0 0
        %896 = vmatpush2.bf16.msra.mxu0 0
        %897 = vmatprep.subr.bf16.mxu0 0
        %898 = vmatpush2.bf16.msra.mxu0 0
        %899 = vmatprep.subr.bf16.mxu0 0
        %900 = vmatpush2.bf16.msra.mxu0 0
        %901 = vmatprep.subr.bf16.mxu0 0
        %902 = vmatpush2.bf16.msra.mxu0 0
        %903 = vmatprep.subr.bf16.mxu0 0
        %904 = vmatpush2.bf16.msra.mxu0 0
        %905 = vmatprep.subr.bf16.mxu0 0
        %906 = vmatpush2.bf16.msra.mxu0 0
        %907 = vmatprep.subr.bf16.mxu0 0
        %908 = vmatpush2.bf16.msra.mxu0 0
        %909 = vmatprep.mubr.bf16.mxu0 0
        %910 = vmatmul.mubr.bf16.gmra.mxu0 %v866
        %v911 = vpop.f32.mrf.mxu0
        %v912 = vadd.f32 0.0, %v911
        %v913 = vpop.f32.mrf.mxu0
        %v914 = vpop.f32.mrf.mxu0
        %v915 = vadd.f32 0.0, %v914
        %v916 = vpop.f32.mrf.mxu0
        %917 = vmatprep.mubr.bf16.mxu0 0
        %918 = vmatmul.mubr.bf16.gmra.mxu0 %v869
        %v919 = vpop.f32.mrf.mxu0
        %v920 = vadd.f32 0.0, %v919
        %v921 = vpop.f32.mrf.mxu0
        %v922 = vpop.f32.mrf.mxu0
        %v923 = vadd.f32 0.0, %v922
        %v924 = vpop.f32.mrf.mxu0
        %925 = vmatprep.mubr.bf16.mxu0 0
        %926 = vmatmul.mubr.bf16.gmra.mxu0 %v872
        %v927 = vpop.f32.mrf.mxu0
        %v928 = vadd.f32 0.0, %v927
        %v929 = vpop.f32.mrf.mxu0
        %v930 = vpop.f32.mrf.mxu0
        %v931 = vadd.f32 0.0, %v930
        %v932 = vpop.f32.mrf.mxu0
        %933 = vmatprep.mubr.bf16.mxu0 0
        %934 = vmatmul.mubr.bf16.gmra.mxu0 %v875
        %v935 = vpop.f32.mrf.mxu0
        %v936 = vadd.f32 0.0, %v935
        %v937 = vpop.f32.mrf.mxu0
        %v938 = vpop.f32.mrf.mxu0
        %v939 = vadd.f32 0.0, %v938
        %v940 = vpop.f32.mrf.mxu0
        %941 = vdwg.mxu0
        %v942 = vadd.f32 %v795, %v912
        %v943 = vadd.f32 %v796, %v915
        %v944 = vadd.f32 %v797, %v920
        %v945 = vadd.f32 %v798, %v923
        %v946 = vadd.f32 %v799, %v928
        %v947 = vadd.f32 %v800, %v931
        %v948 = vadd.f32 %v801, %v936
        %v949 = vadd.f32 %v802, %v939
        %v950 = vld [vmem:[%s803] sm:$0xf]
        %v951 = vld [vmem:[%s803 + $0x4] sm:$0x1]
        %v952 = vld [vmem:[%s803 + $0x8] sm:$0xf]
        %v953 = vld [vmem:[%s803 + $0xc] sm:$0x1]
        %v954 = vld [vmem:[%s803 + $0x10] sm:$0xf]
        %v955 = vld [vmem:[%s803 + $0x14] sm:$0x1]
        %v956 = vld [vmem:[%s803 + $0x18] sm:$0xf]
        %v957 = vld [vmem:[%s803 + $0x1c] sm:$0x1]
        %v958 = vld [vmem:[%s803 + $0x20] sm:$0xf]
        %v959 = vld [vmem:[%s803 + $0x24] sm:$0x1]
        %v960 = vld [vmem:[%s803 + $0x28] sm:$0xf]
        %v961 = vld [vmem:[%s803 + $0x2c] sm:$0x1]
        %v962 = vld [vmem:[%s803 + $0x30] sm:$0xf]
        %v963 = vld [vmem:[%s803 + $0x34] sm:$0x1]
        %v964 = vld [vmem:[%s803 + $0x38] sm:$0xf]
        %v965 = vld [vmem:[%s803 + $0x3c] sm:$0x1]
        %v967 = vshrl.u32 %v950, 16
        %v969 = vrot.slane %v967, 4
        %v970 = vshll.u32 %v950, 16
        %v972 = vrot.slane %v970, 5
        %v973 = vor.u32 %v969, %v972
        %v974 = vrot.slane %v973, 4
        %v976 = vshll.u32 %v951, 16
        %v978 = vrot.slane %v976, 5
        %v979 = vsel %vm257, %v974, %v978
        %v981 = vshrl.u32 %v952, 16
        %v983 = vrot.slane %v981, 4
        %v984 = vshll.u32 %v952, 16
        %v986 = vrot.slane %v984, 5
        %v987 = vor.u32 %v983, %v986
        %v988 = vrot.slane %v987, 4
        %v990 = vshll.u32 %v953, 16
        %v992 = vrot.slane %v990, 5
        %v993 = vsel %vm257, %v988, %v992
        %v995 = vshrl.u32 %v954, 16
        %v997 = vrot.slane %v995, 4
        %v998 = vshll.u32 %v954, 16
        %v1000 = vrot.slane %v998, 5
        %v1001 = vor.u32 %v997, %v1000
        %v1002 = vrot.slane %v1001, 4
        %v1004 = vshll.u32 %v955, 16
        %v1006 = vrot.slane %v1004, 5
        %v1007 = vsel %vm257, %v1002, %v1006
        %v1009 = vshrl.u32 %v956, 16
        %v1011 = vrot.slane %v1009, 4
        %v1012 = vshll.u32 %v956, 16
        %v1014 = vrot.slane %v1012, 5
        %v1015 = vor.u32 %v1011, %v1014
        %v1016 = vrot.slane %v1015, 4
        %v1018 = vshll.u32 %v957, 16
        %v1020 = vrot.slane %v1018, 5
        %v1021 = vsel %vm257, %v1016, %v1020
        %v1023 = vshrl.u32 %v958, 16
        %v1025 = vrot.slane %v1023, 4
        %v1026 = vshll.u32 %v958, 16
        %v1028 = vrot.slane %v1026, 5
        %v1029 = vor.u32 %v1025, %v1028
        %v1030 = vrot.slane %v1029, 4
        %v1032 = vshll.u32 %v959, 16
        %v1034 = vrot.slane %v1032, 5
        %v1035 = vsel %vm257, %v1030, %v1034
        %v1037 = vshrl.u32 %v960, 16
        %v1039 = vrot.slane %v1037, 4
        %v1040 = vshll.u32 %v960, 16
        %v1042 = vrot.slane %v1040, 5
        %v1043 = vor.u32 %v1039, %v1042
        %v1044 = vrot.slane %v1043, 4
        %v1046 = vshll.u32 %v961, 16
        %v1048 = vrot.slane %v1046, 5
        %v1049 = vsel %vm257, %v1044, %v1048
        %v1051 = vshrl.u32 %v962, 16
        %v1053 = vrot.slane %v1051, 4
        %v1054 = vshll.u32 %v962, 16
        %v1056 = vrot.slane %v1054, 5
        %v1057 = vor.u32 %v1053, %v1056
        %v1058 = vrot.slane %v1057, 4
        %v1060 = vshll.u32 %v963, 16
        %v1062 = vrot.slane %v1060, 5
        %v1063 = vsel %vm257, %v1058, %v1062
        %v1065 = vshrl.u32 %v964, 16
        %v1067 = vrot.slane %v1065, 4
        %v1068 = vshll.u32 %v964, 16
        %v1070 = vrot.slane %v1068, 5
        %v1071 = vor.u32 %v1067, %v1070
        %v1072 = vrot.slane %v1071, 4
        %v1074 = vshll.u32 %v965, 16
        %v1076 = vrot.slane %v1074, 5
        %v1077 = vsel %vm257, %v1072, %v1076
        %s1078 = scalar_lea.vmem %s2, 128
        %v1079 = vld [vmem:[%s1078] sm:$0xf]
        %v1080 = vld [vmem:[%s1078 + $0x4] sm:$0xf]
        %v1081 = vld [vmem:[%s1078 + $0x8] sm:$0xf]
        %v1082 = vld [vmem:[%s1078 + $0xc] sm:$0xf]
        %v1083 = vld [vmem:[%s1078 + $0x10] sm:$0xf]
        %v1084 = vld [vmem:[%s1078 + $0x14] sm:$0xf]
        %v1085 = vld [vmem:[%s1078 + $0x18] sm:$0xf]
        %v1086 = vld [vmem:[%s1078 + $0x1c] sm:$0xf]
        %v1087 = vunpack.c.l.b16 %v979
        %v1088 = vunpack.c.l.b16 %v993
        %v1089 = vunpack.c.l.b16 %v1007
        %v1090 = vunpack.c.l.b16 %v1021
        %v1091 = vunpack.c.l.b16 %v1035
        %v1092 = vunpack.c.l.b16 %v1049
        %v1093 = vunpack.c.l.b16 %v1063
        %v1094 = vunpack.c.l.b16 %v1077
        %v1095 = vpack.c.b16 %v1088, %v1087
        %v1096 = vpack.c.b16 %v1090, %v1089
        %v1097 = vpack.c.b16 %v1092, %v1091
        %v1098 = vpack.c.b16 %v1094, %v1093
        %v1107 = vunpack.c.l.b16 %v1079
        %v1108 = vunpack.c.l.b16 %v1080
        %v1109 = vunpack.c.l.b16 %v1081
        %v1110 = vunpack.c.l.b16 %v1082
        %v1111 = vunpack.c.l.b16 %v1083
        %v1112 = vunpack.c.l.b16 %v1084
        %v1113 = vunpack.c.l.b16 %v1085
        %v1114 = vunpack.c.l.b16 %v1086
        %v1115 = vpack.c.b16 %v1108, %v1107
        %v1116 = vpack.c.b16 %v1110, %v1109
        %v1117 = vpack.c.b16 %v1112, %v1111
        %v1118 = vpack.c.b16 %v1114, %v1113
        %v1124 = vsel %vm415, %v1095, 0
        %v1127 = vsel %vm415, %v1096, 0
        %v1130 = vsel %vm415, %v1097, 0
        %v1133 = vsel %vm415, %v1098, 0
        %1135 = vmatprep.subr.bf16.mxu0 0
        %1136 = vmatpush1.bf16.msra.mxu0 0
        %1137 = vmatprep.subr.bf16.mxu0 0
        %1138 = vmatpush1.bf16.msra.mxu0 0
        %1139 = vmatprep.subr.bf16.mxu0 0
        %1140 = vmatpush1.bf16.msra.mxu0 0
        %1141 = vmatprep.subr.bf16.mxu0 0
        %1142 = vmatpush1.bf16.msra.mxu0 0
        %1143 = vmatprep.subr.bf16.mxu0 0
        %1144 = vmatpush1.bf16.msra.mxu0 %v1118
        %1145 = vmatprep.subr.bf16.mxu0 0
        %1146 = vmatpush1.bf16.msra.mxu0 %v1117
        %1147 = vmatprep.subr.bf16.mxu0 0
        %1148 = vmatpush1.bf16.msra.mxu0 %v1116
        %1149 = vmatprep.subr.bf16.mxu0 0
        %1150 = vmatpush1.bf16.msra.mxu0 %v1115
        %1151 = vmatprep.subr.bf16.mxu0 0
        %1152 = vmatpush2.bf16.msra.mxu0 0
        %1153 = vmatprep.subr.bf16.mxu0 0
        %1154 = vmatpush2.bf16.msra.mxu0 0
        %1155 = vmatprep.subr.bf16.mxu0 0
        %1156 = vmatpush2.bf16.msra.mxu0 0
        %1157 = vmatprep.subr.bf16.mxu0 0
        %1158 = vmatpush2.bf16.msra.mxu0 0
        %1159 = vmatprep.subr.bf16.mxu0 0
        %1160 = vmatpush2.bf16.msra.mxu0 0
        %1161 = vmatprep.subr.bf16.mxu0 0
        %1162 = vmatpush2.bf16.msra.mxu0 0
        %1163 = vmatprep.subr.bf16.mxu0 0
        %1164 = vmatpush2.bf16.msra.mxu0 0
        %1165 = vmatprep.subr.bf16.mxu0 0
        %1166 = vmatpush2.bf16.msra.mxu0 0
        %1167 = vmatprep.mubr.bf16.mxu0 0
        %1168 = vmatmul.mubr.bf16.gmra.mxu0 %v1124
        %v1169 = vpop.f32.mrf.mxu0
        %v1170 = vadd.f32 0.0, %v1169
        %v1171 = vpop.f32.mrf.mxu0
        %v1172 = vpop.f32.mrf.mxu0
        %v1173 = vadd.f32 0.0, %v1172
        %v1174 = vpop.f32.mrf.mxu0
        %1175 = vmatprep.mubr.bf16.mxu0 0
        %1176 = vmatmul.mubr.bf16.gmra.mxu0 %v1127
        %v1177 = vpop.f32.mrf.mxu0
        %v1178 = vadd.f32 0.0, %v1177
        %v1179 = vpop.f32.mrf.mxu0
        %v1180 = vpop.f32.mrf.mxu0
        %v1181 = vadd.f32 0.0, %v1180
        %v1182 = vpop.f32.mrf.mxu0
        %1183 = vmatprep.mubr.bf16.mxu0 0
        %1184 = vmatmul.mubr.bf16.gmra.mxu0 %v1130
        %v1185 = vpop.f32.mrf.mxu0
        %v1186 = vadd.f32 0.0, %v1185
        %v1187 = vpop.f32.mrf.mxu0
        %v1188 = vpop.f32.mrf.mxu0
        %v1189 = vadd.f32 0.0, %v1188
        %v1190 = vpop.f32.mrf.mxu0
        %1191 = vmatprep.mubr.bf16.mxu0 0
        %1192 = vmatmul.mubr.bf16.gmra.mxu0 %v1133
        %v1193 = vpop.f32.mrf.mxu0
        %v1194 = vadd.f32 0.0, %v1193
        %v1195 = vpop.f32.mrf.mxu0
        %v1196 = vpop.f32.mrf.mxu0
        %v1197 = vadd.f32 0.0, %v1196
        %v1198 = vpop.f32.mrf.mxu0
        %1199 = vdwg.mxu0
        %v1200 = vadd.f32 %v942, %v1170
        %v1201 = vadd.f32 %v943, %v1173
        %v1202 = vadd.f32 %v944, %v1178
        %v1203 = vadd.f32 %v945, %v1181
        %v1204 = vadd.f32 %v946, %v1186
        %v1205 = vadd.f32 %v947, %v1189
        %v1206 = vadd.f32 %v948, %v1194
        %v1207 = vadd.f32 %v949, %v1197
        %v1208 = vld [vmem:[%s803] sm:$0xe]
        %v1209 = vld [vmem:[%s803 + $0x8] sm:$0xe]
        %v1210 = vld [vmem:[%s803 + $0x10] sm:$0xe]
        %v1211 = vld [vmem:[%s803 + $0x18] sm:$0xe]
        %v1212 = vld [vmem:[%s803 + $0x20] sm:$0xe]
        %v1213 = vld [vmem:[%s803 + $0x28] sm:$0xe]
        %v1214 = vld [vmem:[%s803 + $0x30] sm:$0xe]
        %v1215 = vld [vmem:[%s803 + $0x38] sm:$0xe]
        %v1232 = vrot.slane %v1208, 5
        %v1233 = vrot.slane %v1232, 4
        %v1234 = vrot.slane %v951, 5
        %v1235 = vsel %vm640, %v1233, %v1234
        %v1236 = vrot.slane %v1209, 5
        %v1237 = vrot.slane %v1236, 4
        %v1238 = vrot.slane %v953, 5
        %v1239 = vsel %vm640, %v1237, %v1238
        %v1240 = vrot.slane %v1210, 5
        %v1241 = vrot.slane %v1240, 4
        %v1242 = vrot.slane %v955, 5
        %v1243 = vsel %vm640, %v1241, %v1242
        %v1244 = vrot.slane %v1211, 5
        %v1245 = vrot.slane %v1244, 4
        %v1246 = vrot.slane %v957, 5
        %v1247 = vsel %vm640, %v1245, %v1246
        %v1248 = vrot.slane %v1212, 5
        %v1249 = vrot.slane %v1248, 4
        %v1250 = vrot.slane %v959, 5
        %v1251 = vsel %vm640, %v1249, %v1250
        %v1252 = vrot.slane %v1213, 5
        %v1253 = vrot.slane %v1252, 4
        %v1254 = vrot.slane %v961, 5
        %v1255 = vsel %vm640, %v1253, %v1254
        %v1256 = vrot.slane %v1214, 5
        %v1257 = vrot.slane %v1256, 4
        %v1258 = vrot.slane %v963, 5
        %v1259 = vsel %vm640, %v1257, %v1258
        %v1260 = vrot.slane %v1215, 5
        %v1261 = vrot.slane %v1260, 4
        %v1262 = vrot.slane %v965, 5
        %v1263 = vsel %vm640, %v1261, %v1262
        %s1264 = scalar_lea.vmem %s2, 160
        %v1265 = vld [vmem:[%s1264] sm:$0xf]
        %v1266 = vld [vmem:[%s1264 + $0x4] sm:$0xf]
        %v1267 = vld [vmem:[%s1264 + $0x8] sm:$0xf]
        %v1268 = vld [vmem:[%s1264 + $0xc] sm:$0xf]
        %v1269 = vld [vmem:[%s1264 + $0x10] sm:$0xf]
        %v1270 = vld [vmem:[%s1264 + $0x14] sm:$0xf]
        %v1271 = vld [vmem:[%s1264 + $0x18] sm:$0xf]
        %v1272 = vld [vmem:[%s1264 + $0x1c] sm:$0xf]
        %v1273 = vunpack.c.l.b16 %v1235
        %v1274 = vunpack.c.l.b16 %v1239
        %v1275 = vunpack.c.l.b16 %v1243
        %v1276 = vunpack.c.l.b16 %v1247
        %v1277 = vunpack.c.l.b16 %v1251
        %v1278 = vunpack.c.l.b16 %v1255
        %v1279 = vunpack.c.l.b16 %v1259
        %v1280 = vunpack.c.l.b16 %v1263
        %v1281 = vpack.c.b16 %v1274, %v1273
        %v1282 = vpack.c.b16 %v1276, %v1275
        %v1283 = vpack.c.b16 %v1278, %v1277
        %v1284 = vpack.c.b16 %v1280, %v1279
        %v1293 = vunpack.c.l.b16 %v1265
        %v1294 = vunpack.c.l.b16 %v1266
        %v1295 = vunpack.c.l.b16 %v1267
        %v1296 = vunpack.c.l.b16 %v1268
        %v1297 = vunpack.c.l.b16 %v1269
        %v1298 = vunpack.c.l.b16 %v1270
        %v1299 = vunpack.c.l.b16 %v1271
        %v1300 = vunpack.c.l.b16 %v1272
        %v1301 = vpack.c.b16 %v1294, %v1293
        %v1302 = vpack.c.b16 %v1296, %v1295
        %v1303 = vpack.c.b16 %v1298, %v1297
        %v1304 = vpack.c.b16 %v1300, %v1299
        %v1310 = vsel %vm415, %v1281, 0
        %v1313 = vsel %vm415, %v1282, 0
        %v1316 = vsel %vm415, %v1283, 0
        %v1319 = vsel %vm415, %v1284, 0
        %1321 = vmatprep.subr.bf16.mxu0 0
        %1322 = vmatpush1.bf16.msra.mxu0 0
        %1323 = vmatprep.subr.bf16.mxu0 0
        %1324 = vmatpush1.bf16.msra.mxu0 0
        %1325 = vmatprep.subr.bf16.mxu0 0
        %1326 = vmatpush1.bf16.msra.mxu0 0
        %1327 = vmatprep.subr.bf16.mxu0 0
        %1328 = vmatpush1.bf16.msra.mxu0 0
        %1329 = vmatprep.subr.bf16.mxu0 0
        %1330 = vmatpush1.bf16.msra.mxu0 %v1304
        %1331 = vmatprep.subr.bf16.mxu0 0
        %1332 = vmatpush1.bf16.msra.mxu0 %v1303
        %1333 = vmatprep.subr.bf16.mxu0 0
        %1334 = vmatpush1.bf16.msra.mxu0 %v1302
        %1335 = vmatprep.subr.bf16.mxu0 0
        %1336 = vmatpush1.bf16.msra.mxu0 %v1301
        %1337 = vmatprep.subr.bf16.mxu0 0
        %1338 = vmatpush2.bf16.msra.mxu0 0
        %1339 = vmatprep.subr.bf16.mxu0 0
        %1340 = vmatpush2.bf16.msra.mxu0 0
        %1341 = vmatprep.subr.bf16.mxu0 0
        %1342 = vmatpush2.bf16.msra.mxu0 0
        %1343 = vmatprep.subr.bf16.mxu0 0
        %1344 = vmatpush2.bf16.msra.mxu0 0
        %1345 = vmatprep.subr.bf16.mxu0 0
        %1346 = vmatpush2.bf16.msra.mxu0 0
        %1347 = vmatprep.subr.bf16.mxu0 0
        %1348 = vmatpush2.bf16.msra.mxu0 0
        %1349 = vmatprep.subr.bf16.mxu0 0
        %1350 = vmatpush2.bf16.msra.mxu0 0
        %1351 = vmatprep.subr.bf16.mxu0 0
        %1352 = vmatpush2.bf16.msra.mxu0 0
        %1353 = vmatprep.mubr.bf16.mxu0 0
        %1354 = vmatmul.mubr.bf16.gmra.mxu0 %v1310
        %v1355 = vpop.f32.mrf.mxu0
        %v1356 = vadd.f32 0.0, %v1355
        %v1357 = vpop.f32.mrf.mxu0
        %v1358 = vpop.f32.mrf.mxu0
        %v1359 = vadd.f32 0.0, %v1358
        %v1360 = vpop.f32.mrf.mxu0
        %1361 = vmatprep.mubr.bf16.mxu0 0
        %1362 = vmatmul.mubr.bf16.gmra.mxu0 %v1313
        %v1363 = vpop.f32.mrf.mxu0
        %v1364 = vadd.f32 0.0, %v1363
        %v1365 = vpop.f32.mrf.mxu0
        %v1366 = vpop.f32.mrf.mxu0
        %v1367 = vadd.f32 0.0, %v1366
        %v1368 = vpop.f32.mrf.mxu0
        %1369 = vmatprep.mubr.bf16.mxu0 0
        %1370 = vmatmul.mubr.bf16.gmra.mxu0 %v1316
        %v1371 = vpop.f32.mrf.mxu0
        %v1372 = vadd.f32 0.0, %v1371
        %v1373 = vpop.f32.mrf.mxu0
        %v1374 = vpop.f32.mrf.mxu0
        %v1375 = vadd.f32 0.0, %v1374
        %v1376 = vpop.f32.mrf.mxu0
        %1377 = vmatprep.mubr.bf16.mxu0 0
        %1378 = vmatmul.mubr.bf16.gmra.mxu0 %v1319
        %v1379 = vpop.f32.mrf.mxu0
        %v1380 = vadd.f32 0.0, %v1379
        %v1381 = vpop.f32.mrf.mxu0
        %v1382 = vpop.f32.mrf.mxu0
        %v1383 = vadd.f32 0.0, %v1382
        %v1384 = vpop.f32.mrf.mxu0
        %1385 = vdwg.mxu0
        %v1386 = vadd.f32 %v1200, %v1356
        %v1387 = vadd.f32 %v1201, %v1359
        %v1388 = vadd.f32 %v1202, %v1364
        %v1389 = vadd.f32 %v1203, %v1367
        %v1390 = vadd.f32 %v1204, %v1372
        %v1391 = vadd.f32 %v1205, %v1375
        %v1392 = vadd.f32 %v1206, %v1380
        %v1393 = vadd.f32 %v1207, %v1383
        %s1394 = scalar_lea.vmem %s229, 16
        %v1395 = vld [vmem:[%s1394] sm:$0xf]
        %v1396 = vld [vmem:[%s1394 + $0x8] sm:$0xf]
        %v1397 = vld [vmem:[%s1394 + $0x10] sm:$0xf]
        %v1398 = vld [vmem:[%s1394 + $0x18] sm:$0xf]
        %v1399 = vld [vmem:[%s1394 + $0x20] sm:$0xf]
        %v1400 = vld [vmem:[%s1394 + $0x28] sm:$0xf]
        %v1401 = vld [vmem:[%s1394 + $0x30] sm:$0xf]
        %v1402 = vld [vmem:[%s1394 + $0x38] sm:$0xf]
        %s1403 = scalar_lea.vmem %s2, 192
        %v1404 = vld [vmem:[%s1403] sm:$0xf]
        %v1405 = vld [vmem:[%s1403 + $0x4] sm:$0xf]
        %v1406 = vld [vmem:[%s1403 + $0x8] sm:$0xf]
        %v1407 = vld [vmem:[%s1403 + $0xc] sm:$0xf]
        %v1408 = vld [vmem:[%s1403 + $0x10] sm:$0xf]
        %v1409 = vld [vmem:[%s1403 + $0x14] sm:$0xf]
        %v1410 = vld [vmem:[%s1403 + $0x18] sm:$0xf]
        %v1411 = vld [vmem:[%s1403 + $0x1c] sm:$0xf]
        %v1420 = vunpack.c.l.b16 %v1395
        %v1421 = vunpack.c.l.b16 %v1396
        %v1422 = vunpack.c.l.b16 %v1397
        %v1423 = vunpack.c.l.b16 %v1398
        %v1424 = vunpack.c.l.b16 %v1399
        %v1425 = vunpack.c.l.b16 %v1400
        %v1426 = vunpack.c.l.b16 %v1401
        %v1427 = vunpack.c.l.b16 %v1402
        %v1428 = vpack.c.b16 %v1421, %v1420
        %v1429 = vpack.c.b16 %v1423, %v1422
        %v1430 = vpack.c.b16 %v1425, %v1424
        %v1431 = vpack.c.b16 %v1427, %v1426
        %v1440 = vunpack.c.l.b16 %v1404
        %v1441 = vunpack.c.l.b16 %v1405
        %v1442 = vunpack.c.l.b16 %v1406
        %v1443 = vunpack.c.l.b16 %v1407
        %v1444 = vunpack.c.l.b16 %v1408
        %v1445 = vunpack.c.l.b16 %v1409
        %v1446 = vunpack.c.l.b16 %v1410
        %v1447 = vunpack.c.l.b16 %v1411
        %v1448 = vpack.c.b16 %v1441, %v1440
        %v1449 = vpack.c.b16 %v1443, %v1442
        %v1450 = vpack.c.b16 %v1445, %v1444
        %v1451 = vpack.c.b16 %v1447, %v1446
        %v1457 = vsel %vm415, %v1428, 0
        %v1460 = vsel %vm415, %v1429, 0
        %v1463 = vsel %vm415, %v1430, 0
        %v1466 = vsel %vm415, %v1431, 0
        %1468 = vmatprep.subr.bf16.mxu0 0
        %1469 = vmatpush1.bf16.msra.mxu0 0
        %1470 = vmatprep.subr.bf16.mxu0 0
        %1471 = vmatpush1.bf16.msra.mxu0 0
        %1472 = vmatprep.subr.bf16.mxu0 0
        %1473 = vmatpush1.bf16.msra.mxu0 0
        %1474 = vmatprep.subr.bf16.mxu0 0
        %1475 = vmatpush1.bf16.msra.mxu0 0
        %1476 = vmatprep.subr.bf16.mxu0 0
        %1477 = vmatpush1.bf16.msra.mxu0 %v1451
        %1478 = vmatprep.subr.bf16.mxu0 0
        %1479 = vmatpush1.bf16.msra.mxu0 %v1450
        %1480 = vmatprep.subr.bf16.mxu0 0
        %1481 = vmatpush1.bf16.msra.mxu0 %v1449
        %1482 = vmatprep.subr.bf16.mxu0 0
        %1483 = vmatpush1.bf16.msra.mxu0 %v1448
        %1484 = vmatprep.subr.bf16.mxu0 0
        %1485 = vmatpush2.bf16.msra.mxu0 0
        %1486 = vmatprep.subr.bf16.mxu0 0
        %1487 = vmatpush2.bf16.msra.mxu0 0
        %1488 = vmatprep.subr.bf16.mxu0 0
        %1489 = vmatpush2.bf16.msra.mxu0 0
        %1490 = vmatprep.subr.bf16.mxu0 0
        %1491 = vmatpush2.bf16.msra.mxu0 0
        %1492 = vmatprep.subr.bf16.mxu0 0
        %1493 = vmatpush2.bf16.msra.mxu0 0
        %1494 = vmatprep.subr.bf16.mxu0 0
        %1495 = vmatpush2.bf16.msra.mxu0 0
        %1496 = vmatprep.subr.bf16.mxu0 0
        %1497 = vmatpush2.bf16.msra.mxu0 0
        %1498 = vmatprep.subr.bf16.mxu0 0
        %1499 = vmatpush2.bf16.msra.mxu0 0
        %1500 = vmatprep.mubr.bf16.mxu0 0
        %1501 = vmatmul.mubr.bf16.gmra.mxu0 %v1457
        %v1502 = vpop.f32.mrf.mxu0
        %v1503 = vadd.f32 0.0, %v1502
        %v1504 = vpop.f32.mrf.mxu0
        %v1505 = vpop.f32.mrf.mxu0
        %v1506 = vadd.f32 0.0, %v1505
        %v1507 = vpop.f32.mrf.mxu0
        %1508 = vmatprep.mubr.bf16.mxu0 0
        %1509 = vmatmul.mubr.bf16.gmra.mxu0 %v1460
        %v1510 = vpop.f32.mrf.mxu0
        %v1511 = vadd.f32 0.0, %v1510
        %v1512 = vpop.f32.mrf.mxu0
        %v1513 = vpop.f32.mrf.mxu0
        %v1514 = vadd.f32 0.0, %v1513
        %v1515 = vpop.f32.mrf.mxu0
        %1516 = vmatprep.mubr.bf16.mxu0 0
        %1517 = vmatmul.mubr.bf16.gmra.mxu0 %v1463
        %v1518 = vpop.f32.mrf.mxu0
        %v1519 = vadd.f32 0.0, %v1518
        %v1520 = vpop.f32.mrf.mxu0
        %v1521 = vpop.f32.mrf.mxu0
        %v1522 = vadd.f32 0.0, %v1521
        %v1523 = vpop.f32.mrf.mxu0
        %1524 = vmatprep.mubr.bf16.mxu0 0
        %1525 = vmatmul.mubr.bf16.gmra.mxu0 %v1466
        %v1526 = vpop.f32.mrf.mxu0
        %v1527 = vadd.f32 0.0, %v1526
        %v1528 = vpop.f32.mrf.mxu0
        %v1529 = vpop.f32.mrf.mxu0
        %v1530 = vadd.f32 0.0, %v1529
        %v1531 = vpop.f32.mrf.mxu0
        %1532 = vdwg.mxu0
        %v1533 = vadd.f32 %v1386, %v1503
        %v1534 = vadd.f32 %v1387, %v1506
        %v1535 = vadd.f32 %v1388, %v1511
        %v1536 = vadd.f32 %v1389, %v1514
        %v1537 = vadd.f32 %v1390, %v1519
        %v1538 = vadd.f32 %v1391, %v1522
        %v1539 = vadd.f32 %v1392, %v1527
        %v1540 = vadd.f32 %v1393, %v1530
        %v1541 = vld [vmem:[%s1394] sm:$0xf]
        %v1542 = vld [vmem:[%s1394 + $0x4] sm:$0x1]
        %v1543 = vld [vmem:[%s1394 + $0x8] sm:$0xf]
        %v1544 = vld [vmem:[%s1394 + $0xc] sm:$0x1]
        %v1545 = vld [vmem:[%s1394 + $0x10] sm:$0xf]
        %v1546 = vld [vmem:[%s1394 + $0x14] sm:$0x1]
        %v1547 = vld [vmem:[%s1394 + $0x18] sm:$0xf]
        %v1548 = vld [vmem:[%s1394 + $0x1c] sm:$0x1]
        %v1549 = vld [vmem:[%s1394 + $0x20] sm:$0xf]
        %v1550 = vld [vmem:[%s1394 + $0x24] sm:$0x1]
        %v1551 = vld [vmem:[%s1394 + $0x28] sm:$0xf]
        %v1552 = vld [vmem:[%s1394 + $0x2c] sm:$0x1]
        %v1553 = vld [vmem:[%s1394 + $0x30] sm:$0xf]
        %v1554 = vld [vmem:[%s1394 + $0x34] sm:$0x1]
        %v1555 = vld [vmem:[%s1394 + $0x38] sm:$0xf]
        %v1556 = vld [vmem:[%s1394 + $0x3c] sm:$0x1]
        %v1558 = vshrl.u32 %v1541, 16
        %v1560 = vrot.slane %v1558, 4
        %v1561 = vshll.u32 %v1541, 16
        %v1563 = vrot.slane %v1561, 5
        %v1564 = vor.u32 %v1560, %v1563
        %v1565 = vrot.slane %v1564, 4
        %v1567 = vshll.u32 %v1542, 16
        %v1569 = vrot.slane %v1567, 5
        %v1570 = vsel %vm257, %v1565, %v1569
        %v1572 = vshrl.u32 %v1543, 16
        %v1574 = vrot.slane %v1572, 4
        %v1575 = vshll.u32 %v1543, 16
        %v1577 = vrot.slane %v1575, 5
        %v1578 = vor.u32 %v1574, %v1577
        %v1579 = vrot.slane %v1578, 4
        %v1581 = vshll.u32 %v1544, 16
        %v1583 = vrot.slane %v1581, 5
        %v1584 = vsel %vm257, %v1579, %v1583
        %v1586 = vshrl.u32 %v1545, 16
        %v1588 = vrot.slane %v1586, 4
        %v1589 = vshll.u32 %v1545, 16
        %v1591 = vrot.slane %v1589, 5
        %v1592 = vor.u32 %v1588, %v1591
        %v1593 = vrot.slane %v1592, 4
        %v1595 = vshll.u32 %v1546, 16
        %v1597 = vrot.slane %v1595, 5
        %v1598 = vsel %vm257, %v1593, %v1597
        %v1600 = vshrl.u32 %v1547, 16
        %v1602 = vrot.slane %v1600, 4
        %v1603 = vshll.u32 %v1547, 16
        %v1605 = vrot.slane %v1603, 5
        %v1606 = vor.u32 %v1602, %v1605
        %v1607 = vrot.slane %v1606, 4
        %v1609 = vshll.u32 %v1548, 16
        %v1611 = vrot.slane %v1609, 5
        %v1612 = vsel %vm257, %v1607, %v1611
        %v1614 = vshrl.u32 %v1549, 16
        %v1616 = vrot.slane %v1614, 4
        %v1617 = vshll.u32 %v1549, 16
        %v1619 = vrot.slane %v1617, 5
        %v1620 = vor.u32 %v1616, %v1619
        %v1621 = vrot.slane %v1620, 4
        %v1623 = vshll.u32 %v1550, 16
        %v1625 = vrot.slane %v1623, 5
        %v1626 = vsel %vm257, %v1621, %v1625
        %v1628 = vshrl.u32 %v1551, 16
        %v1630 = vrot.slane %v1628, 4
        %v1631 = vshll.u32 %v1551, 16
        %v1633 = vrot.slane %v1631, 5
        %v1634 = vor.u32 %v1630, %v1633
        %v1635 = vrot.slane %v1634, 4
        %v1637 = vshll.u32 %v1552, 16
        %v1639 = vrot.slane %v1637, 5
        %v1640 = vsel %vm257, %v1635, %v1639
        %v1642 = vshrl.u32 %v1553, 16
        %v1644 = vrot.slane %v1642, 4
        %v1645 = vshll.u32 %v1553, 16
        %v1647 = vrot.slane %v1645, 5
        %v1648 = vor.u32 %v1644, %v1647
        %v1649 = vrot.slane %v1648, 4
        %v1651 = vshll.u32 %v1554, 16
        %v1653 = vrot.slane %v1651, 5
        %v1654 = vsel %vm257, %v1649, %v1653
        %v1656 = vshrl.u32 %v1555, 16
        %v1658 = vrot.slane %v1656, 4
        %v1659 = vshll.u32 %v1555, 16
        %v1661 = vrot.slane %v1659, 5
        %v1662 = vor.u32 %v1658, %v1661
        %v1663 = vrot.slane %v1662, 4
        %v1665 = vshll.u32 %v1556, 16
        %v1667 = vrot.slane %v1665, 5
        %v1668 = vsel %vm257, %v1663, %v1667
        %s1669 = scalar_lea.vmem %s2, 224
        %v1670 = vld [vmem:[%s1669] sm:$0xf]
        %v1671 = vld [vmem:[%s1669 + $0x4] sm:$0xf]
        %v1672 = vld [vmem:[%s1669 + $0x8] sm:$0xf]
        %v1673 = vld [vmem:[%s1669 + $0xc] sm:$0xf]
        %v1674 = vld [vmem:[%s1669 + $0x10] sm:$0xf]
        %v1675 = vld [vmem:[%s1669 + $0x14] sm:$0xf]
        %v1676 = vld [vmem:[%s1669 + $0x18] sm:$0xf]
        %v1677 = vld [vmem:[%s1669 + $0x1c] sm:$0xf]
        %v1678 = vunpack.c.l.b16 %v1570
        %v1679 = vunpack.c.l.b16 %v1584
        %v1680 = vunpack.c.l.b16 %v1598
        %v1681 = vunpack.c.l.b16 %v1612
        %v1682 = vunpack.c.l.b16 %v1626
        %v1683 = vunpack.c.l.b16 %v1640
        %v1684 = vunpack.c.l.b16 %v1654
        %v1685 = vunpack.c.l.b16 %v1668
        %v1686 = vpack.c.b16 %v1679, %v1678
        %v1687 = vpack.c.b16 %v1681, %v1680
        %v1688 = vpack.c.b16 %v1683, %v1682
        %v1689 = vpack.c.b16 %v1685, %v1684
        %v1698 = vunpack.c.l.b16 %v1670
        %v1699 = vunpack.c.l.b16 %v1671
        %v1700 = vunpack.c.l.b16 %v1672
        %v1701 = vunpack.c.l.b16 %v1673
        %v1702 = vunpack.c.l.b16 %v1674
        %v1703 = vunpack.c.l.b16 %v1675
        %v1704 = vunpack.c.l.b16 %v1676
        %v1705 = vunpack.c.l.b16 %v1677
        %v1706 = vpack.c.b16 %v1699, %v1698
        %v1707 = vpack.c.b16 %v1701, %v1700
        %v1708 = vpack.c.b16 %v1703, %v1702
        %v1709 = vpack.c.b16 %v1705, %v1704
        %v1715 = vsel %vm415, %v1686, 0
        %v1718 = vsel %vm415, %v1687, 0
        %v1721 = vsel %vm415, %v1688, 0
        %v1724 = vsel %vm415, %v1689, 0
        %1726 = vmatprep.subr.bf16.mxu0 0
        %1727 = vmatpush1.bf16.msra.mxu0 0
        %1728 = vmatprep.subr.bf16.mxu0 0
        %1729 = vmatpush1.bf16.msra.mxu0 0
        %1730 = vmatprep.subr.bf16.mxu0 0
        %1731 = vmatpush1.bf16.msra.mxu0 0
        %1732 = vmatprep.subr.bf16.mxu0 0
        %1733 = vmatpush1.bf16.msra.mxu0 0
        %1734 = vmatprep.subr.bf16.mxu0 0
        %1735 = vmatpush1.bf16.msra.mxu0 %v1709
        %1736 = vmatprep.subr.bf16.mxu0 0
        %1737 = vmatpush1.bf16.msra.mxu0 %v1708
        %1738 = vmatprep.subr.bf16.mxu0 0
        %1739 = vmatpush1.bf16.msra.mxu0 %v1707
        %1740 = vmatprep.subr.bf16.mxu0 0
        %1741 = vmatpush1.bf16.msra.mxu0 %v1706
        %1742 = vmatprep.subr.bf16.mxu0 0
        %1743 = vmatpush2.bf16.msra.mxu0 0
        %1744 = vmatprep.subr.bf16.mxu0 0
        %1745 = vmatpush2.bf16.msra.mxu0 0
        %1746 = vmatprep.subr.bf16.mxu0 0
        %1747 = vmatpush2.bf16.msra.mxu0 0
        %1748 = vmatprep.subr.bf16.mxu0 0
        %1749 = vmatpush2.bf16.msra.mxu0 0
        %1750 = vmatprep.subr.bf16.mxu0 0
        %1751 = vmatpush2.bf16.msra.mxu0 0
        %1752 = vmatprep.subr.bf16.mxu0 0
        %1753 = vmatpush2.bf16.msra.mxu0 0
        %1754 = vmatprep.subr.bf16.mxu0 0
        %1755 = vmatpush2.bf16.msra.mxu0 0
        %1756 = vmatprep.subr.bf16.mxu0 0
        %1757 = vmatpush2.bf16.msra.mxu0 0
        %1758 = vmatprep.mubr.bf16.mxu0 0
        %1759 = vmatmul.mubr.bf16.gmra.mxu0 %v1715
        %v1760 = vpop.f32.mrf.mxu0
        %v1761 = vadd.f32 0.0, %v1760
        %v1762 = vpop.f32.mrf.mxu0
        %v1763 = vpop.f32.mrf.mxu0
        %v1764 = vadd.f32 0.0, %v1763
        %v1765 = vpop.f32.mrf.mxu0
        %1766 = vmatprep.mubr.bf16.mxu0 0
        %1767 = vmatmul.mubr.bf16.gmra.mxu0 %v1718
        %v1768 = vpop.f32.mrf.mxu0
        %v1769 = vadd.f32 0.0, %v1768
        %v1770 = vpop.f32.mrf.mxu0
        %v1771 = vpop.f32.mrf.mxu0
        %v1772 = vadd.f32 0.0, %v1771
        %v1773 = vpop.f32.mrf.mxu0
        %1774 = vmatprep.mubr.bf16.mxu0 0
        %1775 = vmatmul.mubr.bf16.gmra.mxu0 %v1721
        %v1776 = vpop.f32.mrf.mxu0
        %v1777 = vadd.f32 0.0, %v1776
        %v1778 = vpop.f32.mrf.mxu0
        %v1779 = vpop.f32.mrf.mxu0
        %v1780 = vadd.f32 0.0, %v1779
        %v1781 = vpop.f32.mrf.mxu0
        %1782 = vmatprep.mubr.bf16.mxu0 0
        %1783 = vmatmul.mubr.bf16.gmra.mxu0 %v1724
        %v1784 = vpop.f32.mrf.mxu0
        %v1785 = vadd.f32 0.0, %v1784
        %v1786 = vpop.f32.mrf.mxu0
        %v1787 = vpop.f32.mrf.mxu0
        %v1788 = vadd.f32 0.0, %v1787
        %v1789 = vpop.f32.mrf.mxu0
        %1790 = vdwg.mxu0
        %v1791 = vadd.f32 %v1533, %v1761
        %v1792 = vadd.f32 %v1534, %v1764
        %v1793 = vadd.f32 %v1535, %v1769
        %v1794 = vadd.f32 %v1536, %v1772
        %v1795 = vadd.f32 %v1537, %v1777
        %v1796 = vadd.f32 %v1538, %v1780
        %v1797 = vadd.f32 %v1539, %v1785
        %v1798 = vadd.f32 %v1540, %v1788
        %v1799 = vld [vmem:[%s1394] sm:$0xe]
        %v1800 = vld [vmem:[%s1394 + $0x8] sm:$0xe]
        %v1801 = vld [vmem:[%s1394 + $0x10] sm:$0xe]
        %v1802 = vld [vmem:[%s1394 + $0x18] sm:$0xe]
        %v1803 = vld [vmem:[%s1394 + $0x20] sm:$0xe]
        %v1804 = vld [vmem:[%s1394 + $0x28] sm:$0xe]
        %v1805 = vld [vmem:[%s1394 + $0x30] sm:$0xe]
        %v1806 = vld [vmem:[%s1394 + $0x38] sm:$0xe]
        %v1823 = vrot.slane %v1799, 5
        %v1824 = vrot.slane %v1823, 4
        %v1825 = vrot.slane %v1542, 5
        %v1826 = vsel %vm640, %v1824, %v1825
        %v1827 = vrot.slane %v1800, 5
        %v1828 = vrot.slane %v1827, 4
        %v1829 = vrot.slane %v1544, 5
        %v1830 = vsel %vm640, %v1828, %v1829
        %v1831 = vrot.slane %v1801, 5
        %v1832 = vrot.slane %v1831, 4
        %v1833 = vrot.slane %v1546, 5
        %v1834 = vsel %vm640, %v1832, %v1833
        %v1835 = vrot.slane %v1802, 5
        %v1836 = vrot.slane %v1835, 4
        %v1837 = vrot.slane %v1548, 5
        %v1838 = vsel %vm640, %v1836, %v1837
        %v1839 = vrot.slane %v1803, 5
        %v1840 = vrot.slane %v1839, 4
        %v1841 = vrot.slane %v1550, 5
        %v1842 = vsel %vm640, %v1840, %v1841
        %v1843 = vrot.slane %v1804, 5
        %v1844 = vrot.slane %v1843, 4
        %v1845 = vrot.slane %v1552, 5
        %v1846 = vsel %vm640, %v1844, %v1845
        %v1847 = vrot.slane %v1805, 5
        %v1848 = vrot.slane %v1847, 4
        %v1849 = vrot.slane %v1554, 5
        %v1850 = vsel %vm640, %v1848, %v1849
        %v1851 = vrot.slane %v1806, 5
        %v1852 = vrot.slane %v1851, 4
        %v1853 = vrot.slane %v1556, 5
        %v1854 = vsel %vm640, %v1852, %v1853
        %s1855 = scalar_lea.vmem %s2, 256
        %v1856 = vld [vmem:[%s1855] sm:$0xf]
        %v1857 = vld [vmem:[%s1855 + $0x4] sm:$0xf]
        %v1858 = vld [vmem:[%s1855 + $0x8] sm:$0xf]
        %v1859 = vld [vmem:[%s1855 + $0xc] sm:$0xf]
        %v1860 = vld [vmem:[%s1855 + $0x10] sm:$0xf]
        %v1861 = vld [vmem:[%s1855 + $0x14] sm:$0xf]
        %v1862 = vld [vmem:[%s1855 + $0x18] sm:$0xf]
        %v1863 = vld [vmem:[%s1855 + $0x1c] sm:$0xf]
        %v1864 = vunpack.c.l.b16 %v1826
        %v1865 = vunpack.c.l.b16 %v1830
        %v1866 = vunpack.c.l.b16 %v1834
        %v1867 = vunpack.c.l.b16 %v1838
        %v1868 = vunpack.c.l.b16 %v1842
        %v1869 = vunpack.c.l.b16 %v1846
        %v1870 = vunpack.c.l.b16 %v1850
        %v1871 = vunpack.c.l.b16 %v1854
        %v1872 = vpack.c.b16 %v1865, %v1864
        %v1873 = vpack.c.b16 %v1867, %v1866
        %v1874 = vpack.c.b16 %v1869, %v1868
        %v1875 = vpack.c.b16 %v1871, %v1870
        %v1884 = vunpack.c.l.b16 %v1856
        %v1885 = vunpack.c.l.b16 %v1857
        %v1886 = vunpack.c.l.b16 %v1858
        %v1887 = vunpack.c.l.b16 %v1859
        %v1888 = vunpack.c.l.b16 %v1860
        %v1889 = vunpack.c.l.b16 %v1861
        %v1890 = vunpack.c.l.b16 %v1862
        %v1891 = vunpack.c.l.b16 %v1863
        %v1892 = vpack.c.b16 %v1885, %v1884
        %v1893 = vpack.c.b16 %v1887, %v1886
        %v1894 = vpack.c.b16 %v1889, %v1888
        %v1895 = vpack.c.b16 %v1891, %v1890
        %v1901 = vsel %vm415, %v1872, 0
        %v1904 = vsel %vm415, %v1873, 0
        %v1907 = vsel %vm415, %v1874, 0
        %v1910 = vsel %vm415, %v1875, 0
        %1912 = vmatprep.subr.bf16.mxu0 0
        %1913 = vmatpush1.bf16.msra.mxu0 0
        %1914 = vmatprep.subr.bf16.mxu0 0
        %1915 = vmatpush1.bf16.msra.mxu0 0
        %1916 = vmatprep.subr.bf16.mxu0 0
        %1917 = vmatpush1.bf16.msra.mxu0 0
        %1918 = vmatprep.subr.bf16.mxu0 0
        %1919 = vmatpush1.bf16.msra.mxu0 0
        %1920 = vmatprep.subr.bf16.mxu0 0
        %1921 = vmatpush1.bf16.msra.mxu0 %v1895
        %1922 = vmatprep.subr.bf16.mxu0 0
        %1923 = vmatpush1.bf16.msra.mxu0 %v1894
        %1924 = vmatprep.subr.bf16.mxu0 0
        %1925 = vmatpush1.bf16.msra.mxu0 %v1893
        %1926 = vmatprep.subr.bf16.mxu0 0
        %1927 = vmatpush1.bf16.msra.mxu0 %v1892
        %1928 = vmatprep.subr.bf16.mxu0 0
        %1929 = vmatpush2.bf16.msra.mxu0 0
        %1930 = vmatprep.subr.bf16.mxu0 0
        %1931 = vmatpush2.bf16.msra.mxu0 0
        %1932 = vmatprep.subr.bf16.mxu0 0
        %1933 = vmatpush2.bf16.msra.mxu0 0
        %1934 = vmatprep.subr.bf16.mxu0 0
        %1935 = vmatpush2.bf16.msra.mxu0 0
        %1936 = vmatprep.subr.bf16.mxu0 0
        %1937 = vmatpush2.bf16.msra.mxu0 0
        %1938 = vmatprep.subr.bf16.mxu0 0
        %1939 = vmatpush2.bf16.msra.mxu0 0
        %1940 = vmatprep.subr.bf16.mxu0 0
        %1941 = vmatpush2.bf16.msra.mxu0 0
        %1942 = vmatprep.subr.bf16.mxu0 0
        %1943 = vmatpush2.bf16.msra.mxu0 0
        %1944 = vmatprep.mubr.bf16.mxu0 0
        %1945 = vmatmul.mubr.bf16.gmra.mxu0 %v1901
        %v1946 = vpop.f32.mrf.mxu0
        %v1947 = vadd.f32 0.0, %v1946
        %v1948 = vpop.f32.mrf.mxu0
        %v1949 = vpop.f32.mrf.mxu0
        %v1950 = vadd.f32 0.0, %v1949
        %v1951 = vpop.f32.mrf.mxu0
        %1952 = vmatprep.mubr.bf16.mxu0 0
        %1953 = vmatmul.mubr.bf16.gmra.mxu0 %v1904
        %v1954 = vpop.f32.mrf.mxu0
        %v1955 = vadd.f32 0.0, %v1954
        %v1956 = vpop.f32.mrf.mxu0
        %v1957 = vpop.f32.mrf.mxu0
        %v1958 = vadd.f32 0.0, %v1957
        %v1959 = vpop.f32.mrf.mxu0
        %1960 = vmatprep.mubr.bf16.mxu0 0
        %1961 = vmatmul.mubr.bf16.gmra.mxu0 %v1907
        %v1962 = vpop.f32.mrf.mxu0
        %v1963 = vadd.f32 0.0, %v1962
        %v1964 = vpop.f32.mrf.mxu0
        %v1965 = vpop.f32.mrf.mxu0
        %v1966 = vadd.f32 0.0, %v1965
        %v1967 = vpop.f32.mrf.mxu0
        %1968 = vmatprep.mubr.bf16.mxu0 0
        %1969 = vmatmul.mubr.bf16.gmra.mxu0 %v1910
        %v1970 = vpop.f32.mrf.mxu0
        %v1971 = vadd.f32 0.0, %v1970
        %v1972 = vpop.f32.mrf.mxu0
        %v1973 = vpop.f32.mrf.mxu0
        %v1974 = vadd.f32 0.0, %v1973
        %v1975 = vpop.f32.mrf.mxu0
        %1976 = vdwg.mxu0
        %v1977 = vadd.f32 %v1791, %v1947
        %v1978 = vadd.f32 %v1792, %v1950
        %v1979 = vadd.f32 %v1793, %v1955
        %v1980 = vadd.f32 %v1794, %v1958
        %v1981 = vadd.f32 %v1795, %v1963
        %v1982 = vadd.f32 %v1796, %v1966
        %v1983 = vadd.f32 %v1797, %v1971
        %v1984 = vadd.f32 %v1798, %v1974
        %v1985 = vld [vmem:[%s4] sm:$0x1]
        %v1987 = vlaneseq
        %v1988 = vshrl.u32 %v1987, 7
        %v1989 = vsub.s32 0, %v1988
        %v1990 = vrot.slane %v1985, %v1989
        %v1992 = vadd.f32 %v1977, %v1990
        %v1993 = vadd.f32 %v1978, %v1990
        %v1994 = vadd.f32 %v1979, %v1990
        %v1995 = vadd.f32 %v1980, %v1990
        %v1996 = vadd.f32 %v1981, %v1990
        %v1997 = vadd.f32 %v1982, %v1990
        %v1998 = vadd.f32 %v1983, %v1990
        %v1999 = vadd.f32 %v1984, %v1990
        %s2000 = sld [smem:[#allocation4]]
        %v2001 = vstv %s2000
        %v2002 = vmax.f32 %v1992, %v2001
        %v2003 = vmax.f32 %v1993, %v2001
        %v2004 = vmax.f32 %v1994, %v2001
        %v2005 = vmax.f32 %v1995, %v2001
        %v2006 = vmax.f32 %v1996, %v2001
        %v2007 = vmax.f32 %v1997, %v2001
        %v2008 = vmax.f32 %v1998, %v2001
        %v2009 = vmax.f32 %v1999, %v2001
        %vm2010 = vcmask 519168
        %2011 = vst.msk [vmem:[#allocation2] sm:$0xf] %vm2010, 0
        %vm2012 = vcmask 516096
        %2013 = vst.msk [vmem:[#allocation2 + $0x4] sm:$0x1] %vm2012, 0
        %2014 = vst.msk [vmem:[#allocation2 + $0x8] sm:$0xf] %vm2010, 0
        %2015 = vst.msk [vmem:[#allocation2 + $0xc] sm:$0x1] %vm2012, 0
        %2016 = vst.msk [vmem:[#allocation2 + $0x10] sm:$0xf] %vm2010, 0
        %2017 = vst.msk [vmem:[#allocation2 + $0x14] sm:$0x1] %vm2012, 0
        %2018 = vst.msk [vmem:[#allocation2 + $0x18] sm:$0xf] %vm2010, 0
        %2019 = vst.msk [vmem:[#allocation2 + $0x1c] sm:$0x1] %vm2012, 0
        %2020 = vst.msk [vmem:[#allocation2 + $0x20] sm:$0xf] %vm2010, 0
        %2021 = vst.msk [vmem:[#allocation2 + $0x24] sm:$0x1] %vm2012, 0
        %2022 = vst.msk [vmem:[#allocation2 + $0x28] sm:$0xf] %vm2010, 0
        %2023 = vst.msk [vmem:[#allocation2 + $0x2c] sm:$0x1] %vm2012, 0
        %2024 = vst.msk [vmem:[#allocation2 + $0x30] sm:$0xf] %vm2010, 0
        %2025 = vst.msk [vmem:[#allocation2 + $0x34] sm:$0x1] %vm2012, 0
        %2026 = vst.msk [vmem:[#allocation2 + $0x38] sm:$0xf] %vm2010, 0
        %2027 = vst.msk [vmem:[#allocation2 + $0x3c] sm:$0x1] %vm2012, 0
        %2028 = vst.msk [vmem:[#allocation2 + $0x40] sm:$0xf] %vm2010, 0
        %2029 = vst.msk [vmem:[#allocation2 + $0x44] sm:$0x1] %vm2012, 0
        %2030 = vst.msk [vmem:[#allocation2 + $0x48] sm:$0xf] %vm2010, 0
        %2031 = vst.msk [vmem:[#allocation2 + $0x4c] sm:$0x1] %vm2012, 0
        %v2032 = vpack.c.bf16 %v2003, %v2002
        %v2033 = vpack.c.bf16 %v2005, %v2004
        %v2034 = vpack.c.bf16 %v2007, %v2006
        %v2035 = vpack.c.bf16 %v2009, %v2008
        %v2040 = vunpack.c.l.b16 %v2032
        %v2041 = vunpack.c.h.b16 %v2032
        %v2042 = vunpack.c.l.b16 %v2033
        %v2043 = vunpack.c.h.b16 %v2033
        %v2044 = vunpack.c.l.b16 %v2034
        %v2045 = vunpack.c.h.b16 %v2034
        %v2046 = vunpack.c.l.b16 %v2035
        %v2047 = vunpack.c.h.b16 %v2035
        %v2048 = vpack.c.b16 %v2040, %v2040
        %v2049 = vpack.c.b16 %v2041, %v2041
        %v2050 = vpack.c.b16 %v2042, %v2042
        %v2051 = vpack.c.b16 %v2043, %v2043
        %v2052 = vpack.c.b16 %v2044, %v2044
        %v2053 = vpack.c.b16 %v2045, %v2045
        %v2054 = vpack.c.b16 %v2046, %v2046
        %v2055 = vpack.c.b16 %v2047, %v2047
        %v2057 = vshrl.u32 %v2048, 16
        %v2059 = vrot.slane %v2057, 7
        %v2060 = vshll.u32 %v2048, 16
        %v2062 = vor.u32 %v2059, %v2060
        %v2063 = vrot.slane %v2059, 4
        %v2065 = vshrl.u32 %v2049, 16
        %v2067 = vrot.slane %v2065, 7
        %v2068 = vshll.u32 %v2049, 16
        %v2070 = vor.u32 %v2067, %v2068
        %v2071 = vrot.slane %v2067, 4
        %v2073 = vshrl.u32 %v2050, 16
        %v2075 = vrot.slane %v2073, 7
        %v2076 = vshll.u32 %v2050, 16
        %v2078 = vor.u32 %v2075, %v2076
        %v2079 = vrot.slane %v2075, 4
        %v2081 = vshrl.u32 %v2051, 16
        %v2083 = vrot.slane %v2081, 7
        %v2084 = vshll.u32 %v2051, 16
        %v2086 = vor.u32 %v2083, %v2084
        %v2087 = vrot.slane %v2083, 4
        %v2089 = vshrl.u32 %v2052, 16
        %v2091 = vrot.slane %v2089, 7
        %v2092 = vshll.u32 %v2052, 16
        %v2094 = vor.u32 %v2091, %v2092
        %v2095 = vrot.slane %v2091, 4
        %v2097 = vshrl.u32 %v2053, 16
        %v2099 = vrot.slane %v2097, 7
        %v2100 = vshll.u32 %v2053, 16
        %v2102 = vor.u32 %v2099, %v2100
        %v2103 = vrot.slane %v2099, 4
        %v2105 = vshrl.u32 %v2054, 16
        %v2107 = vrot.slane %v2105, 7
        %v2108 = vshll.u32 %v2054, 16
        %v2110 = vor.u32 %v2107, %v2108
        %v2111 = vrot.slane %v2107, 4
        %v2113 = vshrl.u32 %v2055, 16
        %v2115 = vrot.slane %v2113, 7
        %v2116 = vshll.u32 %v2055, 16
        %v2118 = vor.u32 %v2115, %v2116
        %v2119 = vrot.slane %v2115, 4
        %s2136 = scalar_lea.vmem [#allocation2], 8
        %vm2137 = vcmask 519168
        %vm2138 = vsmask.f32 7938
        %vm2139 = vmand %vm2137, %vm2138
        %v2140 = vld [vmem:[%s2136] sm:$0xf]
        %v2141 = vsel %vm2139, %v2062, %v2140
        %2142 = vst [vmem:[%s2136] sm:$0xf] %v2141
        %vm2143 = vcmask 516096
        %vm2144 = vsmask.f32 256
        %vm2145 = vmand %vm2143, %vm2144
        %v2146 = vld [vmem:[%s2136 + $0x4] sm:$0x1]
        %v2147 = vsel %vm2145, %v2063, %v2146
        %2148 = vst [vmem:[%s2136 + $0x4] sm:$0x1] %v2147
        %v2149 = vld [vmem:[%s2136 + $0x8] sm:$0xf]
        %v2150 = vsel %vm2139, %v2070, %v2149
        %2151 = vst [vmem:[%s2136 + $0x8] sm:$0xf] %v2150
        %v2152 = vld [vmem:[%s2136 + $0xc] sm:$0x1]
        %v2153 = vsel %vm2145, %v2071, %v2152
        %2154 = vst [vmem:[%s2136 + $0xc] sm:$0x1] %v2153
        %v2155 = vld [vmem:[%s2136 + $0x10] sm:$0xf]
        %v2156 = vsel %vm2139, %v2078, %v2155
        %2157 = vst [vmem:[%s2136 + $0x10] sm:$0xf] %v2156
        %v2158 = vld [vmem:[%s2136 + $0x14] sm:$0x1]
        %v2159 = vsel %vm2145, %v2079, %v2158
        %2160 = vst [vmem:[%s2136 + $0x14] sm:$0x1] %v2159
        %v2161 = vld [vmem:[%s2136 + $0x18] sm:$0xf]
        %v2162 = vsel %vm2139, %v2086, %v2161
        %2163 = vst [vmem:[%s2136 + $0x18] sm:$0xf] %v2162
        %v2164 = vld [vmem:[%s2136 + $0x1c] sm:$0x1]
        %v2165 = vsel %vm2145, %v2087, %v2164
        %2166 = vst [vmem:[%s2136 + $0x1c] sm:$0x1] %v2165
        %v2167 = vld [vmem:[%s2136 + $0x20] sm:$0xf]
        %v2168 = vsel %vm2139, %v2094, %v2167
        %2169 = vst [vmem:[%s2136 + $0x20] sm:$0xf] %v2168
        %v2170 = vld [vmem:[%s2136 + $0x24] sm:$0x1]
        %v2171 = vsel %vm2145, %v2095, %v2170
        %2172 = vst [vmem:[%s2136 + $0x24] sm:$0x1] %v2171
        %v2173 = vld [vmem:[%s2136 + $0x28] sm:$0xf]
        %v2174 = vsel %vm2139, %v2102, %v2173
        %2175 = vst [vmem:[%s2136 + $0x28] sm:$0xf] %v2174
        %v2176 = vld [vmem:[%s2136 + $0x2c] sm:$0x1]
        %v2177 = vsel %vm2145, %v2103, %v2176
        %2178 = vst [vmem:[%s2136 + $0x2c] sm:$0x1] %v2177
        %v2179 = vld [vmem:[%s2136 + $0x30] sm:$0xf]
        %v2180 = vsel %vm2139, %v2110, %v2179
        %2181 = vst [vmem:[%s2136 + $0x30] sm:$0xf] %v2180
        %v2182 = vld [vmem:[%s2136 + $0x34] sm:$0x1]
        %v2183 = vsel %vm2145, %v2111, %v2182
        %2184 = vst [vmem:[%s2136 + $0x34] sm:$0x1] %v2183
        %v2185 = vld [vmem:[%s2136 + $0x38] sm:$0xf]
        %v2186 = vsel %vm2139, %v2118, %v2185
        %2187 = vst [vmem:[%s2136 + $0x38] sm:$0xf] %v2186
        %v2188 = vld [vmem:[%s2136 + $0x3c] sm:$0x1]
        %v2189 = vsel %vm2145, %v2119, %v2188
        %2190 = vst [vmem:[%s2136 + $0x3c] sm:$0x1] %v2189
        %v2191 = vld [vmem:[#allocation2] sm:$0xf]
        %v2192 = vld [vmem:[#allocation2 + $0x8] sm:$0xf]
        %v2193 = vld [vmem:[#allocation2 + $0x10] sm:$0xf]
        %v2194 = vld [vmem:[#allocation2 + $0x18] sm:$0xf]
        %v2195 = vld [vmem:[#allocation2 + $0x20] sm:$0xf]
        %v2196 = vld [vmem:[#allocation2 + $0x28] sm:$0xf]
        %v2197 = vld [vmem:[#allocation2 + $0x30] sm:$0xf]
        %v2198 = vld [vmem:[#allocation2 + $0x38] sm:$0xf]
        %v2199 = vld [vmem:[%s3] sm:$0xf]
        %v2200 = vld [vmem:[%s3 + $0x4] sm:$0xf]
        %v2201 = vld [vmem:[%s3 + $0x8] sm:$0xf]
        %v2202 = vld [vmem:[%s3 + $0xc] sm:$0xf]
        %v2203 = vld [vmem:[%s3 + $0x10] sm:$0xf]
        %v2204 = vld [vmem:[%s3 + $0x14] sm:$0xf]
        %v2205 = vld [vmem:[%s3 + $0x18] sm:$0xf]
        %v2206 = vld [vmem:[%s3 + $0x1c] sm:$0xf]
        %v2207 = vld [vmem:[#allocation2 + $0x4] sm:$0x1]
        %v2208 = vld [vmem:[#allocation2 + $0xc] sm:$0x1]
        %v2209 = vld [vmem:[#allocation2 + $0x14] sm:$0x1]
        %v2210 = vld [vmem:[#allocation2 + $0x1c] sm:$0x1]
        %v2211 = vld [vmem:[#allocation2 + $0x24] sm:$0x1]
        %v2212 = vld [vmem:[#allocation2 + $0x2c] sm:$0x1]
        %v2213 = vld [vmem:[#allocation2 + $0x34] sm:$0x1]
        %v2214 = vld [vmem:[#allocation2 + $0x3c] sm:$0x1]
        %v2216 = vshrl.u32 %v2191, 16
        %v2218 = vrot.slane %v2216, 4
        %v2219 = vshll.u32 %v2191, 16
        %v2221 = vrot.slane %v2219, 5
        %v2222 = vor.u32 %v2218, %v2221
        %v2223 = vrot.slane %v2222, 4
        %v2225 = vshll.u32 %v2207, 16
        %v2227 = vrot.slane %v2225, 5
        %v2228 = vsel %vm257, %v2223, %v2227
        %v2230 = vshrl.u32 %v2192, 16
        %v2232 = vrot.slane %v2230, 4
        %v2233 = vshll.u32 %v2192, 16
        %v2235 = vrot.slane %v2233, 5
        %v2236 = vor.u32 %v2232, %v2235
        %v2237 = vrot.slane %v2236, 4
        %v2239 = vshll.u32 %v2208, 16
        %v2241 = vrot.slane %v2239, 5
        %v2242 = vsel %vm257, %v2237, %v2241
        %v2244 = vshrl.u32 %v2193, 16
        %v2246 = vrot.slane %v2244, 4
        %v2247 = vshll.u32 %v2193, 16
        %v2249 = vrot.slane %v2247, 5
        %v2250 = vor.u32 %v2246, %v2249
        %v2251 = vrot.slane %v2250, 4
        %v2253 = vshll.u32 %v2209, 16
        %v2255 = vrot.slane %v2253, 5
        %v2256 = vsel %vm257, %v2251, %v2255
        %v2258 = vshrl.u32 %v2194, 16
        %v2260 = vrot.slane %v2258, 4
        %v2261 = vshll.u32 %v2194, 16
        %v2263 = vrot.slane %v2261, 5
        %v2264 = vor.u32 %v2260, %v2263
        %v2265 = vrot.slane %v2264, 4
        %v2267 = vshll.u32 %v2210, 16
        %v2269 = vrot.slane %v2267, 5
        %v2270 = vsel %vm257, %v2265, %v2269
        %v2272 = vshrl.u32 %v2195, 16
        %v2274 = vrot.slane %v2272, 4
        %v2275 = vshll.u32 %v2195, 16
        %v2277 = vrot.slane %v2275, 5
        %v2278 = vor.u32 %v2274, %v2277
        %v2279 = vrot.slane %v2278, 4
        %v2281 = vshll.u32 %v2211, 16
        %v2283 = vrot.slane %v2281, 5
        %v2284 = vsel %vm257, %v2279, %v2283
        %v2286 = vshrl.u32 %v2196, 16
        %v2288 = vrot.slane %v2286, 4
        %v2289 = vshll.u32 %v2196, 16
        %v2291 = vrot.slane %v2289, 5
        %v2292 = vor.u32 %v2288, %v2291
        %v2293 = vrot.slane %v2292, 4
        %v2295 = vshll.u32 %v2212, 16
        %v2297 = vrot.slane %v2295, 5
        %v2298 = vsel %vm257, %v2293, %v2297
        %v2300 = vshrl.u32 %v2197, 16
        %v2302 = vrot.slane %v2300, 4
        %v2303 = vshll.u32 %v2197, 16
        %v2305 = vrot.slane %v2303, 5
        %v2306 = vor.u32 %v2302, %v2305
        %v2307 = vrot.slane %v2306, 4
        %v2309 = vshll.u32 %v2213, 16
        %v2311 = vrot.slane %v2309, 5
        %v2312 = vsel %vm257, %v2307, %v2311
        %v2314 = vshrl.u32 %v2198, 16
        %v2316 = vrot.slane %v2314, 4
        %v2317 = vshll.u32 %v2198, 16
        %v2319 = vrot.slane %v2317, 5
        %v2320 = vor.u32 %v2316, %v2319
        %v2321 = vrot.slane %v2320, 4
        %v2323 = vshll.u32 %v2214, 16
        %v2325 = vrot.slane %v2323, 5
        %v2326 = vsel %vm257, %v2321, %v2325
        %s2327 = scalar_lea.vmem %s3, 32
        %v2328 = vld [vmem:[%s2327] sm:$0xf]
        %v2329 = vld [vmem:[%s2327 + $0x4] sm:$0xf]
        %v2330 = vld [vmem:[%s2327 + $0x8] sm:$0xf]
        %v2331 = vld [vmem:[%s2327 + $0xc] sm:$0xf]
        %v2332 = vld [vmem:[%s2327 + $0x10] sm:$0xf]
        %v2333 = vld [vmem:[%s2327 + $0x14] sm:$0xf]
        %v2334 = vld [vmem:[%s2327 + $0x18] sm:$0xf]
        %v2335 = vld [vmem:[%s2327 + $0x1c] sm:$0xf]
        %v2336 = vunpack.c.l.b16 %v2228
        %v2337 = vunpack.c.l.b16 %v2242
        %v2338 = vunpack.c.l.b16 %v2256
        %v2339 = vunpack.c.l.b16 %v2270
        %v2340 = vunpack.c.l.b16 %v2284
        %v2341 = vunpack.c.l.b16 %v2298
        %v2342 = vunpack.c.l.b16 %v2312
        %v2343 = vunpack.c.l.b16 %v2326
        %v2344 = vpack.c.b16 %v2337, %v2336
        %v2345 = vpack.c.b16 %v2339, %v2338
        %v2346 = vpack.c.b16 %v2341, %v2340
        %v2347 = vpack.c.b16 %v2343, %v2342
        %v2356 = vunpack.c.l.b16 %v2328
        %v2357 = vunpack.c.l.b16 %v2329
        %v2358 = vunpack.c.l.b16 %v2330
        %v2359 = vunpack.c.l.b16 %v2331
        %v2360 = vunpack.c.l.b16 %v2332
        %v2361 = vunpack.c.l.b16 %v2333
        %v2362 = vunpack.c.l.b16 %v2334
        %v2363 = vunpack.c.l.b16 %v2335
        %v2364 = vpack.c.b16 %v2357, %v2356
        %v2365 = vpack.c.b16 %v2359, %v2358
        %v2366 = vpack.c.b16 %v2361, %v2360
        %v2367 = vpack.c.b16 %v2363, %v2362
        %v2373 = vsel %vm415, %v2344, 0
        %v2376 = vsel %vm415, %v2345, 0
        %v2379 = vsel %vm415, %v2346, 0
        %v2382 = vsel %vm415, %v2347, 0
        %2384 = vmatprep.subr.bf16.mxu0 0
        %2385 = vmatpush1.bf16.msra.mxu0 0
        %2386 = vmatprep.subr.bf16.mxu0 0
        %2387 = vmatpush1.bf16.msra.mxu0 0
        %2388 = vmatprep.subr.bf16.mxu0 0
        %2389 = vmatpush1.bf16.msra.mxu0 0
        %2390 = vmatprep.subr.bf16.mxu0 0
        %2391 = vmatpush1.bf16.msra.mxu0 0
        %2392 = vmatprep.subr.bf16.mxu0 0
        %2393 = vmatpush1.bf16.msra.mxu0 %v2367
        %2394 = vmatprep.subr.bf16.mxu0 0
        %2395 = vmatpush1.bf16.msra.mxu0 %v2366
        %2396 = vmatprep.subr.bf16.mxu0 0
        %2397 = vmatpush1.bf16.msra.mxu0 %v2365
        %2398 = vmatprep.subr.bf16.mxu0 0
        %2399 = vmatpush1.bf16.msra.mxu0 %v2364
        %2400 = vmatprep.subr.bf16.mxu0 0
        %2401 = vmatpush2.bf16.msra.mxu0 0
        %2402 = vmatprep.subr.bf16.mxu0 0
        %2403 = vmatpush2.bf16.msra.mxu0 0
        %2404 = vmatprep.subr.bf16.mxu0 0
        %2405 = vmatpush2.bf16.msra.mxu0 0
        %2406 = vmatprep.subr.bf16.mxu0 0
        %2407 = vmatpush2.bf16.msra.mxu0 0
        %2408 = vmatprep.subr.bf16.mxu0 0
        %2409 = vmatpush2.bf16.msra.mxu0 0
        %2410 = vmatprep.subr.bf16.mxu0 0
        %2411 = vmatpush2.bf16.msra.mxu0 0
        %2412 = vmatprep.subr.bf16.mxu0 0
        %2413 = vmatpush2.bf16.msra.mxu0 0
        %2414 = vmatprep.subr.bf16.mxu0 0
        %2415 = vmatpush2.bf16.msra.mxu0 0
        %2416 = vmatprep.mubr.bf16.mxu0 0
        %2417 = vmatmul.mubr.bf16.gmra.mxu0 %v2373
        %v2418 = vpop.f32.mrf.mxu0
        %v2419 = vadd.f32 0.0, %v2418
        %v2420 = vpop.f32.mrf.mxu0
        %v2421 = vpop.f32.mrf.mxu0
        %v2422 = vadd.f32 0.0, %v2421
        %v2423 = vpop.f32.mrf.mxu0
        %2424 = vmatprep.mubr.bf16.mxu0 0
        %2425 = vmatmul.mubr.bf16.gmra.mxu0 %v2376
        %v2426 = vpop.f32.mrf.mxu0
        %v2427 = vadd.f32 0.0, %v2426
        %v2428 = vpop.f32.mrf.mxu0
        %v2429 = vpop.f32.mrf.mxu0
        %v2430 = vadd.f32 0.0, %v2429
        %v2431 = vpop.f32.mrf.mxu0
        %2432 = vmatprep.mubr.bf16.mxu0 0
        %2433 = vmatmul.mubr.bf16.gmra.mxu0 %v2379
        %v2434 = vpop.f32.mrf.mxu0
        %v2435 = vadd.f32 0.0, %v2434
        %v2436 = vpop.f32.mrf.mxu0
        %v2437 = vpop.f32.mrf.mxu0
        %v2438 = vadd.f32 0.0, %v2437
        %v2439 = vpop.f32.mrf.mxu0
        %2440 = vmatprep.mubr.bf16.mxu0 0
        %2441 = vmatmul.mubr.bf16.gmra.mxu0 %v2382
        %v2442 = vpop.f32.mrf.mxu0
        %v2443 = vadd.f32 0.0, %v2442
        %v2444 = vpop.f32.mrf.mxu0
        %v2445 = vpop.f32.mrf.mxu0
        %v2446 = vadd.f32 0.0, %v2445
        %v2447 = vpop.f32.mrf.mxu0
        %2448 = vdwg.mxu0
        %v2457 = vunpack.c.l.b16 %v2191
        %v2458 = vunpack.c.l.b16 %v2192
        %v2459 = vunpack.c.l.b16 %v2193
        %v2460 = vunpack.c.l.b16 %v2194
        %v2461 = vunpack.c.l.b16 %v2195
        %v2462 = vunpack.c.l.b16 %v2196
        %v2463 = vunpack.c.l.b16 %v2197
        %v2464 = vunpack.c.l.b16 %v2198
        %v2465 = vpack.c.b16 %v2458, %v2457
        %v2466 = vpack.c.b16 %v2460, %v2459
        %v2467 = vpack.c.b16 %v2462, %v2461
        %v2468 = vpack.c.b16 %v2464, %v2463
        %v2477 = vunpack.c.l.b16 %v2199
        %v2478 = vunpack.c.l.b16 %v2200
        %v2479 = vunpack.c.l.b16 %v2201
        %v2480 = vunpack.c.l.b16 %v2202
        %v2481 = vunpack.c.l.b16 %v2203
        %v2482 = vunpack.c.l.b16 %v2204
        %v2483 = vunpack.c.l.b16 %v2205
        %v2484 = vunpack.c.l.b16 %v2206
        %v2485 = vpack.c.b16 %v2478, %v2477
        %v2486 = vpack.c.b16 %v2480, %v2479
        %v2487 = vpack.c.b16 %v2482, %v2481
        %v2488 = vpack.c.b16 %v2484, %v2483
        %v2494 = vsel %vm415, %v2465, 0
        %v2497 = vsel %vm415, %v2466, 0
        %v2500 = vsel %vm415, %v2467, 0
        %v2503 = vsel %vm415, %v2468, 0
        %2505 = vmatprep.subr.bf16.mxu0 0
        %2506 = vmatpush1.bf16.msra.mxu0 0
        %2507 = vmatprep.subr.bf16.mxu0 0
        %2508 = vmatpush1.bf16.msra.mxu0 0
        %2509 = vmatprep.subr.bf16.mxu0 0
        %2510 = vmatpush1.bf16.msra.mxu0 0
        %2511 = vmatprep.subr.bf16.mxu0 0
        %2512 = vmatpush1.bf16.msra.mxu0 0
        %2513 = vmatprep.subr.bf16.mxu0 0
        %2514 = vmatpush1.bf16.msra.mxu0 %v2488
        %2515 = vmatprep.subr.bf16.mxu0 0
        %2516 = vmatpush1.bf16.msra.mxu0 %v2487
        %2517 = vmatprep.subr.bf16.mxu0 0
        %2518 = vmatpush1.bf16.msra.mxu0 %v2486
        %2519 = vmatprep.subr.bf16.mxu0 0
        %2520 = vmatpush1.bf16.msra.mxu0 %v2485
        %2521 = vmatprep.subr.bf16.mxu0 0
        %2522 = vmatpush2.bf16.msra.mxu0 0
        %2523 = vmatprep.subr.bf16.mxu0 0
        %2524 = vmatpush2.bf16.msra.mxu0 0
        %2525 = vmatprep.subr.bf16.mxu0 0
        %2526 = vmatpush2.bf16.msra.mxu0 0
        %2527 = vmatprep.subr.bf16.mxu0 0
        %2528 = vmatpush2.bf16.msra.mxu0 0
        %2529 = vmatprep.subr.bf16.mxu0 0
        %2530 = vmatpush2.bf16.msra.mxu0 0
        %2531 = vmatprep.subr.bf16.mxu0 0
        %2532 = vmatpush2.bf16.msra.mxu0 0
        %2533 = vmatprep.subr.bf16.mxu0 0
        %2534 = vmatpush2.bf16.msra.mxu0 0
        %2535 = vmatprep.subr.bf16.mxu0 0
        %2536 = vmatpush2.bf16.msra.mxu0 0
        %2537 = vmatprep.mubr.bf16.mxu0 0
        %2538 = vmatmul.mubr.bf16.gmra.mxu0 %v2494
        %v2539 = vpop.f32.mrf.mxu0
        %v2540 = vadd.f32 %v2419, %v2539
        %v2541 = vpop.f32.mrf.mxu0
        %v2542 = vpop.f32.mrf.mxu0
        %v2543 = vadd.f32 %v2422, %v2542
        %v2544 = vpop.f32.mrf.mxu0
        %2545 = vmatprep.mubr.bf16.mxu0 0
        %2546 = vmatmul.mubr.bf16.gmra.mxu0 %v2497
        %v2547 = vpop.f32.mrf.mxu0
        %v2548 = vadd.f32 %v2427, %v2547
        %v2549 = vpop.f32.mrf.mxu0
        %v2550 = vpop.f32.mrf.mxu0
        %v2551 = vadd.f32 %v2430, %v2550
        %v2552 = vpop.f32.mrf.mxu0
        %2553 = vmatprep.mubr.bf16.mxu0 0
        %2554 = vmatmul.mubr.bf16.gmra.mxu0 %v2500
        %v2555 = vpop.f32.mrf.mxu0
        %v2556 = vadd.f32 %v2435, %v2555
        %v2557 = vpop.f32.mrf.mxu0
        %v2558 = vpop.f32.mrf.mxu0
        %v2559 = vadd.f32 %v2438, %v2558
        %v2560 = vpop.f32.mrf.mxu0
        %2561 = vmatprep.mubr.bf16.mxu0 0
        %2562 = vmatmul.mubr.bf16.gmra.mxu0 %v2503
        %v2563 = vpop.f32.mrf.mxu0
        %v2564 = vadd.f32 %v2443, %v2563
        %v2565 = vpop.f32.mrf.mxu0
        %v2566 = vpop.f32.mrf.mxu0
        %v2567 = vadd.f32 %v2446, %v2566
        %v2568 = vpop.f32.mrf.mxu0
        %2569 = vdwg.mxu0
        %v2570 = vld [vmem:[#allocation2] sm:$0xe]
        %v2571 = vld [vmem:[#allocation2 + $0x8] sm:$0xe]
        %v2572 = vld [vmem:[#allocation2 + $0x10] sm:$0xe]
        %v2573 = vld [vmem:[#allocation2 + $0x18] sm:$0xe]
        %v2574 = vld [vmem:[#allocation2 + $0x20] sm:$0xe]
        %v2575 = vld [vmem:[#allocation2 + $0x28] sm:$0xe]
        %v2576 = vld [vmem:[#allocation2 + $0x30] sm:$0xe]
        %v2577 = vld [vmem:[#allocation2 + $0x38] sm:$0xe]
        %v2594 = vrot.slane %v2570, 5
        %v2595 = vrot.slane %v2594, 4
        %v2596 = vrot.slane %v2207, 5
        %v2597 = vsel %vm640, %v2595, %v2596
        %v2598 = vrot.slane %v2571, 5
        %v2599 = vrot.slane %v2598, 4
        %v2600 = vrot.slane %v2208, 5
        %v2601 = vsel %vm640, %v2599, %v2600
        %v2602 = vrot.slane %v2572, 5
        %v2603 = vrot.slane %v2602, 4
        %v2604 = vrot.slane %v2209, 5
        %v2605 = vsel %vm640, %v2603, %v2604
        %v2606 = vrot.slane %v2573, 5
        %v2607 = vrot.slane %v2606, 4
        %v2608 = vrot.slane %v2210, 5
        %v2609 = vsel %vm640, %v2607, %v2608
        %v2610 = vrot.slane %v2574, 5
        %v2611 = vrot.slane %v2610, 4
        %v2612 = vrot.slane %v2211, 5
        %v2613 = vsel %vm640, %v2611, %v2612
        %v2614 = vrot.slane %v2575, 5
        %v2615 = vrot.slane %v2614, 4
        %v2616 = vrot.slane %v2212, 5
        %v2617 = vsel %vm640, %v2615, %v2616
        %v2618 = vrot.slane %v2576, 5
        %v2619 = vrot.slane %v2618, 4
        %v2620 = vrot.slane %v2213, 5
        %v2621 = vsel %vm640, %v2619, %v2620
        %v2622 = vrot.slane %v2577, 5
        %v2623 = vrot.slane %v2622, 4
        %v2624 = vrot.slane %v2214, 5
        %v2625 = vsel %vm640, %v2623, %v2624
        %s2626 = scalar_lea.vmem %s3, 64
        %v2627 = vld [vmem:[%s2626] sm:$0xf]
        %v2628 = vld [vmem:[%s2626 + $0x4] sm:$0xf]
        %v2629 = vld [vmem:[%s2626 + $0x8] sm:$0xf]
        %v2630 = vld [vmem:[%s2626 + $0xc] sm:$0xf]
        %v2631 = vld [vmem:[%s2626 + $0x10] sm:$0xf]
        %v2632 = vld [vmem:[%s2626 + $0x14] sm:$0xf]
        %v2633 = vld [vmem:[%s2626 + $0x18] sm:$0xf]
        %v2634 = vld [vmem:[%s2626 + $0x1c] sm:$0xf]
        %v2635 = vunpack.c.l.b16 %v2597
        %v2636 = vunpack.c.l.b16 %v2601
        %v2637 = vunpack.c.l.b16 %v2605
        %v2638 = vunpack.c.l.b16 %v2609
        %v2639 = vunpack.c.l.b16 %v2613
        %v2640 = vunpack.c.l.b16 %v2617
        %v2641 = vunpack.c.l.b16 %v2621
        %v2642 = vunpack.c.l.b16 %v2625
        %v2643 = vpack.c.b16 %v2636, %v2635
        %v2644 = vpack.c.b16 %v2638, %v2637
        %v2645 = vpack.c.b16 %v2640, %v2639
        %v2646 = vpack.c.b16 %v2642, %v2641
        %v2655 = vunpack.c.l.b16 %v2627
        %v2656 = vunpack.c.l.b16 %v2628
        %v2657 = vunpack.c.l.b16 %v2629
        %v2658 = vunpack.c.l.b16 %v2630
        %v2659 = vunpack.c.l.b16 %v2631
        %v2660 = vunpack.c.l.b16 %v2632
        %v2661 = vunpack.c.l.b16 %v2633
        %v2662 = vunpack.c.l.b16 %v2634
        %v2663 = vpack.c.b16 %v2656, %v2655
        %v2664 = vpack.c.b16 %v2658, %v2657
        %v2665 = vpack.c.b16 %v2660, %v2659
        %v2666 = vpack.c.b16 %v2662, %v2661
        %v2672 = vsel %vm415, %v2643, 0
        %v2675 = vsel %vm415, %v2644, 0
        %v2678 = vsel %vm415, %v2645, 0
        %v2681 = vsel %vm415, %v2646, 0
        %2683 = vmatprep.subr.bf16.mxu0 0
        %2684 = vmatpush1.bf16.msra.mxu0 0
        %2685 = vmatprep.subr.bf16.mxu0 0
        %2686 = vmatpush1.bf16.msra.mxu0 0
        %2687 = vmatprep.subr.bf16.mxu0 0
        %2688 = vmatpush1.bf16.msra.mxu0 0
        %2689 = vmatprep.subr.bf16.mxu0 0
        %2690 = vmatpush1.bf16.msra.mxu0 0
        %2691 = vmatprep.subr.bf16.mxu0 0
        %2692 = vmatpush1.bf16.msra.mxu0 %v2666
        %2693 = vmatprep.subr.bf16.mxu0 0
        %2694 = vmatpush1.bf16.msra.mxu0 %v2665
        %2695 = vmatprep.subr.bf16.mxu0 0
        %2696 = vmatpush1.bf16.msra.mxu0 %v2664
        %2697 = vmatprep.subr.bf16.mxu0 0
        %2698 = vmatpush1.bf16.msra.mxu0 %v2663
        %2699 = vmatprep.subr.bf16.mxu0 0
        %2700 = vmatpush2.bf16.msra.mxu0 0
        %2701 = vmatprep.subr.bf16.mxu0 0
        %2702 = vmatpush2.bf16.msra.mxu0 0
        %2703 = vmatprep.subr.bf16.mxu0 0
        %2704 = vmatpush2.bf16.msra.mxu0 0
        %2705 = vmatprep.subr.bf16.mxu0 0
        %2706 = vmatpush2.bf16.msra.mxu0 0
        %2707 = vmatprep.subr.bf16.mxu0 0
        %2708 = vmatpush2.bf16.msra.mxu0 0
        %2709 = vmatprep.subr.bf16.mxu0 0
        %2710 = vmatpush2.bf16.msra.mxu0 0
        %2711 = vmatprep.subr.bf16.mxu0 0
        %2712 = vmatpush2.bf16.msra.mxu0 0
        %2713 = vmatprep.subr.bf16.mxu0 0
        %2714 = vmatpush2.bf16.msra.mxu0 0
        %2715 = vmatprep.mubr.bf16.mxu0 0
        %2716 = vmatmul.mubr.bf16.gmra.mxu0 %v2672
        %v2717 = vpop.f32.mrf.mxu0
        %v2718 = vadd.f32 0.0, %v2717
        %v2719 = vpop.f32.mrf.mxu0
        %v2720 = vpop.f32.mrf.mxu0
        %v2721 = vadd.f32 0.0, %v2720
        %v2722 = vpop.f32.mrf.mxu0
        %2723 = vmatprep.mubr.bf16.mxu0 0
        %2724 = vmatmul.mubr.bf16.gmra.mxu0 %v2675
        %v2725 = vpop.f32.mrf.mxu0
        %v2726 = vadd.f32 0.0, %v2725
        %v2727 = vpop.f32.mrf.mxu0
        %v2728 = vpop.f32.mrf.mxu0
        %v2729 = vadd.f32 0.0, %v2728
        %v2730 = vpop.f32.mrf.mxu0
        %2731 = vmatprep.mubr.bf16.mxu0 0
        %2732 = vmatmul.mubr.bf16.gmra.mxu0 %v2678
        %v2733 = vpop.f32.mrf.mxu0
        %v2734 = vadd.f32 0.0, %v2733
        %v2735 = vpop.f32.mrf.mxu0
        %v2736 = vpop.f32.mrf.mxu0
        %v2737 = vadd.f32 0.0, %v2736
        %v2738 = vpop.f32.mrf.mxu0
        %2739 = vmatprep.mubr.bf16.mxu0 0
        %2740 = vmatmul.mubr.bf16.gmra.mxu0 %v2681
        %v2741 = vpop.f32.mrf.mxu0
        %v2742 = vadd.f32 0.0, %v2741
        %v2743 = vpop.f32.mrf.mxu0
        %v2744 = vpop.f32.mrf.mxu0
        %v2745 = vadd.f32 0.0, %v2744
        %v2746 = vpop.f32.mrf.mxu0
        %2747 = vdwg.mxu0
        %v2748 = vadd.f32 %v2540, %v2718
        %v2749 = vadd.f32 %v2543, %v2721
        %v2750 = vadd.f32 %v2548, %v2726
        %v2751 = vadd.f32 %v2551, %v2729
        %v2752 = vadd.f32 %v2556, %v2734
        %v2753 = vadd.f32 %v2559, %v2737
        %v2754 = vadd.f32 %v2564, %v2742
        %v2755 = vadd.f32 %v2567, %v2745
        %v2756 = vld [vmem:[%s2136] sm:$0xf]
        %v2757 = vld [vmem:[%s2136 + $0x8] sm:$0xf]
        %v2758 = vld [vmem:[%s2136 + $0x10] sm:$0xf]
        %v2759 = vld [vmem:[%s2136 + $0x18] sm:$0xf]
        %v2760 = vld [vmem:[%s2136 + $0x20] sm:$0xf]
        %v2761 = vld [vmem:[%s2136 + $0x28] sm:$0xf]
        %v2762 = vld [vmem:[%s2136 + $0x30] sm:$0xf]
        %v2763 = vld [vmem:[%s2136 + $0x38] sm:$0xf]
        %s2764 = scalar_lea.vmem %s3, 96
        %v2765 = vld [vmem:[%s2764] sm:$0xf]
        %v2766 = vld [vmem:[%s2764 + $0x4] sm:$0xf]
        %v2767 = vld [vmem:[%s2764 + $0x8] sm:$0xf]
        %v2768 = vld [vmem:[%s2764 + $0xc] sm:$0xf]
        %v2769 = vld [vmem:[%s2764 + $0x10] sm:$0xf]
        %v2770 = vld [vmem:[%s2764 + $0x14] sm:$0xf]
        %v2771 = vld [vmem:[%s2764 + $0x18] sm:$0xf]
        %v2772 = vld [vmem:[%s2764 + $0x1c] sm:$0xf]
        %v2781 = vunpack.c.l.b16 %v2756
        %v2782 = vunpack.c.l.b16 %v2757
        %v2783 = vunpack.c.l.b16 %v2758
        %v2784 = vunpack.c.l.b16 %v2759
        %v2785 = vunpack.c.l.b16 %v2760
        %v2786 = vunpack.c.l.b16 %v2761
        %v2787 = vunpack.c.l.b16 %v2762
        %v2788 = vunpack.c.l.b16 %v2763
        %v2789 = vpack.c.b16 %v2782, %v2781
        %v2790 = vpack.c.b16 %v2784, %v2783
        %v2791 = vpack.c.b16 %v2786, %v2785
        %v2792 = vpack.c.b16 %v2788, %v2787
        %v2801 = vunpack.c.l.b16 %v2765
        %v2802 = vunpack.c.l.b16 %v2766
        %v2803 = vunpack.c.l.b16 %v2767
        %v2804 = vunpack.c.l.b16 %v2768
        %v2805 = vunpack.c.l.b16 %v2769
        %v2806 = vunpack.c.l.b16 %v2770
        %v2807 = vunpack.c.l.b16 %v2771
        %v2808 = vunpack.c.l.b16 %v2772
        %v2809 = vpack.c.b16 %v2802, %v2801
        %v2810 = vpack.c.b16 %v2804, %v2803
        %v2811 = vpack.c.b16 %v2806, %v2805
        %v2812 = vpack.c.b16 %v2808, %v2807
        %v2818 = vsel %vm415, %v2789, 0
        %v2821 = vsel %vm415, %v2790, 0
        %v2824 = vsel %vm415, %v2791, 0
        %v2827 = vsel %vm415, %v2792, 0
        %2829 = vmatprep.subr.bf16.mxu0 0
        %2830 = vmatpush1.bf16.msra.mxu0 0
        %2831 = vmatprep.subr.bf16.mxu0 0
        %2832 = vmatpush1.bf16.msra.mxu0 0
        %2833 = vmatprep.subr.bf16.mxu0 0
        %2834 = vmatpush1.bf16.msra.mxu0 0
        %2835 = vmatprep.subr.bf16.mxu0 0
        %2836 = vmatpush1.bf16.msra.mxu0 0
        %2837 = vmatprep.subr.bf16.mxu0 0
        %2838 = vmatpush1.bf16.msra.mxu0 %v2812
        %2839 = vmatprep.subr.bf16.mxu0 0
        %2840 = vmatpush1.bf16.msra.mxu0 %v2811
        %2841 = vmatprep.subr.bf16.mxu0 0
        %2842 = vmatpush1.bf16.msra.mxu0 %v2810
        %2843 = vmatprep.subr.bf16.mxu0 0
        %2844 = vmatpush1.bf16.msra.mxu0 %v2809
        %2845 = vmatprep.subr.bf16.mxu0 0
        %2846 = vmatpush2.bf16.msra.mxu0 0
        %2847 = vmatprep.subr.bf16.mxu0 0
        %2848 = vmatpush2.bf16.msra.mxu0 0
        %2849 = vmatprep.subr.bf16.mxu0 0
        %2850 = vmatpush2.bf16.msra.mxu0 0
        %2851 = vmatprep.subr.bf16.mxu0 0
        %2852 = vmatpush2.bf16.msra.mxu0 0
        %2853 = vmatprep.subr.bf16.mxu0 0
        %2854 = vmatpush2.bf16.msra.mxu0 0
        %2855 = vmatprep.subr.bf16.mxu0 0
        %2856 = vmatpush2.bf16.msra.mxu0 0
        %2857 = vmatprep.subr.bf16.mxu0 0
        %2858 = vmatpush2.bf16.msra.mxu0 0
        %2859 = vmatprep.subr.bf16.mxu0 0
        %2860 = vmatpush2.bf16.msra.mxu0 0
        %2861 = vmatprep.mubr.bf16.mxu0 0
        %2862 = vmatmul.mubr.bf16.gmra.mxu0 %v2818
        %v2863 = vpop.f32.mrf.mxu0
        %v2864 = vadd.f32 0.0, %v2863
        %v2865 = vpop.f32.mrf.mxu0
        %v2866 = vpop.f32.mrf.mxu0
        %v2867 = vadd.f32 0.0, %v2866
        %v2868 = vpop.f32.mrf.mxu0
        %2869 = vmatprep.mubr.bf16.mxu0 0
        %2870 = vmatmul.mubr.bf16.gmra.mxu0 %v2821
        %v2871 = vpop.f32.mrf.mxu0
        %v2872 = vadd.f32 0.0, %v2871
        %v2873 = vpop.f32.mrf.mxu0
        %v2874 = vpop.f32.mrf.mxu0
        %v2875 = vadd.f32 0.0, %v2874
        %v2876 = vpop.f32.mrf.mxu0
        %2877 = vmatprep.mubr.bf16.mxu0 0
        %2878 = vmatmul.mubr.bf16.gmra.mxu0 %v2824
        %v2879 = vpop.f32.mrf.mxu0
        %v2880 = vadd.f32 0.0, %v2879
        %v2881 = vpop.f32.mrf.mxu0
        %v2882 = vpop.f32.mrf.mxu0
        %v2883 = vadd.f32 0.0, %v2882
        %v2884 = vpop.f32.mrf.mxu0
        %2885 = vmatprep.mubr.bf16.mxu0 0
        %2886 = vmatmul.mubr.bf16.gmra.mxu0 %v2827
        %v2887 = vpop.f32.mrf.mxu0
        %v2888 = vadd.f32 0.0, %v2887
        %v2889 = vpop.f32.mrf.mxu0
        %v2890 = vpop.f32.mrf.mxu0
        %v2891 = vadd.f32 0.0, %v2890
        %v2892 = vpop.f32.mrf.mxu0
        %2893 = vdwg.mxu0
        %v2894 = vadd.f32 %v2748, %v2864
        %v2895 = vadd.f32 %v2749, %v2867
        %v2896 = vadd.f32 %v2750, %v2872
        %v2897 = vadd.f32 %v2751, %v2875
        %v2898 = vadd.f32 %v2752, %v2880
        %v2899 = vadd.f32 %v2753, %v2883
        %v2900 = vadd.f32 %v2754, %v2888
        %v2901 = vadd.f32 %v2755, %v2891
        %v2902 = vld [vmem:[%s2136] sm:$0xf]
        %v2903 = vld [vmem:[%s2136 + $0x4] sm:$0x1]
        %v2904 = vld [vmem:[%s2136 + $0x8] sm:$0xf]
        %v2905 = vld [vmem:[%s2136 + $0xc] sm:$0x1]
        %v2906 = vld [vmem:[%s2136 + $0x10] sm:$0xf]
        %v2907 = vld [vmem:[%s2136 + $0x14] sm:$0x1]
        %v2908 = vld [vmem:[%s2136 + $0x18] sm:$0xf]
        %v2909 = vld [vmem:[%s2136 + $0x1c] sm:$0x1]
        %v2910 = vld [vmem:[%s2136 + $0x20] sm:$0xf]
        %v2911 = vld [vmem:[%s2136 + $0x24] sm:$0x1]
        %v2912 = vld [vmem:[%s2136 + $0x28] sm:$0xf]
        %v2913 = vld [vmem:[%s2136 + $0x2c] sm:$0x1]
        %v2914 = vld [vmem:[%s2136 + $0x30] sm:$0xf]
        %v2915 = vld [vmem:[%s2136 + $0x34] sm:$0x1]
        %v2916 = vld [vmem:[%s2136 + $0x38] sm:$0xf]
        %v2917 = vld [vmem:[%s2136 + $0x3c] sm:$0x1]
        %v2919 = vshrl.u32 %v2902, 16
        %v2921 = vrot.slane %v2919, 4
        %v2922 = vshll.u32 %v2902, 16
        %v2924 = vrot.slane %v2922, 5
        %v2925 = vor.u32 %v2921, %v2924
        %v2926 = vrot.slane %v2925, 4
        %v2928 = vshll.u32 %v2903, 16
        %v2930 = vrot.slane %v2928, 5
        %v2931 = vsel %vm257, %v2926, %v2930
        %v2933 = vshrl.u32 %v2904, 16
        %v2935 = vrot.slane %v2933, 4
        %v2936 = vshll.u32 %v2904, 16
        %v2938 = vrot.slane %v2936, 5
        %v2939 = vor.u32 %v2935, %v2938
        %v2940 = vrot.slane %v2939, 4
        %v2942 = vshll.u32 %v2905, 16
        %v2944 = vrot.slane %v2942, 5
        %v2945 = vsel %vm257, %v2940, %v2944
        %v2947 = vshrl.u32 %v2906, 16
        %v2949 = vrot.slane %v2947, 4
        %v2950 = vshll.u32 %v2906, 16
        %v2952 = vrot.slane %v2950, 5
        %v2953 = vor.u32 %v2949, %v2952
        %v2954 = vrot.slane %v2953, 4
        %v2956 = vshll.u32 %v2907, 16
        %v2958 = vrot.slane %v2956, 5
        %v2959 = vsel %vm257, %v2954, %v2958
        %v2961 = vshrl.u32 %v2908, 16
        %v2963 = vrot.slane %v2961, 4
        %v2964 = vshll.u32 %v2908, 16
        %v2966 = vrot.slane %v2964, 5
        %v2967 = vor.u32 %v2963, %v2966
        %v2968 = vrot.slane %v2967, 4
        %v2970 = vshll.u32 %v2909, 16
        %v2972 = vrot.slane %v2970, 5
        %v2973 = vsel %vm257, %v2968, %v2972
        %v2975 = vshrl.u32 %v2910, 16
        %v2977 = vrot.slane %v2975, 4
        %v2978 = vshll.u32 %v2910, 16
        %v2980 = vrot.slane %v2978, 5
        %v2981 = vor.u32 %v2977, %v2980
        %v2982 = vrot.slane %v2981, 4
        %v2984 = vshll.u32 %v2911, 16
        %v2986 = vrot.slane %v2984, 5
        %v2987 = vsel %vm257, %v2982, %v2986
        %v2989 = vshrl.u32 %v2912, 16
        %v2991 = vrot.slane %v2989, 4
        %v2992 = vshll.u32 %v2912, 16
        %v2994 = vrot.slane %v2992, 5
        %v2995 = vor.u32 %v2991, %v2994
        %v2996 = vrot.slane %v2995, 4
        %v2998 = vshll.u32 %v2913, 16
        %v3000 = vrot.slane %v2998, 5
        %v3001 = vsel %vm257, %v2996, %v3000
        %v3003 = vshrl.u32 %v2914, 16
        %v3005 = vrot.slane %v3003, 4
        %v3006 = vshll.u32 %v2914, 16
        %v3008 = vrot.slane %v3006, 5
        %v3009 = vor.u32 %v3005, %v3008
        %v3010 = vrot.slane %v3009, 4
        %v3012 = vshll.u32 %v2915, 16
        %v3014 = vrot.slane %v3012, 5
        %v3015 = vsel %vm257, %v3010, %v3014
        %v3017 = vshrl.u32 %v2916, 16
        %v3019 = vrot.slane %v3017, 4
        %v3020 = vshll.u32 %v2916, 16
        %v3022 = vrot.slane %v3020, 5
        %v3023 = vor.u32 %v3019, %v3022
        %v3024 = vrot.slane %v3023, 4
        %v3026 = vshll.u32 %v2917, 16
        %v3028 = vrot.slane %v3026, 5
        %v3029 = vsel %vm257, %v3024, %v3028
        %s3030 = scalar_lea.vmem %s3, 128
        %v3031 = vld [vmem:[%s3030] sm:$0xf]
        %v3032 = vld [vmem:[%s3030 + $0x4] sm:$0xf]
        %v3033 = vld [vmem:[%s3030 + $0x8] sm:$0xf]
        %v3034 = vld [vmem:[%s3030 + $0xc] sm:$0xf]
        %v3035 = vld [vmem:[%s3030 + $0x10] sm:$0xf]
        %v3036 = vld [vmem:[%s3030 + $0x14] sm:$0xf]
        %v3037 = vld [vmem:[%s3030 + $0x18] sm:$0xf]
        %v3038 = vld [vmem:[%s3030 + $0x1c] sm:$0xf]
        %v3039 = vunpack.c.l.b16 %v2931
        %v3040 = vunpack.c.l.b16 %v2945
        %v3041 = vunpack.c.l.b16 %v2959
        %v3042 = vunpack.c.l.b16 %v2973
        %v3043 = vunpack.c.l.b16 %v2987
        %v3044 = vunpack.c.l.b16 %v3001
        %v3045 = vunpack.c.l.b16 %v3015
        %v3046 = vunpack.c.l.b16 %v3029
        %v3047 = vpack.c.b16 %v3040, %v3039
        %v3048 = vpack.c.b16 %v3042, %v3041
        %v3049 = vpack.c.b16 %v3044, %v3043
        %v3050 = vpack.c.b16 %v3046, %v3045
        %v3059 = vunpack.c.l.b16 %v3031
        %v3060 = vunpack.c.l.b16 %v3032
        %v3061 = vunpack.c.l.b16 %v3033
        %v3062 = vunpack.c.l.b16 %v3034
        %v3063 = vunpack.c.l.b16 %v3035
        %v3064 = vunpack.c.l.b16 %v3036
        %v3065 = vunpack.c.l.b16 %v3037
        %v3066 = vunpack.c.l.b16 %v3038
        %v3067 = vpack.c.b16 %v3060, %v3059
        %v3068 = vpack.c.b16 %v3062, %v3061
        %v3069 = vpack.c.b16 %v3064, %v3063
        %v3070 = vpack.c.b16 %v3066, %v3065
        %v3076 = vsel %vm415, %v3047, 0
        %v3079 = vsel %vm415, %v3048, 0
        %v3082 = vsel %vm415, %v3049, 0
        %v3085 = vsel %vm415, %v3050, 0
        %3087 = vmatprep.subr.bf16.mxu0 0
        %3088 = vmatpush1.bf16.msra.mxu0 0
        %3089 = vmatprep.subr.bf16.mxu0 0
        %3090 = vmatpush1.bf16.msra.mxu0 0
        %3091 = vmatprep.subr.bf16.mxu0 0
        %3092 = vmatpush1.bf16.msra.mxu0 0
        %3093 = vmatprep.subr.bf16.mxu0 0
        %3094 = vmatpush1.bf16.msra.mxu0 0
        %3095 = vmatprep.subr.bf16.mxu0 0
        %3096 = vmatpush1.bf16.msra.mxu0 %v3070
        %3097 = vmatprep.subr.bf16.mxu0 0
        %3098 = vmatpush1.bf16.msra.mxu0 %v3069
        %3099 = vmatprep.subr.bf16.mxu0 0
        %3100 = vmatpush1.bf16.msra.mxu0 %v3068
        %3101 = vmatprep.subr.bf16.mxu0 0
        %3102 = vmatpush1.bf16.msra.mxu0 %v3067
        %3103 = vmatprep.subr.bf16.mxu0 0
        %3104 = vmatpush2.bf16.msra.mxu0 0
        %3105 = vmatprep.subr.bf16.mxu0 0
        %3106 = vmatpush2.bf16.msra.mxu0 0
        %3107 = vmatprep.subr.bf16.mxu0 0
        %3108 = vmatpush2.bf16.msra.mxu0 0
        %3109 = vmatprep.subr.bf16.mxu0 0
        %3110 = vmatpush2.bf16.msra.mxu0 0
        %3111 = vmatprep.subr.bf16.mxu0 0
        %3112 = vmatpush2.bf16.msra.mxu0 0
        %3113 = vmatprep.subr.bf16.mxu0 0
        %3114 = vmatpush2.bf16.msra.mxu0 0
        %3115 = vmatprep.subr.bf16.mxu0 0
        %3116 = vmatpush2.bf16.msra.mxu0 0
        %3117 = vmatprep.subr.bf16.mxu0 0
        %3118 = vmatpush2.bf16.msra.mxu0 0
        %3119 = vmatprep.mubr.bf16.mxu0 0
        %3120 = vmatmul.mubr.bf16.gmra.mxu0 %v3076
        %v3121 = vpop.f32.mrf.mxu0
        %v3122 = vadd.f32 0.0, %v3121
        %v3123 = vpop.f32.mrf.mxu0
        %v3124 = vpop.f32.mrf.mxu0
        %v3125 = vadd.f32 0.0, %v3124
        %v3126 = vpop.f32.mrf.mxu0
        %3127 = vmatprep.mubr.bf16.mxu0 0
        %3128 = vmatmul.mubr.bf16.gmra.mxu0 %v3079
        %v3129 = vpop.f32.mrf.mxu0
        %v3130 = vadd.f32 0.0, %v3129
        %v3131 = vpop.f32.mrf.mxu0
        %v3132 = vpop.f32.mrf.mxu0
        %v3133 = vadd.f32 0.0, %v3132
        %v3134 = vpop.f32.mrf.mxu0
        %3135 = vmatprep.mubr.bf16.mxu0 0
        %3136 = vmatmul.mubr.bf16.gmra.mxu0 %v3082
        %v3137 = vpop.f32.mrf.mxu0
        %v3138 = vadd.f32 0.0, %v3137
        %v3139 = vpop.f32.mrf.mxu0
        %v3140 = vpop.f32.mrf.mxu0
        %v3141 = vadd.f32 0.0, %v3140
        %v3142 = vpop.f32.mrf.mxu0
        %3143 = vmatprep.mubr.bf16.mxu0 0
        %3144 = vmatmul.mubr.bf16.gmra.mxu0 %v3085
        %v3145 = vpop.f32.mrf.mxu0
        %v3146 = vadd.f32 0.0, %v3145
        %v3147 = vpop.f32.mrf.mxu0
        %v3148 = vpop.f32.mrf.mxu0
        %v3149 = vadd.f32 0.0, %v3148
        %v3150 = vpop.f32.mrf.mxu0
        %3151 = vdwg.mxu0
        %v3152 = vadd.f32 %v2894, %v3122
        %v3153 = vadd.f32 %v2895, %v3125
        %v3154 = vadd.f32 %v2896, %v3130
        %v3155 = vadd.f32 %v2897, %v3133
        %v3156 = vadd.f32 %v2898, %v3138
        %v3157 = vadd.f32 %v2899, %v3141
        %v3158 = vadd.f32 %v2900, %v3146
        %v3159 = vadd.f32 %v2901, %v3149
        %v3160 = vld [vmem:[%s2136] sm:$0xe]
        %v3161 = vld [vmem:[%s2136 + $0x8] sm:$0xe]
        %v3162 = vld [vmem:[%s2136 + $0x10] sm:$0xe]
        %v3163 = vld [vmem:[%s2136 + $0x18] sm:$0xe]
        %v3164 = vld [vmem:[%s2136 + $0x20] sm:$0xe]
        %v3165 = vld [vmem:[%s2136 + $0x28] sm:$0xe]
        %v3166 = vld [vmem:[%s2136 + $0x30] sm:$0xe]
        %v3167 = vld [vmem:[%s2136 + $0x38] sm:$0xe]
        %v3184 = vrot.slane %v3160, 5
        %v3185 = vrot.slane %v3184, 4
        %v3186 = vrot.slane %v2903, 5
        %v3187 = vsel %vm640, %v3185, %v3186
        %v3188 = vrot.slane %v3161, 5
        %v3189 = vrot.slane %v3188, 4
        %v3190 = vrot.slane %v2905, 5
        %v3191 = vsel %vm640, %v3189, %v3190
        %v3192 = vrot.slane %v3162, 5
        %v3193 = vrot.slane %v3192, 4
        %v3194 = vrot.slane %v2907, 5
        %v3195 = vsel %vm640, %v3193, %v3194
        %v3196 = vrot.slane %v3163, 5
        %v3197 = vrot.slane %v3196, 4
        %v3198 = vrot.slane %v2909, 5
        %v3199 = vsel %vm640, %v3197, %v3198
        %v3200 = vrot.slane %v3164, 5
        %v3201 = vrot.slane %v3200, 4
        %v3202 = vrot.slane %v2911, 5
        %v3203 = vsel %vm640, %v3201, %v3202
        %v3204 = vrot.slane %v3165, 5
        %v3205 = vrot.slane %v3204, 4
        %v3206 = vrot.slane %v2913, 5
        %v3207 = vsel %vm640, %v3205, %v3206
        %v3208 = vrot.slane %v3166, 5
        %v3209 = vrot.slane %v3208, 4
        %v3210 = vrot.slane %v2915, 5
        %v3211 = vsel %vm640, %v3209, %v3210
        %v3212 = vrot.slane %v3167, 5
        %v3213 = vrot.slane %v3212, 4
        %v3214 = vrot.slane %v2917, 5
        %v3215 = vsel %vm640, %v3213, %v3214
        %s3216 = scalar_lea.vmem %s3, 160
        %v3217 = vld [vmem:[%s3216] sm:$0xf]
        %v3218 = vld [vmem:[%s3216 + $0x4] sm:$0xf]
        %v3219 = vld [vmem:[%s3216 + $0x8] sm:$0xf]
        %v3220 = vld [vmem:[%s3216 + $0xc] sm:$0xf]
        %v3221 = vld [vmem:[%s3216 + $0x10] sm:$0xf]
        %v3222 = vld [vmem:[%s3216 + $0x14] sm:$0xf]
        %v3223 = vld [vmem:[%s3216 + $0x18] sm:$0xf]
        %v3224 = vld [vmem:[%s3216 + $0x1c] sm:$0xf]
        %v3225 = vunpack.c.l.b16 %v3187
        %v3226 = vunpack.c.l.b16 %v3191
        %v3227 = vunpack.c.l.b16 %v3195
        %v3228 = vunpack.c.l.b16 %v3199
        %v3229 = vunpack.c.l.b16 %v3203
        %v3230 = vunpack.c.l.b16 %v3207
        %v3231 = vunpack.c.l.b16 %v3211
        %v3232 = vunpack.c.l.b16 %v3215
        %v3233 = vpack.c.b16 %v3226, %v3225
        %v3234 = vpack.c.b16 %v3228, %v3227
        %v3235 = vpack.c.b16 %v3230, %v3229
        %v3236 = vpack.c.b16 %v3232, %v3231
        %v3245 = vunpack.c.l.b16 %v3217
        %v3246 = vunpack.c.l.b16 %v3218
        %v3247 = vunpack.c.l.b16 %v3219
        %v3248 = vunpack.c.l.b16 %v3220
        %v3249 = vunpack.c.l.b16 %v3221
        %v3250 = vunpack.c.l.b16 %v3222
        %v3251 = vunpack.c.l.b16 %v3223
        %v3252 = vunpack.c.l.b16 %v3224
        %v3253 = vpack.c.b16 %v3246, %v3245
        %v3254 = vpack.c.b16 %v3248, %v3247
        %v3255 = vpack.c.b16 %v3250, %v3249
        %v3256 = vpack.c.b16 %v3252, %v3251
        %v3262 = vsel %vm415, %v3233, 0
        %v3265 = vsel %vm415, %v3234, 0
        %v3268 = vsel %vm415, %v3235, 0
        %v3271 = vsel %vm415, %v3236, 0
        %3273 = vmatprep.subr.bf16.mxu0 0
        %3274 = vmatpush1.bf16.msra.mxu0 0
        %3275 = vmatprep.subr.bf16.mxu0 0
        %3276 = vmatpush1.bf16.msra.mxu0 0
        %3277 = vmatprep.subr.bf16.mxu0 0
        %3278 = vmatpush1.bf16.msra.mxu0 0
        %3279 = vmatprep.subr.bf16.mxu0 0
        %3280 = vmatpush1.bf16.msra.mxu0 0
        %3281 = vmatprep.subr.bf16.mxu0 0
        %3282 = vmatpush1.bf16.msra.mxu0 %v3256
        %3283 = vmatprep.subr.bf16.mxu0 0
        %3284 = vmatpush1.bf16.msra.mxu0 %v3255
        %3285 = vmatprep.subr.bf16.mxu0 0
        %3286 = vmatpush1.bf16.msra.mxu0 %v3254
        %3287 = vmatprep.subr.bf16.mxu0 0
        %3288 = vmatpush1.bf16.msra.mxu0 %v3253
        %3289 = vmatprep.subr.bf16.mxu0 0
        %3290 = vmatpush2.bf16.msra.mxu0 0
        %3291 = vmatprep.subr.bf16.mxu0 0
        %3292 = vmatpush2.bf16.msra.mxu0 0
        %3293 = vmatprep.subr.bf16.mxu0 0
        %3294 = vmatpush2.bf16.msra.mxu0 0
        %3295 = vmatprep.subr.bf16.mxu0 0
        %3296 = vmatpush2.bf16.msra.mxu0 0
        %3297 = vmatprep.subr.bf16.mxu0 0
        %3298 = vmatpush2.bf16.msra.mxu0 0
        %3299 = vmatprep.subr.bf16.mxu0 0
        %3300 = vmatpush2.bf16.msra.mxu0 0
        %3301 = vmatprep.subr.bf16.mxu0 0
        %3302 = vmatpush2.bf16.msra.mxu0 0
        %3303 = vmatprep.subr.bf16.mxu0 0
        %3304 = vmatpush2.bf16.msra.mxu0 0
        %3305 = vmatprep.mubr.bf16.mxu0 0
        %3306 = vmatmul.mubr.bf16.gmra.mxu0 %v3262
        %v3307 = vpop.f32.mrf.mxu0
        %v3308 = vadd.f32 0.0, %v3307
        %v3309 = vpop.f32.mrf.mxu0
        %v3310 = vpop.f32.mrf.mxu0
        %v3311 = vadd.f32 0.0, %v3310
        %v3312 = vpop.f32.mrf.mxu0
        %3313 = vmatprep.mubr.bf16.mxu0 0
        %3314 = vmatmul.mubr.bf16.gmra.mxu0 %v3265
        %v3315 = vpop.f32.mrf.mxu0
        %v3316 = vadd.f32 0.0, %v3315
        %v3317 = vpop.f32.mrf.mxu0
        %v3318 = vpop.f32.mrf.mxu0
        %v3319 = vadd.f32 0.0, %v3318
        %v3320 = vpop.f32.mrf.mxu0
        %3321 = vmatprep.mubr.bf16.mxu0 0
        %3322 = vmatmul.mubr.bf16.gmra.mxu0 %v3268
        %v3323 = vpop.f32.mrf.mxu0
        %v3324 = vadd.f32 0.0, %v3323
        %v3325 = vpop.f32.mrf.mxu0
        %v3326 = vpop.f32.mrf.mxu0
        %v3327 = vadd.f32 0.0, %v3326
        %v3328 = vpop.f32.mrf.mxu0
        %3329 = vmatprep.mubr.bf16.mxu0 0
        %3330 = vmatmul.mubr.bf16.gmra.mxu0 %v3271
        %v3331 = vpop.f32.mrf.mxu0
        %v3332 = vadd.f32 0.0, %v3331
        %v3333 = vpop.f32.mrf.mxu0
        %v3334 = vpop.f32.mrf.mxu0
        %v3335 = vadd.f32 0.0, %v3334
        %v3336 = vpop.f32.mrf.mxu0
        %3337 = vdwg.mxu0
        %v3338 = vadd.f32 %v3152, %v3308
        %v3339 = vadd.f32 %v3153, %v3311
        %v3340 = vadd.f32 %v3154, %v3316
        %v3341 = vadd.f32 %v3155, %v3319
        %v3342 = vadd.f32 %v3156, %v3324
        %v3343 = vadd.f32 %v3157, %v3327
        %v3344 = vadd.f32 %v3158, %v3332
        %v3345 = vadd.f32 %v3159, %v3335
        %s3346 = scalar_lea.vmem [#allocation2], 16
        %v3347 = vld [vmem:[%s3346] sm:$0xf]
        %v3348 = vld [vmem:[%s3346 + $0x8] sm:$0xf]
        %v3349 = vld [vmem:[%s3346 + $0x10] sm:$0xf]
        %v3350 = vld [vmem:[%s3346 + $0x18] sm:$0xf]
        %v3351 = vld [vmem:[%s3346 + $0x20] sm:$0xf]
        %v3352 = vld [vmem:[%s3346 + $0x28] sm:$0xf]
        %v3353 = vld [vmem:[%s3346 + $0x30] sm:$0xf]
        %v3354 = vld [vmem:[%s3346 + $0x38] sm:$0xf]
        %s3355 = scalar_lea.vmem %s3, 192
        %v3356 = vld [vmem:[%s3355] sm:$0xf]
        %v3357 = vld [vmem:[%s3355 + $0x4] sm:$0xf]
        %v3358 = vld [vmem:[%s3355 + $0x8] sm:$0xf]
        %v3359 = vld [vmem:[%s3355 + $0xc] sm:$0xf]
        %v3360 = vld [vmem:[%s3355 + $0x10] sm:$0xf]
        %v3361 = vld [vmem:[%s3355 + $0x14] sm:$0xf]
        %v3362 = vld [vmem:[%s3355 + $0x18] sm:$0xf]
        %v3363 = vld [vmem:[%s3355 + $0x1c] sm:$0xf]
        %v3372 = vunpack.c.l.b16 %v3347
        %v3373 = vunpack.c.l.b16 %v3348
        %v3374 = vunpack.c.l.b16 %v3349
        %v3375 = vunpack.c.l.b16 %v3350
        %v3376 = vunpack.c.l.b16 %v3351
        %v3377 = vunpack.c.l.b16 %v3352
        %v3378 = vunpack.c.l.b16 %v3353
        %v3379 = vunpack.c.l.b16 %v3354
        %v3380 = vpack.c.b16 %v3373, %v3372
        %v3381 = vpack.c.b16 %v3375, %v3374
        %v3382 = vpack.c.b16 %v3377, %v3376
        %v3383 = vpack.c.b16 %v3379, %v3378
        %v3392 = vunpack.c.l.b16 %v3356
        %v3393 = vunpack.c.l.b16 %v3357
        %v3394 = vunpack.c.l.b16 %v3358
        %v3395 = vunpack.c.l.b16 %v3359
        %v3396 = vunpack.c.l.b16 %v3360
        %v3397 = vunpack.c.l.b16 %v3361
        %v3398 = vunpack.c.l.b16 %v3362
        %v3399 = vunpack.c.l.b16 %v3363
        %v3400 = vpack.c.b16 %v3393, %v3392
        %v3401 = vpack.c.b16 %v3395, %v3394
        %v3402 = vpack.c.b16 %v3397, %v3396
        %v3403 = vpack.c.b16 %v3399, %v3398
        %v3409 = vsel %vm415, %v3380, 0
        %v3412 = vsel %vm415, %v3381, 0
        %v3415 = vsel %vm415, %v3382, 0
        %v3418 = vsel %vm415, %v3383, 0
        %3420 = vmatprep.subr.bf16.mxu0 0
        %3421 = vmatpush1.bf16.msra.mxu0 0
        %3422 = vmatprep.subr.bf16.mxu0 0
        %3423 = vmatpush1.bf16.msra.mxu0 0
        %3424 = vmatprep.subr.bf16.mxu0 0
        %3425 = vmatpush1.bf16.msra.mxu0 0
        %3426 = vmatprep.subr.bf16.mxu0 0
        %3427 = vmatpush1.bf16.msra.mxu0 0
        %3428 = vmatprep.subr.bf16.mxu0 0
        %3429 = vmatpush1.bf16.msra.mxu0 %v3403
        %3430 = vmatprep.subr.bf16.mxu0 0
        %3431 = vmatpush1.bf16.msra.mxu0 %v3402
        %3432 = vmatprep.subr.bf16.mxu0 0
        %3433 = vmatpush1.bf16.msra.mxu0 %v3401
        %3434 = vmatprep.subr.bf16.mxu0 0
        %3435 = vmatpush1.bf16.msra.mxu0 %v3400
        %3436 = vmatprep.subr.bf16.mxu0 0
        %3437 = vmatpush2.bf16.msra.mxu0 0
        %3438 = vmatprep.subr.bf16.mxu0 0
        %3439 = vmatpush2.bf16.msra.mxu0 0
        %3440 = vmatprep.subr.bf16.mxu0 0
        %3441 = vmatpush2.bf16.msra.mxu0 0
        %3442 = vmatprep.subr.bf16.mxu0 0
        %3443 = vmatpush2.bf16.msra.mxu0 0
        %3444 = vmatprep.subr.bf16.mxu0 0
        %3445 = vmatpush2.bf16.msra.mxu0 0
        %3446 = vmatprep.subr.bf16.mxu0 0
        %3447 = vmatpush2.bf16.msra.mxu0 0
        %3448 = vmatprep.subr.bf16.mxu0 0
        %3449 = vmatpush2.bf16.msra.mxu0 0
        %3450 = vmatprep.subr.bf16.mxu0 0
        %3451 = vmatpush2.bf16.msra.mxu0 0
        %3452 = vmatprep.mubr.bf16.mxu0 0
        %3453 = vmatmul.mubr.bf16.gmra.mxu0 %v3409
        %v3454 = vpop.f32.mrf.mxu0
        %v3455 = vadd.f32 0.0, %v3454
        %v3456 = vpop.f32.mrf.mxu0
        %v3457 = vpop.f32.mrf.mxu0
        %v3458 = vadd.f32 0.0, %v3457
        %v3459 = vpop.f32.mrf.mxu0
        %3460 = vmatprep.mubr.bf16.mxu0 0
        %3461 = vmatmul.mubr.bf16.gmra.mxu0 %v3412
        %v3462 = vpop.f32.mrf.mxu0
        %v3463 = vadd.f32 0.0, %v3462
        %v3464 = vpop.f32.mrf.mxu0
        %v3465 = vpop.f32.mrf.mxu0
        %v3466 = vadd.f32 0.0, %v3465
        %v3467 = vpop.f32.mrf.mxu0
        %3468 = vmatprep.mubr.bf16.mxu0 0
        %3469 = vmatmul.mubr.bf16.gmra.mxu0 %v3415
        %v3470 = vpop.f32.mrf.mxu0
        %v3471 = vadd.f32 0.0, %v3470
        %v3472 = vpop.f32.mrf.mxu0
        %v3473 = vpop.f32.mrf.mxu0
        %v3474 = vadd.f32 0.0, %v3473
        %v3475 = vpop.f32.mrf.mxu0
        %3476 = vmatprep.mubr.bf16.mxu0 0
        %3477 = vmatmul.mubr.bf16.gmra.mxu0 %v3418
        %v3478 = vpop.f32.mrf.mxu0
        %v3479 = vadd.f32 0.0, %v3478
        %v3480 = vpop.f32.mrf.mxu0
        %v3481 = vpop.f32.mrf.mxu0
        %v3482 = vadd.f32 0.0, %v3481
        %v3483 = vpop.f32.mrf.mxu0
        %3484 = vdwg.mxu0
        %v3485 = vadd.f32 %v3338, %v3455
        %v3486 = vadd.f32 %v3339, %v3458
        %v3487 = vadd.f32 %v3340, %v3463
        %v3488 = vadd.f32 %v3341, %v3466
        %v3489 = vadd.f32 %v3342, %v3471
        %v3490 = vadd.f32 %v3343, %v3474
        %v3491 = vadd.f32 %v3344, %v3479
        %v3492 = vadd.f32 %v3345, %v3482
        %v3493 = vld [vmem:[%s3346] sm:$0xf]
        %v3494 = vld [vmem:[%s3346 + $0x4] sm:$0x1]
        %v3495 = vld [vmem:[%s3346 + $0x8] sm:$0xf]
        %v3496 = vld [vmem:[%s3346 + $0xc] sm:$0x1]
        %v3497 = vld [vmem:[%s3346 + $0x10] sm:$0xf]
        %v3498 = vld [vmem:[%s3346 + $0x14] sm:$0x1]
        %v3499 = vld [vmem:[%s3346 + $0x18] sm:$0xf]
        %v3500 = vld [vmem:[%s3346 + $0x1c] sm:$0x1]
        %v3501 = vld [vmem:[%s3346 + $0x20] sm:$0xf]
        %v3502 = vld [vmem:[%s3346 + $0x24] sm:$0x1]
        %v3503 = vld [vmem:[%s3346 + $0x28] sm:$0xf]
        %v3504 = vld [vmem:[%s3346 + $0x2c] sm:$0x1]
        %v3505 = vld [vmem:[%s3346 + $0x30] sm:$0xf]
        %v3506 = vld [vmem:[%s3346 + $0x34] sm:$0x1]
        %v3507 = vld [vmem:[%s3346 + $0x38] sm:$0xf]
        %v3508 = vld [vmem:[%s3346 + $0x3c] sm:$0x1]
        %v3510 = vshrl.u32 %v3493, 16
        %v3512 = vrot.slane %v3510, 4
        %v3513 = vshll.u32 %v3493, 16
        %v3515 = vrot.slane %v3513, 5
        %v3516 = vor.u32 %v3512, %v3515
        %v3517 = vrot.slane %v3516, 4
        %v3519 = vshll.u32 %v3494, 16
        %v3521 = vrot.slane %v3519, 5
        %v3522 = vsel %vm257, %v3517, %v3521
        %v3524 = vshrl.u32 %v3495, 16
        %v3526 = vrot.slane %v3524, 4
        %v3527 = vshll.u32 %v3495, 16
        %v3529 = vrot.slane %v3527, 5
        %v3530 = vor.u32 %v3526, %v3529
        %v3531 = vrot.slane %v3530, 4
        %v3533 = vshll.u32 %v3496, 16
        %v3535 = vrot.slane %v3533, 5
        %v3536 = vsel %vm257, %v3531, %v3535
        %v3538 = vshrl.u32 %v3497, 16
        %v3540 = vrot.slane %v3538, 4
        %v3541 = vshll.u32 %v3497, 16
        %v3543 = vrot.slane %v3541, 5
        %v3544 = vor.u32 %v3540, %v3543
        %v3545 = vrot.slane %v3544, 4
        %v3547 = vshll.u32 %v3498, 16
        %v3549 = vrot.slane %v3547, 5
        %v3550 = vsel %vm257, %v3545, %v3549
        %v3552 = vshrl.u32 %v3499, 16
        %v3554 = vrot.slane %v3552, 4
        %v3555 = vshll.u32 %v3499, 16
        %v3557 = vrot.slane %v3555, 5
        %v3558 = vor.u32 %v3554, %v3557
        %v3559 = vrot.slane %v3558, 4
        %v3561 = vshll.u32 %v3500, 16
        %v3563 = vrot.slane %v3561, 5
        %v3564 = vsel %vm257, %v3559, %v3563
        %v3566 = vshrl.u32 %v3501, 16
        %v3568 = vrot.slane %v3566, 4
        %v3569 = vshll.u32 %v3501, 16
        %v3571 = vrot.slane %v3569, 5
        %v3572 = vor.u32 %v3568, %v3571
        %v3573 = vrot.slane %v3572, 4
        %v3575 = vshll.u32 %v3502, 16
        %v3577 = vrot.slane %v3575, 5
        %v3578 = vsel %vm257, %v3573, %v3577
        %v3580 = vshrl.u32 %v3503, 16
        %v3582 = vrot.slane %v3580, 4
        %v3583 = vshll.u32 %v3503, 16
        %v3585 = vrot.slane %v3583, 5
        %v3586 = vor.u32 %v3582, %v3585
        %v3587 = vrot.slane %v3586, 4
        %v3589 = vshll.u32 %v3504, 16
        %v3591 = vrot.slane %v3589, 5
        %v3592 = vsel %vm257, %v3587, %v3591
        %v3594 = vshrl.u32 %v3505, 16
        %v3596 = vrot.slane %v3594, 4
        %v3597 = vshll.u32 %v3505, 16
        %v3599 = vrot.slane %v3597, 5
        %v3600 = vor.u32 %v3596, %v3599
        %v3601 = vrot.slane %v3600, 4
        %v3603 = vshll.u32 %v3506, 16
        %v3605 = vrot.slane %v3603, 5
        %v3606 = vsel %vm257, %v3601, %v3605
        %v3608 = vshrl.u32 %v3507, 16
        %v3610 = vrot.slane %v3608, 4
        %v3611 = vshll.u32 %v3507, 16
        %v3613 = vrot.slane %v3611, 5
        %v3614 = vor.u32 %v3610, %v3613
        %v3615 = vrot.slane %v3614, 4
        %v3617 = vshll.u32 %v3508, 16
        %v3619 = vrot.slane %v3617, 5
        %v3620 = vsel %vm257, %v3615, %v3619
        %s3621 = scalar_lea.vmem %s3, 224
        %v3622 = vld [vmem:[%s3621] sm:$0xf]
        %v3623 = vld [vmem:[%s3621 + $0x4] sm:$0xf]
        %v3624 = vld [vmem:[%s3621 + $0x8] sm:$0xf]
        %v3625 = vld [vmem:[%s3621 + $0xc] sm:$0xf]
        %v3626 = vld [vmem:[%s3621 + $0x10] sm:$0xf]
        %v3627 = vld [vmem:[%s3621 + $0x14] sm:$0xf]
        %v3628 = vld [vmem:[%s3621 + $0x18] sm:$0xf]
        %v3629 = vld [vmem:[%s3621 + $0x1c] sm:$0xf]
        %v3630 = vunpack.c.l.b16 %v3522
        %v3631 = vunpack.c.l.b16 %v3536
        %v3632 = vunpack.c.l.b16 %v3550
        %v3633 = vunpack.c.l.b16 %v3564
        %v3634 = vunpack.c.l.b16 %v3578
        %v3635 = vunpack.c.l.b16 %v3592
        %v3636 = vunpack.c.l.b16 %v3606
        %v3637 = vunpack.c.l.b16 %v3620
        %v3638 = vpack.c.b16 %v3631, %v3630
        %v3639 = vpack.c.b16 %v3633, %v3632
        %v3640 = vpack.c.b16 %v3635, %v3634
        %v3641 = vpack.c.b16 %v3637, %v3636
        %v3650 = vunpack.c.l.b16 %v3622
        %v3651 = vunpack.c.l.b16 %v3623
        %v3652 = vunpack.c.l.b16 %v3624
        %v3653 = vunpack.c.l.b16 %v3625
        %v3654 = vunpack.c.l.b16 %v3626
        %v3655 = vunpack.c.l.b16 %v3627
        %v3656 = vunpack.c.l.b16 %v3628
        %v3657 = vunpack.c.l.b16 %v3629
        %v3658 = vpack.c.b16 %v3651, %v3650
        %v3659 = vpack.c.b16 %v3653, %v3652
        %v3660 = vpack.c.b16 %v3655, %v3654
        %v3661 = vpack.c.b16 %v3657, %v3656
        %v3667 = vsel %vm415, %v3638, 0
        %v3670 = vsel %vm415, %v3639, 0
        %v3673 = vsel %vm415, %v3640, 0
        %v3676 = vsel %vm415, %v3641, 0
        %3678 = vmatprep.subr.bf16.mxu0 0
        %3679 = vmatpush1.bf16.msra.mxu0 0
        %3680 = vmatprep.subr.bf16.mxu0 0
        %3681 = vmatpush1.bf16.msra.mxu0 0
        %3682 = vmatprep.subr.bf16.mxu0 0
        %3683 = vmatpush1.bf16.msra.mxu0 0
        %3684 = vmatprep.subr.bf16.mxu0 0
        %3685 = vmatpush1.bf16.msra.mxu0 0
        %3686 = vmatprep.subr.bf16.mxu0 0
        %3687 = vmatpush1.bf16.msra.mxu0 %v3661
        %3688 = vmatprep.subr.bf16.mxu0 0
        %3689 = vmatpush1.bf16.msra.mxu0 %v3660
        %3690 = vmatprep.subr.bf16.mxu0 0
        %3691 = vmatpush1.bf16.msra.mxu0 %v3659
        %3692 = vmatprep.subr.bf16.mxu0 0
        %3693 = vmatpush1.bf16.msra.mxu0 %v3658
        %3694 = vmatprep.subr.bf16.mxu0 0
        %3695 = vmatpush2.bf16.msra.mxu0 0
        %3696 = vmatprep.subr.bf16.mxu0 0
        %3697 = vmatpush2.bf16.msra.mxu0 0
        %3698 = vmatprep.subr.bf16.mxu0 0
        %3699 = vmatpush2.bf16.msra.mxu0 0
        %3700 = vmatprep.subr.bf16.mxu0 0
        %3701 = vmatpush2.bf16.msra.mxu0 0
        %3702 = vmatprep.subr.bf16.mxu0 0
        %3703 = vmatpush2.bf16.msra.mxu0 0
        %3704 = vmatprep.subr.bf16.mxu0 0
        %3705 = vmatpush2.bf16.msra.mxu0 0
        %3706 = vmatprep.subr.bf16.mxu0 0
        %3707 = vmatpush2.bf16.msra.mxu0 0
        %3708 = vmatprep.subr.bf16.mxu0 0
        %3709 = vmatpush2.bf16.msra.mxu0 0
        %3710 = vmatprep.mubr.bf16.mxu0 0
        %3711 = vmatmul.mubr.bf16.gmra.mxu0 %v3667
        %v3712 = vpop.f32.mrf.mxu0
        %v3713 = vadd.f32 0.0, %v3712
        %v3714 = vpop.f32.mrf.mxu0
        %v3715 = vpop.f32.mrf.mxu0
        %v3716 = vadd.f32 0.0, %v3715
        %v3717 = vpop.f32.mrf.mxu0
        %3718 = vmatprep.mubr.bf16.mxu0 0
        %3719 = vmatmul.mubr.bf16.gmra.mxu0 %v3670
        %v3720 = vpop.f32.mrf.mxu0
        %v3721 = vadd.f32 0.0, %v3720
        %v3722 = vpop.f32.mrf.mxu0
        %v3723 = vpop.f32.mrf.mxu0
        %v3724 = vadd.f32 0.0, %v3723
        %v3725 = vpop.f32.mrf.mxu0
        %3726 = vmatprep.mubr.bf16.mxu0 0
        %3727 = vmatmul.mubr.bf16.gmra.mxu0 %v3673
        %v3728 = vpop.f32.mrf.mxu0
        %v3729 = vadd.f32 0.0, %v3728
        %v3730 = vpop.f32.mrf.mxu0
        %v3731 = vpop.f32.mrf.mxu0
        %v3732 = vadd.f32 0.0, %v3731
        %v3733 = vpop.f32.mrf.mxu0
        %3734 = vmatprep.mubr.bf16.mxu0 0
        %3735 = vmatmul.mubr.bf16.gmra.mxu0 %v3676
        %v3736 = vpop.f32.mrf.mxu0
        %v3737 = vadd.f32 0.0, %v3736
        %v3738 = vpop.f32.mrf.mxu0
        %v3739 = vpop.f32.mrf.mxu0
        %v3740 = vadd.f32 0.0, %v3739
        %v3741 = vpop.f32.mrf.mxu0
        %3742 = vdwg.mxu0
        %v3743 = vadd.f32 %v3485, %v3713
        %v3744 = vadd.f32 %v3486, %v3716
        %v3745 = vadd.f32 %v3487, %v3721
        %v3746 = vadd.f32 %v3488, %v3724
        %v3747 = vadd.f32 %v3489, %v3729
        %v3748 = vadd.f32 %v3490, %v3732
        %v3749 = vadd.f32 %v3491, %v3737
        %v3750 = vadd.f32 %v3492, %v3740
        %v3751 = vld [vmem:[%s3346] sm:$0xe]
        %v3752 = vld [vmem:[%s3346 + $0x8] sm:$0xe]
        %v3753 = vld [vmem:[%s3346 + $0x10] sm:$0xe]
        %v3754 = vld [vmem:[%s3346 + $0x18] sm:$0xe]
        %v3755 = vld [vmem:[%s3346 + $0x20] sm:$0xe]
        %v3756 = vld [vmem:[%s3346 + $0x28] sm:$0xe]
        %v3757 = vld [vmem:[%s3346 + $0x30] sm:$0xe]
        %v3758 = vld [vmem:[%s3346 + $0x38] sm:$0xe]
        %v3775 = vrot.slane %v3751, 5
        %v3776 = vrot.slane %v3775, 4
        %v3777 = vrot.slane %v3494, 5
        %v3778 = vsel %vm640, %v3776, %v3777
        %v3779 = vrot.slane %v3752, 5
        %v3780 = vrot.slane %v3779, 4
        %v3781 = vrot.slane %v3496, 5
        %v3782 = vsel %vm640, %v3780, %v3781
        %v3783 = vrot.slane %v3753, 5
        %v3784 = vrot.slane %v3783, 4
        %v3785 = vrot.slane %v3498, 5
        %v3786 = vsel %vm640, %v3784, %v3785
        %v3787 = vrot.slane %v3754, 5
        %v3788 = vrot.slane %v3787, 4
        %v3789 = vrot.slane %v3500, 5
        %v3790 = vsel %vm640, %v3788, %v3789
        %v3791 = vrot.slane %v3755, 5
        %v3792 = vrot.slane %v3791, 4
        %v3793 = vrot.slane %v3502, 5
        %v3794 = vsel %vm640, %v3792, %v3793
        %v3795 = vrot.slane %v3756, 5
        %v3796 = vrot.slane %v3795, 4
        %v3797 = vrot.slane %v3504, 5
        %v3798 = vsel %vm640, %v3796, %v3797
        %v3799 = vrot.slane %v3757, 5
        %v3800 = vrot.slane %v3799, 4
        %v3801 = vrot.slane %v3506, 5
        %v3802 = vsel %vm640, %v3800, %v3801
        %v3803 = vrot.slane %v3758, 5
        %v3804 = vrot.slane %v3803, 4
        %v3805 = vrot.slane %v3508, 5
        %v3806 = vsel %vm640, %v3804, %v3805
        %s3807 = scalar_lea.vmem %s3, 256
        %v3808 = vld [vmem:[%s3807] sm:$0xf]
        %v3809 = vld [vmem:[%s3807 + $0x4] sm:$0xf]
        %v3810 = vld [vmem:[%s3807 + $0x8] sm:$0xf]
        %v3811 = vld [vmem:[%s3807 + $0xc] sm:$0xf]
        %v3812 = vld [vmem:[%s3807 + $0x10] sm:$0xf]
        %v3813 = vld [vmem:[%s3807 + $0x14] sm:$0xf]
        %v3814 = vld [vmem:[%s3807 + $0x18] sm:$0xf]
        %v3815 = vld [vmem:[%s3807 + $0x1c] sm:$0xf]
        %v3816 = vunpack.c.l.b16 %v3778
        %v3817 = vunpack.c.l.b16 %v3782
        %v3818 = vunpack.c.l.b16 %v3786
        %v3819 = vunpack.c.l.b16 %v3790
        %v3820 = vunpack.c.l.b16 %v3794
        %v3821 = vunpack.c.l.b16 %v3798
        %v3822 = vunpack.c.l.b16 %v3802
        %v3823 = vunpack.c.l.b16 %v3806
        %v3824 = vpack.c.b16 %v3817, %v3816
        %v3825 = vpack.c.b16 %v3819, %v3818
        %v3826 = vpack.c.b16 %v3821, %v3820
        %v3827 = vpack.c.b16 %v3823, %v3822
        %v3836 = vunpack.c.l.b16 %v3808
        %v3837 = vunpack.c.l.b16 %v3809
        %v3838 = vunpack.c.l.b16 %v3810
        %v3839 = vunpack.c.l.b16 %v3811
        %v3840 = vunpack.c.l.b16 %v3812
        %v3841 = vunpack.c.l.b16 %v3813
        %v3842 = vunpack.c.l.b16 %v3814
        %v3843 = vunpack.c.l.b16 %v3815
        %v3844 = vpack.c.b16 %v3837, %v3836
        %v3845 = vpack.c.b16 %v3839, %v3838
        %v3846 = vpack.c.b16 %v3841, %v3840
        %v3847 = vpack.c.b16 %v3843, %v3842
        %v3853 = vsel %vm415, %v3824, 0
        %v3856 = vsel %vm415, %v3825, 0
        %v3859 = vsel %vm415, %v3826, 0
        %v3862 = vsel %vm415, %v3827, 0
        %3864 = vmatprep.subr.bf16.mxu0 0
        %3865 = vmatpush1.bf16.msra.mxu0 0
        %3866 = vmatprep.subr.bf16.mxu0 0
        %3867 = vmatpush1.bf16.msra.mxu0 0
        %3868 = vmatprep.subr.bf16.mxu0 0
        %3869 = vmatpush1.bf16.msra.mxu0 0
        %3870 = vmatprep.subr.bf16.mxu0 0
        %3871 = vmatpush1.bf16.msra.mxu0 0
        %3872 = vmatprep.subr.bf16.mxu0 0
        %3873 = vmatpush1.bf16.msra.mxu0 %v3847
        %3874 = vmatprep.subr.bf16.mxu0 0
        %3875 = vmatpush1.bf16.msra.mxu0 %v3846
        %3876 = vmatprep.subr.bf16.mxu0 0
        %3877 = vmatpush1.bf16.msra.mxu0 %v3845
        %3878 = vmatprep.subr.bf16.mxu0 0
        %3879 = vmatpush1.bf16.msra.mxu0 %v3844
        %3880 = vmatprep.subr.bf16.mxu0 0
        %3881 = vmatpush2.bf16.msra.mxu0 0
        %3882 = vmatprep.subr.bf16.mxu0 0
        %3883 = vmatpush2.bf16.msra.mxu0 0
        %3884 = vmatprep.subr.bf16.mxu0 0
        %3885 = vmatpush2.bf16.msra.mxu0 0
        %3886 = vmatprep.subr.bf16.mxu0 0
        %3887 = vmatpush2.bf16.msra.mxu0 0
        %3888 = vmatprep.subr.bf16.mxu0 0
        %3889 = vmatpush2.bf16.msra.mxu0 0
        %3890 = vmatprep.subr.bf16.mxu0 0
        %3891 = vmatpush2.bf16.msra.mxu0 0
        %3892 = vmatprep.subr.bf16.mxu0 0
        %3893 = vmatpush2.bf16.msra.mxu0 0
        %3894 = vmatprep.subr.bf16.mxu0 0
        %3895 = vmatpush2.bf16.msra.mxu0 0
        %3896 = vmatprep.mubr.bf16.mxu0 0
        %3897 = vmatmul.mubr.bf16.gmra.mxu0 %v3853
        %v3898 = vpop.f32.mrf.mxu0
        %v3899 = vadd.f32 0.0, %v3898
        %v3900 = vpop.f32.mrf.mxu0
        %v3901 = vpop.f32.mrf.mxu0
        %v3902 = vadd.f32 0.0, %v3901
        %v3903 = vpop.f32.mrf.mxu0
        %3904 = vmatprep.mubr.bf16.mxu0 0
        %3905 = vmatmul.mubr.bf16.gmra.mxu0 %v3856
        %v3906 = vpop.f32.mrf.mxu0
        %v3907 = vadd.f32 0.0, %v3906
        %v3908 = vpop.f32.mrf.mxu0
        %v3909 = vpop.f32.mrf.mxu0
        %v3910 = vadd.f32 0.0, %v3909
        %v3911 = vpop.f32.mrf.mxu0
        %3912 = vmatprep.mubr.bf16.mxu0 0
        %3913 = vmatmul.mubr.bf16.gmra.mxu0 %v3859
        %v3914 = vpop.f32.mrf.mxu0
        %v3915 = vadd.f32 0.0, %v3914
        %v3916 = vpop.f32.mrf.mxu0
        %v3917 = vpop.f32.mrf.mxu0
        %v3918 = vadd.f32 0.0, %v3917
        %v3919 = vpop.f32.mrf.mxu0
        %3920 = vmatprep.mubr.bf16.mxu0 0
        %3921 = vmatmul.mubr.bf16.gmra.mxu0 %v3862
        %v3922 = vpop.f32.mrf.mxu0
        %v3923 = vadd.f32 0.0, %v3922
        %v3924 = vpop.f32.mrf.mxu0
        %v3925 = vpop.f32.mrf.mxu0
        %v3926 = vadd.f32 0.0, %v3925
        %v3927 = vpop.f32.mrf.mxu0
        %3928 = vdwg.mxu0
        %v3929 = vadd.f32 %v3743, %v3899
        %v3930 = vadd.f32 %v3744, %v3902
        %v3931 = vadd.f32 %v3745, %v3907
        %v3932 = vadd.f32 %v3746, %v3910
        %v3933 = vadd.f32 %v3747, %v3915
        %v3934 = vadd.f32 %v3748, %v3918
        %v3935 = vadd.f32 %v3749, %v3923
        %v3936 = vadd.f32 %v3750, %v3926
        %v3937 = vld [vmem:[%s803] sm:$0xf]
        %v3938 = vld [vmem:[%s803 + $0x4] sm:$0x1]
        %v3939 = vld [vmem:[%s803 + $0x8] sm:$0xf]
        %v3940 = vld [vmem:[%s803 + $0xc] sm:$0x1]
        %v3941 = vld [vmem:[%s803 + $0x10] sm:$0xf]
        %v3942 = vld [vmem:[%s803 + $0x14] sm:$0x1]
        %v3943 = vld [vmem:[%s803 + $0x18] sm:$0xf]
        %v3944 = vld [vmem:[%s803 + $0x1c] sm:$0x1]
        %v3945 = vld [vmem:[%s803 + $0x20] sm:$0xf]
        %v3946 = vld [vmem:[%s803 + $0x24] sm:$0x1]
        %v3947 = vld [vmem:[%s803 + $0x28] sm:$0xf]
        %v3948 = vld [vmem:[%s803 + $0x2c] sm:$0x1]
        %v3949 = vld [vmem:[%s803 + $0x30] sm:$0xf]
        %v3950 = vld [vmem:[%s803 + $0x34] sm:$0x1]
        %v3951 = vld [vmem:[%s803 + $0x38] sm:$0xf]
        %v3952 = vld [vmem:[%s803 + $0x3c] sm:$0x1]
        %v3954 = vshrl.u32 %v3937, 16
        %v3956 = vrot.slane %v3954, 4
        %v3957 = vshll.u32 %v3937, 16
        %v3959 = vrot.slane %v3957, 5
        %v3960 = vor.u32 %v3956, %v3959
        %v3961 = vrot.slane %v3960, 4
        %v3963 = vshll.u32 %v3938, 16
        %v3965 = vrot.slane %v3963, 5
        %v3966 = vsel %vm257, %v3961, %v3965
        %v3968 = vshrl.u32 %v3939, 16
        %v3970 = vrot.slane %v3968, 4
        %v3971 = vshll.u32 %v3939, 16
        %v3973 = vrot.slane %v3971, 5
        %v3974 = vor.u32 %v3970, %v3973
        %v3975 = vrot.slane %v3974, 4
        %v3977 = vshll.u32 %v3940, 16
        %v3979 = vrot.slane %v3977, 5
        %v3980 = vsel %vm257, %v3975, %v3979
        %v3982 = vshrl.u32 %v3941, 16
        %v3984 = vrot.slane %v3982, 4
        %v3985 = vshll.u32 %v3941, 16
        %v3987 = vrot.slane %v3985, 5
        %v3988 = vor.u32 %v3984, %v3987
        %v3989 = vrot.slane %v3988, 4
        %v3991 = vshll.u32 %v3942, 16
        %v3993 = vrot.slane %v3991, 5
        %v3994 = vsel %vm257, %v3989, %v3993
        %v3996 = vshrl.u32 %v3943, 16
        %v3998 = vrot.slane %v3996, 4
        %v3999 = vshll.u32 %v3943, 16
        %v4001 = vrot.slane %v3999, 5
        %v4002 = vor.u32 %v3998, %v4001
        %v4003 = vrot.slane %v4002, 4
        %v4005 = vshll.u32 %v3944, 16
        %v4007 = vrot.slane %v4005, 5
        %v4008 = vsel %vm257, %v4003, %v4007
        %v4010 = vshrl.u32 %v3945, 16
        %v4012 = vrot.slane %v4010, 4
        %v4013 = vshll.u32 %v3945, 16
        %v4015 = vrot.slane %v4013, 5
        %v4016 = vor.u32 %v4012, %v4015
        %v4017 = vrot.slane %v4016, 4
        %v4019 = vshll.u32 %v3946, 16
        %v4021 = vrot.slane %v4019, 5
        %v4022 = vsel %vm257, %v4017, %v4021
        %v4024 = vshrl.u32 %v3947, 16
        %v4026 = vrot.slane %v4024, 4
        %v4027 = vshll.u32 %v3947, 16
        %v4029 = vrot.slane %v4027, 5
        %v4030 = vor.u32 %v4026, %v4029
        %v4031 = vrot.slane %v4030, 4
        %v4033 = vshll.u32 %v3948, 16
        %v4035 = vrot.slane %v4033, 5
        %v4036 = vsel %vm257, %v4031, %v4035
        %v4038 = vshrl.u32 %v3949, 16
        %v4040 = vrot.slane %v4038, 4
        %v4041 = vshll.u32 %v3949, 16
        %v4043 = vrot.slane %v4041, 5
        %v4044 = vor.u32 %v4040, %v4043
        %v4045 = vrot.slane %v4044, 4
        %v4047 = vshll.u32 %v3950, 16
        %v4049 = vrot.slane %v4047, 5
        %v4050 = vsel %vm257, %v4045, %v4049
        %v4052 = vshrl.u32 %v3951, 16
        %v4054 = vrot.slane %v4052, 4
        %v4055 = vshll.u32 %v3951, 16
        %v4057 = vrot.slane %v4055, 5
        %v4058 = vor.u32 %v4054, %v4057
        %v4059 = vrot.slane %v4058, 4
        %v4061 = vshll.u32 %v3952, 16
        %v4063 = vrot.slane %v4061, 5
        %v4064 = vsel %vm257, %v4059, %v4063
        %v4073 = vunpack.c.l.bf16 %v3966
        %v4074 = vunpack.c.l.bf16 %v3980
        %v4075 = vunpack.c.l.bf16 %v3994
        %v4076 = vunpack.c.l.bf16 %v4008
        %v4077 = vunpack.c.l.bf16 %v4022
        %v4078 = vunpack.c.l.bf16 %v4036
        %v4079 = vunpack.c.l.bf16 %v4050
        %v4080 = vunpack.c.l.bf16 %v4064
        %v4081 = vadd.f32 %v3929, %v4073
        %v4082 = vadd.f32 %v3930, %v4074
        %v4083 = vadd.f32 %v3931, %v4075
        %v4084 = vadd.f32 %v3932, %v4076
        %v4085 = vadd.f32 %v3933, %v4077
        %v4086 = vadd.f32 %v3934, %v4078
        %v4087 = vadd.f32 %v3935, %v4079
        %v4088 = vadd.f32 %v3936, %v4080
        %v4089 = vld [vmem:[%s5] sm:$0x1]
        %v4091 = vlaneseq
        %v4092 = vshrl.u32 %v4091, 7
        %v4093 = vsub.s32 0, %v4092
        %v4094 = vrot.slane %v4089, %v4093
        %v4096 = vadd.f32 %v4081, %v4094
        %v4097 = vadd.f32 %v4082, %v4094
        %v4098 = vadd.f32 %v4083, %v4094
        %v4099 = vadd.f32 %v4084, %v4094
        %v4100 = vadd.f32 %v4085, %v4094
        %v4101 = vadd.f32 %v4086, %v4094
        %v4102 = vadd.f32 %v4087, %v4094
        %v4103 = vadd.f32 %v4088, %v4094
        %s4104 = sld [smem:[#allocation4 + $0x1]]
        %v4105 = vstv %s4104
        %v4106 = vmax.f32 %v4096, %v4105
        %v4107 = vmax.f32 %v4097, %v4105
        %v4108 = vmax.f32 %v4098, %v4105
        %v4109 = vmax.f32 %v4099, %v4105
        %v4110 = vmax.f32 %v4100, %v4105
        %v4111 = vmax.f32 %v4101, %v4105
        %v4112 = vmax.f32 %v4102, %v4105
        %v4113 = vmax.f32 %v4103, %v4105
        %4114 = vst.msk [vmem:[%s224] sm:$0xff] %vm415, %v4106
        %4115 = vst.msk [vmem:[%s224 + $0x8] sm:$0xff] %vm415, %v4107
        %4116 = vst.msk [vmem:[%s224 + $0x10] sm:$0xff] %vm415, %v4108
        %4117 = vst.msk [vmem:[%s224 + $0x18] sm:$0xff] %vm415, %v4109
        %4118 = vst.msk [vmem:[%s224 + $0x20] sm:$0xff] %vm415, %v4110
        %4119 = vst.msk [vmem:[%s224 + $0x28] sm:$0xff] %vm415, %v4111
        %4120 = vst.msk [vmem:[%s224 + $0x30] sm:$0xff] %vm415, %v4112
        %4121 = vst.msk [vmem:[%s224 + $0x38] sm:$0xff] %vm415, %v4113
        %s4122 = sand.u32 %s144, 1
        %s4123 = scalar_lea.sflag [#allocation6], %s4122
        %s4124 = sand.u32 %s144, 1
        %s4125 = smul.addr %s4124, 64
        %s4126 = scalar_lea.vmem [#allocation5], %s4125
        // Predicated region
        $region41: #{fwd.3} parent=39 // pred_check
          %p4127 = pneg %p154
        $region42: #{fwd.3} parent=39 // pred_check_branch
          %4129 = sbr.rel (%p4127) target = $region44
        $region43: #{fwd.3} parent=39 // pred_region
          %s4131 = ssub.s32 1024, 1024
          %4132 = vsyncadd %s4123, %s4131
          %s4133 = smul.addr %s26, 8
          %s4134 = smul.addr %s4133, 128
          %s4135 = scalar_lea.hbm %s6, %s4134
          %s4136 = sshll.u32 %s4126, 4
          %s4137 = int_to_ptr.vmem [resolvable:$true] %s4136
          %4142 = dma.vmem_to_hbm [thread:$0]  %s4137, 1024, %s4135, %s4123, 128, 128, 8
        $region44: #{fwd.3} parent=39 // pred_fallthru
          _
      $region40: #{fwd.3} parent=5 // pred_fallthru
        _
      %p4143 = scmp.le.s32.totalorder 2, %s21
      // Predicated region
      $region45: #{fwd.3} parent=5 // pred_check
        %p4144 = pneg %p4143
      $region46: #{fwd.3} parent=5 // pred_check_branch
        %4146 = sbr.rel (%p4144) target = $region48
      $region47: #{fwd.3} parent=5 // pred_region
        %s4147 = ssub.s32 %s21, 2
        // Predicated region
        $region49: #{fwd.3} parent=47 // pred_check
          %p4148 = pneg %p160
        $region50: #{fwd.3} parent=47 // pred_check_branch
          %4150 = sbr.rel (%p4148) target = $region52
        $region51: #{fwd.3} parent=47 // pred_region
          %s4151 = sand.u32 %s145, 1
          %s4152 = scalar_lea.sflag [#allocation6], %s4151
          %s4153 = sand.u32 %s145, 1
          %s4154 = smul.addr %s4153, 64
          %s4155 = scalar_lea.vmem [#allocation5], %s4154
          %4156 = dma.done %s4152, 1024
        $region52: #{fwd.3} parent=47 // pred_fallthru
          _
      $region48: #{fwd.3} parent=5 // pred_fallthru
        _
    $region6: #{fwd.3} parent=1 // loop_footer
      %s25 = sadd.s32 1, %s21
    $region7: #{fwd.3} parent=1 // loop_footer_branch
      %20 = sbr.rel target = $region3
    $region8: #{fwd.3} parent=1 // loop_exit
      _
    %4157 = vsyncpa [#allocation6], 1
    %s4158 = scalar_lea.sflag [#allocation6], 1
    %4159 = vsyncpa %s4158, 1

// kernel: fwd.2
$region0: #{fwd.2}
  #allocation0 [shape = 'u32[]', space=smem, size = 0x4, offset = 0x4, fixed_abs, tag = 'smem constant byte address 0x4 - core index']
  #allocation1 [shape = 'u32[144,128]{1,0:T(1,128)}', space=vmem, size = 0x12000, scoped, tag = 'internal scratch']
  #allocation2 [shape = 'bf16[10,10,64]{2,1,0:T(8,128)(2,1)}', space=vmem, size = 0xa000, scoped, tag = 'scratch operand']
  #allocation3 [shape = 's32[1]{0}', space=sflag, size = 0x4, scoped, tag = 'scoped memory for fwd.2']
  #allocation4 [shape = 'u8[512]{0}', space=smem, size = 0x200, scoped, tag = 'prefetched SMEM operand 0']
  %s0 = inlined_call_operand.vmem [shape: f32[2], index: 0, kind: input, shape index: {}]
  %s1 = inlined_call_operand.vmem [shape: bf16[2,4,9,9,64], index: 1, kind: input, shape index: {}]
  %s2 = inlined_call_operand.vmem [shape: bf16[9,64,64], index: 2, kind: input, shape index: {}]
  %s3 = inlined_call_operand.vmem [shape: bf16[9,64,64], index: 3, kind: input, shape index: {}]
  %s4 = inlined_call_operand.vmem [shape: bf16[64,64], index: 4, kind: input, shape index: {}]
  %s5 = inlined_call_operand.vmem [shape: f32[1,64], index: 5, kind: input, shape index: {}]
  %s6 = inlined_call_operand.vmem [shape: f32[1,64], index: 6, kind: input, shape index: {}]
  %s7 = inlined_call_operand.vmem [shape: f32[2,8,8,64], index: 7, kind: output, shape index: {}]
  %s8 = sld [smem:[#allocation0]]
  $region57: #{fwd.2} parent=0
    _
  %s10 = ssub.s32 1, %s8
  %s11 = scalar_select 0, %s10, %s8
  %s12 = sshll.u32 %s0, 4
  %s13 = int_to_ptr.vmem [resolvable:$true] %s12
  %15 = dma.vmem_to_smem %s13, 16, [#allocation4], [#allocation3]
  %16 = dma.done [#allocation3], 16
  %17 = sfence
  loop: start=0, step=1, limit=4
  $region2: #{fwd.2} parent=0 // loop_pre_header
    _
  $region3: #{fwd.2} parent=0 // loop_header
    %s19 = sphi 0, %s23
    %p20 = scmp.ge.s32.totalorder %s19, 4
    %s29 = sphi 0, %s31
    %s32 = sphi 0, %s29
    %s33 = sphi 0, %s32
    %s49 = sphi 0, %s33
    %s53 = sphi 0, %s53
    %s55 = sphi 0, %s53
    %s56 = sphi 0, %s55
    %s70 = sphi 0, %s56
    %s74 = sphi 0, %s74
    %s76 = sphi 0, %s74
    %s77 = sphi 0, %s76
    %s91 = sphi 0, %s77
    %s95 = sphi 0, %s95
    %s97 = sphi 0, %s95
    %s98 = sphi 0, %s97
    %s112 = sphi 0, %s98
    %s116 = sphi 0, %s116
    %s118 = sphi 0, %s116
    %s119 = sphi 0, %s118
    %s133 = sphi 0, %s119
    %s137 = sphi 0, %s137
    %s139 = sphi 0, %s137
    %s140 = sphi 0, %s139
    %s154 = sphi 0, %s140
    %s160 = sphi 0, %s162
    %s163 = sphi 0, %s160
    %s164 = sphi 0, %s163
    %s180 = sphi 0, %s164
  $region4: #{fwd.2} parent=0 // loop_header_branch
    %22 = sbr.rel (%p20) target = $region8
  $region5: #{fwd.2} parent=0 // loop_body
    %s24 = ssub.s32 %s19, 1
    %s25 = ssub.s32 %s19, 2
    %s26 = sadd.s32 %s19, 1
    %s27 = ssub.s32 %s19, %s26
    %p28 = scmp.eq.s32.totalorder %s27, 0
    %s30 = sadd.s32 %s29, 1
    %s31 = scalar_select %p28, %s29, %s30
    %p34 = pneg %p28
    %p35 = scmp.eq.s32.totalorder %s19, 1
    %p36 = por %p34, %p35
    %p37 = scmp.ne.s32.totalorder %s29, %s32
    %p38 = scmp.eq.s32.totalorder %s19, 0
    %p39 = por %p37, %p38
    %p40 = scmp.ne.s32.totalorder %s29, %s32
    %p41 = scmp.eq.s32.totalorder %s24, 1
    %p42 = por %p40, %p41
    %p43 = scmp.ne.s32.totalorder %s32, %s33
    %p44 = scmp.eq.s32.totalorder %s24, 0
    %p45 = por %p43, %p44
    %p46 = scmp.ne.s32.totalorder %s32, %s33
    %p47 = scmp.eq.s32.totalorder %s25, 1
    %p48 = por %p46, %p47
    %p50 = scmp.ne.s32.totalorder %s33, %s49
    %p51 = scmp.eq.s32.totalorder %s25, 0
    %p52 = por %p50, %p51
    %s54 = sadd.s32 %s53, 1
    %p57 = scmp.eq.s32.totalorder %s19, 1
    %p58 = scmp.ne.s32.totalorder %s53, %s55
    %p59 = scmp.eq.s32.totalorder %s19, 0
    %p60 = por %p58, %p59
    %p61 = scmp.ne.s32.totalorder %s53, %s55
    %p62 = scmp.eq.s32.totalorder %s24, 1
    %p63 = por %p61, %p62
    %p64 = scmp.ne.s32.totalorder %s55, %s56
    %p65 = scmp.eq.s32.totalorder %s24, 0
    %p66 = por %p64, %p65
    %p67 = scmp.ne.s32.totalorder %s55, %s56
    %p68 = scmp.eq.s32.totalorder %s25, 1
    %p69 = por %p67, %p68
    %p71 = scmp.ne.s32.totalorder %s56, %s70
    %p72 = scmp.eq.s32.totalorder %s25, 0
    %p73 = por %p71, %p72
    %s75 = sadd.s32 %s74, 1
    %p78 = scmp.eq.s32.totalorder %s19, 1
    %p79 = scmp.ne.s32.totalorder %s74, %s76
    %p80 = scmp.eq.s32.totalorder %s19, 0
    %p81 = por %p79, %p80
    %p82 = scmp.ne.s32.totalorder %s74, %s76
    %p83 = scmp.eq.s32.totalorder %s24, 1
    %p84 = por %p82, %p83
    %p85 = scmp.ne.s32.totalorder %s76, %s77
    %p86 = scmp.eq.s32.totalorder %s24, 0
    %p87 = por %p85, %p86
    %p88 = scmp.ne.s32.totalorder %s76, %s77
    %p89 = scmp.eq.s32.totalorder %s25, 1
    %p90 = por %p88, %p89
    %p92 = scmp.ne.s32.totalorder %s77, %s91
    %p93 = scmp.eq.s32.totalorder %s25, 0
    %p94 = por %p92, %p93
    %s96 = sadd.s32 %s95, 1
    %p99 = scmp.eq.s32.totalorder %s19, 1
    %p100 = scmp.ne.s32.totalorder %s95, %s97
    %p101 = scmp.eq.s32.totalorder %s19, 0
    %p102 = por %p100, %p101
    %p103 = scmp.ne.s32.totalorder %s95, %s97
    %p104 = scmp.eq.s32.totalorder %s24, 1
    %p105 = por %p103, %p104
    %p106 = scmp.ne.s32.totalorder %s97, %s98
    %p107 = scmp.eq.s32.totalorder %s24, 0
    %p108 = por %p106, %p107
    %p109 = scmp.ne.s32.totalorder %s97, %s98
    %p110 = scmp.eq.s32.totalorder %s25, 1
    %p111 = por %p109, %p110
    %p113 = scmp.ne.s32.totalorder %s98, %s112
    %p114 = scmp.eq.s32.totalorder %s25, 0
    %p115 = por %p113, %p114
    %s117 = sadd.s32 %s116, 1
    %p120 = scmp.eq.s32.totalorder %s19, 1
    %p121 = scmp.ne.s32.totalorder %s116, %s118
    %p122 = scmp.eq.s32.totalorder %s19, 0
    %p123 = por %p121, %p122
    %p124 = scmp.ne.s32.totalorder %s116, %s118
    %p125 = scmp.eq.s32.totalorder %s24, 1
    %p126 = por %p124, %p125
    %p127 = scmp.ne.s32.totalorder %s118, %s119
    %p128 = scmp.eq.s32.totalorder %s24, 0
    %p129 = por %p127, %p128
    %p130 = scmp.ne.s32.totalorder %s118, %s119
    %p131 = scmp.eq.s32.totalorder %s25, 1
    %p132 = por %p130, %p131
    %p134 = scmp.ne.s32.totalorder %s119, %s133
    %p135 = scmp.eq.s32.totalorder %s25, 0
    %p136 = por %p134, %p135
    %s138 = sadd.s32 %s137, 1
    %p141 = scmp.eq.s32.totalorder %s19, 1
    %p142 = scmp.ne.s32.totalorder %s137, %s139
    %p143 = scmp.eq.s32.totalorder %s19, 0
    %p144 = por %p142, %p143
    %p145 = scmp.ne.s32.totalorder %s137, %s139
    %p146 = scmp.eq.s32.totalorder %s24, 1
    %p147 = por %p145, %p146
    %p148 = scmp.ne.s32.totalorder %s139, %s140
    %p149 = scmp.eq.s32.totalorder %s24, 0
    %p150 = por %p148, %p149
    %p151 = scmp.ne.s32.totalorder %s139, %s140
    %p152 = scmp.eq.s32.totalorder %s25, 1
    %p153 = por %p151, %p152
    %p155 = scmp.ne.s32.totalorder %s140, %s154
    %p156 = scmp.eq.s32.totalorder %s25, 0
    %p157 = por %p155, %p156
    %s158 = ssub.s32 %s19, %s26
    %p159 = scmp.eq.s32.totalorder %s158, 0
    %s161 = sadd.s32 %s160, 1
    %s162 = scalar_select %p159, %s160, %s161
    %p165 = pneg %p159
    %p166 = scmp.eq.s32.totalorder %s19, 1
    %p167 = por %p165, %p166
    %p168 = scmp.ne.s32.totalorder %s160, %s163
    %p169 = scmp.eq.s32.totalorder %s19, 0
    %p170 = por %p168, %p169
    %p171 = scmp.ne.s32.totalorder %s160, %s163
    %p172 = scmp.eq.s32.totalorder %s24, 1
    %p173 = por %p171, %p172
    %p174 = scmp.ne.s32.totalorder %s163, %s164
    %p175 = scmp.eq.s32.totalorder %s24, 0
    %p176 = por %p174, %p175
    %p177 = scmp.ne.s32.totalorder %s163, %s164
    %p178 = scmp.eq.s32.totalorder %s25, 1
    %p179 = por %p177, %p178
    %p181 = scmp.ne.s32.totalorder %s164, %s180
    %p182 = scmp.eq.s32.totalorder %s25, 0
    %p183 = por %p181, %p182
    %p184 = scmp.le.s32.totalorder 1, %s19
    %p185 = scmp.lt.s32.totalorder %s19, 3
    %p186 = pnand %p184, %p185
    %p187 = pneg %p186
    // Predicated region
    $region9: #{fwd.2} parent=5 // pred_check
      _
    $region10: #{fwd.2} parent=5 // pred_check_branch
      %189 = sbr.rel (%p186) target = $region12
    $region11: #{fwd.2} parent=5 // pred_region
      %s190 = ssub.s32 %s19, 1
      // Predicated region
      $region13: #{fwd.2} parent=11 // pred_check
        %p191 = pneg %p66
      $region14: #{fwd.2} parent=11 // pred_check_branch
        %193 = sbr.rel (%p191) target = $region16
      $region15: #{fwd.2} parent=11 // pred_region
        _
      $region16: #{fwd.2} parent=11 // pred_fallthru
        _
      // Predicated region
      $region17: #{fwd.2} parent=11 // pred_check
        %p194 = pneg %p87
      $region18: #{fwd.2} parent=11 // pred_check_branch
        %196 = sbr.rel (%p194) target = $region20
      $region19: #{fwd.2} parent=11 // pred_region
        _
      $region20: #{fwd.2} parent=11 // pred_fallthru
        _
      // Predicated region
      $region21: #{fwd.2} parent=11 // pred_check
        %p197 = pneg %p108
      $region22: #{fwd.2} parent=11 // pred_check_branch
        %199 = sbr.rel (%p197) target = $region24
      $region23: #{fwd.2} parent=11 // pred_region
        _
      $region24: #{fwd.2} parent=11 // pred_fallthru
        _
      // Predicated region
      $region25: #{fwd.2} parent=11 // pred_check
        %p200 = pneg %p129
      $region26: #{fwd.2} parent=11 // pred_check_branch
        %202 = sbr.rel (%p200) target = $region28
      $region27: #{fwd.2} parent=11 // pred_region
        _
      $region28: #{fwd.2} parent=11 // pred_fallthru
        _
      // Predicated region
      $region29: #{fwd.2} parent=11 // pred_check
        %p203 = pneg %p150
      $region30: #{fwd.2} parent=11 // pred_check_branch
        %205 = sbr.rel (%p203) target = $region32
      $region31: #{fwd.2} parent=11 // pred_region
        _
      $region32: #{fwd.2} parent=11 // pred_fallthru
        _
    $region12: #{fwd.2} parent=5 // pred_fallthru
      _
    %p206 = scmp.lt.s32.totalorder %s19, 2
    // Predicated region
    $region33: #{fwd.2} parent=5 // pred_check
      %p207 = pneg %p206
    $region34: #{fwd.2} parent=5 // pred_check_branch
      %209 = sbr.rel (%p207) target = $region36
    $region35: #{fwd.2} parent=5 // pred_region
      // Predicated region
      $region37: #{fwd.2} parent=35 // pred_check
        %p210 = pneg %p39
      $region38: #{fwd.2} parent=35 // pred_check_branch
        %212 = sbr.rel (%p210) target = $region40
      $region39: #{fwd.2} parent=35 // pred_region
        %p213 = scmp.lt.s32.totalorder %s19, 1
        %s214 = scalar_select %p213, %s19, 1
        %s215 = smul.addr %s214, 72
        %s216 = smul.addr %s215, 4
        %s217 = scalar_lea.vmem %s1, %s216
      $region40: #{fwd.2} parent=35 // pred_fallthru
        _
    $region36: #{fwd.2} parent=5 // pred_fallthru
      _
    %p218 = scmp.le.s32.totalorder 1, %s19
    %p219 = scmp.lt.s32.totalorder %s19, 3
    %p220 = pnand %p218, %p219
    %p221 = pneg %p220
    // Predicated region
    $region41: #{fwd.2} parent=5 // pred_check
      _
    $region42: #{fwd.2} parent=5 // pred_check_branch
      %223 = sbr.rel (%p220) target = $region44
    $region43: #{fwd.2} parent=5 // pred_region
      %s224 = ssub.s32 %s19, 1
      %p225 = scmp.lt.s32.totalorder %s24, 1
      %s226 = scalar_select %p225, %s24, 1
      %s227 = smul.addr %s226, 72
      %s228 = smul.addr %s227, 4
      %s229 = scalar_lea.vmem %s1, %s228
      %p230 = pneg %p45
      %p231 = pneg %p42
      %p232 = pneg %p66
      %p233 = pneg %p63
      %p234 = pneg %p87
      %p235 = pneg %p84
      %p236 = pneg %p108
      %p237 = pneg %p105
      %p238 = pneg %p129
      %p239 = pneg %p126
      %p240 = pneg %p150
      %p241 = pneg %p147
      %p242 = pneg %p176
      %p243 = pneg %p173
      %p244 = scmp.lt.s32.totalorder %s24, 1
      %s245 = scalar_select %p244, %s24, 1
      %s246 = smul.addr %s245, 8
      %s247 = smul.addr %s246, 8
      %s248 = scalar_lea.vmem %s7, %s247
      %p249 = scmp.lt.s32.totalorder %s24, 1
      %s250 = scalar_select %p249, %s24, 1
      %s251 = smul.addr %s250, 72
      %s252 = smul.addr %s251, 4
      %s253 = scalar_lea.vmem %s1, %s252
      %p254 = scmp.lt.s32.totalorder %s24, 1
      %s255 = scalar_select %p254, %s24, 1
      %s256 = smul.addr %s255, 8
      %s257 = smul.addr %s256, 8
      %s258 = scalar_lea.vmem %s7, %s257
      %v260 = vld [vmem:[%s253] sm:$0xf]
      %v261 = vld [vmem:[%s253 + $0x8] sm:$0xf]
      %v262 = vld [vmem:[%s253 + $0x10] sm:$0xf]
      %v263 = vld [vmem:[%s253 + $0x18] sm:$0xf]
      %v264 = vld [vmem:[%s253 + $0x20] sm:$0xf]
      %v265 = vld [vmem:[%s253 + $0x28] sm:$0xf]
      %v266 = vld [vmem:[%s253 + $0x30] sm:$0xf]
      %v267 = vld [vmem:[%s253 + $0x38] sm:$0xf]
      %v268 = vld [vmem:[%s2] sm:$0xf]
      %v269 = vld [vmem:[%s2 + $0x4] sm:$0xf]
      %v270 = vld [vmem:[%s2 + $0x8] sm:$0xf]
      %v271 = vld [vmem:[%s2 + $0xc] sm:$0xf]
      %v272 = vld [vmem:[%s2 + $0x10] sm:$0xf]
      %v273 = vld [vmem:[%s2 + $0x14] sm:$0xf]
      %v274 = vld [vmem:[%s2 + $0x18] sm:$0xf]
      %v275 = vld [vmem:[%s2 + $0x1c] sm:$0xf]
      %s276 = scalar_lea.vmem %s253, 72
      %v277 = vld [vmem:[%s276] sm:$0xf]
      %v278 = vld [vmem:[%s276 + $0x8] sm:$0xf]
      %v279 = vld [vmem:[%s276 + $0x10] sm:$0xf]
      %v280 = vld [vmem:[%s276 + $0x18] sm:$0xf]
      %v281 = vld [vmem:[%s276 + $0x20] sm:$0xf]
      %v282 = vld [vmem:[%s276 + $0x28] sm:$0xf]
      %v283 = vld [vmem:[%s276 + $0x30] sm:$0xf]
      %v284 = vld [vmem:[%s276 + $0x38] sm:$0xf]
      %s285 = scalar_lea.vmem %s2, 32
      %v286 = vld [vmem:[%s285] sm:$0xf]
      %v287 = vld [vmem:[%s285 + $0x4] sm:$0xf]
      %v288 = vld [vmem:[%s285 + $0x8] sm:$0xf]
      %v289 = vld [vmem:[%s285 + $0xc] sm:$0xf]
      %v290 = vld [vmem:[%s285 + $0x10] sm:$0xf]
      %v291 = vld [vmem:[%s285 + $0x14] sm:$0xf]
      %v292 = vld [vmem:[%s285 + $0x18] sm:$0xf]
      %v293 = vld [vmem:[%s285 + $0x1c] sm:$0xf]
      %v302 = vunpack.c.l.b16 %v277
      %v303 = vunpack.c.l.b16 %v278
      %v304 = vunpack.c.l.b16 %v279
      %v305 = vunpack.c.l.b16 %v280
      %v306 = vunpack.c.l.b16 %v281
      %v307 = vunpack.c.l.b16 %v282
      %v308 = vunpack.c.l.b16 %v283
      %v309 = vunpack.c.l.b16 %v284
      %v310 = vpack.c.b16 %v303, %v302
      %v311 = vpack.c.b16 %v305, %v304
      %v312 = vpack.c.b16 %v307, %v306
      %v313 = vpack.c.b16 %v309, %v308
      %v322 = vunpack.c.l.b16 %v286
      %v323 = vunpack.c.l.b16 %v287
      %v324 = vunpack.c.l.b16 %v288
      %v325 = vunpack.c.l.b16 %v289
      %v326 = vunpack.c.l.b16 %v290
      %v327 = vunpack.c.l.b16 %v291
      %v328 = vunpack.c.l.b16 %v292
      %v329 = vunpack.c.l.b16 %v293
      %v330 = vpack.c.b16 %v323, %v322
      %v331 = vpack.c.b16 %v325, %v324
      %v332 = vpack.c.b16 %v327, %v326
      %v333 = vpack.c.b16 %v329, %v328
      %vm338 = vcmask 523264
      %v340 = vsel %vm338, %v310, 0
      %v343 = vsel %vm338, %v311, 0
      %v346 = vsel %vm338, %v312, 0
      %v349 = vsel %vm338, %v313, 0
      %351 = vmatprep.subr.bf16.mxu0 0
      %352 = vmatpush1.bf16.msra.mxu0 0
      %353 = vmatprep.subr.bf16.mxu0 0
      %354 = vmatpush1.bf16.msra.mxu0 0
      %355 = vmatprep.subr.bf16.mxu0 0
      %356 = vmatpush1.bf16.msra.mxu0 0
      %357 = vmatprep.subr.bf16.mxu0 0
      %358 = vmatpush1.bf16.msra.mxu0 0
      %359 = vmatprep.subr.bf16.mxu0 0
      %360 = vmatpush1.bf16.msra.mxu0 %v333
      %361 = vmatprep.subr.bf16.mxu0 0
      %362 = vmatpush1.bf16.msra.mxu0 %v332
      %363 = vmatprep.subr.bf16.mxu0 0
      %364 = vmatpush1.bf16.msra.mxu0 %v331
      %365 = vmatprep.subr.bf16.mxu0 0
      %366 = vmatpush1.bf16.msra.mxu0 %v330
      %367 = vmatprep.subr.bf16.mxu0 0
      %368 = vmatpush2.bf16.msra.mxu0 0
      %369 = vmatprep.subr.bf16.mxu0 0
      %370 = vmatpush2.bf16.msra.mxu0 0
      %371 = vmatprep.subr.bf16.mxu0 0
      %372 = vmatpush2.bf16.msra.mxu0 0
      %373 = vmatprep.subr.bf16.mxu0 0
      %374 = vmatpush2.bf16.msra.mxu0 0
      %375 = vmatprep.subr.bf16.mxu0 0
      %376 = vmatpush2.bf16.msra.mxu0 0
      %377 = vmatprep.subr.bf16.mxu0 0
      %378 = vmatpush2.bf16.msra.mxu0 0
      %379 = vmatprep.subr.bf16.mxu0 0
      %380 = vmatpush2.bf16.msra.mxu0 0
      %381 = vmatprep.subr.bf16.mxu0 0
      %382 = vmatpush2.bf16.msra.mxu0 0
      %383 = vmatprep.mubr.bf16.mxu0 0
      %384 = vmatmul.mubr.bf16.gmra.mxu0 %v340
      %v385 = vpop.f32.mrf.mxu0
      %v386 = vadd.f32 0.0, %v385
      %v387 = vpop.f32.mrf.mxu0
      %v388 = vpop.f32.mrf.mxu0
      %v389 = vadd.f32 0.0, %v388
      %v390 = vpop.f32.mrf.mxu0
      %391 = vmatprep.mubr.bf16.mxu0 0
      %392 = vmatmul.mubr.bf16.gmra.mxu0 %v343
      %v393 = vpop.f32.mrf.mxu0
      %v394 = vadd.f32 0.0, %v393
      %v395 = vpop.f32.mrf.mxu0
      %v396 = vpop.f32.mrf.mxu0
      %v397 = vadd.f32 0.0, %v396
      %v398 = vpop.f32.mrf.mxu0
      %399 = vmatprep.mubr.bf16.mxu0 0
      %400 = vmatmul.mubr.bf16.gmra.mxu0 %v346
      %v401 = vpop.f32.mrf.mxu0
      %v402 = vadd.f32 0.0, %v401
      %v403 = vpop.f32.mrf.mxu0
      %v404 = vpop.f32.mrf.mxu0
      %v405 = vadd.f32 0.0, %v404
      %v406 = vpop.f32.mrf.mxu0
      %407 = vmatprep.mubr.bf16.mxu0 0
      %408 = vmatmul.mubr.bf16.gmra.mxu0 %v349
      %v409 = vpop.f32.mrf.mxu0
      %v410 = vadd.f32 0.0, %v409
      %v411 = vpop.f32.mrf.mxu0
      %v412 = vpop.f32.mrf.mxu0
      %v413 = vadd.f32 0.0, %v412
      %v414 = vpop.f32.mrf.mxu0
      %415 = vdwg.mxu0
      %v424 = vunpack.c.l.b16 %v260
      %v425 = vunpack.c.l.b16 %v261
      %v426 = vunpack.c.l.b16 %v262
      %v427 = vunpack.c.l.b16 %v263
      %v428 = vunpack.c.l.b16 %v264
      %v429 = vunpack.c.l.b16 %v265
      %v430 = vunpack.c.l.b16 %v266
      %v431 = vunpack.c.l.b16 %v267
      %v432 = vpack.c.b16 %v425, %v424
      %v433 = vpack.c.b16 %v427, %v426
      %v434 = vpack.c.b16 %v429, %v428
      %v435 = vpack.c.b16 %v431, %v430
      %v444 = vunpack.c.l.b16 %v268
      %v445 = vunpack.c.l.b16 %v269
      %v446 = vunpack.c.l.b16 %v270
      %v447 = vunpack.c.l.b16 %v271
      %v448 = vunpack.c.l.b16 %v272
      %v449 = vunpack.c.l.b16 %v273
      %v450 = vunpack.c.l.b16 %v274
      %v451 = vunpack.c.l.b16 %v275
      %v452 = vpack.c.b16 %v445, %v444
      %v453 = vpack.c.b16 %v447, %v446
      %v454 = vpack.c.b16 %v449, %v448
      %v455 = vpack.c.b16 %v451, %v450
      %v461 = vsel %vm338, %v432, 0
      %v464 = vsel %vm338, %v433, 0
      %v467 = vsel %vm338, %v434, 0
      %v470 = vsel %vm338, %v435, 0
      %472 = vmatprep.subr.bf16.mxu0 0
      %473 = vmatpush1.bf16.msra.mxu0 0
      %474 = vmatprep.subr.bf16.mxu0 0
      %475 = vmatpush1.bf16.msra.mxu0 0
      %476 = vmatprep.subr.bf16.mxu0 0
      %477 = vmatpush1.bf16.msra.mxu0 0
      %478 = vmatprep.subr.bf16.mxu0 0
      %479 = vmatpush1.bf16.msra.mxu0 0
      %480 = vmatprep.subr.bf16.mxu0 0
      %481 = vmatpush1.bf16.msra.mxu0 %v455
      %482 = vmatprep.subr.bf16.mxu0 0
      %483 = vmatpush1.bf16.msra.mxu0 %v454
      %484 = vmatprep.subr.bf16.mxu0 0
      %485 = vmatpush1.bf16.msra.mxu0 %v453
      %486 = vmatprep.subr.bf16.mxu0 0
      %487 = vmatpush1.bf16.msra.mxu0 %v452
      %488 = vmatprep.subr.bf16.mxu0 0
      %489 = vmatpush2.bf16.msra.mxu0 0
      %490 = vmatprep.subr.bf16.mxu0 0
      %491 = vmatpush2.bf16.msra.mxu0 0
      %492 = vmatprep.subr.bf16.mxu0 0
      %493 = vmatpush2.bf16.msra.mxu0 0
      %494 = vmatprep.subr.bf16.mxu0 0
      %495 = vmatpush2.bf16.msra.mxu0 0
      %496 = vmatprep.subr.bf16.mxu0 0
      %497 = vmatpush2.bf16.msra.mxu0 0
      %498 = vmatprep.subr.bf16.mxu0 0
      %499 = vmatpush2.bf16.msra.mxu0 0
      %500 = vmatprep.subr.bf16.mxu0 0
      %501 = vmatpush2.bf16.msra.mxu0 0
      %502 = vmatprep.subr.bf16.mxu0 0
      %503 = vmatpush2.bf16.msra.mxu0 0
      %504 = vmatprep.mubr.bf16.mxu0 0
      %505 = vmatmul.mubr.bf16.gmra.mxu0 %v461
      %v506 = vpop.f32.mrf.mxu0
      %v507 = vadd.f32 %v386, %v506
      %v508 = vpop.f32.mrf.mxu0
      %v509 = vpop.f32.mrf.mxu0
      %v510 = vadd.f32 %v389, %v509
      %v511 = vpop.f32.mrf.mxu0
      %512 = vmatprep.mubr.bf16.mxu0 0
      %513 = vmatmul.mubr.bf16.gmra.mxu0 %v464
      %v514 = vpop.f32.mrf.mxu0
      %v515 = vadd.f32 %v394, %v514
      %v516 = vpop.f32.mrf.mxu0
      %v517 = vpop.f32.mrf.mxu0
      %v518 = vadd.f32 %v397, %v517
      %v519 = vpop.f32.mrf.mxu0
      %520 = vmatprep.mubr.bf16.mxu0 0
      %521 = vmatmul.mubr.bf16.gmra.mxu0 %v467
      %v522 = vpop.f32.mrf.mxu0
      %v523 = vadd.f32 %v402, %v522
      %v524 = vpop.f32.mrf.mxu0
      %v525 = vpop.f32.mrf.mxu0
      %v526 = vadd.f32 %v405, %v525
      %v527 = vpop.f32.mrf.mxu0
      %528 = vmatprep.mubr.bf16.mxu0 0
      %529 = vmatmul.mubr.bf16.gmra.mxu0 %v470
      %v530 = vpop.f32.mrf.mxu0
      %v531 = vadd.f32 %v410, %v530
      %v532 = vpop.f32.mrf.mxu0
      %v533 = vpop.f32.mrf.mxu0
      %v534 = vadd.f32 %v413, %v533
      %v535 = vpop.f32.mrf.mxu0
      %536 = vdwg.mxu0
      %v537 = vld [vmem:[%s253] sm:$0xf]
      %v538 = vld [vmem:[%s253 + $0x4] sm:$0x1]
      %v539 = vld [vmem:[%s253 + $0x8] sm:$0xf]
      %v540 = vld [vmem:[%s253 + $0xc] sm:$0x1]
      %v541 = vld [vmem:[%s253 + $0x10] sm:$0xf]
      %v542 = vld [vmem:[%s253 + $0x14] sm:$0x1]
      %v543 = vld [vmem:[%s253 + $0x18] sm:$0xf]
      %v544 = vld [vmem:[%s253 + $0x1c] sm:$0x1]
      %v545 = vld [vmem:[%s253 + $0x20] sm:$0xf]
      %v546 = vld [vmem:[%s253 + $0x24] sm:$0x1]
      %v547 = vld [vmem:[%s253 + $0x28] sm:$0xf]
      %v548 = vld [vmem:[%s253 + $0x2c] sm:$0x1]
      %v549 = vld [vmem:[%s253 + $0x30] sm:$0xf]
      %v550 = vld [vmem:[%s253 + $0x34] sm:$0x1]
      %v551 = vld [vmem:[%s253 + $0x38] sm:$0xf]
      %v552 = vld [vmem:[%s253 + $0x3c] sm:$0x1]
      %vm553 = vsmask.f32 3328
      %vm554 = vsmask.f32 7440
      %vm555 = vmor %vm553, %vm554
      %v557 = vshrl.u32 %v537, 16
      %v559 = vrot.slane %v557, 4
      %v560 = vshll.u32 %v537, 16
      %v562 = vrot.slane %v560, 5
      %v563 = vor.u32 %v559, %v562
      %v564 = vrot.slane %v563, 4
      %v566 = vshll.u32 %v538, 16
      %v568 = vrot.slane %v566, 5
      %v569 = vsel %vm555, %v564, %v568
      %v571 = vshrl.u32 %v539, 16
      %v573 = vrot.slane %v571, 4
      %v574 = vshll.u32 %v539, 16
      %v576 = vrot.slane %v574, 5
      %v577 = vor.u32 %v573, %v576
      %v578 = vrot.slane %v577, 4
      %v580 = vshll.u32 %v540, 16
      %v582 = vrot.slane %v580, 5
      %v583 = vsel %vm555, %v578, %v582
      %v585 = vshrl.u32 %v541, 16
      %v587 = vrot.slane %v585, 4
      %v588 = vshll.u32 %v541, 16
      %v590 = vrot.slane %v588, 5
      %v591 = vor.u32 %v587, %v590
      %v592 = vrot.slane %v591, 4
      %v594 = vshll.u32 %v542, 16
      %v596 = vrot.slane %v594, 5
      %v597 = vsel %vm555, %v592, %v596
      %v599 = vshrl.u32 %v543, 16
      %v601 = vrot.slane %v599, 4
      %v602 = vshll.u32 %v543, 16
      %v604 = vrot.slane %v602, 5
      %v605 = vor.u32 %v601, %v604
      %v606 = vrot.slane %v605, 4
      %v608 = vshll.u32 %v544, 16
      %v610 = vrot.slane %v608, 5
      %v611 = vsel %vm555, %v606, %v610
      %v613 = vshrl.u32 %v545, 16
      %v615 = vrot.slane %v613, 4
      %v616 = vshll.u32 %v545, 16
      %v618 = vrot.slane %v616, 5
      %v619 = vor.u32 %v615, %v618
      %v620 = vrot.slane %v619, 4
      %v622 = vshll.u32 %v546, 16
      %v624 = vrot.slane %v622, 5
      %v625 = vsel %vm555, %v620, %v624
      %v627 = vshrl.u32 %v547, 16
      %v629 = vrot.slane %v627, 4
      %v630 = vshll.u32 %v547, 16
      %v632 = vrot.slane %v630, 5
      %v633 = vor.u32 %v629, %v632
      %v634 = vrot.slane %v633, 4
      %v636 = vshll.u32 %v548, 16
      %v638 = vrot.slane %v636, 5
      %v639 = vsel %vm555, %v634, %v638
      %v641 = vshrl.u32 %v549, 16
      %v643 = vrot.slane %v641, 4
      %v644 = vshll.u32 %v549, 16
      %v646 = vrot.slane %v644, 5
      %v647 = vor.u32 %v643, %v646
      %v648 = vrot.slane %v647, 4
      %v650 = vshll.u32 %v550, 16
      %v652 = vrot.slane %v650, 5
      %v653 = vsel %vm555, %v648, %v652
      %v655 = vshrl.u32 %v551, 16
      %v657 = vrot.slane %v655, 4
      %v658 = vshll.u32 %v551, 16
      %v660 = vrot.slane %v658, 5
      %v661 = vor.u32 %v657, %v660
      %v662 = vrot.slane %v661, 4
      %v664 = vshll.u32 %v552, 16
      %v666 = vrot.slane %v664, 5
      %v667 = vsel %vm555, %v662, %v666
      %s668 = scalar_lea.vmem %s2, 64
      %v669 = vld [vmem:[%s668] sm:$0xf]
      %v670 = vld [vmem:[%s668 + $0x4] sm:$0xf]
      %v671 = vld [vmem:[%s668 + $0x8] sm:$0xf]
      %v672 = vld [vmem:[%s668 + $0xc] sm:$0xf]
      %v673 = vld [vmem:[%s668 + $0x10] sm:$0xf]
      %v674 = vld [vmem:[%s668 + $0x14] sm:$0xf]
      %v675 = vld [vmem:[%s668 + $0x18] sm:$0xf]
      %v676 = vld [vmem:[%s668 + $0x1c] sm:$0xf]
      %v677 = vunpack.c.l.b16 %v569
      %v678 = vunpack.c.l.b16 %v583
      %v679 = vunpack.c.l.b16 %v597
      %v680 = vunpack.c.l.b16 %v611
      %v681 = vunpack.c.l.b16 %v625
      %v682 = vunpack.c.l.b16 %v639
      %v683 = vunpack.c.l.b16 %v653
      %v684 = vunpack.c.l.b16 %v667
      %v685 = vpack.c.b16 %v678, %v677
      %v686 = vpack.c.b16 %v680, %v679
      %v687 = vpack.c.b16 %v682, %v681
      %v688 = vpack.c.b16 %v684, %v683
      %v697 = vunpack.c.l.b16 %v669
      %v698 = vunpack.c.l.b16 %v670
      %v699 = vunpack.c.l.b16 %v671
      %v700 = vunpack.c.l.b16 %v672
      %v701 = vunpack.c.l.b16 %v673
      %v702 = vunpack.c.l.b16 %v674
      %v703 = vunpack.c.l.b16 %v675
      %v704 = vunpack.c.l.b16 %v676
      %v705 = vpack.c.b16 %v698, %v697
      %v706 = vpack.c.b16 %v700, %v699
      %v707 = vpack.c.b16 %v702, %v701
      %v708 = vpack.c.b16 %v704, %v703
      %v714 = vsel %vm338, %v685, 0
      %v717 = vsel %vm338, %v686, 0
      %v720 = vsel %vm338, %v687, 0
      %v723 = vsel %vm338, %v688, 0
      %725 = vmatprep.subr.bf16.mxu0 0
      %726 = vmatpush1.bf16.msra.mxu0 0
      %727 = vmatprep.subr.bf16.mxu0 0
      %728 = vmatpush1.bf16.msra.mxu0 0
      %729 = vmatprep.subr.bf16.mxu0 0
      %730 = vmatpush1.bf16.msra.mxu0 0
      %731 = vmatprep.subr.bf16.mxu0 0
      %732 = vmatpush1.bf16.msra.mxu0 0
      %733 = vmatprep.subr.bf16.mxu0 0
      %734 = vmatpush1.bf16.msra.mxu0 %v708
      %735 = vmatprep.subr.bf16.mxu0 0
      %736 = vmatpush1.bf16.msra.mxu0 %v707
      %737 = vmatprep.subr.bf16.mxu0 0
      %738 = vmatpush1.bf16.msra.mxu0 %v706
      %739 = vmatprep.subr.bf16.mxu0 0
      %740 = vmatpush1.bf16.msra.mxu0 %v705
      %741 = vmatprep.subr.bf16.mxu0 0
      %742 = vmatpush2.bf16.msra.mxu0 0
      %743 = vmatprep.subr.bf16.mxu0 0
      %744 = vmatpush2.bf16.msra.mxu0 0
      %745 = vmatprep.subr.bf16.mxu0 0
      %746 = vmatpush2.bf16.msra.mxu0 0
      %747 = vmatprep.subr.bf16.mxu0 0
      %748 = vmatpush2.bf16.msra.mxu0 0
      %749 = vmatprep.subr.bf16.mxu0 0
      %750 = vmatpush2.bf16.msra.mxu0 0
      %751 = vmatprep.subr.bf16.mxu0 0
      %752 = vmatpush2.bf16.msra.mxu0 0
      %753 = vmatprep.subr.bf16.mxu0 0
      %754 = vmatpush2.bf16.msra.mxu0 0
      %755 = vmatprep.subr.bf16.mxu0 0
      %756 = vmatpush2.bf16.msra.mxu0 0
      %757 = vmatprep.mubr.bf16.mxu0 0
      %758 = vmatmul.mubr.bf16.gmra.mxu0 %v714
      %v759 = vpop.f32.mrf.mxu0
      %v760 = vadd.f32 0.0, %v759
      %v761 = vpop.f32.mrf.mxu0
      %v762 = vpop.f32.mrf.mxu0
      %v763 = vadd.f32 0.0, %v762
      %v764 = vpop.f32.mrf.mxu0
      %765 = vmatprep.mubr.bf16.mxu0 0
      %766 = vmatmul.mubr.bf16.gmra.mxu0 %v717
      %v767 = vpop.f32.mrf.mxu0
      %v768 = vadd.f32 0.0, %v767
      %v769 = vpop.f32.mrf.mxu0
      %v770 = vpop.f32.mrf.mxu0
      %v771 = vadd.f32 0.0, %v770
      %v772 = vpop.f32.mrf.mxu0
      %773 = vmatprep.mubr.bf16.mxu0 0
      %774 = vmatmul.mubr.bf16.gmra.mxu0 %v720
      %v775 = vpop.f32.mrf.mxu0
      %v776 = vadd.f32 0.0, %v775
      %v777 = vpop.f32.mrf.mxu0
      %v778 = vpop.f32.mrf.mxu0
      %v779 = vadd.f32 0.0, %v778
      %v780 = vpop.f32.mrf.mxu0
      %781 = vmatprep.mubr.bf16.mxu0 0
      %782 = vmatmul.mubr.bf16.gmra.mxu0 %v723
      %v783 = vpop.f32.mrf.mxu0
      %v784 = vadd.f32 0.0, %v783
      %v785 = vpop.f32.mrf.mxu0
      %v786 = vpop.f32.mrf.mxu0
      %v787 = vadd.f32 0.0, %v786
      %v788 = vpop.f32.mrf.mxu0
      %789 = vdwg.mxu0
      %v790 = vadd.f32 %v507, %v760
      %v791 = vadd.f32 %v510, %v763
      %v792 = vadd.f32 %v515, %v768
      %v793 = vadd.f32 %v518, %v771
      %v794 = vadd.f32 %v523, %v776
      %v795 = vadd.f32 %v526, %v779
      %v796 = vadd.f32 %v531, %v784
      %v797 = vadd.f32 %v534, %v787
      %s798 = scalar_lea.vmem %s253, 144
      %v799 = vld [vmem:[%s798] sm:$0xf]
      %v800 = vld [vmem:[%s798 + $0x8] sm:$0xf]
      %v801 = vld [vmem:[%s798 + $0x10] sm:$0xf]
      %v802 = vld [vmem:[%s798 + $0x18] sm:$0xf]
      %v803 = vld [vmem:[%s798 + $0x20] sm:$0xf]
      %v804 = vld [vmem:[%s798 + $0x28] sm:$0xf]
      %v805 = vld [vmem:[%s798 + $0x30] sm:$0xf]
      %v806 = vld [vmem:[%s798 + $0x38] sm:$0xf]
      %s807 = scalar_lea.vmem %s2, 96
      %v808 = vld [vmem:[%s807] sm:$0xf]
      %v809 = vld [vmem:[%s807 + $0x4] sm:$0xf]
      %v810 = vld [vmem:[%s807 + $0x8] sm:$0xf]
      %v811 = vld [vmem:[%s807 + $0xc] sm:$0xf]
      %v812 = vld [vmem:[%s807 + $0x10] sm:$0xf]
      %v813 = vld [vmem:[%s807 + $0x14] sm:$0xf]
      %v814 = vld [vmem:[%s807 + $0x18] sm:$0xf]
      %v815 = vld [vmem:[%s807 + $0x1c] sm:$0xf]
      %v824 = vunpack.c.l.b16 %v799
      %v825 = vunpack.c.l.b16 %v800
      %v826 = vunpack.c.l.b16 %v801
      %v827 = vunpack.c.l.b16 %v802
      %v828 = vunpack.c.l.b16 %v803
      %v829 = vunpack.c.l.b16 %v804
      %v830 = vunpack.c.l.b16 %v805
      %v831 = vunpack.c.l.b16 %v806
      %v832 = vpack.c.b16 %v825, %v824
      %v833 = vpack.c.b16 %v827, %v826
      %v834 = vpack.c.b16 %v829, %v828
      %v835 = vpack.c.b16 %v831, %v830
      %v844 = vunpack.c.l.b16 %v808
      %v845 = vunpack.c.l.b16 %v809
      %v846 = vunpack.c.l.b16 %v810
      %v847 = vunpack.c.l.b16 %v811
      %v848 = vunpack.c.l.b16 %v812
      %v849 = vunpack.c.l.b16 %v813
      %v850 = vunpack.c.l.b16 %v814
      %v851 = vunpack.c.l.b16 %v815
      %v852 = vpack.c.b16 %v845, %v844
      %v853 = vpack.c.b16 %v847, %v846
      %v854 = vpack.c.b16 %v849, %v848
      %v855 = vpack.c.b16 %v851, %v850
      %v861 = vsel %vm338, %v832, 0
      %v864 = vsel %vm338, %v833, 0
      %v867 = vsel %vm338, %v834, 0
      %v870 = vsel %vm338, %v835, 0
      %872 = vmatprep.subr.bf16.mxu0 0
      %873 = vmatpush1.bf16.msra.mxu0 0
      %874 = vmatprep.subr.bf16.mxu0 0
      %875 = vmatpush1.bf16.msra.mxu0 0
      %876 = vmatprep.subr.bf16.mxu0 0
      %877 = vmatpush1.bf16.msra.mxu0 0
      %878 = vmatprep.subr.bf16.mxu0 0
      %879 = vmatpush1.bf16.msra.mxu0 0
      %880 = vmatprep.subr.bf16.mxu0 0
      %881 = vmatpush1.bf16.msra.mxu0 %v855
      %882 = vmatprep.subr.bf16.mxu0 0
      %883 = vmatpush1.bf16.msra.mxu0 %v854
      %884 = vmatprep.subr.bf16.mxu0 0
      %885 = vmatpush1.bf16.msra.mxu0 %v853
      %886 = vmatprep.subr.bf16.mxu0 0
      %887 = vmatpush1.bf16.msra.mxu0 %v852
      %888 = vmatprep.subr.bf16.mxu0 0
      %889 = vmatpush2.bf16.msra.mxu0 0
      %890 = vmatprep.subr.bf16.mxu0 0
      %891 = vmatpush2.bf16.msra.mxu0 0
      %892 = vmatprep.subr.bf16.mxu0 0
      %893 = vmatpush2.bf16.msra.mxu0 0
      %894 = vmatprep.subr.bf16.mxu0 0
      %895 = vmatpush2.bf16.msra.mxu0 0
      %896 = vmatprep.subr.bf16.mxu0 0
      %897 = vmatpush2.bf16.msra.mxu0 0
      %898 = vmatprep.subr.bf16.mxu0 0
      %899 = vmatpush2.bf16.msra.mxu0 0
      %900 = vmatprep.subr.bf16.mxu0 0
      %901 = vmatpush2.bf16.msra.mxu0 0
      %902 = vmatprep.subr.bf16.mxu0 0
      %903 = vmatpush2.bf16.msra.mxu0 0
      %904 = vmatprep.mubr.bf16.mxu0 0
      %905 = vmatmul.mubr.bf16.gmra.mxu0 %v861
      %v906 = vpop.f32.mrf.mxu0
      %v907 = vadd.f32 0.0, %v906
      %v908 = vpop.f32.mrf.mxu0
      %v909 = vpop.f32.mrf.mxu0
      %v910 = vadd.f32 0.0, %v909
      %v911 = vpop.f32.mrf.mxu0
      %912 = vmatprep.mubr.bf16.mxu0 0
      %913 = vmatmul.mubr.bf16.gmra.mxu0 %v864
      %v914 = vpop.f32.mrf.mxu0
      %v915 = vadd.f32 0.0, %v914
      %v916 = vpop.f32.mrf.mxu0
      %v917 = vpop.f32.mrf.mxu0
      %v918 = vadd.f32 0.0, %v917
      %v919 = vpop.f32.mrf.mxu0
      %920 = vmatprep.mubr.bf16.mxu0 0
      %921 = vmatmul.mubr.bf16.gmra.mxu0 %v867
      %v922 = vpop.f32.mrf.mxu0
      %v923 = vadd.f32 0.0, %v922
      %v924 = vpop.f32.mrf.mxu0
      %v925 = vpop.f32.mrf.mxu0
      %v926 = vadd.f32 0.0, %v925
      %v927 = vpop.f32.mrf.mxu0
      %928 = vmatprep.mubr.bf16.mxu0 0
      %929 = vmatmul.mubr.bf16.gmra.mxu0 %v870
      %v930 = vpop.f32.mrf.mxu0
      %v931 = vadd.f32 0.0, %v930
      %v932 = vpop.f32.mrf.mxu0
      %v933 = vpop.f32.mrf.mxu0
      %v934 = vadd.f32 0.0, %v933
      %v935 = vpop.f32.mrf.mxu0
      %936 = vdwg.mxu0
      %v937 = vadd.f32 %v790, %v907
      %v938 = vadd.f32 %v791, %v910
      %v939 = vadd.f32 %v792, %v915
      %v940 = vadd.f32 %v793, %v918
      %v941 = vadd.f32 %v794, %v923
      %v942 = vadd.f32 %v795, %v926
      %v943 = vadd.f32 %v796, %v931
      %v944 = vadd.f32 %v797, %v934
      %s945 = scalar_lea.vmem %s253, 216
      %v946 = vld [vmem:[%s945] sm:$0xf]
      %v947 = vld [vmem:[%s945 + $0x8] sm:$0xf]
      %v948 = vld [vmem:[%s945 + $0x10] sm:$0xf]
      %v949 = vld [vmem:[%s945 + $0x18] sm:$0xf]
      %v950 = vld [vmem:[%s945 + $0x20] sm:$0xf]
      %v951 = vld [vmem:[%s945 + $0x28] sm:$0xf]
      %v952 = vld [vmem:[%s945 + $0x30] sm:$0xf]
      %v953 = vld [vmem:[%s945 + $0x38] sm:$0xf]
      %s954 = scalar_lea.vmem %s2, 128
      %v955 = vld [vmem:[%s954] sm:$0xf]
      %v956 = vld [vmem:[%s954 + $0x4] sm:$0xf]
      %v957 = vld [vmem:[%s954 + $0x8] sm:$0xf]
      %v958 = vld [vmem:[%s954 + $0xc] sm:$0xf]
      %v959 = vld [vmem:[%s954 + $0x10] sm:$0xf]
      %v960 = vld [vmem:[%s954 + $0x14] sm:$0xf]
      %v961 = vld [vmem:[%s954 + $0x18] sm:$0xf]
      %v962 = vld [vmem:[%s954 + $0x1c] sm:$0xf]
      %v971 = vunpack.c.l.b16 %v946
      %v972 = vunpack.c.l.b16 %v947
      %v973 = vunpack.c.l.b16 %v948
      %v974 = vunpack.c.l.b16 %v949
      %v975 = vunpack.c.l.b16 %v950
      %v976 = vunpack.c.l.b16 %v951
      %v977 = vunpack.c.l.b16 %v952
      %v978 = vunpack.c.l.b16 %v953
      %v979 = vpack.c.b16 %v972, %v971
      %v980 = vpack.c.b16 %v974, %v973
      %v981 = vpack.c.b16 %v976, %v975
      %v982 = vpack.c.b16 %v978, %v977
      %v991 = vunpack.c.l.b16 %v955
      %v992 = vunpack.c.l.b16 %v956
      %v993 = vunpack.c.l.b16 %v957
      %v994 = vunpack.c.l.b16 %v958
      %v995 = vunpack.c.l.b16 %v959
      %v996 = vunpack.c.l.b16 %v960
      %v997 = vunpack.c.l.b16 %v961
      %v998 = vunpack.c.l.b16 %v962
      %v999 = vpack.c.b16 %v992, %v991
      %v1000 = vpack.c.b16 %v994, %v993
      %v1001 = vpack.c.b16 %v996, %v995
      %v1002 = vpack.c.b16 %v998, %v997
      %v1008 = vsel %vm338, %v979, 0
      %v1011 = vsel %vm338, %v980, 0
      %v1014 = vsel %vm338, %v981, 0
      %v1017 = vsel %vm338, %v982, 0
      %1019 = vmatprep.subr.bf16.mxu0 0
      %1020 = vmatpush1.bf16.msra.mxu0 0
      %1021 = vmatprep.subr.bf16.mxu0 0
      %1022 = vmatpush1.bf16.msra.mxu0 0
      %1023 = vmatprep.subr.bf16.mxu0 0
      %1024 = vmatpush1.bf16.msra.mxu0 0
      %1025 = vmatprep.subr.bf16.mxu0 0
      %1026 = vmatpush1.bf16.msra.mxu0 0
      %1027 = vmatprep.subr.bf16.mxu0 0
      %1028 = vmatpush1.bf16.msra.mxu0 %v1002
      %1029 = vmatprep.subr.bf16.mxu0 0
      %1030 = vmatpush1.bf16.msra.mxu0 %v1001
      %1031 = vmatprep.subr.bf16.mxu0 0
      %1032 = vmatpush1.bf16.msra.mxu0 %v1000
      %1033 = vmatprep.subr.bf16.mxu0 0
      %1034 = vmatpush1.bf16.msra.mxu0 %v999
      %1035 = vmatprep.subr.bf16.mxu0 0
      %1036 = vmatpush2.bf16.msra.mxu0 0
      %1037 = vmatprep.subr.bf16.mxu0 0
      %1038 = vmatpush2.bf16.msra.mxu0 0
      %1039 = vmatprep.subr.bf16.mxu0 0
      %1040 = vmatpush2.bf16.msra.mxu0 0
      %1041 = vmatprep.subr.bf16.mxu0 0
      %1042 = vmatpush2.bf16.msra.mxu0 0
      %1043 = vmatprep.subr.bf16.mxu0 0
      %1044 = vmatpush2.bf16.msra.mxu0 0
      %1045 = vmatprep.subr.bf16.mxu0 0
      %1046 = vmatpush2.bf16.msra.mxu0 0
      %1047 = vmatprep.subr.bf16.mxu0 0
      %1048 = vmatpush2.bf16.msra.mxu0 0
      %1049 = vmatprep.subr.bf16.mxu0 0
      %1050 = vmatpush2.bf16.msra.mxu0 0
      %1051 = vmatprep.mubr.bf16.mxu0 0
      %1052 = vmatmul.mubr.bf16.gmra.mxu0 %v1008
      %v1053 = vpop.f32.mrf.mxu0
      %v1054 = vadd.f32 0.0, %v1053
      %v1055 = vpop.f32.mrf.mxu0
      %v1056 = vpop.f32.mrf.mxu0
      %v1057 = vadd.f32 0.0, %v1056
      %v1058 = vpop.f32.mrf.mxu0
      %1059 = vmatprep.mubr.bf16.mxu0 0
      %1060 = vmatmul.mubr.bf16.gmra.mxu0 %v1011
      %v1061 = vpop.f32.mrf.mxu0
      %v1062 = vadd.f32 0.0, %v1061
      %v1063 = vpop.f32.mrf.mxu0
      %v1064 = vpop.f32.mrf.mxu0
      %v1065 = vadd.f32 0.0, %v1064
      %v1066 = vpop.f32.mrf.mxu0
      %1067 = vmatprep.mubr.bf16.mxu0 0
      %1068 = vmatmul.mubr.bf16.gmra.mxu0 %v1014
      %v1069 = vpop.f32.mrf.mxu0
      %v1070 = vadd.f32 0.0, %v1069
      %v1071 = vpop.f32.mrf.mxu0
      %v1072 = vpop.f32.mrf.mxu0
      %v1073 = vadd.f32 0.0, %v1072
      %v1074 = vpop.f32.mrf.mxu0
      %1075 = vmatprep.mubr.bf16.mxu0 0
      %1076 = vmatmul.mubr.bf16.gmra.mxu0 %v1017
      %v1077 = vpop.f32.mrf.mxu0
      %v1078 = vadd.f32 0.0, %v1077
      %v1079 = vpop.f32.mrf.mxu0
      %v1080 = vpop.f32.mrf.mxu0
      %v1081 = vadd.f32 0.0, %v1080
      %v1082 = vpop.f32.mrf.mxu0
      %1083 = vdwg.mxu0
      %v1084 = vadd.f32 %v937, %v1054
      %v1085 = vadd.f32 %v938, %v1057
      %v1086 = vadd.f32 %v939, %v1062
      %v1087 = vadd.f32 %v940, %v1065
      %v1088 = vadd.f32 %v941, %v1070
      %v1089 = vadd.f32 %v942, %v1073
      %v1090 = vadd.f32 %v943, %v1078
      %v1091 = vadd.f32 %v944, %v1081
      %v1092 = vld [vmem:[%s798] sm:$0xf]
      %v1093 = vld [vmem:[%s798 + $0x4] sm:$0x1]
      %v1094 = vld [vmem:[%s798 + $0x8] sm:$0xf]
      %v1095 = vld [vmem:[%s798 + $0xc] sm:$0x1]
      %v1096 = vld [vmem:[%s798 + $0x10] sm:$0xf]
      %v1097 = vld [vmem:[%s798 + $0x14] sm:$0x1]
      %v1098 = vld [vmem:[%s798 + $0x18] sm:$0xf]
      %v1099 = vld [vmem:[%s798 + $0x1c] sm:$0x1]
      %v1100 = vld [vmem:[%s798 + $0x20] sm:$0xf]
      %v1101 = vld [vmem:[%s798 + $0x24] sm:$0x1]
      %v1102 = vld [vmem:[%s798 + $0x28] sm:$0xf]
      %v1103 = vld [vmem:[%s798 + $0x2c] sm:$0x1]
      %v1104 = vld [vmem:[%s798 + $0x30] sm:$0xf]
      %v1105 = vld [vmem:[%s798 + $0x34] sm:$0x1]
      %v1106 = vld [vmem:[%s798 + $0x38] sm:$0xf]
      %v1107 = vld [vmem:[%s798 + $0x3c] sm:$0x1]
      %v1109 = vshrl.u32 %v1092, 16
      %v1111 = vrot.slane %v1109, 4
      %v1112 = vshll.u32 %v1092, 16
      %v1114 = vrot.slane %v1112, 5
      %v1115 = vor.u32 %v1111, %v1114
      %v1116 = vrot.slane %v1115, 4
      %v1118 = vshll.u32 %v1093, 16
      %v1120 = vrot.slane %v1118, 5
      %v1121 = vsel %vm555, %v1116, %v1120
      %v1123 = vshrl.u32 %v1094, 16
      %v1125 = vrot.slane %v1123, 4
      %v1126 = vshll.u32 %v1094, 16
      %v1128 = vrot.slane %v1126, 5
      %v1129 = vor.u32 %v1125, %v1128
      %v1130 = vrot.slane %v1129, 4
      %v1132 = vshll.u32 %v1095, 16
      %v1134 = vrot.slane %v1132, 5
      %v1135 = vsel %vm555, %v1130, %v1134
      %v1137 = vshrl.u32 %v1096, 16
      %v1139 = vrot.slane %v1137, 4
      %v1140 = vshll.u32 %v1096, 16
      %v1142 = vrot.slane %v1140, 5
      %v1143 = vor.u32 %v1139, %v1142
      %v1144 = vrot.slane %v1143, 4
      %v1146 = vshll.u32 %v1097, 16
      %v1148 = vrot.slane %v1146, 5
      %v1149 = vsel %vm555, %v1144, %v1148
      %v1151 = vshrl.u32 %v1098, 16
      %v1153 = vrot.slane %v1151, 4
      %v1154 = vshll.u32 %v1098, 16
      %v1156 = vrot.slane %v1154, 5
      %v1157 = vor.u32 %v1153, %v1156
      %v1158 = vrot.slane %v1157, 4
      %v1160 = vshll.u32 %v1099, 16
      %v1162 = vrot.slane %v1160, 5
      %v1163 = vsel %vm555, %v1158, %v1162
      %v1165 = vshrl.u32 %v1100, 16
      %v1167 = vrot.slane %v1165, 4
      %v1168 = vshll.u32 %v1100, 16
      %v1170 = vrot.slane %v1168, 5
      %v1171 = vor.u32 %v1167, %v1170
      %v1172 = vrot.slane %v1171, 4
      %v1174 = vshll.u32 %v1101, 16
      %v1176 = vrot.slane %v1174, 5
      %v1177 = vsel %vm555, %v1172, %v1176
      %v1179 = vshrl.u32 %v1102, 16
      %v1181 = vrot.slane %v1179, 4
      %v1182 = vshll.u32 %v1102, 16
      %v1184 = vrot.slane %v1182, 5
      %v1185 = vor.u32 %v1181, %v1184
      %v1186 = vrot.slane %v1185, 4
      %v1188 = vshll.u32 %v1103, 16
      %v1190 = vrot.slane %v1188, 5
      %v1191 = vsel %vm555, %v1186, %v1190
      %v1193 = vshrl.u32 %v1104, 16
      %v1195 = vrot.slane %v1193, 4
      %v1196 = vshll.u32 %v1104, 16
      %v1198 = vrot.slane %v1196, 5
      %v1199 = vor.u32 %v1195, %v1198
      %v1200 = vrot.slane %v1199, 4
      %v1202 = vshll.u32 %v1105, 16
      %v1204 = vrot.slane %v1202, 5
      %v1205 = vsel %vm555, %v1200, %v1204
      %v1207 = vshrl.u32 %v1106, 16
      %v1209 = vrot.slane %v1207, 4
      %v1210 = vshll.u32 %v1106, 16
      %v1212 = vrot.slane %v1210, 5
      %v1213 = vor.u32 %v1209, %v1212
      %v1214 = vrot.slane %v1213, 4
      %v1216 = vshll.u32 %v1107, 16
      %v1218 = vrot.slane %v1216, 5
      %v1219 = vsel %vm555, %v1214, %v1218
      %s1220 = scalar_lea.vmem %s2, 160
      %v1221 = vld [vmem:[%s1220] sm:$0xf]
      %v1222 = vld [vmem:[%s1220 + $0x4] sm:$0xf]
      %v1223 = vld [vmem:[%s1220 + $0x8] sm:$0xf]
      %v1224 = vld [vmem:[%s1220 + $0xc] sm:$0xf]
      %v1225 = vld [vmem:[%s1220 + $0x10] sm:$0xf]
      %v1226 = vld [vmem:[%s1220 + $0x14] sm:$0xf]
      %v1227 = vld [vmem:[%s1220 + $0x18] sm:$0xf]
      %v1228 = vld [vmem:[%s1220 + $0x1c] sm:$0xf]
      %v1229 = vunpack.c.l.b16 %v1121
      %v1230 = vunpack.c.l.b16 %v1135
      %v1231 = vunpack.c.l.b16 %v1149
      %v1232 = vunpack.c.l.b16 %v1163
      %v1233 = vunpack.c.l.b16 %v1177
      %v1234 = vunpack.c.l.b16 %v1191
      %v1235 = vunpack.c.l.b16 %v1205
      %v1236 = vunpack.c.l.b16 %v1219
      %v1237 = vpack.c.b16 %v1230, %v1229
      %v1238 = vpack.c.b16 %v1232, %v1231
      %v1239 = vpack.c.b16 %v1234, %v1233
      %v1240 = vpack.c.b16 %v1236, %v1235
      %v1249 = vunpack.c.l.b16 %v1221
      %v1250 = vunpack.c.l.b16 %v1222
      %v1251 = vunpack.c.l.b16 %v1223
      %v1252 = vunpack.c.l.b16 %v1224
      %v1253 = vunpack.c.l.b16 %v1225
      %v1254 = vunpack.c.l.b16 %v1226
      %v1255 = vunpack.c.l.b16 %v1227
      %v1256 = vunpack.c.l.b16 %v1228
      %v1257 = vpack.c.b16 %v1250, %v1249
      %v1258 = vpack.c.b16 %v1252, %v1251
      %v1259 = vpack.c.b16 %v1254, %v1253
      %v1260 = vpack.c.b16 %v1256, %v1255
      %v1266 = vsel %vm338, %v1237, 0
      %v1269 = vsel %vm338, %v1238, 0
      %v1272 = vsel %vm338, %v1239, 0
      %v1275 = vsel %vm338, %v1240, 0
      %1277 = vmatprep.subr.bf16.mxu0 0
      %1278 = vmatpush1.bf16.msra.mxu0 0
      %1279 = vmatprep.subr.bf16.mxu0 0
      %1280 = vmatpush1.bf16.msra.mxu0 0
      %1281 = vmatprep.subr.bf16.mxu0 0
      %1282 = vmatpush1.bf16.msra.mxu0 0
      %1283 = vmatprep.subr.bf16.mxu0 0
      %1284 = vmatpush1.bf16.msra.mxu0 0
      %1285 = vmatprep.subr.bf16.mxu0 0
      %1286 = vmatpush1.bf16.msra.mxu0 %v1260
      %1287 = vmatprep.subr.bf16.mxu0 0
      %1288 = vmatpush1.bf16.msra.mxu0 %v1259
      %1289 = vmatprep.subr.bf16.mxu0 0
      %1290 = vmatpush1.bf16.msra.mxu0 %v1258
      %1291 = vmatprep.subr.bf16.mxu0 0
      %1292 = vmatpush1.bf16.msra.mxu0 %v1257
      %1293 = vmatprep.subr.bf16.mxu0 0
      %1294 = vmatpush2.bf16.msra.mxu0 0
      %1295 = vmatprep.subr.bf16.mxu0 0
      %1296 = vmatpush2.bf16.msra.mxu0 0
      %1297 = vmatprep.subr.bf16.mxu0 0
      %1298 = vmatpush2.bf16.msra.mxu0 0
      %1299 = vmatprep.subr.bf16.mxu0 0
      %1300 = vmatpush2.bf16.msra.mxu0 0
      %1301 = vmatprep.subr.bf16.mxu0 0
      %1302 = vmatpush2.bf16.msra.mxu0 0
      %1303 = vmatprep.subr.bf16.mxu0 0
      %1304 = vmatpush2.bf16.msra.mxu0 0
      %1305 = vmatprep.subr.bf16.mxu0 0
      %1306 = vmatpush2.bf16.msra.mxu0 0
      %1307 = vmatprep.subr.bf16.mxu0 0
      %1308 = vmatpush2.bf16.msra.mxu0 0
      %1309 = vmatprep.mubr.bf16.mxu0 0
      %1310 = vmatmul.mubr.bf16.gmra.mxu0 %v1266
      %v1311 = vpop.f32.mrf.mxu0
      %v1312 = vadd.f32 0.0, %v1311
      %v1313 = vpop.f32.mrf.mxu0
      %v1314 = vpop.f32.mrf.mxu0
      %v1315 = vadd.f32 0.0, %v1314
      %v1316 = vpop.f32.mrf.mxu0
      %1317 = vmatprep.mubr.bf16.mxu0 0
      %1318 = vmatmul.mubr.bf16.gmra.mxu0 %v1269
      %v1319 = vpop.f32.mrf.mxu0
      %v1320 = vadd.f32 0.0, %v1319
      %v1321 = vpop.f32.mrf.mxu0
      %v1322 = vpop.f32.mrf.mxu0
      %v1323 = vadd.f32 0.0, %v1322
      %v1324 = vpop.f32.mrf.mxu0
      %1325 = vmatprep.mubr.bf16.mxu0 0
      %1326 = vmatmul.mubr.bf16.gmra.mxu0 %v1272
      %v1327 = vpop.f32.mrf.mxu0
      %v1328 = vadd.f32 0.0, %v1327
      %v1329 = vpop.f32.mrf.mxu0
      %v1330 = vpop.f32.mrf.mxu0
      %v1331 = vadd.f32 0.0, %v1330
      %v1332 = vpop.f32.mrf.mxu0
      %1333 = vmatprep.mubr.bf16.mxu0 0
      %1334 = vmatmul.mubr.bf16.gmra.mxu0 %v1275
      %v1335 = vpop.f32.mrf.mxu0
      %v1336 = vadd.f32 0.0, %v1335
      %v1337 = vpop.f32.mrf.mxu0
      %v1338 = vpop.f32.mrf.mxu0
      %v1339 = vadd.f32 0.0, %v1338
      %v1340 = vpop.f32.mrf.mxu0
      %1341 = vdwg.mxu0
      %v1342 = vadd.f32 %v1084, %v1312
      %v1343 = vadd.f32 %v1085, %v1315
      %v1344 = vadd.f32 %v1086, %v1320
      %v1345 = vadd.f32 %v1087, %v1323
      %v1346 = vadd.f32 %v1088, %v1328
      %v1347 = vadd.f32 %v1089, %v1331
      %v1348 = vadd.f32 %v1090, %v1336
      %v1349 = vadd.f32 %v1091, %v1339
      %s1350 = scalar_lea.vmem %s253, 8
      %v1351 = vld [vmem:[%s1350] sm:$0xf]
      %v1352 = vld [vmem:[%s1350 + $0x8] sm:$0xf]
      %v1353 = vld [vmem:[%s1350 + $0x10] sm:$0xf]
      %v1354 = vld [vmem:[%s1350 + $0x18] sm:$0xf]
      %v1355 = vld [vmem:[%s1350 + $0x20] sm:$0xf]
      %v1356 = vld [vmem:[%s1350 + $0x28] sm:$0xf]
      %v1357 = vld [vmem:[%s1350 + $0x30] sm:$0xf]
      %v1358 = vld [vmem:[%s1350 + $0x38] sm:$0xf]
      %s1359 = scalar_lea.vmem %s2, 192
      %v1360 = vld [vmem:[%s1359] sm:$0xf]
      %v1361 = vld [vmem:[%s1359 + $0x4] sm:$0xf]
      %v1362 = vld [vmem:[%s1359 + $0x8] sm:$0xf]
      %v1363 = vld [vmem:[%s1359 + $0xc] sm:$0xf]
      %v1364 = vld [vmem:[%s1359 + $0x10] sm:$0xf]
      %v1365 = vld [vmem:[%s1359 + $0x14] sm:$0xf]
      %v1366 = vld [vmem:[%s1359 + $0x18] sm:$0xf]
      %v1367 = vld [vmem:[%s1359 + $0x1c] sm:$0xf]
      %v1376 = vunpack.c.l.b16 %v1351
      %v1377 = vunpack.c.l.b16 %v1352
      %v1378 = vunpack.c.l.b16 %v1353
      %v1379 = vunpack.c.l.b16 %v1354
      %v1380 = vunpack.c.l.b16 %v1355
      %v1381 = vunpack.c.l.b16 %v1356
      %v1382 = vunpack.c.l.b16 %v1357
      %v1383 = vunpack.c.l.b16 %v1358
      %v1384 = vpack.c.b16 %v1377, %v1376
      %v1385 = vpack.c.b16 %v1379, %v1378
      %v1386 = vpack.c.b16 %v1381, %v1380
      %v1387 = vpack.c.b16 %v1383, %v1382
      %v1396 = vunpack.c.l.b16 %v1360
      %v1397 = vunpack.c.l.b16 %v1361
      %v1398 = vunpack.c.l.b16 %v1362
      %v1399 = vunpack.c.l.b16 %v1363
      %v1400 = vunpack.c.l.b16 %v1364
      %v1401 = vunpack.c.l.b16 %v1365
      %v1402 = vunpack.c.l.b16 %v1366
      %v1403 = vunpack.c.l.b16 %v1367
      %v1404 = vpack.c.b16 %v1397, %v1396
      %v1405 = vpack.c.b16 %v1399, %v1398
      %v1406 = vpack.c.b16 %v1401, %v1400
      %v1407 = vpack.c.b16 %v1403, %v1402
      %v1413 = vsel %vm338, %v1384, 0
      %v1416 = vsel %vm338, %v1385, 0
      %v1419 = vsel %vm338, %v1386, 0
      %v1422 = vsel %vm338, %v1387, 0
      %1424 = vmatprep.subr.bf16.mxu0 0
      %1425 = vmatpush1.bf16.msra.mxu0 0
      %1426 = vmatprep.subr.bf16.mxu0 0
      %1427 = vmatpush1.bf16.msra.mxu0 0
      %1428 = vmatprep.subr.bf16.mxu0 0
      %1429 = vmatpush1.bf16.msra.mxu0 0
      %1430 = vmatprep.subr.bf16.mxu0 0
      %1431 = vmatpush1.bf16.msra.mxu0 0
      %1432 = vmatprep.subr.bf16.mxu0 0
      %1433 = vmatpush1.bf16.msra.mxu0 %v1407
      %1434 = vmatprep.subr.bf16.mxu0 0
      %1435 = vmatpush1.bf16.msra.mxu0 %v1406
      %1436 = vmatprep.subr.bf16.mxu0 0
      %1437 = vmatpush1.bf16.msra.mxu0 %v1405
      %1438 = vmatprep.subr.bf16.mxu0 0
      %1439 = vmatpush1.bf16.msra.mxu0 %v1404
      %1440 = vmatprep.subr.bf16.mxu0 0
      %1441 = vmatpush2.bf16.msra.mxu0 0
      %1442 = vmatprep.subr.bf16.mxu0 0
      %1443 = vmatpush2.bf16.msra.mxu0 0
      %1444 = vmatprep.subr.bf16.mxu0 0
      %1445 = vmatpush2.bf16.msra.mxu0 0
      %1446 = vmatprep.subr.bf16.mxu0 0
      %1447 = vmatpush2.bf16.msra.mxu0 0
      %1448 = vmatprep.subr.bf16.mxu0 0
      %1449 = vmatpush2.bf16.msra.mxu0 0
      %1450 = vmatprep.subr.bf16.mxu0 0
      %1451 = vmatpush2.bf16.msra.mxu0 0
      %1452 = vmatprep.subr.bf16.mxu0 0
      %1453 = vmatpush2.bf16.msra.mxu0 0
      %1454 = vmatprep.subr.bf16.mxu0 0
      %1455 = vmatpush2.bf16.msra.mxu0 0
      %1456 = vmatprep.mubr.bf16.mxu0 0
      %1457 = vmatmul.mubr.bf16.gmra.mxu0 %v1413
      %v1458 = vpop.f32.mrf.mxu0
      %v1459 = vadd.f32 0.0, %v1458
      %v1460 = vpop.f32.mrf.mxu0
      %v1461 = vpop.f32.mrf.mxu0
      %v1462 = vadd.f32 0.0, %v1461
      %v1463 = vpop.f32.mrf.mxu0
      %1464 = vmatprep.mubr.bf16.mxu0 0
      %1465 = vmatmul.mubr.bf16.gmra.mxu0 %v1416
      %v1466 = vpop.f32.mrf.mxu0
      %v1467 = vadd.f32 0.0, %v1466
      %v1468 = vpop.f32.mrf.mxu0
      %v1469 = vpop.f32.mrf.mxu0
      %v1470 = vadd.f32 0.0, %v1469
      %v1471 = vpop.f32.mrf.mxu0
      %1472 = vmatprep.mubr.bf16.mxu0 0
      %1473 = vmatmul.mubr.bf16.gmra.mxu0 %v1419
      %v1474 = vpop.f32.mrf.mxu0
      %v1475 = vadd.f32 0.0, %v1474
      %v1476 = vpop.f32.mrf.mxu0
      %v1477 = vpop.f32.mrf.mxu0
      %v1478 = vadd.f32 0.0, %v1477
      %v1479 = vpop.f32.mrf.mxu0
      %1480 = vmatprep.mubr.bf16.mxu0 0
      %1481 = vmatmul.mubr.bf16.gmra.mxu0 %v1422
      %v1482 = vpop.f32.mrf.mxu0
      %v1483 = vadd.f32 0.0, %v1482
      %v1484 = vpop.f32.mrf.mxu0
      %v1485 = vpop.f32.mrf.mxu0
      %v1486 = vadd.f32 0.0, %v1485
      %v1487 = vpop.f32.mrf.mxu0
      %1488 = vdwg.mxu0
      %v1489 = vadd.f32 %v1342, %v1459
      %v1490 = vadd.f32 %v1343, %v1462
      %v1491 = vadd.f32 %v1344, %v1467
      %v1492 = vadd.f32 %v1345, %v1470
      %v1493 = vadd.f32 %v1346, %v1475
      %v1494 = vadd.f32 %v1347, %v1478
      %v1495 = vadd.f32 %v1348, %v1483
      %v1496 = vadd.f32 %v1349, %v1486
      %s1497 = scalar_lea.vmem %s253, 80
      %v1498 = vld [vmem:[%s1497] sm:$0xf]
      %v1499 = vld [vmem:[%s1497 + $0x8] sm:$0xf]
      %v1500 = vld [vmem:[%s1497 + $0x10] sm:$0xf]
      %v1501 = vld [vmem:[%s1497 + $0x18] sm:$0xf]
      %v1502 = vld [vmem:[%s1497 + $0x20] sm:$0xf]
      %v1503 = vld [vmem:[%s1497 + $0x28] sm:$0xf]
      %v1504 = vld [vmem:[%s1497 + $0x30] sm:$0xf]
      %v1505 = vld [vmem:[%s1497 + $0x38] sm:$0xf]
      %s1506 = scalar_lea.vmem %s2, 224
      %v1507 = vld [vmem:[%s1506] sm:$0xf]
      %v1508 = vld [vmem:[%s1506 + $0x4] sm:$0xf]
      %v1509 = vld [vmem:[%s1506 + $0x8] sm:$0xf]
      %v1510 = vld [vmem:[%s1506 + $0xc] sm:$0xf]
      %v1511 = vld [vmem:[%s1506 + $0x10] sm:$0xf]
      %v1512 = vld [vmem:[%s1506 + $0x14] sm:$0xf]
      %v1513 = vld [vmem:[%s1506 + $0x18] sm:$0xf]
      %v1514 = vld [vmem:[%s1506 + $0x1c] sm:$0xf]
      %v1523 = vunpack.c.l.b16 %v1498
      %v1524 = vunpack.c.l.b16 %v1499
      %v1525 = vunpack.c.l.b16 %v1500
      %v1526 = vunpack.c.l.b16 %v1501
      %v1527 = vunpack.c.l.b16 %v1502
      %v1528 = vunpack.c.l.b16 %v1503
      %v1529 = vunpack.c.l.b16 %v1504
      %v1530 = vunpack.c.l.b16 %v1505
      %v1531 = vpack.c.b16 %v1524, %v1523
      %v1532 = vpack.c.b16 %v1526, %v1525
      %v1533 = vpack.c.b16 %v1528, %v1527
      %v1534 = vpack.c.b16 %v1530, %v1529
      %v1543 = vunpack.c.l.b16 %v1507
      %v1544 = vunpack.c.l.b16 %v1508
      %v1545 = vunpack.c.l.b16 %v1509
      %v1546 = vunpack.c.l.b16 %v1510
      %v1547 = vunpack.c.l.b16 %v1511
      %v1548 = vunpack.c.l.b16 %v1512
      %v1549 = vunpack.c.l.b16 %v1513
      %v1550 = vunpack.c.l.b16 %v1514
      %v1551 = vpack.c.b16 %v1544, %v1543
      %v1552 = vpack.c.b16 %v1546, %v1545
      %v1553 = vpack.c.b16 %v1548, %v1547
      %v1554 = vpack.c.b16 %v1550, %v1549
      %v1560 = vsel %vm338, %v1531, 0
      %v1563 = vsel %vm338, %v1532, 0
      %v1566 = vsel %vm338, %v1533, 0
      %v1569 = vsel %vm338, %v1534, 0
      %1571 = vmatprep.subr.bf16.mxu0 0
      %1572 = vmatpush1.bf16.msra.mxu0 0
      %1573 = vmatprep.subr.bf16.mxu0 0
      %1574 = vmatpush1.bf16.msra.mxu0 0
      %1575 = vmatprep.subr.bf16.mxu0 0
      %1576 = vmatpush1.bf16.msra.mxu0 0
      %1577 = vmatprep.subr.bf16.mxu0 0
      %1578 = vmatpush1.bf16.msra.mxu0 0
      %1579 = vmatprep.subr.bf16.mxu0 0
      %1580 = vmatpush1.bf16.msra.mxu0 %v1554
      %1581 = vmatprep.subr.bf16.mxu0 0
      %1582 = vmatpush1.bf16.msra.mxu0 %v1553
      %1583 = vmatprep.subr.bf16.mxu0 0
      %1584 = vmatpush1.bf16.msra.mxu0 %v1552
      %1585 = vmatprep.subr.bf16.mxu0 0
      %1586 = vmatpush1.bf16.msra.mxu0 %v1551
      %1587 = vmatprep.subr.bf16.mxu0 0
      %1588 = vmatpush2.bf16.msra.mxu0 0
      %1589 = vmatprep.subr.bf16.mxu0 0
      %1590 = vmatpush2.bf16.msra.mxu0 0
      %1591 = vmatprep.subr.bf16.mxu0 0
      %1592 = vmatpush2.bf16.msra.mxu0 0
      %1593 = vmatprep.subr.bf16.mxu0 0
      %1594 = vmatpush2.bf16.msra.mxu0 0
      %1595 = vmatprep.subr.bf16.mxu0 0
      %1596 = vmatpush2.bf16.msra.mxu0 0
      %1597 = vmatprep.subr.bf16.mxu0 0
      %1598 = vmatpush2.bf16.msra.mxu0 0
      %1599 = vmatprep.subr.bf16.mxu0 0
      %1600 = vmatpush2.bf16.msra.mxu0 0
      %1601 = vmatprep.subr.bf16.mxu0 0
      %1602 = vmatpush2.bf16.msra.mxu0 0
      %1603 = vmatprep.mubr.bf16.mxu0 0
      %1604 = vmatmul.mubr.bf16.gmra.mxu0 %v1560
      %v1605 = vpop.f32.mrf.mxu0
      %v1606 = vadd.f32 0.0, %v1605
      %v1607 = vpop.f32.mrf.mxu0
      %v1608 = vpop.f32.mrf.mxu0
      %v1609 = vadd.f32 0.0, %v1608
      %v1610 = vpop.f32.mrf.mxu0
      %1611 = vmatprep.mubr.bf16.mxu0 0
      %1612 = vmatmul.mubr.bf16.gmra.mxu0 %v1563
      %v1613 = vpop.f32.mrf.mxu0
      %v1614 = vadd.f32 0.0, %v1613
      %v1615 = vpop.f32.mrf.mxu0
      %v1616 = vpop.f32.mrf.mxu0
      %v1617 = vadd.f32 0.0, %v1616
      %v1618 = vpop.f32.mrf.mxu0
      %1619 = vmatprep.mubr.bf16.mxu0 0
      %1620 = vmatmul.mubr.bf16.gmra.mxu0 %v1566
      %v1621 = vpop.f32.mrf.mxu0
      %v1622 = vadd.f32 0.0, %v1621
      %v1623 = vpop.f32.mrf.mxu0
      %v1624 = vpop.f32.mrf.mxu0
      %v1625 = vadd.f32 0.0, %v1624
      %v1626 = vpop.f32.mrf.mxu0
      %1627 = vmatprep.mubr.bf16.mxu0 0
      %1628 = vmatmul.mubr.bf16.gmra.mxu0 %v1569
      %v1629 = vpop.f32.mrf.mxu0
      %v1630 = vadd.f32 0.0, %v1629
      %v1631 = vpop.f32.mrf.mxu0
      %v1632 = vpop.f32.mrf.mxu0
      %v1633 = vadd.f32 0.0, %v1632
      %v1634 = vpop.f32.mrf.mxu0
      %1635 = vdwg.mxu0
      %v1636 = vadd.f32 %v1489, %v1606
      %v1637 = vadd.f32 %v1490, %v1609
      %v1638 = vadd.f32 %v1491, %v1614
      %v1639 = vadd.f32 %v1492, %v1617
      %v1640 = vadd.f32 %v1493, %v1622
      %v1641 = vadd.f32 %v1494, %v1625
      %v1642 = vadd.f32 %v1495, %v1630
      %v1643 = vadd.f32 %v1496, %v1633
      %v1644 = vld [vmem:[%s1350] sm:$0xf]
      %v1645 = vld [vmem:[%s1350 + $0x4] sm:$0x1]
      %v1646 = vld [vmem:[%s1350 + $0x8] sm:$0xf]
      %v1647 = vld [vmem:[%s1350 + $0xc] sm:$0x1]
      %v1648 = vld [vmem:[%s1350 + $0x10] sm:$0xf]
      %v1649 = vld [vmem:[%s1350 + $0x14] sm:$0x1]
      %v1650 = vld [vmem:[%s1350 + $0x18] sm:$0xf]
      %v1651 = vld [vmem:[%s1350 + $0x1c] sm:$0x1]
      %v1652 = vld [vmem:[%s1350 + $0x20] sm:$0xf]
      %v1653 = vld [vmem:[%s1350 + $0x24] sm:$0x1]
      %v1654 = vld [vmem:[%s1350 + $0x28] sm:$0xf]
      %v1655 = vld [vmem:[%s1350 + $0x2c] sm:$0x1]
      %v1656 = vld [vmem:[%s1350 + $0x30] sm:$0xf]
      %v1657 = vld [vmem:[%s1350 + $0x34] sm:$0x1]
      %v1658 = vld [vmem:[%s1350 + $0x38] sm:$0xf]
      %v1659 = vld [vmem:[%s1350 + $0x3c] sm:$0x1]
      %v1661 = vshrl.u32 %v1644, 16
      %v1663 = vrot.slane %v1661, 4
      %v1664 = vshll.u32 %v1644, 16
      %v1666 = vrot.slane %v1664, 5
      %v1667 = vor.u32 %v1663, %v1666
      %v1668 = vrot.slane %v1667, 4
      %v1670 = vshll.u32 %v1645, 16
      %v1672 = vrot.slane %v1670, 5
      %v1673 = vsel %vm555, %v1668, %v1672
      %v1675 = vshrl.u32 %v1646, 16
      %v1677 = vrot.slane %v1675, 4
      %v1678 = vshll.u32 %v1646, 16
      %v1680 = vrot.slane %v1678, 5
      %v1681 = vor.u32 %v1677, %v1680
      %v1682 = vrot.slane %v1681, 4
      %v1684 = vshll.u32 %v1647, 16
      %v1686 = vrot.slane %v1684, 5
      %v1687 = vsel %vm555, %v1682, %v1686
      %v1689 = vshrl.u32 %v1648, 16
      %v1691 = vrot.slane %v1689, 4
      %v1692 = vshll.u32 %v1648, 16
      %v1694 = vrot.slane %v1692, 5
      %v1695 = vor.u32 %v1691, %v1694
      %v1696 = vrot.slane %v1695, 4
      %v1698 = vshll.u32 %v1649, 16
      %v1700 = vrot.slane %v1698, 5
      %v1701 = vsel %vm555, %v1696, %v1700
      %v1703 = vshrl.u32 %v1650, 16
      %v1705 = vrot.slane %v1703, 4
      %v1706 = vshll.u32 %v1650, 16
      %v1708 = vrot.slane %v1706, 5
      %v1709 = vor.u32 %v1705, %v1708
      %v1710 = vrot.slane %v1709, 4
      %v1712 = vshll.u32 %v1651, 16
      %v1714 = vrot.slane %v1712, 5
      %v1715 = vsel %vm555, %v1710, %v1714
      %v1717 = vshrl.u32 %v1652, 16
      %v1719 = vrot.slane %v1717, 4
      %v1720 = vshll.u32 %v1652, 16
      %v1722 = vrot.slane %v1720, 5
      %v1723 = vor.u32 %v1719, %v1722
      %v1724 = vrot.slane %v1723, 4
      %v1726 = vshll.u32 %v1653, 16
      %v1728 = vrot.slane %v1726, 5
      %v1729 = vsel %vm555, %v1724, %v1728
      %v1731 = vshrl.u32 %v1654, 16
      %v1733 = vrot.slane %v1731, 4
      %v1734 = vshll.u32 %v1654, 16
      %v1736 = vrot.slane %v1734, 5
      %v1737 = vor.u32 %v1733, %v1736
      %v1738 = vrot.slane %v1737, 4
      %v1740 = vshll.u32 %v1655, 16
      %v1742 = vrot.slane %v1740, 5
      %v1743 = vsel %vm555, %v1738, %v1742
      %v1745 = vshrl.u32 %v1656, 16
      %v1747 = vrot.slane %v1745, 4
      %v1748 = vshll.u32 %v1656, 16
      %v1750 = vrot.slane %v1748, 5
      %v1751 = vor.u32 %v1747, %v1750
      %v1752 = vrot.slane %v1751, 4
      %v1754 = vshll.u32 %v1657, 16
      %v1756 = vrot.slane %v1754, 5
      %v1757 = vsel %vm555, %v1752, %v1756
      %v1759 = vshrl.u32 %v1658, 16
      %v1761 = vrot.slane %v1759, 4
      %v1762 = vshll.u32 %v1658, 16
      %v1764 = vrot.slane %v1762, 5
      %v1765 = vor.u32 %v1761, %v1764
      %v1766 = vrot.slane %v1765, 4
      %v1768 = vshll.u32 %v1659, 16
      %v1770 = vrot.slane %v1768, 5
      %v1771 = vsel %vm555, %v1766, %v1770
      %s1772 = scalar_lea.vmem %s2, 256
      %v1773 = vld [vmem:[%s1772] sm:$0xf]
      %v1774 = vld [vmem:[%s1772 + $0x4] sm:$0xf]
      %v1775 = vld [vmem:[%s1772 + $0x8] sm:$0xf]
      %v1776 = vld [vmem:[%s1772 + $0xc] sm:$0xf]
      %v1777 = vld [vmem:[%s1772 + $0x10] sm:$0xf]
      %v1778 = vld [vmem:[%s1772 + $0x14] sm:$0xf]
      %v1779 = vld [vmem:[%s1772 + $0x18] sm:$0xf]
      %v1780 = vld [vmem:[%s1772 + $0x1c] sm:$0xf]
      %v1781 = vunpack.c.l.b16 %v1673
      %v1782 = vunpack.c.l.b16 %v1687
      %v1783 = vunpack.c.l.b16 %v1701
      %v1784 = vunpack.c.l.b16 %v1715
      %v1785 = vunpack.c.l.b16 %v1729
      %v1786 = vunpack.c.l.b16 %v1743
      %v1787 = vunpack.c.l.b16 %v1757
      %v1788 = vunpack.c.l.b16 %v1771
      %v1789 = vpack.c.b16 %v1782, %v1781
      %v1790 = vpack.c.b16 %v1784, %v1783
      %v1791 = vpack.c.b16 %v1786, %v1785
      %v1792 = vpack.c.b16 %v1788, %v1787
      %v1801 = vunpack.c.l.b16 %v1773
      %v1802 = vunpack.c.l.b16 %v1774
      %v1803 = vunpack.c.l.b16 %v1775
      %v1804 = vunpack.c.l.b16 %v1776
      %v1805 = vunpack.c.l.b16 %v1777
      %v1806 = vunpack.c.l.b16 %v1778
      %v1807 = vunpack.c.l.b16 %v1779
      %v1808 = vunpack.c.l.b16 %v1780
      %v1809 = vpack.c.b16 %v1802, %v1801
      %v1810 = vpack.c.b16 %v1804, %v1803
      %v1811 = vpack.c.b16 %v1806, %v1805
      %v1812 = vpack.c.b16 %v1808, %v1807
      %v1818 = vsel %vm338, %v1789, 0
      %v1821 = vsel %vm338, %v1790, 0
      %v1824 = vsel %vm338, %v1791, 0
      %v1827 = vsel %vm338, %v1792, 0
      %1829 = vmatprep.subr.bf16.mxu0 0
      %1830 = vmatpush1.bf16.msra.mxu0 0
      %1831 = vmatprep.subr.bf16.mxu0 0
      %1832 = vmatpush1.bf16.msra.mxu0 0
      %1833 = vmatprep.subr.bf16.mxu0 0
      %1834 = vmatpush1.bf16.msra.mxu0 0
      %1835 = vmatprep.subr.bf16.mxu0 0
      %1836 = vmatpush1.bf16.msra.mxu0 0
      %1837 = vmatprep.subr.bf16.mxu0 0
      %1838 = vmatpush1.bf16.msra.mxu0 %v1812
      %1839 = vmatprep.subr.bf16.mxu0 0
      %1840 = vmatpush1.bf16.msra.mxu0 %v1811
      %1841 = vmatprep.subr.bf16.mxu0 0
      %1842 = vmatpush1.bf16.msra.mxu0 %v1810
      %1843 = vmatprep.subr.bf16.mxu0 0
      %1844 = vmatpush1.bf16.msra.mxu0 %v1809
      %1845 = vmatprep.subr.bf16.mxu0 0
      %1846 = vmatpush2.bf16.msra.mxu0 0
      %1847 = vmatprep.subr.bf16.mxu0 0
      %1848 = vmatpush2.bf16.msra.mxu0 0
      %1849 = vmatprep.subr.bf16.mxu0 0
      %1850 = vmatpush2.bf16.msra.mxu0 0
      %1851 = vmatprep.subr.bf16.mxu0 0
      %1852 = vmatpush2.bf16.msra.mxu0 0
      %1853 = vmatprep.subr.bf16.mxu0 0
      %1854 = vmatpush2.bf16.msra.mxu0 0
      %1855 = vmatprep.subr.bf16.mxu0 0
      %1856 = vmatpush2.bf16.msra.mxu0 0
      %1857 = vmatprep.subr.bf16.mxu0 0
      %1858 = vmatpush2.bf16.msra.mxu0 0
      %1859 = vmatprep.subr.bf16.mxu0 0
      %1860 = vmatpush2.bf16.msra.mxu0 0
      %1861 = vmatprep.mubr.bf16.mxu0 0
      %1862 = vmatmul.mubr.bf16.gmra.mxu0 %v1818
      %v1863 = vpop.f32.mrf.mxu0
      %v1864 = vadd.f32 0.0, %v1863
      %v1865 = vpop.f32.mrf.mxu0
      %v1866 = vpop.f32.mrf.mxu0
      %v1867 = vadd.f32 0.0, %v1866
      %v1868 = vpop.f32.mrf.mxu0
      %1869 = vmatprep.mubr.bf16.mxu0 0
      %1870 = vmatmul.mubr.bf16.gmra.mxu0 %v1821
      %v1871 = vpop.f32.mrf.mxu0
      %v1872 = vadd.f32 0.0, %v1871
      %v1873 = vpop.f32.mrf.mxu0
      %v1874 = vpop.f32.mrf.mxu0
      %v1875 = vadd.f32 0.0, %v1874
      %v1876 = vpop.f32.mrf.mxu0
      %1877 = vmatprep.mubr.bf16.mxu0 0
      %1878 = vmatmul.mubr.bf16.gmra.mxu0 %v1824
      %v1879 = vpop.f32.mrf.mxu0
      %v1880 = vadd.f32 0.0, %v1879
      %v1881 = vpop.f32.mrf.mxu0
      %v1882 = vpop.f32.mrf.mxu0
      %v1883 = vadd.f32 0.0, %v1882
      %v1884 = vpop.f32.mrf.mxu0
      %1885 = vmatprep.mubr.bf16.mxu0 0
      %1886 = vmatmul.mubr.bf16.gmra.mxu0 %v1827
      %v1887 = vpop.f32.mrf.mxu0
      %v1888 = vadd.f32 0.0, %v1887
      %v1889 = vpop.f32.mrf.mxu0
      %v1890 = vpop.f32.mrf.mxu0
      %v1891 = vadd.f32 0.0, %v1890
      %v1892 = vpop.f32.mrf.mxu0
      %1893 = vdwg.mxu0
      %v1894 = vadd.f32 %v1636, %v1864
      %v1895 = vadd.f32 %v1637, %v1867
      %v1896 = vadd.f32 %v1638, %v1872
      %v1897 = vadd.f32 %v1639, %v1875
      %v1898 = vadd.f32 %v1640, %v1880
      %v1899 = vadd.f32 %v1641, %v1883
      %v1900 = vadd.f32 %v1642, %v1888
      %v1901 = vadd.f32 %v1643, %v1891
      %v1902 = vld [vmem:[%s5] sm:$0x1]
      %v1904 = vlaneseq
      %v1905 = vshrl.u32 %v1904, 7
      %v1906 = vsub.s32 0, %v1905
      %v1907 = vrot.slane %v1902, %v1906
      %v1909 = vadd.f32 %v1894, %v1907
      %v1910 = vadd.f32 %v1895, %v1907
      %v1911 = vadd.f32 %v1896, %v1907
      %v1912 = vadd.f32 %v1897, %v1907
      %v1913 = vadd.f32 %v1898, %v1907
      %v1914 = vadd.f32 %v1899, %v1907
      %v1915 = vadd.f32 %v1900, %v1907
      %v1916 = vadd.f32 %v1901, %v1907
      %s1917 = sld [smem:[#allocation4]]
      %v1918 = vstv %s1917
      %v1919 = vmax.f32 %v1909, %v1918
      %v1920 = vmax.f32 %v1910, %v1918
      %v1921 = vmax.f32 %v1911, %v1918
      %v1922 = vmax.f32 %v1912, %v1918
      %v1923 = vmax.f32 %v1913, %v1918
      %v1924 = vmax.f32 %v1914, %v1918
      %v1925 = vmax.f32 %v1915, %v1918
      %v1926 = vmax.f32 %v1916, %v1918
      %vm1927 = vcmask 519168
      %1928 = vst.msk [vmem:[#allocation2] sm:$0xf] %vm1927, 0
      %vm1929 = vcmask 516096
      %1930 = vst.msk [vmem:[#allocation2 + $0x4] sm:$0x1] %vm1929, 0
      %1931 = vst.msk [vmem:[#allocation2 + $0x8] sm:$0xf] %vm1927, 0
      %1932 = vst.msk [vmem:[#allocation2 + $0xc] sm:$0x1] %vm1929, 0
      %1933 = vst.msk [vmem:[#allocation2 + $0x10] sm:$0xf] %vm1927, 0
      %1934 = vst.msk [vmem:[#allocation2 + $0x14] sm:$0x1] %vm1929, 0
      %1935 = vst.msk [vmem:[#allocation2 + $0x18] sm:$0xf] %vm1927, 0
      %1936 = vst.msk [vmem:[#allocation2 + $0x1c] sm:$0x1] %vm1929, 0
      %1937 = vst.msk [vmem:[#allocation2 + $0x20] sm:$0xf] %vm1927, 0
      %1938 = vst.msk [vmem:[#allocation2 + $0x24] sm:$0x1] %vm1929, 0
      %1939 = vst.msk [vmem:[#allocation2 + $0x28] sm:$0xf] %vm1927, 0
      %1940 = vst.msk [vmem:[#allocation2 + $0x2c] sm:$0x1] %vm1929, 0
      %1941 = vst.msk [vmem:[#allocation2 + $0x30] sm:$0xf] %vm1927, 0
      %1942 = vst.msk [vmem:[#allocation2 + $0x34] sm:$0x1] %vm1929, 0
      %1943 = vst.msk [vmem:[#allocation2 + $0x38] sm:$0xf] %vm1927, 0
      %1944 = vst.msk [vmem:[#allocation2 + $0x3c] sm:$0x1] %vm1929, 0
      %1945 = vst.msk [vmem:[#allocation2 + $0x40] sm:$0xf] %vm1927, 0
      %1946 = vst.msk [vmem:[#allocation2 + $0x44] sm:$0x1] %vm1929, 0
      %1947 = vst.msk [vmem:[#allocation2 + $0x48] sm:$0xf] %vm1927, 0
      %1948 = vst.msk [vmem:[#allocation2 + $0x4c] sm:$0x1] %vm1929, 0
      %v1949 = vpack.c.bf16 %v1920, %v1919
      %v1950 = vpack.c.bf16 %v1922, %v1921
      %v1951 = vpack.c.bf16 %v1924, %v1923
      %v1952 = vpack.c.bf16 %v1926, %v1925
      %v1957 = vunpack.c.l.b16 %v1949
      %v1958 = vunpack.c.h.b16 %v1949
      %v1959 = vunpack.c.l.b16 %v1950
      %v1960 = vunpack.c.h.b16 %v1950
      %v1961 = vunpack.c.l.b16 %v1951
      %v1962 = vunpack.c.h.b16 %v1951
      %v1963 = vunpack.c.l.b16 %v1952
      %v1964 = vunpack.c.h.b16 %v1952
      %v1965 = vpack.c.b16 %v1957, %v1957
      %v1966 = vpack.c.b16 %v1958, %v1958
      %v1967 = vpack.c.b16 %v1959, %v1959
      %v1968 = vpack.c.b16 %v1960, %v1960
      %v1969 = vpack.c.b16 %v1961, %v1961
      %v1970 = vpack.c.b16 %v1962, %v1962
      %v1971 = vpack.c.b16 %v1963, %v1963
      %v1972 = vpack.c.b16 %v1964, %v1964
      %v1974 = vshrl.u32 %v1965, 16
      %v1976 = vrot.slane %v1974, 7
      %v1977 = vshll.u32 %v1965, 16
      %v1979 = vor.u32 %v1976, %v1977
      %v1980 = vrot.slane %v1976, 4
      %v1982 = vshrl.u32 %v1966, 16
      %v1984 = vrot.slane %v1982, 7
      %v1985 = vshll.u32 %v1966, 16
      %v1987 = vor.u32 %v1984, %v1985
      %v1988 = vrot.slane %v1984, 4
      %v1990 = vshrl.u32 %v1967, 16
      %v1992 = vrot.slane %v1990, 7
      %v1993 = vshll.u32 %v1967, 16
      %v1995 = vor.u32 %v1992, %v1993
      %v1996 = vrot.slane %v1992, 4
      %v1998 = vshrl.u32 %v1968, 16
      %v2000 = vrot.slane %v1998, 7
      %v2001 = vshll.u32 %v1968, 16
      %v2003 = vor.u32 %v2000, %v2001
      %v2004 = vrot.slane %v2000, 4
      %v2006 = vshrl.u32 %v1969, 16
      %v2008 = vrot.slane %v2006, 7
      %v2009 = vshll.u32 %v1969, 16
      %v2011 = vor.u32 %v2008, %v2009
      %v2012 = vrot.slane %v2008, 4
      %v2014 = vshrl.u32 %v1970, 16
      %v2016 = vrot.slane %v2014, 7
      %v2017 = vshll.u32 %v1970, 16
      %v2019 = vor.u32 %v2016, %v2017
      %v2020 = vrot.slane %v2016, 4
      %v2022 = vshrl.u32 %v1971, 16
      %v2024 = vrot.slane %v2022, 7
      %v2025 = vshll.u32 %v1971, 16
      %v2027 = vor.u32 %v2024, %v2025
      %v2028 = vrot.slane %v2024, 4
      %v2030 = vshrl.u32 %v1972, 16
      %v2032 = vrot.slane %v2030, 7
      %v2033 = vshll.u32 %v1972, 16
      %v2035 = vor.u32 %v2032, %v2033
      %v2036 = vrot.slane %v2032, 4
      %s2053 = scalar_lea.vmem [#allocation2], 8
      %vm2054 = vcmask 519168
      %vm2055 = vsmask.f32 7938
      %vm2056 = vmand %vm2054, %vm2055
      %v2057 = vld [vmem:[%s2053] sm:$0xf]
      %v2058 = vsel %vm2056, %v1979, %v2057
      %2059 = vst [vmem:[%s2053] sm:$0xf] %v2058
      %vm2060 = vcmask 516096
      %vm2061 = vsmask.f32 256
      %vm2062 = vmand %vm2060, %vm2061
      %v2063 = vld [vmem:[%s2053 + $0x4] sm:$0x1]
      %v2064 = vsel %vm2062, %v1980, %v2063
      %2065 = vst [vmem:[%s2053 + $0x4] sm:$0x1] %v2064
      %v2066 = vld [vmem:[%s2053 + $0x8] sm:$0xf]
      %v2067 = vsel %vm2056, %v1987, %v2066
      %2068 = vst [vmem:[%s2053 + $0x8] sm:$0xf] %v2067
      %v2069 = vld [vmem:[%s2053 + $0xc] sm:$0x1]
      %v2070 = vsel %vm2062, %v1988, %v2069
      %2071 = vst [vmem:[%s2053 + $0xc] sm:$0x1] %v2070
      %v2072 = vld [vmem:[%s2053 + $0x10] sm:$0xf]
      %v2073 = vsel %vm2056, %v1995, %v2072
      %2074 = vst [vmem:[%s2053 + $0x10] sm:$0xf] %v2073
      %v2075 = vld [vmem:[%s2053 + $0x14] sm:$0x1]
      %v2076 = vsel %vm2062, %v1996, %v2075
      %2077 = vst [vmem:[%s2053 + $0x14] sm:$0x1] %v2076
      %v2078 = vld [vmem:[%s2053 + $0x18] sm:$0xf]
      %v2079 = vsel %vm2056, %v2003, %v2078
      %2080 = vst [vmem:[%s2053 + $0x18] sm:$0xf] %v2079
      %v2081 = vld [vmem:[%s2053 + $0x1c] sm:$0x1]
      %v2082 = vsel %vm2062, %v2004, %v2081
      %2083 = vst [vmem:[%s2053 + $0x1c] sm:$0x1] %v2082
      %v2084 = vld [vmem:[%s2053 + $0x20] sm:$0xf]
      %v2085 = vsel %vm2056, %v2011, %v2084
      %2086 = vst [vmem:[%s2053 + $0x20] sm:$0xf] %v2085
      %v2087 = vld [vmem:[%s2053 + $0x24] sm:$0x1]
      %v2088 = vsel %vm2062, %v2012, %v2087
      %2089 = vst [vmem:[%s2053 + $0x24] sm:$0x1] %v2088
      %v2090 = vld [vmem:[%s2053 + $0x28] sm:$0xf]
      %v2091 = vsel %vm2056, %v2019, %v2090
      %2092 = vst [vmem:[%s2053 + $0x28] sm:$0xf] %v2091
      %v2093 = vld [vmem:[%s2053 + $0x2c] sm:$0x1]
      %v2094 = vsel %vm2062, %v2020, %v2093
      %2095 = vst [vmem:[%s2053 + $0x2c] sm:$0x1] %v2094
      %v2096 = vld [vmem:[%s2053 + $0x30] sm:$0xf]
      %v2097 = vsel %vm2056, %v2027, %v2096
      %2098 = vst [vmem:[%s2053 + $0x30] sm:$0xf] %v2097
      %v2099 = vld [vmem:[%s2053 + $0x34] sm:$0x1]
      %v2100 = vsel %vm2062, %v2028, %v2099
      %2101 = vst [vmem:[%s2053 + $0x34] sm:$0x1] %v2100
      %v2102 = vld [vmem:[%s2053 + $0x38] sm:$0xf]
      %v2103 = vsel %vm2056, %v2035, %v2102
      %2104 = vst [vmem:[%s2053 + $0x38] sm:$0xf] %v2103
      %v2105 = vld [vmem:[%s2053 + $0x3c] sm:$0x1]
      %v2106 = vsel %vm2062, %v2036, %v2105
      %2107 = vst [vmem:[%s2053 + $0x3c] sm:$0x1] %v2106
      %v2108 = vld [vmem:[#allocation2] sm:$0xf]
      %v2109 = vld [vmem:[#allocation2 + $0x8] sm:$0xf]
      %v2110 = vld [vmem:[#allocation2 + $0x10] sm:$0xf]
      %v2111 = vld [vmem:[#allocation2 + $0x18] sm:$0xf]
      %v2112 = vld [vmem:[#allocation2 + $0x20] sm:$0xf]
      %v2113 = vld [vmem:[#allocation2 + $0x28] sm:$0xf]
      %v2114 = vld [vmem:[#allocation2 + $0x30] sm:$0xf]
      %v2115 = vld [vmem:[#allocation2 + $0x38] sm:$0xf]
      %v2116 = vld [vmem:[%s3] sm:$0xf]
      %v2117 = vld [vmem:[%s3 + $0x4] sm:$0xf]
      %v2118 = vld [vmem:[%s3 + $0x8] sm:$0xf]
      %v2119 = vld [vmem:[%s3 + $0xc] sm:$0xf]
      %v2120 = vld [vmem:[%s3 + $0x10] sm:$0xf]
      %v2121 = vld [vmem:[%s3 + $0x14] sm:$0xf]
      %v2122 = vld [vmem:[%s3 + $0x18] sm:$0xf]
      %v2123 = vld [vmem:[%s3 + $0x1c] sm:$0xf]
      %v2124 = vld [vmem:[#allocation2 + $0x4] sm:$0x1]
      %v2125 = vld [vmem:[#allocation2 + $0xc] sm:$0x1]
      %v2126 = vld [vmem:[#allocation2 + $0x14] sm:$0x1]
      %v2127 = vld [vmem:[#allocation2 + $0x1c] sm:$0x1]
      %v2128 = vld [vmem:[#allocation2 + $0x24] sm:$0x1]
      %v2129 = vld [vmem:[#allocation2 + $0x2c] sm:$0x1]
      %v2130 = vld [vmem:[#allocation2 + $0x34] sm:$0x1]
      %v2131 = vld [vmem:[#allocation2 + $0x3c] sm:$0x1]
      %v2133 = vshrl.u32 %v2108, 16
      %v2135 = vrot.slane %v2133, 4
      %v2136 = vshll.u32 %v2108, 16
      %v2138 = vrot.slane %v2136, 5
      %v2139 = vor.u32 %v2135, %v2138
      %v2140 = vrot.slane %v2139, 4
      %v2142 = vshll.u32 %v2124, 16
      %v2144 = vrot.slane %v2142, 5
      %v2145 = vsel %vm555, %v2140, %v2144
      %v2147 = vshrl.u32 %v2109, 16
      %v2149 = vrot.slane %v2147, 4
      %v2150 = vshll.u32 %v2109, 16
      %v2152 = vrot.slane %v2150, 5
      %v2153 = vor.u32 %v2149, %v2152
      %v2154 = vrot.slane %v2153, 4
      %v2156 = vshll.u32 %v2125, 16
      %v2158 = vrot.slane %v2156, 5
      %v2159 = vsel %vm555, %v2154, %v2158
      %v2161 = vshrl.u32 %v2110, 16
      %v2163 = vrot.slane %v2161, 4
      %v2164 = vshll.u32 %v2110, 16
      %v2166 = vrot.slane %v2164, 5
      %v2167 = vor.u32 %v2163, %v2166
      %v2168 = vrot.slane %v2167, 4
      %v2170 = vshll.u32 %v2126, 16
      %v2172 = vrot.slane %v2170, 5
      %v2173 = vsel %vm555, %v2168, %v2172
      %v2175 = vshrl.u32 %v2111, 16
      %v2177 = vrot.slane %v2175, 4
      %v2178 = vshll.u32 %v2111, 16
      %v2180 = vrot.slane %v2178, 5
      %v2181 = vor.u32 %v2177, %v2180
      %v2182 = vrot.slane %v2181, 4
      %v2184 = vshll.u32 %v2127, 16
      %v2186 = vrot.slane %v2184, 5
      %v2187 = vsel %vm555, %v2182, %v2186
      %v2189 = vshrl.u32 %v2112, 16
      %v2191 = vrot.slane %v2189, 4
      %v2192 = vshll.u32 %v2112, 16
      %v2194 = vrot.slane %v2192, 5
      %v2195 = vor.u32 %v2191, %v2194
      %v2196 = vrot.slane %v2195, 4
      %v2198 = vshll.u32 %v2128, 16
      %v2200 = vrot.slane %v2198, 5
      %v2201 = vsel %vm555, %v2196, %v2200
      %v2203 = vshrl.u32 %v2113, 16
      %v2205 = vrot.slane %v2203, 4
      %v2206 = vshll.u32 %v2113, 16
      %v2208 = vrot.slane %v2206, 5
      %v2209 = vor.u32 %v2205, %v2208
      %v2210 = vrot.slane %v2209, 4
      %v2212 = vshll.u32 %v2129, 16
      %v2214 = vrot.slane %v2212, 5
      %v2215 = vsel %vm555, %v2210, %v2214
      %v2217 = vshrl.u32 %v2114, 16
      %v2219 = vrot.slane %v2217, 4
      %v2220 = vshll.u32 %v2114, 16
      %v2222 = vrot.slane %v2220, 5
      %v2223 = vor.u32 %v2219, %v2222
      %v2224 = vrot.slane %v2223, 4
      %v2226 = vshll.u32 %v2130, 16
      %v2228 = vrot.slane %v2226, 5
      %v2229 = vsel %vm555, %v2224, %v2228
      %v2231 = vshrl.u32 %v2115, 16
      %v2233 = vrot.slane %v2231, 4
      %v2234 = vshll.u32 %v2115, 16
      %v2236 = vrot.slane %v2234, 5
      %v2237 = vor.u32 %v2233, %v2236
      %v2238 = vrot.slane %v2237, 4
      %v2240 = vshll.u32 %v2131, 16
      %v2242 = vrot.slane %v2240, 5
      %v2243 = vsel %vm555, %v2238, %v2242
      %s2244 = scalar_lea.vmem %s3, 32
      %v2245 = vld [vmem:[%s2244] sm:$0xf]
      %v2246 = vld [vmem:[%s2244 + $0x4] sm:$0xf]
      %v2247 = vld [vmem:[%s2244 + $0x8] sm:$0xf]
      %v2248 = vld [vmem:[%s2244 + $0xc] sm:$0xf]
      %v2249 = vld [vmem:[%s2244 + $0x10] sm:$0xf]
      %v2250 = vld [vmem:[%s2244 + $0x14] sm:$0xf]
      %v2251 = vld [vmem:[%s2244 + $0x18] sm:$0xf]
      %v2252 = vld [vmem:[%s2244 + $0x1c] sm:$0xf]
      %v2253 = vunpack.c.l.b16 %v2145
      %v2254 = vunpack.c.l.b16 %v2159
      %v2255 = vunpack.c.l.b16 %v2173
      %v2256 = vunpack.c.l.b16 %v2187
      %v2257 = vunpack.c.l.b16 %v2201
      %v2258 = vunpack.c.l.b16 %v2215
      %v2259 = vunpack.c.l.b16 %v2229
      %v2260 = vunpack.c.l.b16 %v2243
      %v2261 = vpack.c.b16 %v2254, %v2253
      %v2262 = vpack.c.b16 %v2256, %v2255
      %v2263 = vpack.c.b16 %v2258, %v2257
      %v2264 = vpack.c.b16 %v2260, %v2259
      %v2273 = vunpack.c.l.b16 %v2245
      %v2274 = vunpack.c.l.b16 %v2246
      %v2275 = vunpack.c.l.b16 %v2247
      %v2276 = vunpack.c.l.b16 %v2248
      %v2277 = vunpack.c.l.b16 %v2249
      %v2278 = vunpack.c.l.b16 %v2250
      %v2279 = vunpack.c.l.b16 %v2251
      %v2280 = vunpack.c.l.b16 %v2252
      %v2281 = vpack.c.b16 %v2274, %v2273
      %v2282 = vpack.c.b16 %v2276, %v2275
      %v2283 = vpack.c.b16 %v2278, %v2277
      %v2284 = vpack.c.b16 %v2280, %v2279
      %v2290 = vsel %vm338, %v2261, 0
      %v2293 = vsel %vm338, %v2262, 0
      %v2296 = vsel %vm338, %v2263, 0
      %v2299 = vsel %vm338, %v2264, 0
      %2301 = vmatprep.subr.bf16.mxu0 0
      %2302 = vmatpush1.bf16.msra.mxu0 0
      %2303 = vmatprep.subr.bf16.mxu0 0
      %2304 = vmatpush1.bf16.msra.mxu0 0
      %2305 = vmatprep.subr.bf16.mxu0 0
      %2306 = vmatpush1.bf16.msra.mxu0 0
      %2307 = vmatprep.subr.bf16.mxu0 0
      %2308 = vmatpush1.bf16.msra.mxu0 0
      %2309 = vmatprep.subr.bf16.mxu0 0
      %2310 = vmatpush1.bf16.msra.mxu0 %v2284
      %2311 = vmatprep.subr.bf16.mxu0 0
      %2312 = vmatpush1.bf16.msra.mxu0 %v2283
      %2313 = vmatprep.subr.bf16.mxu0 0
      %2314 = vmatpush1.bf16.msra.mxu0 %v2282
      %2315 = vmatprep.subr.bf16.mxu0 0
      %2316 = vmatpush1.bf16.msra.mxu0 %v2281
      %2317 = vmatprep.subr.bf16.mxu0 0
      %2318 = vmatpush2.bf16.msra.mxu0 0
      %2319 = vmatprep.subr.bf16.mxu0 0
      %2320 = vmatpush2.bf16.msra.mxu0 0
      %2321 = vmatprep.subr.bf16.mxu0 0
      %2322 = vmatpush2.bf16.msra.mxu0 0
      %2323 = vmatprep.subr.bf16.mxu0 0
      %2324 = vmatpush2.bf16.msra.mxu0 0
      %2325 = vmatprep.subr.bf16.mxu0 0
      %2326 = vmatpush2.bf16.msra.mxu0 0
      %2327 = vmatprep.subr.bf16.mxu0 0
      %2328 = vmatpush2.bf16.msra.mxu0 0
      %2329 = vmatprep.subr.bf16.mxu0 0
      %2330 = vmatpush2.bf16.msra.mxu0 0
      %2331 = vmatprep.subr.bf16.mxu0 0
      %2332 = vmatpush2.bf16.msra.mxu0 0
      %2333 = vmatprep.mubr.bf16.mxu0 0
      %2334 = vmatmul.mubr.bf16.gmra.mxu0 %v2290
      %v2335 = vpop.f32.mrf.mxu0
      %v2336 = vadd.f32 0.0, %v2335
      %v2337 = vpop.f32.mrf.mxu0
      %v2338 = vpop.f32.mrf.mxu0
      %v2339 = vadd.f32 0.0, %v2338
      %v2340 = vpop.f32.mrf.mxu0
      %2341 = vmatprep.mubr.bf16.mxu0 0
      %2342 = vmatmul.mubr.bf16.gmra.mxu0 %v2293
      %v2343 = vpop.f32.mrf.mxu0
      %v2344 = vadd.f32 0.0, %v2343
      %v2345 = vpop.f32.mrf.mxu0
      %v2346 = vpop.f32.mrf.mxu0
      %v2347 = vadd.f32 0.0, %v2346
      %v2348 = vpop.f32.mrf.mxu0
      %2349 = vmatprep.mubr.bf16.mxu0 0
      %2350 = vmatmul.mubr.bf16.gmra.mxu0 %v2296
      %v2351 = vpop.f32.mrf.mxu0
      %v2352 = vadd.f32 0.0, %v2351
      %v2353 = vpop.f32.mrf.mxu0
      %v2354 = vpop.f32.mrf.mxu0
      %v2355 = vadd.f32 0.0, %v2354
      %v2356 = vpop.f32.mrf.mxu0
      %2357 = vmatprep.mubr.bf16.mxu0 0
      %2358 = vmatmul.mubr.bf16.gmra.mxu0 %v2299
      %v2359 = vpop.f32.mrf.mxu0
      %v2360 = vadd.f32 0.0, %v2359
      %v2361 = vpop.f32.mrf.mxu0
      %v2362 = vpop.f32.mrf.mxu0
      %v2363 = vadd.f32 0.0, %v2362
      %v2364 = vpop.f32.mrf.mxu0
      %2365 = vdwg.mxu0
      %v2374 = vunpack.c.l.b16 %v2108
      %v2375 = vunpack.c.l.b16 %v2109
      %v2376 = vunpack.c.l.b16 %v2110
      %v2377 = vunpack.c.l.b16 %v2111
      %v2378 = vunpack.c.l.b16 %v2112
      %v2379 = vunpack.c.l.b16 %v2113
      %v2380 = vunpack.c.l.b16 %v2114
      %v2381 = vunpack.c.l.b16 %v2115
      %v2382 = vpack.c.b16 %v2375, %v2374
      %v2383 = vpack.c.b16 %v2377, %v2376
      %v2384 = vpack.c.b16 %v2379, %v2378
      %v2385 = vpack.c.b16 %v2381, %v2380
      %v2394 = vunpack.c.l.b16 %v2116
      %v2395 = vunpack.c.l.b16 %v2117
      %v2396 = vunpack.c.l.b16 %v2118
      %v2397 = vunpack.c.l.b16 %v2119
      %v2398 = vunpack.c.l.b16 %v2120
      %v2399 = vunpack.c.l.b16 %v2121
      %v2400 = vunpack.c.l.b16 %v2122
      %v2401 = vunpack.c.l.b16 %v2123
      %v2402 = vpack.c.b16 %v2395, %v2394
      %v2403 = vpack.c.b16 %v2397, %v2396
      %v2404 = vpack.c.b16 %v2399, %v2398
      %v2405 = vpack.c.b16 %v2401, %v2400
      %v2411 = vsel %vm338, %v2382, 0
      %v2414 = vsel %vm338, %v2383, 0
      %v2417 = vsel %vm338, %v2384, 0
      %v2420 = vsel %vm338, %v2385, 0
      %2422 = vmatprep.subr.bf16.mxu0 0
      %2423 = vmatpush1.bf16.msra.mxu0 0
      %2424 = vmatprep.subr.bf16.mxu0 0
      %2425 = vmatpush1.bf16.msra.mxu0 0
      %2426 = vmatprep.subr.bf16.mxu0 0
      %2427 = vmatpush1.bf16.msra.mxu0 0
      %2428 = vmatprep.subr.bf16.mxu0 0
      %2429 = vmatpush1.bf16.msra.mxu0 0
      %2430 = vmatprep.subr.bf16.mxu0 0
      %2431 = vmatpush1.bf16.msra.mxu0 %v2405
      %2432 = vmatprep.subr.bf16.mxu0 0
      %2433 = vmatpush1.bf16.msra.mxu0 %v2404
      %2434 = vmatprep.subr.bf16.mxu0 0
      %2435 = vmatpush1.bf16.msra.mxu0 %v2403
      %2436 = vmatprep.subr.bf16.mxu0 0
      %2437 = vmatpush1.bf16.msra.mxu0 %v2402
      %2438 = vmatprep.subr.bf16.mxu0 0
      %2439 = vmatpush2.bf16.msra.mxu0 0
      %2440 = vmatprep.subr.bf16.mxu0 0
      %2441 = vmatpush2.bf16.msra.mxu0 0
      %2442 = vmatprep.subr.bf16.mxu0 0
      %2443 = vmatpush2.bf16.msra.mxu0 0
      %2444 = vmatprep.subr.bf16.mxu0 0
      %2445 = vmatpush2.bf16.msra.mxu0 0
      %2446 = vmatprep.subr.bf16.mxu0 0
      %2447 = vmatpush2.bf16.msra.mxu0 0
      %2448 = vmatprep.subr.bf16.mxu0 0
      %2449 = vmatpush2.bf16.msra.mxu0 0
      %2450 = vmatprep.subr.bf16.mxu0 0
      %2451 = vmatpush2.bf16.msra.mxu0 0
      %2452 = vmatprep.subr.bf16.mxu0 0
      %2453 = vmatpush2.bf16.msra.mxu0 0
      %2454 = vmatprep.mubr.bf16.mxu0 0
      %2455 = vmatmul.mubr.bf16.gmra.mxu0 %v2411
      %v2456 = vpop.f32.mrf.mxu0
      %v2457 = vadd.f32 %v2336, %v2456
      %v2458 = vpop.f32.mrf.mxu0
      %v2459 = vpop.f32.mrf.mxu0
      %v2460 = vadd.f32 %v2339, %v2459
      %v2461 = vpop.f32.mrf.mxu0
      %2462 = vmatprep.mubr.bf16.mxu0 0
      %2463 = vmatmul.mubr.bf16.gmra.mxu0 %v2414
      %v2464 = vpop.f32.mrf.mxu0
      %v2465 = vadd.f32 %v2344, %v2464
      %v2466 = vpop.f32.mrf.mxu0
      %v2467 = vpop.f32.mrf.mxu0
      %v2468 = vadd.f32 %v2347, %v2467
      %v2469 = vpop.f32.mrf.mxu0
      %2470 = vmatprep.mubr.bf16.mxu0 0
      %2471 = vmatmul.mubr.bf16.gmra.mxu0 %v2417
      %v2472 = vpop.f32.mrf.mxu0
      %v2473 = vadd.f32 %v2352, %v2472
      %v2474 = vpop.f32.mrf.mxu0
      %v2475 = vpop.f32.mrf.mxu0
      %v2476 = vadd.f32 %v2355, %v2475
      %v2477 = vpop.f32.mrf.mxu0
      %2478 = vmatprep.mubr.bf16.mxu0 0
      %2479 = vmatmul.mubr.bf16.gmra.mxu0 %v2420
      %v2480 = vpop.f32.mrf.mxu0
      %v2481 = vadd.f32 %v2360, %v2480
      %v2482 = vpop.f32.mrf.mxu0
      %v2483 = vpop.f32.mrf.mxu0
      %v2484 = vadd.f32 %v2363, %v2483
      %v2485 = vpop.f32.mrf.mxu0
      %2486 = vdwg.mxu0
      %v2487 = vld [vmem:[#allocation2] sm:$0xe]
      %v2488 = vld [vmem:[#allocation2 + $0x8] sm:$0xe]
      %v2489 = vld [vmem:[#allocation2 + $0x10] sm:$0xe]
      %v2490 = vld [vmem:[#allocation2 + $0x18] sm:$0xe]
      %v2491 = vld [vmem:[#allocation2 + $0x20] sm:$0xe]
      %v2492 = vld [vmem:[#allocation2 + $0x28] sm:$0xe]
      %v2493 = vld [vmem:[#allocation2 + $0x30] sm:$0xe]
      %v2494 = vld [vmem:[#allocation2 + $0x38] sm:$0xe]
      %vm2511 = vcmask 1042432
      %vm2512 = vcmask 1046532
      %vm2513 = vmor %vm2511, %vm2512
      %v2514 = vrot.slane %v2487, 5
      %v2515 = vrot.slane %v2514, 4
      %v2516 = vrot.slane %v2124, 5
      %v2517 = vsel %vm2513, %v2515, %v2516
      %v2518 = vrot.slane %v2488, 5
      %v2519 = vrot.slane %v2518, 4
      %v2520 = vrot.slane %v2125, 5
      %v2521 = vsel %vm2513, %v2519, %v2520
      %v2522 = vrot.slane %v2489, 5
      %v2523 = vrot.slane %v2522, 4
      %v2524 = vrot.slane %v2126, 5
      %v2525 = vsel %vm2513, %v2523, %v2524
      %v2526 = vrot.slane %v2490, 5
      %v2527 = vrot.slane %v2526, 4
      %v2528 = vrot.slane %v2127, 5
      %v2529 = vsel %vm2513, %v2527, %v2528
      %v2530 = vrot.slane %v2491, 5
      %v2531 = vrot.slane %v2530, 4
      %v2532 = vrot.slane %v2128, 5
      %v2533 = vsel %vm2513, %v2531, %v2532
      %v2534 = vrot.slane %v2492, 5
      %v2535 = vrot.slane %v2534, 4
      %v2536 = vrot.slane %v2129, 5
      %v2537 = vsel %vm2513, %v2535, %v2536
      %v2538 = vrot.slane %v2493, 5
      %v2539 = vrot.slane %v2538, 4
      %v2540 = vrot.slane %v2130, 5
      %v2541 = vsel %vm2513, %v2539, %v2540
      %v2542 = vrot.slane %v2494, 5
      %v2543 = vrot.slane %v2542, 4
      %v2544 = vrot.slane %v2131, 5
      %v2545 = vsel %vm2513, %v2543, %v2544
      %s2546 = scalar_lea.vmem %s3, 64
      %v2547 = vld [vmem:[%s2546] sm:$0xf]
      %v2548 = vld [vmem:[%s2546 + $0x4] sm:$0xf]
      %v2549 = vld [vmem:[%s2546 + $0x8] sm:$0xf]
      %v2550 = vld [vmem:[%s2546 + $0xc] sm:$0xf]
      %v2551 = vld [vmem:[%s2546 + $0x10] sm:$0xf]
      %v2552 = vld [vmem:[%s2546 + $0x14] sm:$0xf]
      %v2553 = vld [vmem:[%s2546 + $0x18] sm:$0xf]
      %v2554 = vld [vmem:[%s2546 + $0x1c] sm:$0xf]
      %v2555 = vunpack.c.l.b16 %v2517
      %v2556 = vunpack.c.l.b16 %v2521
      %v2557 = vunpack.c.l.b16 %v2525
      %v2558 = vunpack.c.l.b16 %v2529
      %v2559 = vunpack.c.l.b16 %v2533
      %v2560 = vunpack.c.l.b16 %v2537
      %v2561 = vunpack.c.l.b16 %v2541
      %v2562 = vunpack.c.l.b16 %v2545
      %v2563 = vpack.c.b16 %v2556, %v2555
      %v2564 = vpack.c.b16 %v2558, %v2557
      %v2565 = vpack.c.b16 %v2560, %v2559
      %v2566 = vpack.c.b16 %v2562, %v2561
      %v2575 = vunpack.c.l.b16 %v2547
      %v2576 = vunpack.c.l.b16 %v2548
      %v2577 = vunpack.c.l.b16 %v2549
      %v2578 = vunpack.c.l.b16 %v2550
      %v2579 = vunpack.c.l.b16 %v2551
      %v2580 = vunpack.c.l.b16 %v2552
      %v2581 = vunpack.c.l.b16 %v2553
      %v2582 = vunpack.c.l.b16 %v2554
      %v2583 = vpack.c.b16 %v2576, %v2575
      %v2584 = vpack.c.b16 %v2578, %v2577
      %v2585 = vpack.c.b16 %v2580, %v2579
      %v2586 = vpack.c.b16 %v2582, %v2581
      %v2592 = vsel %vm338, %v2563, 0
      %v2595 = vsel %vm338, %v2564, 0
      %v2598 = vsel %vm338, %v2565, 0
      %v2601 = vsel %vm338, %v2566, 0
      %2603 = vmatprep.subr.bf16.mxu0 0
      %2604 = vmatpush1.bf16.msra.mxu0 0
      %2605 = vmatprep.subr.bf16.mxu0 0
      %2606 = vmatpush1.bf16.msra.mxu0 0
      %2607 = vmatprep.subr.bf16.mxu0 0
      %2608 = vmatpush1.bf16.msra.mxu0 0
      %2609 = vmatprep.subr.bf16.mxu0 0
      %2610 = vmatpush1.bf16.msra.mxu0 0
      %2611 = vmatprep.subr.bf16.mxu0 0
      %2612 = vmatpush1.bf16.msra.mxu0 %v2586
      %2613 = vmatprep.subr.bf16.mxu0 0
      %2614 = vmatpush1.bf16.msra.mxu0 %v2585
      %2615 = vmatprep.subr.bf16.mxu0 0
      %2616 = vmatpush1.bf16.msra.mxu0 %v2584
      %2617 = vmatprep.subr.bf16.mxu0 0
      %2618 = vmatpush1.bf16.msra.mxu0 %v2583
      %2619 = vmatprep.subr.bf16.mxu0 0
      %2620 = vmatpush2.bf16.msra.mxu0 0
      %2621 = vmatprep.subr.bf16.mxu0 0
      %2622 = vmatpush2.bf16.msra.mxu0 0
      %2623 = vmatprep.subr.bf16.mxu0 0
      %2624 = vmatpush2.bf16.msra.mxu0 0
      %2625 = vmatprep.subr.bf16.mxu0 0
      %2626 = vmatpush2.bf16.msra.mxu0 0
      %2627 = vmatprep.subr.bf16.mxu0 0
      %2628 = vmatpush2.bf16.msra.mxu0 0
      %2629 = vmatprep.subr.bf16.mxu0 0
      %2630 = vmatpush2.bf16.msra.mxu0 0
      %2631 = vmatprep.subr.bf16.mxu0 0
      %2632 = vmatpush2.bf16.msra.mxu0 0
      %2633 = vmatprep.subr.bf16.mxu0 0
      %2634 = vmatpush2.bf16.msra.mxu0 0
      %2635 = vmatprep.mubr.bf16.mxu0 0
      %2636 = vmatmul.mubr.bf16.gmra.mxu0 %v2592
      %v2637 = vpop.f32.mrf.mxu0
      %v2638 = vadd.f32 0.0, %v2637
      %v2639 = vpop.f32.mrf.mxu0
      %v2640 = vpop.f32.mrf.mxu0
      %v2641 = vadd.f32 0.0, %v2640
      %v2642 = vpop.f32.mrf.mxu0
      %2643 = vmatprep.mubr.bf16.mxu0 0
      %2644 = vmatmul.mubr.bf16.gmra.mxu0 %v2595
      %v2645 = vpop.f32.mrf.mxu0
      %v2646 = vadd.f32 0.0, %v2645
      %v2647 = vpop.f32.mrf.mxu0
      %v2648 = vpop.f32.mrf.mxu0
      %v2649 = vadd.f32 0.0, %v2648
      %v2650 = vpop.f32.mrf.mxu0
      %2651 = vmatprep.mubr.bf16.mxu0 0
      %2652 = vmatmul.mubr.bf16.gmra.mxu0 %v2598
      %v2653 = vpop.f32.mrf.mxu0
      %v2654 = vadd.f32 0.0, %v2653
      %v2655 = vpop.f32.mrf.mxu0
      %v2656 = vpop.f32.mrf.mxu0
      %v2657 = vadd.f32 0.0, %v2656
      %v2658 = vpop.f32.mrf.mxu0
      %2659 = vmatprep.mubr.bf16.mxu0 0
      %2660 = vmatmul.mubr.bf16.gmra.mxu0 %v2601
      %v2661 = vpop.f32.mrf.mxu0
      %v2662 = vadd.f32 0.0, %v2661
      %v2663 = vpop.f32.mrf.mxu0
      %v2664 = vpop.f32.mrf.mxu0
      %v2665 = vadd.f32 0.0, %v2664
      %v2666 = vpop.f32.mrf.mxu0
      %2667 = vdwg.mxu0
      %v2668 = vadd.f32 %v2457, %v2638
      %v2669 = vadd.f32 %v2460, %v2641
      %v2670 = vadd.f32 %v2465, %v2646
      %v2671 = vadd.f32 %v2468, %v2649
      %v2672 = vadd.f32 %v2473, %v2654
      %v2673 = vadd.f32 %v2476, %v2657
      %v2674 = vadd.f32 %v2481, %v2662
      %v2675 = vadd.f32 %v2484, %v2665
      %v2676 = vld [vmem:[%s2053] sm:$0xf]
      %v2677 = vld [vmem:[%s2053 + $0x8] sm:$0xf]
      %v2678 = vld [vmem:[%s2053 + $0x10] sm:$0xf]
      %v2679 = vld [vmem:[%s2053 + $0x18] sm:$0xf]
      %v2680 = vld [vmem:[%s2053 + $0x20] sm:$0xf]
      %v2681 = vld [vmem:[%s2053 + $0x28] sm:$0xf]
      %v2682 = vld [vmem:[%s2053 + $0x30] sm:$0xf]
      %v2683 = vld [vmem:[%s2053 + $0x38] sm:$0xf]
      %s2684 = scalar_lea.vmem %s3, 96
      %v2685 = vld [vmem:[%s2684] sm:$0xf]
      %v2686 = vld [vmem:[%s2684 + $0x4] sm:$0xf]
      %v2687 = vld [vmem:[%s2684 + $0x8] sm:$0xf]
      %v2688 = vld [vmem:[%s2684 + $0xc] sm:$0xf]
      %v2689 = vld [vmem:[%s2684 + $0x10] sm:$0xf]
      %v2690 = vld [vmem:[%s2684 + $0x14] sm:$0xf]
      %v2691 = vld [vmem:[%s2684 + $0x18] sm:$0xf]
      %v2692 = vld [vmem:[%s2684 + $0x1c] sm:$0xf]
      %v2701 = vunpack.c.l.b16 %v2676
      %v2702 = vunpack.c.l.b16 %v2677
      %v2703 = vunpack.c.l.b16 %v2678
      %v2704 = vunpack.c.l.b16 %v2679
      %v2705 = vunpack.c.l.b16 %v2680
      %v2706 = vunpack.c.l.b16 %v2681
      %v2707 = vunpack.c.l.b16 %v2682
      %v2708 = vunpack.c.l.b16 %v2683
      %v2709 = vpack.c.b16 %v2702, %v2701
      %v2710 = vpack.c.b16 %v2704, %v2703
      %v2711 = vpack.c.b16 %v2706, %v2705
      %v2712 = vpack.c.b16 %v2708, %v2707
      %v2721 = vunpack.c.l.b16 %v2685
      %v2722 = vunpack.c.l.b16 %v2686
      %v2723 = vunpack.c.l.b16 %v2687
      %v2724 = vunpack.c.l.b16 %v2688
      %v2725 = vunpack.c.l.b16 %v2689
      %v2726 = vunpack.c.l.b16 %v2690
      %v2727 = vunpack.c.l.b16 %v2691
      %v2728 = vunpack.c.l.b16 %v2692
      %v2729 = vpack.c.b16 %v2722, %v2721
      %v2730 = vpack.c.b16 %v2724, %v2723
      %v2731 = vpack.c.b16 %v2726, %v2725
      %v2732 = vpack.c.b16 %v2728, %v2727
      %v2738 = vsel %vm338, %v2709, 0
      %v2741 = vsel %vm338, %v2710, 0
      %v2744 = vsel %vm338, %v2711, 0
      %v2747 = vsel %vm338, %v2712, 0
      %2749 = vmatprep.subr.bf16.mxu0 0
      %2750 = vmatpush1.bf16.msra.mxu0 0
      %2751 = vmatprep.subr.bf16.mxu0 0
      %2752 = vmatpush1.bf16.msra.mxu0 0
      %2753 = vmatprep.subr.bf16.mxu0 0
      %2754 = vmatpush1.bf16.msra.mxu0 0
      %2755 = vmatprep.subr.bf16.mxu0 0
      %2756 = vmatpush1.bf16.msra.mxu0 0
      %2757 = vmatprep.subr.bf16.mxu0 0
      %2758 = vmatpush1.bf16.msra.mxu0 %v2732
      %2759 = vmatprep.subr.bf16.mxu0 0
      %2760 = vmatpush1.bf16.msra.mxu0 %v2731
      %2761 = vmatprep.subr.bf16.mxu0 0
      %2762 = vmatpush1.bf16.msra.mxu0 %v2730
      %2763 = vmatprep.subr.bf16.mxu0 0
      %2764 = vmatpush1.bf16.msra.mxu0 %v2729
      %2765 = vmatprep.subr.bf16.mxu0 0
      %2766 = vmatpush2.bf16.msra.mxu0 0
      %2767 = vmatprep.subr.bf16.mxu0 0
      %2768 = vmatpush2.bf16.msra.mxu0 0
      %2769 = vmatprep.subr.bf16.mxu0 0
      %2770 = vmatpush2.bf16.msra.mxu0 0
      %2771 = vmatprep.subr.bf16.mxu0 0
      %2772 = vmatpush2.bf16.msra.mxu0 0
      %2773 = vmatprep.subr.bf16.mxu0 0
      %2774 = vmatpush2.bf16.msra.mxu0 0
      %2775 = vmatprep.subr.bf16.mxu0 0
      %2776 = vmatpush2.bf16.msra.mxu0 0
      %2777 = vmatprep.subr.bf16.mxu0 0
      %2778 = vmatpush2.bf16.msra.mxu0 0
      %2779 = vmatprep.subr.bf16.mxu0 0
      %2780 = vmatpush2.bf16.msra.mxu0 0
      %2781 = vmatprep.mubr.bf16.mxu0 0
      %2782 = vmatmul.mubr.bf16.gmra.mxu0 %v2738
      %v2783 = vpop.f32.mrf.mxu0
      %v2784 = vadd.f32 0.0, %v2783
      %v2785 = vpop.f32.mrf.mxu0
      %v2786 = vpop.f32.mrf.mxu0
      %v2787 = vadd.f32 0.0, %v2786
      %v2788 = vpop.f32.mrf.mxu0
      %2789 = vmatprep.mubr.bf16.mxu0 0
      %2790 = vmatmul.mubr.bf16.gmra.mxu0 %v2741
      %v2791 = vpop.f32.mrf.mxu0
      %v2792 = vadd.f32 0.0, %v2791
      %v2793 = vpop.f32.mrf.mxu0
      %v2794 = vpop.f32.mrf.mxu0
      %v2795 = vadd.f32 0.0, %v2794
      %v2796 = vpop.f32.mrf.mxu0
      %2797 = vmatprep.mubr.bf16.mxu0 0
      %2798 = vmatmul.mubr.bf16.gmra.mxu0 %v2744
      %v2799 = vpop.f32.mrf.mxu0
      %v2800 = vadd.f32 0.0, %v2799
      %v2801 = vpop.f32.mrf.mxu0
      %v2802 = vpop.f32.mrf.mxu0
      %v2803 = vadd.f32 0.0, %v2802
      %v2804 = vpop.f32.mrf.mxu0
      %2805 = vmatprep.mubr.bf16.mxu0 0
      %2806 = vmatmul.mubr.bf16.gmra.mxu0 %v2747
      %v2807 = vpop.f32.mrf.mxu0
      %v2808 = vadd.f32 0.0, %v2807
      %v2809 = vpop.f32.mrf.mxu0
      %v2810 = vpop.f32.mrf.mxu0
      %v2811 = vadd.f32 0.0, %v2810
      %v2812 = vpop.f32.mrf.mxu0
      %2813 = vdwg.mxu0
      %v2814 = vadd.f32 %v2668, %v2784
      %v2815 = vadd.f32 %v2669, %v2787
      %v2816 = vadd.f32 %v2670, %v2792
      %v2817 = vadd.f32 %v2671, %v2795
      %v2818 = vadd.f32 %v2672, %v2800
      %v2819 = vadd.f32 %v2673, %v2803
      %v2820 = vadd.f32 %v2674, %v2808
      %v2821 = vadd.f32 %v2675, %v2811
      %v2822 = vld [vmem:[%s2053] sm:$0xf]
      %v2823 = vld [vmem:[%s2053 + $0x4] sm:$0x1]
      %v2824 = vld [vmem:[%s2053 + $0x8] sm:$0xf]
      %v2825 = vld [vmem:[%s2053 + $0xc] sm:$0x1]
      %v2826 = vld [vmem:[%s2053 + $0x10] sm:$0xf]
      %v2827 = vld [vmem:[%s2053 + $0x14] sm:$0x1]
      %v2828 = vld [vmem:[%s2053 + $0x18] sm:$0xf]
      %v2829 = vld [vmem:[%s2053 + $0x1c] sm:$0x1]
      %v2830 = vld [vmem:[%s2053 + $0x20] sm:$0xf]
      %v2831 = vld [vmem:[%s2053 + $0x24] sm:$0x1]
      %v2832 = vld [vmem:[%s2053 + $0x28] sm:$0xf]
      %v2833 = vld [vmem:[%s2053 + $0x2c] sm:$0x1]
      %v2834 = vld [vmem:[%s2053 + $0x30] sm:$0xf]
      %v2835 = vld [vmem:[%s2053 + $0x34] sm:$0x1]
      %v2836 = vld [vmem:[%s2053 + $0x38] sm:$0xf]
      %v2837 = vld [vmem:[%s2053 + $0x3c] sm:$0x1]
      %v2839 = vshrl.u32 %v2822, 16
      %v2841 = vrot.slane %v2839, 4
      %v2842 = vshll.u32 %v2822, 16
      %v2844 = vrot.slane %v2842, 5
      %v2845 = vor.u32 %v2841, %v2844
      %v2846 = vrot.slane %v2845, 4
      %v2848 = vshll.u32 %v2823, 16
      %v2850 = vrot.slane %v2848, 5
      %v2851 = vsel %vm555, %v2846, %v2850
      %v2853 = vshrl.u32 %v2824, 16
      %v2855 = vrot.slane %v2853, 4
      %v2856 = vshll.u32 %v2824, 16
      %v2858 = vrot.slane %v2856, 5
      %v2859 = vor.u32 %v2855, %v2858
      %v2860 = vrot.slane %v2859, 4
      %v2862 = vshll.u32 %v2825, 16
      %v2864 = vrot.slane %v2862, 5
      %v2865 = vsel %vm555, %v2860, %v2864
      %v2867 = vshrl.u32 %v2826, 16
      %v2869 = vrot.slane %v2867, 4
      %v2870 = vshll.u32 %v2826, 16
      %v2872 = vrot.slane %v2870, 5
      %v2873 = vor.u32 %v2869, %v2872
      %v2874 = vrot.slane %v2873, 4
      %v2876 = vshll.u32 %v2827, 16
      %v2878 = vrot.slane %v2876, 5
      %v2879 = vsel %vm555, %v2874, %v2878
      %v2881 = vshrl.u32 %v2828, 16
      %v2883 = vrot.slane %v2881, 4
      %v2884 = vshll.u32 %v2828, 16
      %v2886 = vrot.slane %v2884, 5
      %v2887 = vor.u32 %v2883, %v2886
      %v2888 = vrot.slane %v2887, 4
      %v2890 = vshll.u32 %v2829, 16
      %v2892 = vrot.slane %v2890, 5
      %v2893 = vsel %vm555, %v2888, %v2892
      %v2895 = vshrl.u32 %v2830, 16
      %v2897 = vrot.slane %v2895, 4
      %v2898 = vshll.u32 %v2830, 16
      %v2900 = vrot.slane %v2898, 5
      %v2901 = vor.u32 %v2897, %v2900
      %v2902 = vrot.slane %v2901, 4
      %v2904 = vshll.u32 %v2831, 16
      %v2906 = vrot.slane %v2904, 5
      %v2907 = vsel %vm555, %v2902, %v2906
      %v2909 = vshrl.u32 %v2832, 16
      %v2911 = vrot.slane %v2909, 4
      %v2912 = vshll.u32 %v2832, 16
      %v2914 = vrot.slane %v2912, 5
      %v2915 = vor.u32 %v2911, %v2914
      %v2916 = vrot.slane %v2915, 4
      %v2918 = vshll.u32 %v2833, 16
      %v2920 = vrot.slane %v2918, 5
      %v2921 = vsel %vm555, %v2916, %v2920
      %v2923 = vshrl.u32 %v2834, 16
      %v2925 = vrot.slane %v2923, 4
      %v2926 = vshll.u32 %v2834, 16
      %v2928 = vrot.slane %v2926, 5
      %v2929 = vor.u32 %v2925, %v2928
      %v2930 = vrot.slane %v2929, 4
      %v2932 = vshll.u32 %v2835, 16
      %v2934 = vrot.slane %v2932, 5
      %v2935 = vsel %vm555, %v2930, %v2934
      %v2937 = vshrl.u32 %v2836, 16
      %v2939 = vrot.slane %v2937, 4
      %v2940 = vshll.u32 %v2836, 16
      %v2942 = vrot.slane %v2940, 5
      %v2943 = vor.u32 %v2939, %v2942
      %v2944 = vrot.slane %v2943, 4
      %v2946 = vshll.u32 %v2837, 16
      %v2948 = vrot.slane %v2946, 5
      %v2949 = vsel %vm555, %v2944, %v2948
      %s2950 = scalar_lea.vmem %s3, 128
      %v2951 = vld [vmem:[%s2950] sm:$0xf]
      %v2952 = vld [vmem:[%s2950 + $0x4] sm:$0xf]
      %v2953 = vld [vmem:[%s2950 + $0x8] sm:$0xf]
      %v2954 = vld [vmem:[%s2950 + $0xc] sm:$0xf]
      %v2955 = vld [vmem:[%s2950 + $0x10] sm:$0xf]
      %v2956 = vld [vmem:[%s2950 + $0x14] sm:$0xf]
      %v2957 = vld [vmem:[%s2950 + $0x18] sm:$0xf]
      %v2958 = vld [vmem:[%s2950 + $0x1c] sm:$0xf]
      %v2959 = vunpack.c.l.b16 %v2851
      %v2960 = vunpack.c.l.b16 %v2865
      %v2961 = vunpack.c.l.b16 %v2879
      %v2962 = vunpack.c.l.b16 %v2893
      %v2963 = vunpack.c.l.b16 %v2907
      %v2964 = vunpack.c.l.b16 %v2921
      %v2965 = vunpack.c.l.b16 %v2935
      %v2966 = vunpack.c.l.b16 %v2949
      %v2967 = vpack.c.b16 %v2960, %v2959
      %v2968 = vpack.c.b16 %v2962, %v2961
      %v2969 = vpack.c.b16 %v2964, %v2963
      %v2970 = vpack.c.b16 %v2966, %v2965
      %v2979 = vunpack.c.l.b16 %v2951
      %v2980 = vunpack.c.l.b16 %v2952
      %v2981 = vunpack.c.l.b16 %v2953
      %v2982 = vunpack.c.l.b16 %v2954
      %v2983 = vunpack.c.l.b16 %v2955
      %v2984 = vunpack.c.l.b16 %v2956
      %v2985 = vunpack.c.l.b16 %v2957
      %v2986 = vunpack.c.l.b16 %v2958
      %v2987 = vpack.c.b16 %v2980, %v2979
      %v2988 = vpack.c.b16 %v2982, %v2981
      %v2989 = vpack.c.b16 %v2984, %v2983
      %v2990 = vpack.c.b16 %v2986, %v2985
      %v2996 = vsel %vm338, %v2967, 0
      %v2999 = vsel %vm338, %v2968, 0
      %v3002 = vsel %vm338, %v2969, 0
      %v3005 = vsel %vm338, %v2970, 0
      %3007 = vmatprep.subr.bf16.mxu0 0
      %3008 = vmatpush1.bf16.msra.mxu0 0
      %3009 = vmatprep.subr.bf16.mxu0 0
      %3010 = vmatpush1.bf16.msra.mxu0 0
      %3011 = vmatprep.subr.bf16.mxu0 0
      %3012 = vmatpush1.bf16.msra.mxu0 0
      %3013 = vmatprep.subr.bf16.mxu0 0
      %3014 = vmatpush1.bf16.msra.mxu0 0
      %3015 = vmatprep.subr.bf16.mxu0 0
      %3016 = vmatpush1.bf16.msra.mxu0 %v2990
      %3017 = vmatprep.subr.bf16.mxu0 0
      %3018 = vmatpush1.bf16.msra.mxu0 %v2989
      %3019 = vmatprep.subr.bf16.mxu0 0
      %3020 = vmatpush1.bf16.msra.mxu0 %v2988
      %3021 = vmatprep.subr.bf16.mxu0 0
      %3022 = vmatpush1.bf16.msra.mxu0 %v2987
      %3023 = vmatprep.subr.bf16.mxu0 0
      %3024 = vmatpush2.bf16.msra.mxu0 0
      %3025 = vmatprep.subr.bf16.mxu0 0
      %3026 = vmatpush2.bf16.msra.mxu0 0
      %3027 = vmatprep.subr.bf16.mxu0 0
      %3028 = vmatpush2.bf16.msra.mxu0 0
      %3029 = vmatprep.subr.bf16.mxu0 0
      %3030 = vmatpush2.bf16.msra.mxu0 0
      %3031 = vmatprep.subr.bf16.mxu0 0
      %3032 = vmatpush2.bf16.msra.mxu0 0
      %3033 = vmatprep.subr.bf16.mxu0 0
      %3034 = vmatpush2.bf16.msra.mxu0 0
      %3035 = vmatprep.subr.bf16.mxu0 0
      %3036 = vmatpush2.bf16.msra.mxu0 0
      %3037 = vmatprep.subr.bf16.mxu0 0
      %3038 = vmatpush2.bf16.msra.mxu0 0
      %3039 = vmatprep.mubr.bf16.mxu0 0
      %3040 = vmatmul.mubr.bf16.gmra.mxu0 %v2996
      %v3041 = vpop.f32.mrf.mxu0
      %v3042 = vadd.f32 0.0, %v3041
      %v3043 = vpop.f32.mrf.mxu0
      %v3044 = vpop.f32.mrf.mxu0
      %v3045 = vadd.f32 0.0, %v3044
      %v3046 = vpop.f32.mrf.mxu0
      %3047 = vmatprep.mubr.bf16.mxu0 0
      %3048 = vmatmul.mubr.bf16.gmra.mxu0 %v2999
      %v3049 = vpop.f32.mrf.mxu0
      %v3050 = vadd.f32 0.0, %v3049
      %v3051 = vpop.f32.mrf.mxu0
      %v3052 = vpop.f32.mrf.mxu0
      %v3053 = vadd.f32 0.0, %v3052
      %v3054 = vpop.f32.mrf.mxu0
      %3055 = vmatprep.mubr.bf16.mxu0 0
      %3056 = vmatmul.mubr.bf16.gmra.mxu0 %v3002
      %v3057 = vpop.f32.mrf.mxu0
      %v3058 = vadd.f32 0.0, %v3057
      %v3059 = vpop.f32.mrf.mxu0
      %v3060 = vpop.f32.mrf.mxu0
      %v3061 = vadd.f32 0.0, %v3060
      %v3062 = vpop.f32.mrf.mxu0
      %3063 = vmatprep.mubr.bf16.mxu0 0
      %3064 = vmatmul.mubr.bf16.gmra.mxu0 %v3005
      %v3065 = vpop.f32.mrf.mxu0
      %v3066 = vadd.f32 0.0, %v3065
      %v3067 = vpop.f32.mrf.mxu0
      %v3068 = vpop.f32.mrf.mxu0
      %v3069 = vadd.f32 0.0, %v3068
      %v3070 = vpop.f32.mrf.mxu0
      %3071 = vdwg.mxu0
      %v3072 = vadd.f32 %v2814, %v3042
      %v3073 = vadd.f32 %v2815, %v3045
      %v3074 = vadd.f32 %v2816, %v3050
      %v3075 = vadd.f32 %v2817, %v3053
      %v3076 = vadd.f32 %v2818, %v3058
      %v3077 = vadd.f32 %v2819, %v3061
      %v3078 = vadd.f32 %v2820, %v3066
      %v3079 = vadd.f32 %v2821, %v3069
      %v3080 = vld [vmem:[%s2053] sm:$0xe]
      %v3081 = vld [vmem:[%s2053 + $0x8] sm:$0xe]
      %v3082 = vld [vmem:[%s2053 + $0x10] sm:$0xe]
      %v3083 = vld [vmem:[%s2053 + $0x18] sm:$0xe]
      %v3084 = vld [vmem:[%s2053 + $0x20] sm:$0xe]
      %v3085 = vld [vmem:[%s2053 + $0x28] sm:$0xe]
      %v3086 = vld [vmem:[%s2053 + $0x30] sm:$0xe]
      %v3087 = vld [vmem:[%s2053 + $0x38] sm:$0xe]
      %v3104 = vrot.slane %v3080, 5
      %v3105 = vrot.slane %v3104, 4
      %v3106 = vrot.slane %v2823, 5
      %v3107 = vsel %vm2513, %v3105, %v3106
      %v3108 = vrot.slane %v3081, 5
      %v3109 = vrot.slane %v3108, 4
      %v3110 = vrot.slane %v2825, 5
      %v3111 = vsel %vm2513, %v3109, %v3110
      %v3112 = vrot.slane %v3082, 5
      %v3113 = vrot.slane %v3112, 4
      %v3114 = vrot.slane %v2827, 5
      %v3115 = vsel %vm2513, %v3113, %v3114
      %v3116 = vrot.slane %v3083, 5
      %v3117 = vrot.slane %v3116, 4
      %v3118 = vrot.slane %v2829, 5
      %v3119 = vsel %vm2513, %v3117, %v3118
      %v3120 = vrot.slane %v3084, 5
      %v3121 = vrot.slane %v3120, 4
      %v3122 = vrot.slane %v2831, 5
      %v3123 = vsel %vm2513, %v3121, %v3122
      %v3124 = vrot.slane %v3085, 5
      %v3125 = vrot.slane %v3124, 4
      %v3126 = vrot.slane %v2833, 5
      %v3127 = vsel %vm2513, %v3125, %v3126
      %v3128 = vrot.slane %v3086, 5
      %v3129 = vrot.slane %v3128, 4
      %v3130 = vrot.slane %v2835, 5
      %v3131 = vsel %vm2513, %v3129, %v3130
      %v3132 = vrot.slane %v3087, 5
      %v3133 = vrot.slane %v3132, 4
      %v3134 = vrot.slane %v2837, 5
      %v3135 = vsel %vm2513, %v3133, %v3134
      %s3136 = scalar_lea.vmem %s3, 160
      %v3137 = vld [vmem:[%s3136] sm:$0xf]
      %v3138 = vld [vmem:[%s3136 + $0x4] sm:$0xf]
      %v3139 = vld [vmem:[%s3136 + $0x8] sm:$0xf]
      %v3140 = vld [vmem:[%s3136 + $0xc] sm:$0xf]
      %v3141 = vld [vmem:[%s3136 + $0x10] sm:$0xf]
      %v3142 = vld [vmem:[%s3136 + $0x14] sm:$0xf]
      %v3143 = vld [vmem:[%s3136 + $0x18] sm:$0xf]
      %v3144 = vld [vmem:[%s3136 + $0x1c] sm:$0xf]
      %v3145 = vunpack.c.l.b16 %v3107
      %v3146 = vunpack.c.l.b16 %v3111
      %v3147 = vunpack.c.l.b16 %v3115
      %v3148 = vunpack.c.l.b16 %v3119
      %v3149 = vunpack.c.l.b16 %v3123
      %v3150 = vunpack.c.l.b16 %v3127
      %v3151 = vunpack.c.l.b16 %v3131
      %v3152 = vunpack.c.l.b16 %v3135
      %v3153 = vpack.c.b16 %v3146, %v3145
      %v3154 = vpack.c.b16 %v3148, %v3147
      %v3155 = vpack.c.b16 %v3150, %v3149
      %v3156 = vpack.c.b16 %v3152, %v3151
      %v3165 = vunpack.c.l.b16 %v3137
      %v3166 = vunpack.c.l.b16 %v3138
      %v3167 = vunpack.c.l.b16 %v3139
      %v3168 = vunpack.c.l.b16 %v3140
      %v3169 = vunpack.c.l.b16 %v3141
      %v3170 = vunpack.c.l.b16 %v3142
      %v3171 = vunpack.c.l.b16 %v3143
      %v3172 = vunpack.c.l.b16 %v3144
      %v3173 = vpack.c.b16 %v3166, %v3165
      %v3174 = vpack.c.b16 %v3168, %v3167
      %v3175 = vpack.c.b16 %v3170, %v3169
      %v3176 = vpack.c.b16 %v3172, %v3171
      %v3182 = vsel %vm338, %v3153, 0
      %v3185 = vsel %vm338, %v3154, 0
      %v3188 = vsel %vm338, %v3155, 0
      %v3191 = vsel %vm338, %v3156, 0
      %3193 = vmatprep.subr.bf16.mxu0 0
      %3194 = vmatpush1.bf16.msra.mxu0 0
      %3195 = vmatprep.subr.bf16.mxu0 0
      %3196 = vmatpush1.bf16.msra.mxu0 0
      %3197 = vmatprep.subr.bf16.mxu0 0
      %3198 = vmatpush1.bf16.msra.mxu0 0
      %3199 = vmatprep.subr.bf16.mxu0 0
      %3200 = vmatpush1.bf16.msra.mxu0 0
      %3201 = vmatprep.subr.bf16.mxu0 0
      %3202 = vmatpush1.bf16.msra.mxu0 %v3176
      %3203 = vmatprep.subr.bf16.mxu0 0
      %3204 = vmatpush1.bf16.msra.mxu0 %v3175
      %3205 = vmatprep.subr.bf16.mxu0 0
      %3206 = vmatpush1.bf16.msra.mxu0 %v3174
      %3207 = vmatprep.subr.bf16.mxu0 0
      %3208 = vmatpush1.bf16.msra.mxu0 %v3173
      %3209 = vmatprep.subr.bf16.mxu0 0
      %3210 = vmatpush2.bf16.msra.mxu0 0
      %3211 = vmatprep.subr.bf16.mxu0 0
      %3212 = vmatpush2.bf16.msra.mxu0 0
      %3213 = vmatprep.subr.bf16.mxu0 0
      %3214 = vmatpush2.bf16.msra.mxu0 0
      %3215 = vmatprep.subr.bf16.mxu0 0
      %3216 = vmatpush2.bf16.msra.mxu0 0
      %3217 = vmatprep.subr.bf16.mxu0 0
      %3218 = vmatpush2.bf16.msra.mxu0 0
      %3219 = vmatprep.subr.bf16.mxu0 0
      %3220 = vmatpush2.bf16.msra.mxu0 0
      %3221 = vmatprep.subr.bf16.mxu0 0
      %3222 = vmatpush2.bf16.msra.mxu0 0
      %3223 = vmatprep.subr.bf16.mxu0 0
      %3224 = vmatpush2.bf16.msra.mxu0 0
      %3225 = vmatprep.mubr.bf16.mxu0 0
      %3226 = vmatmul.mubr.bf16.gmra.mxu0 %v3182
      %v3227 = vpop.f32.mrf.mxu0
      %v3228 = vadd.f32 0.0, %v3227
      %v3229 = vpop.f32.mrf.mxu0
      %v3230 = vpop.f32.mrf.mxu0
      %v3231 = vadd.f32 0.0, %v3230
      %v3232 = vpop.f32.mrf.mxu0
      %3233 = vmatprep.mubr.bf16.mxu0 0
      %3234 = vmatmul.mubr.bf16.gmra.mxu0 %v3185
      %v3235 = vpop.f32.mrf.mxu0
      %v3236 = vadd.f32 0.0, %v3235
      %v3237 = vpop.f32.mrf.mxu0
      %v3238 = vpop.f32.mrf.mxu0
      %v3239 = vadd.f32 0.0, %v3238
      %v3240 = vpop.f32.mrf.mxu0
      %3241 = vmatprep.mubr.bf16.mxu0 0
      %3242 = vmatmul.mubr.bf16.gmra.mxu0 %v3188
      %v3243 = vpop.f32.mrf.mxu0
      %v3244 = vadd.f32 0.0, %v3243
      %v3245 = vpop.f32.mrf.mxu0
      %v3246 = vpop.f32.mrf.mxu0
      %v3247 = vadd.f32 0.0, %v3246
      %v3248 = vpop.f32.mrf.mxu0
      %3249 = vmatprep.mubr.bf16.mxu0 0
      %3250 = vmatmul.mubr.bf16.gmra.mxu0 %v3191
      %v3251 = vpop.f32.mrf.mxu0
      %v3252 = vadd.f32 0.0, %v3251
      %v3253 = vpop.f32.mrf.mxu0
      %v3254 = vpop.f32.mrf.mxu0
      %v3255 = vadd.f32 0.0, %v3254
      %v3256 = vpop.f32.mrf.mxu0
      %3257 = vdwg.mxu0
      %v3258 = vadd.f32 %v3072, %v3228
      %v3259 = vadd.f32 %v3073, %v3231
      %v3260 = vadd.f32 %v3074, %v3236
      %v3261 = vadd.f32 %v3075, %v3239
      %v3262 = vadd.f32 %v3076, %v3244
      %v3263 = vadd.f32 %v3077, %v3247
      %v3264 = vadd.f32 %v3078, %v3252
      %v3265 = vadd.f32 %v3079, %v3255
      %s3266 = scalar_lea.vmem [#allocation2], 16
      %v3267 = vld [vmem:[%s3266] sm:$0xf]
      %v3268 = vld [vmem:[%s3266 + $0x8] sm:$0xf]
      %v3269 = vld [vmem:[%s3266 + $0x10] sm:$0xf]
      %v3270 = vld [vmem:[%s3266 + $0x18] sm:$0xf]
      %v3271 = vld [vmem:[%s3266 + $0x20] sm:$0xf]
      %v3272 = vld [vmem:[%s3266 + $0x28] sm:$0xf]
      %v3273 = vld [vmem:[%s3266 + $0x30] sm:$0xf]
      %v3274 = vld [vmem:[%s3266 + $0x38] sm:$0xf]
      %s3275 = scalar_lea.vmem %s3, 192
      %v3276 = vld [vmem:[%s3275] sm:$0xf]
      %v3277 = vld [vmem:[%s3275 + $0x4] sm:$0xf]
      %v3278 = vld [vmem:[%s3275 + $0x8] sm:$0xf]
      %v3279 = vld [vmem:[%s3275 + $0xc] sm:$0xf]
      %v3280 = vld [vmem:[%s3275 + $0x10] sm:$0xf]
      %v3281 = vld [vmem:[%s3275 + $0x14] sm:$0xf]
      %v3282 = vld [vmem:[%s3275 + $0x18] sm:$0xf]
      %v3283 = vld [vmem:[%s3275 + $0x1c] sm:$0xf]
      %v3292 = vunpack.c.l.b16 %v3267
      %v3293 = vunpack.c.l.b16 %v3268
      %v3294 = vunpack.c.l.b16 %v3269
      %v3295 = vunpack.c.l.b16 %v3270
      %v3296 = vunpack.c.l.b16 %v3271
      %v3297 = vunpack.c.l.b16 %v3272
      %v3298 = vunpack.c.l.b16 %v3273
      %v3299 = vunpack.c.l.b16 %v3274
      %v3300 = vpack.c.b16 %v3293, %v3292
      %v3301 = vpack.c.b16 %v3295, %v3294
      %v3302 = vpack.c.b16 %v3297, %v3296
      %v3303 = vpack.c.b16 %v3299, %v3298
      %v3312 = vunpack.c.l.b16 %v3276
      %v3313 = vunpack.c.l.b16 %v3277
      %v3314 = vunpack.c.l.b16 %v3278
      %v3315 = vunpack.c.l.b16 %v3279
      %v3316 = vunpack.c.l.b16 %v3280
      %v3317 = vunpack.c.l.b16 %v3281
      %v3318 = vunpack.c.l.b16 %v3282
      %v3319 = vunpack.c.l.b16 %v3283
      %v3320 = vpack.c.b16 %v3313, %v3312
      %v3321 = vpack.c.b16 %v3315, %v3314
      %v3322 = vpack.c.b16 %v3317, %v3316
      %v3323 = vpack.c.b16 %v3319, %v3318
      %v3329 = vsel %vm338, %v3300, 0
      %v3332 = vsel %vm338, %v3301, 0
      %v3335 = vsel %vm338, %v3302, 0
      %v3338 = vsel %vm338, %v3303, 0
      %3340 = vmatprep.subr.bf16.mxu0 0
      %3341 = vmatpush1.bf16.msra.mxu0 0
      %3342 = vmatprep.subr.bf16.mxu0 0
      %3343 = vmatpush1.bf16.msra.mxu0 0
      %3344 = vmatprep.subr.bf16.mxu0 0
      %3345 = vmatpush1.bf16.msra.mxu0 0
      %3346 = vmatprep.subr.bf16.mxu0 0
      %3347 = vmatpush1.bf16.msra.mxu0 0
      %3348 = vmatprep.subr.bf16.mxu0 0
      %3349 = vmatpush1.bf16.msra.mxu0 %v3323
      %3350 = vmatprep.subr.bf16.mxu0 0
      %3351 = vmatpush1.bf16.msra.mxu0 %v3322
      %3352 = vmatprep.subr.bf16.mxu0 0
      %3353 = vmatpush1.bf16.msra.mxu0 %v3321
      %3354 = vmatprep.subr.bf16.mxu0 0
      %3355 = vmatpush1.bf16.msra.mxu0 %v3320
      %3356 = vmatprep.subr.bf16.mxu0 0
      %3357 = vmatpush2.bf16.msra.mxu0 0
      %3358 = vmatprep.subr.bf16.mxu0 0
      %3359 = vmatpush2.bf16.msra.mxu0 0
      %3360 = vmatprep.subr.bf16.mxu0 0
      %3361 = vmatpush2.bf16.msra.mxu0 0
      %3362 = vmatprep.subr.bf16.mxu0 0
      %3363 = vmatpush2.bf16.msra.mxu0 0
      %3364 = vmatprep.subr.bf16.mxu0 0
      %3365 = vmatpush2.bf16.msra.mxu0 0
      %3366 = vmatprep.subr.bf16.mxu0 0
      %3367 = vmatpush2.bf16.msra.mxu0 0
      %3368 = vmatprep.subr.bf16.mxu0 0
      %3369 = vmatpush2.bf16.msra.mxu0 0
      %3370 = vmatprep.subr.bf16.mxu0 0
      %3371 = vmatpush2.bf16.msra.mxu0 0
      %3372 = vmatprep.mubr.bf16.mxu0 0
      %3373 = vmatmul.mubr.bf16.gmra.mxu0 %v3329
      %v3374 = vpop.f32.mrf.mxu0
      %v3375 = vadd.f32 0.0, %v3374
      %v3376 = vpop.f32.mrf.mxu0
      %v3377 = vpop.f32.mrf.mxu0
      %v3378 = vadd.f32 0.0, %v3377
      %v3379 = vpop.f32.mrf.mxu0
      %3380 = vmatprep.mubr.bf16.mxu0 0
      %3381 = vmatmul.mubr.bf16.gmra.mxu0 %v3332
      %v3382 = vpop.f32.mrf.mxu0
      %v3383 = vadd.f32 0.0, %v3382
      %v3384 = vpop.f32.mrf.mxu0
      %v3385 = vpop.f32.mrf.mxu0
      %v3386 = vadd.f32 0.0, %v3385
      %v3387 = vpop.f32.mrf.mxu0
      %3388 = vmatprep.mubr.bf16.mxu0 0
      %3389 = vmatmul.mubr.bf16.gmra.mxu0 %v3335
      %v3390 = vpop.f32.mrf.mxu0
      %v3391 = vadd.f32 0.0, %v3390
      %v3392 = vpop.f32.mrf.mxu0
      %v3393 = vpop.f32.mrf.mxu0
      %v3394 = vadd.f32 0.0, %v3393
      %v3395 = vpop.f32.mrf.mxu0
      %3396 = vmatprep.mubr.bf16.mxu0 0
      %3397 = vmatmul.mubr.bf16.gmra.mxu0 %v3338
      %v3398 = vpop.f32.mrf.mxu0
      %v3399 = vadd.f32 0.0, %v3398
      %v3400 = vpop.f32.mrf.mxu0
      %v3401 = vpop.f32.mrf.mxu0
      %v3402 = vadd.f32 0.0, %v3401
      %v3403 = vpop.f32.mrf.mxu0
      %3404 = vdwg.mxu0
      %v3405 = vadd.f32 %v3258, %v3375
      %v3406 = vadd.f32 %v3259, %v3378
      %v3407 = vadd.f32 %v3260, %v3383
      %v3408 = vadd.f32 %v3261, %v3386
      %v3409 = vadd.f32 %v3262, %v3391
      %v3410 = vadd.f32 %v3263, %v3394
      %v3411 = vadd.f32 %v3264, %v3399
      %v3412 = vadd.f32 %v3265, %v3402
      %v3413 = vld [vmem:[%s3266] sm:$0xf]
      %v3414 = vld [vmem:[%s3266 + $0x4] sm:$0x1]
      %v3415 = vld [vmem:[%s3266 + $0x8] sm:$0xf]
      %v3416 = vld [vmem:[%s3266 + $0xc] sm:$0x1]
      %v3417 = vld [vmem:[%s3266 + $0x10] sm:$0xf]
      %v3418 = vld [vmem:[%s3266 + $0x14] sm:$0x1]
      %v3419 = vld [vmem:[%s3266 + $0x18] sm:$0xf]
      %v3420 = vld [vmem:[%s3266 + $0x1c] sm:$0x1]
      %v3421 = vld [vmem:[%s3266 + $0x20] sm:$0xf]
      %v3422 = vld [vmem:[%s3266 + $0x24] sm:$0x1]
      %v3423 = vld [vmem:[%s3266 + $0x28] sm:$0xf]
      %v3424 = vld [vmem:[%s3266 + $0x2c] sm:$0x1]
      %v3425 = vld [vmem:[%s3266 + $0x30] sm:$0xf]
      %v3426 = vld [vmem:[%s3266 + $0x34] sm:$0x1]
      %v3427 = vld [vmem:[%s3266 + $0x38] sm:$0xf]
      %v3428 = vld [vmem:[%s3266 + $0x3c] sm:$0x1]
      %v3430 = vshrl.u32 %v3413, 16
      %v3432 = vrot.slane %v3430, 4
      %v3433 = vshll.u32 %v3413, 16
      %v3435 = vrot.slane %v3433, 5
      %v3436 = vor.u32 %v3432, %v3435
      %v3437 = vrot.slane %v3436, 4
      %v3439 = vshll.u32 %v3414, 16
      %v3441 = vrot.slane %v3439, 5
      %v3442 = vsel %vm555, %v3437, %v3441
      %v3444 = vshrl.u32 %v3415, 16
      %v3446 = vrot.slane %v3444, 4
      %v3447 = vshll.u32 %v3415, 16
      %v3449 = vrot.slane %v3447, 5
      %v3450 = vor.u32 %v3446, %v3449
      %v3451 = vrot.slane %v3450, 4
      %v3453 = vshll.u32 %v3416, 16
      %v3455 = vrot.slane %v3453, 5
      %v3456 = vsel %vm555, %v3451, %v3455
      %v3458 = vshrl.u32 %v3417, 16
      %v3460 = vrot.slane %v3458, 4
      %v3461 = vshll.u32 %v3417, 16
      %v3463 = vrot.slane %v3461, 5
      %v3464 = vor.u32 %v3460, %v3463
      %v3465 = vrot.slane %v3464, 4
      %v3467 = vshll.u32 %v3418, 16
      %v3469 = vrot.slane %v3467, 5
      %v3470 = vsel %vm555, %v3465, %v3469
      %v3472 = vshrl.u32 %v3419, 16
      %v3474 = vrot.slane %v3472, 4
      %v3475 = vshll.u32 %v3419, 16
      %v3477 = vrot.slane %v3475, 5
      %v3478 = vor.u32 %v3474, %v3477
      %v3479 = vrot.slane %v3478, 4
      %v3481 = vshll.u32 %v3420, 16
      %v3483 = vrot.slane %v3481, 5
      %v3484 = vsel %vm555, %v3479, %v3483
      %v3486 = vshrl.u32 %v3421, 16
      %v3488 = vrot.slane %v3486, 4
      %v3489 = vshll.u32 %v3421, 16
      %v3491 = vrot.slane %v3489, 5
      %v3492 = vor.u32 %v3488, %v3491
      %v3493 = vrot.slane %v3492, 4
      %v3495 = vshll.u32 %v3422, 16
      %v3497 = vrot.slane %v3495, 5
      %v3498 = vsel %vm555, %v3493, %v3497
      %v3500 = vshrl.u32 %v3423, 16
      %v3502 = vrot.slane %v3500, 4
      %v3503 = vshll.u32 %v3423, 16
      %v3505 = vrot.slane %v3503, 5
      %v3506 = vor.u32 %v3502, %v3505
      %v3507 = vrot.slane %v3506, 4
      %v3509 = vshll.u32 %v3424, 16
      %v3511 = vrot.slane %v3509, 5
      %v3512 = vsel %vm555, %v3507, %v3511
      %v3514 = vshrl.u32 %v3425, 16
      %v3516 = vrot.slane %v3514, 4
      %v3517 = vshll.u32 %v3425, 16
      %v3519 = vrot.slane %v3517, 5
      %v3520 = vor.u32 %v3516, %v3519
      %v3521 = vrot.slane %v3520, 4
      %v3523 = vshll.u32 %v3426, 16
      %v3525 = vrot.slane %v3523, 5
      %v3526 = vsel %vm555, %v3521, %v3525
      %v3528 = vshrl.u32 %v3427, 16
      %v3530 = vrot.slane %v3528, 4
      %v3531 = vshll.u32 %v3427, 16
      %v3533 = vrot.slane %v3531, 5
      %v3534 = vor.u32 %v3530, %v3533
      %v3535 = vrot.slane %v3534, 4
      %v3537 = vshll.u32 %v3428, 16
      %v3539 = vrot.slane %v3537, 5
      %v3540 = vsel %vm555, %v3535, %v3539
      %s3541 = scalar_lea.vmem %s3, 224
      %v3542 = vld [vmem:[%s3541] sm:$0xf]
      %v3543 = vld [vmem:[%s3541 + $0x4] sm:$0xf]
      %v3544 = vld [vmem:[%s3541 + $0x8] sm:$0xf]
      %v3545 = vld [vmem:[%s3541 + $0xc] sm:$0xf]
      %v3546 = vld [vmem:[%s3541 + $0x10] sm:$0xf]
      %v3547 = vld [vmem:[%s3541 + $0x14] sm:$0xf]
      %v3548 = vld [vmem:[%s3541 + $0x18] sm:$0xf]
      %v3549 = vld [vmem:[%s3541 + $0x1c] sm:$0xf]
      %v3550 = vunpack.c.l.b16 %v3442
      %v3551 = vunpack.c.l.b16 %v3456
      %v3552 = vunpack.c.l.b16 %v3470
      %v3553 = vunpack.c.l.b16 %v3484
      %v3554 = vunpack.c.l.b16 %v3498
      %v3555 = vunpack.c.l.b16 %v3512
      %v3556 = vunpack.c.l.b16 %v3526
      %v3557 = vunpack.c.l.b16 %v3540
      %v3558 = vpack.c.b16 %v3551, %v3550
      %v3559 = vpack.c.b16 %v3553, %v3552
      %v3560 = vpack.c.b16 %v3555, %v3554
      %v3561 = vpack.c.b16 %v3557, %v3556
      %v3570 = vunpack.c.l.b16 %v3542
      %v3571 = vunpack.c.l.b16 %v3543
      %v3572 = vunpack.c.l.b16 %v3544
      %v3573 = vunpack.c.l.b16 %v3545
      %v3574 = vunpack.c.l.b16 %v3546
      %v3575 = vunpack.c.l.b16 %v3547
      %v3576 = vunpack.c.l.b16 %v3548
      %v3577 = vunpack.c.l.b16 %v3549
      %v3578 = vpack.c.b16 %v3571, %v3570
      %v3579 = vpack.c.b16 %v3573, %v3572
      %v3580 = vpack.c.b16 %v3575, %v3574
      %v3581 = vpack.c.b16 %v3577, %v3576
      %v3587 = vsel %vm338, %v3558, 0
      %v3590 = vsel %vm338, %v3559, 0
      %v3593 = vsel %vm338, %v3560, 0
      %v3596 = vsel %vm338, %v3561, 0
      %3598 = vmatprep.subr.bf16.mxu0 0
      %3599 = vmatpush1.bf16.msra.mxu0 0
      %3600 = vmatprep.subr.bf16.mxu0 0
      %3601 = vmatpush1.bf16.msra.mxu0 0
      %3602 = vmatprep.subr.bf16.mxu0 0
      %3603 = vmatpush1.bf16.msra.mxu0 0
      %3604 = vmatprep.subr.bf16.mxu0 0
      %3605 = vmatpush1.bf16.msra.mxu0 0
      %3606 = vmatprep.subr.bf16.mxu0 0
      %3607 = vmatpush1.bf16.msra.mxu0 %v3581
      %3608 = vmatprep.subr.bf16.mxu0 0
      %3609 = vmatpush1.bf16.msra.mxu0 %v3580
      %3610 = vmatprep.subr.bf16.mxu0 0
      %3611 = vmatpush1.bf16.msra.mxu0 %v3579
      %3612 = vmatprep.subr.bf16.mxu0 0
      %3613 = vmatpush1.bf16.msra.mxu0 %v3578
      %3614 = vmatprep.subr.bf16.mxu0 0
      %3615 = vmatpush2.bf16.msra.mxu0 0
      %3616 = vmatprep.subr.bf16.mxu0 0
      %3617 = vmatpush2.bf16.msra.mxu0 0
      %3618 = vmatprep.subr.bf16.mxu0 0
      %3619 = vmatpush2.bf16.msra.mxu0 0
      %3620 = vmatprep.subr.bf16.mxu0 0
      %3621 = vmatpush2.bf16.msra.mxu0 0
      %3622 = vmatprep.subr.bf16.mxu0 0
      %3623 = vmatpush2.bf16.msra.mxu0 0
      %3624 = vmatprep.subr.bf16.mxu0 0
      %3625 = vmatpush2.bf16.msra.mxu0 0
      %3626 = vmatprep.subr.bf16.mxu0 0
      %3627 = vmatpush2.bf16.msra.mxu0 0
      %3628 = vmatprep.subr.bf16.mxu0 0
      %3629 = vmatpush2.bf16.msra.mxu0 0
      %3630 = vmatprep.mubr.bf16.mxu0 0
      %3631 = vmatmul.mubr.bf16.gmra.mxu0 %v3587
      %v3632 = vpop.f32.mrf.mxu0
      %v3633 = vadd.f32 0.0, %v3632
      %v3634 = vpop.f32.mrf.mxu0
      %v3635 = vpop.f32.mrf.mxu0
      %v3636 = vadd.f32 0.0, %v3635
      %v3637 = vpop.f32.mrf.mxu0
      %3638 = vmatprep.mubr.bf16.mxu0 0
      %3639 = vmatmul.mubr.bf16.gmra.mxu0 %v3590
      %v3640 = vpop.f32.mrf.mxu0
      %v3641 = vadd.f32 0.0, %v3640
      %v3642 = vpop.f32.mrf.mxu0
      %v3643 = vpop.f32.mrf.mxu0
      %v3644 = vadd.f32 0.0, %v3643
      %v3645 = vpop.f32.mrf.mxu0
      %3646 = vmatprep.mubr.bf16.mxu0 0
      %3647 = vmatmul.mubr.bf16.gmra.mxu0 %v3593
      %v3648 = vpop.f32.mrf.mxu0
      %v3649 = vadd.f32 0.0, %v3648
      %v3650 = vpop.f32.mrf.mxu0
      %v3651 = vpop.f32.mrf.mxu0
      %v3652 = vadd.f32 0.0, %v3651
      %v3653 = vpop.f32.mrf.mxu0
      %3654 = vmatprep.mubr.bf16.mxu0 0
      %3655 = vmatmul.mubr.bf16.gmra.mxu0 %v3596
      %v3656 = vpop.f32.mrf.mxu0
      %v3657 = vadd.f32 0.0, %v3656
      %v3658 = vpop.f32.mrf.mxu0
      %v3659 = vpop.f32.mrf.mxu0
      %v3660 = vadd.f32 0.0, %v3659
      %v3661 = vpop.f32.mrf.mxu0
      %3662 = vdwg.mxu0
      %v3663 = vadd.f32 %v3405, %v3633
      %v3664 = vadd.f32 %v3406, %v3636
      %v3665 = vadd.f32 %v3407, %v3641
      %v3666 = vadd.f32 %v3408, %v3644
      %v3667 = vadd.f32 %v3409, %v3649
      %v3668 = vadd.f32 %v3410, %v3652
      %v3669 = vadd.f32 %v3411, %v3657
      %v3670 = vadd.f32 %v3412, %v3660
      %v3671 = vld [vmem:[%s3266] sm:$0xe]
      %v3672 = vld [vmem:[%s3266 + $0x8] sm:$0xe]
      %v3673 = vld [vmem:[%s3266 + $0x10] sm:$0xe]
      %v3674 = vld [vmem:[%s3266 + $0x18] sm:$0xe]
      %v3675 = vld [vmem:[%s3266 + $0x20] sm:$0xe]
      %v3676 = vld [vmem:[%s3266 + $0x28] sm:$0xe]
      %v3677 = vld [vmem:[%s3266 + $0x30] sm:$0xe]
      %v3678 = vld [vmem:[%s3266 + $0x38] sm:$0xe]
      %v3695 = vrot.slane %v3671, 5
      %v3696 = vrot.slane %v3695, 4
      %v3697 = vrot.slane %v3414, 5
      %v3698 = vsel %vm2513, %v3696, %v3697
      %v3699 = vrot.slane %v3672, 5
      %v3700 = vrot.slane %v3699, 4
      %v3701 = vrot.slane %v3416, 5
      %v3702 = vsel %vm2513, %v3700, %v3701
      %v3703 = vrot.slane %v3673, 5
      %v3704 = vrot.slane %v3703, 4
      %v3705 = vrot.slane %v3418, 5
      %v3706 = vsel %vm2513, %v3704, %v3705
      %v3707 = vrot.slane %v3674, 5
      %v3708 = vrot.slane %v3707, 4
      %v3709 = vrot.slane %v3420, 5
      %v3710 = vsel %vm2513, %v3708, %v3709
      %v3711 = vrot.slane %v3675, 5
      %v3712 = vrot.slane %v3711, 4
      %v3713 = vrot.slane %v3422, 5
      %v3714 = vsel %vm2513, %v3712, %v3713
      %v3715 = vrot.slane %v3676, 5
      %v3716 = vrot.slane %v3715, 4
      %v3717 = vrot.slane %v3424, 5
      %v3718 = vsel %vm2513, %v3716, %v3717
      %v3719 = vrot.slane %v3677, 5
      %v3720 = vrot.slane %v3719, 4
      %v3721 = vrot.slane %v3426, 5
      %v3722 = vsel %vm2513, %v3720, %v3721
      %v3723 = vrot.slane %v3678, 5
      %v3724 = vrot.slane %v3723, 4
      %v3725 = vrot.slane %v3428, 5
      %v3726 = vsel %vm2513, %v3724, %v3725
      %s3727 = scalar_lea.vmem %s3, 256
      %v3728 = vld [vmem:[%s3727] sm:$0xf]
      %v3729 = vld [vmem:[%s3727 + $0x4] sm:$0xf]
      %v3730 = vld [vmem:[%s3727 + $0x8] sm:$0xf]
      %v3731 = vld [vmem:[%s3727 + $0xc] sm:$0xf]
      %v3732 = vld [vmem:[%s3727 + $0x10] sm:$0xf]
      %v3733 = vld [vmem:[%s3727 + $0x14] sm:$0xf]
      %v3734 = vld [vmem:[%s3727 + $0x18] sm:$0xf]
      %v3735 = vld [vmem:[%s3727 + $0x1c] sm:$0xf]
      %v3736 = vunpack.c.l.b16 %v3698
      %v3737 = vunpack.c.l.b16 %v3702
      %v3738 = vunpack.c.l.b16 %v3706
      %v3739 = vunpack.c.l.b16 %v3710
      %v3740 = vunpack.c.l.b16 %v3714
      %v3741 = vunpack.c.l.b16 %v3718
      %v3742 = vunpack.c.l.b16 %v3722
      %v3743 = vunpack.c.l.b16 %v3726
      %v3744 = vpack.c.b16 %v3737, %v3736
      %v3745 = vpack.c.b16 %v3739, %v3738
      %v3746 = vpack.c.b16 %v3741, %v3740
      %v3747 = vpack.c.b16 %v3743, %v3742
      %v3756 = vunpack.c.l.b16 %v3728
      %v3757 = vunpack.c.l.b16 %v3729
      %v3758 = vunpack.c.l.b16 %v3730
      %v3759 = vunpack.c.l.b16 %v3731
      %v3760 = vunpack.c.l.b16 %v3732
      %v3761 = vunpack.c.l.b16 %v3733
      %v3762 = vunpack.c.l.b16 %v3734
      %v3763 = vunpack.c.l.b16 %v3735
      %v3764 = vpack.c.b16 %v3757, %v3756
      %v3765 = vpack.c.b16 %v3759, %v3758
      %v3766 = vpack.c.b16 %v3761, %v3760
      %v3767 = vpack.c.b16 %v3763, %v3762
      %v3773 = vsel %vm338, %v3744, 0
      %v3776 = vsel %vm338, %v3745, 0
      %v3779 = vsel %vm338, %v3746, 0
      %v3782 = vsel %vm338, %v3747, 0
      %3784 = vmatprep.subr.bf16.mxu0 0
      %3785 = vmatpush1.bf16.msra.mxu0 0
      %3786 = vmatprep.subr.bf16.mxu0 0
      %3787 = vmatpush1.bf16.msra.mxu0 0
      %3788 = vmatprep.subr.bf16.mxu0 0
      %3789 = vmatpush1.bf16.msra.mxu0 0
      %3790 = vmatprep.subr.bf16.mxu0 0
      %3791 = vmatpush1.bf16.msra.mxu0 0
      %3792 = vmatprep.subr.bf16.mxu0 0
      %3793 = vmatpush1.bf16.msra.mxu0 %v3767
      %3794 = vmatprep.subr.bf16.mxu0 0
      %3795 = vmatpush1.bf16.msra.mxu0 %v3766
      %3796 = vmatprep.subr.bf16.mxu0 0
      %3797 = vmatpush1.bf16.msra.mxu0 %v3765
      %3798 = vmatprep.subr.bf16.mxu0 0
      %3799 = vmatpush1.bf16.msra.mxu0 %v3764
      %3800 = vmatprep.subr.bf16.mxu0 0
      %3801 = vmatpush2.bf16.msra.mxu0 0
      %3802 = vmatprep.subr.bf16.mxu0 0
      %3803 = vmatpush2.bf16.msra.mxu0 0
      %3804 = vmatprep.subr.bf16.mxu0 0
      %3805 = vmatpush2.bf16.msra.mxu0 0
      %3806 = vmatprep.subr.bf16.mxu0 0
      %3807 = vmatpush2.bf16.msra.mxu0 0
      %3808 = vmatprep.subr.bf16.mxu0 0
      %3809 = vmatpush2.bf16.msra.mxu0 0
      %3810 = vmatprep.subr.bf16.mxu0 0
      %3811 = vmatpush2.bf16.msra.mxu0 0
      %3812 = vmatprep.subr.bf16.mxu0 0
      %3813 = vmatpush2.bf16.msra.mxu0 0
      %3814 = vmatprep.subr.bf16.mxu0 0
      %3815 = vmatpush2.bf16.msra.mxu0 0
      %3816 = vmatprep.mubr.bf16.mxu0 0
      %3817 = vmatmul.mubr.bf16.gmra.mxu0 %v3773
      %v3818 = vpop.f32.mrf.mxu0
      %v3819 = vadd.f32 0.0, %v3818
      %v3820 = vpop.f32.mrf.mxu0
      %v3821 = vpop.f32.mrf.mxu0
      %v3822 = vadd.f32 0.0, %v3821
      %v3823 = vpop.f32.mrf.mxu0
      %3824 = vmatprep.mubr.bf16.mxu0 0
      %3825 = vmatmul.mubr.bf16.gmra.mxu0 %v3776
      %v3826 = vpop.f32.mrf.mxu0
      %v3827 = vadd.f32 0.0, %v3826
      %v3828 = vpop.f32.mrf.mxu0
      %v3829 = vpop.f32.mrf.mxu0
      %v3830 = vadd.f32 0.0, %v3829
      %v3831 = vpop.f32.mrf.mxu0
      %3832 = vmatprep.mubr.bf16.mxu0 0
      %3833 = vmatmul.mubr.bf16.gmra.mxu0 %v3779
      %v3834 = vpop.f32.mrf.mxu0
      %v3835 = vadd.f32 0.0, %v3834
      %v3836 = vpop.f32.mrf.mxu0
      %v3837 = vpop.f32.mrf.mxu0
      %v3838 = vadd.f32 0.0, %v3837
      %v3839 = vpop.f32.mrf.mxu0
      %3840 = vmatprep.mubr.bf16.mxu0 0
      %3841 = vmatmul.mubr.bf16.gmra.mxu0 %v3782
      %v3842 = vpop.f32.mrf.mxu0
      %v3843 = vadd.f32 0.0, %v3842
      %v3844 = vpop.f32.mrf.mxu0
      %v3845 = vpop.f32.mrf.mxu0
      %v3846 = vadd.f32 0.0, %v3845
      %v3847 = vpop.f32.mrf.mxu0
      %3848 = vdwg.mxu0
      %v3849 = vadd.f32 %v3663, %v3819
      %v3850 = vadd.f32 %v3664, %v3822
      %v3851 = vadd.f32 %v3665, %v3827
      %v3852 = vadd.f32 %v3666, %v3830
      %v3853 = vadd.f32 %v3667, %v3835
      %v3854 = vadd.f32 %v3668, %v3838
      %v3855 = vadd.f32 %v3669, %v3843
      %v3856 = vadd.f32 %v3670, %v3846
      %v3857 = vld [vmem:[%s945] sm:$0xf]
      %v3858 = vld [vmem:[%s945 + $0x8] sm:$0xf]
      %v3859 = vld [vmem:[%s945 + $0x10] sm:$0xf]
      %v3860 = vld [vmem:[%s945 + $0x18] sm:$0xf]
      %v3861 = vld [vmem:[%s945 + $0x20] sm:$0xf]
      %v3862 = vld [vmem:[%s945 + $0x28] sm:$0xf]
      %v3863 = vld [vmem:[%s945 + $0x30] sm:$0xf]
      %v3864 = vld [vmem:[%s945 + $0x38] sm:$0xf]
      %v3865 = vld [vmem:[%s4] sm:$0xf]
      %v3866 = vld [vmem:[%s4 + $0x4] sm:$0xf]
      %v3867 = vld [vmem:[%s4 + $0x8] sm:$0xf]
      %v3868 = vld [vmem:[%s4 + $0xc] sm:$0xf]
      %v3869 = vld [vmem:[%s4 + $0x10] sm:$0xf]
      %v3870 = vld [vmem:[%s4 + $0x14] sm:$0xf]
      %v3871 = vld [vmem:[%s4 + $0x18] sm:$0xf]
      %v3872 = vld [vmem:[%s4 + $0x1c] sm:$0xf]
      %v3881 = vunpack.c.l.b16 %v3857
      %v3882 = vunpack.c.l.b16 %v3858
      %v3883 = vunpack.c.l.b16 %v3859
      %v3884 = vunpack.c.l.b16 %v3860
      %v3885 = vunpack.c.l.b16 %v3861
      %v3886 = vunpack.c.l.b16 %v3862
      %v3887 = vunpack.c.l.b16 %v3863
      %v3888 = vunpack.c.l.b16 %v3864
      %v3889 = vpack.c.b16 %v3882, %v3881
      %v3890 = vpack.c.b16 %v3884, %v3883
      %v3891 = vpack.c.b16 %v3886, %v3885
      %v3892 = vpack.c.b16 %v3888, %v3887
      %v3901 = vunpack.c.l.b16 %v3865
      %v3902 = vunpack.c.l.b16 %v3866
      %v3903 = vunpack.c.l.b16 %v3867
      %v3904 = vunpack.c.l.b16 %v3868
      %v3905 = vunpack.c.l.b16 %v3869
      %v3906 = vunpack.c.l.b16 %v3870
      %v3907 = vunpack.c.l.b16 %v3871
      %v3908 = vunpack.c.l.b16 %v3872
      %v3909 = vpack.c.b16 %v3902, %v3901
      %v3910 = vpack.c.b16 %v3904, %v3903
      %v3911 = vpack.c.b16 %v3906, %v3905
      %v3912 = vpack.c.b16 %v3908, %v3907
      %v3918 = vsel %vm338, %v3889, 0
      %v3921 = vsel %vm338, %v3890, 0
      %v3924 = vsel %vm338, %v3891, 0
      %v3927 = vsel %vm338, %v3892, 0
      %3929 = vmatprep.subr.bf16.mxu0 0
      %3930 = vmatpush1.bf16.msra.mxu0 0
      %3931 = vmatprep.subr.bf16.mxu0 0
      %3932 = vmatpush1.bf16.msra.mxu0 0
      %3933 = vmatprep.subr.bf16.mxu0 0
      %3934 = vmatpush1.bf16.msra.mxu0 0
      %3935 = vmatprep.subr.bf16.mxu0 0
      %3936 = vmatpush1.bf16.msra.mxu0 0
      %3937 = vmatprep.subr.bf16.mxu0 0
      %3938 = vmatpush1.bf16.msra.mxu0 %v3912
      %3939 = vmatprep.subr.bf16.mxu0 0
      %3940 = vmatpush1.bf16.msra.mxu0 %v3911
      %3941 = vmatprep.subr.bf16.mxu0 0
      %3942 = vmatpush1.bf16.msra.mxu0 %v3910
      %3943 = vmatprep.subr.bf16.mxu0 0
      %3944 = vmatpush1.bf16.msra.mxu0 %v3909
      %3945 = vmatprep.subr.bf16.mxu0 0
      %3946 = vmatpush2.bf16.msra.mxu0 0
      %3947 = vmatprep.subr.bf16.mxu0 0
      %3948 = vmatpush2.bf16.msra.mxu0 0
      %3949 = vmatprep.subr.bf16.mxu0 0
      %3950 = vmatpush2.bf16.msra.mxu0 0
      %3951 = vmatprep.subr.bf16.mxu0 0
      %3952 = vmatpush2.bf16.msra.mxu0 0
      %3953 = vmatprep.subr.bf16.mxu0 0
      %3954 = vmatpush2.bf16.msra.mxu0 0
      %3955 = vmatprep.subr.bf16.mxu0 0
      %3956 = vmatpush2.bf16.msra.mxu0 0
      %3957 = vmatprep.subr.bf16.mxu0 0
      %3958 = vmatpush2.bf16.msra.mxu0 0
      %3959 = vmatprep.subr.bf16.mxu0 0
      %3960 = vmatpush2.bf16.msra.mxu0 0
      %3961 = vmatprep.mubr.bf16.mxu0 0
      %3962 = vmatmul.mubr.bf16.gmra.mxu0 %v3918
      %v3963 = vpop.f32.mrf.mxu0
      %v3964 = vadd.f32 0.0, %v3963
      %v3965 = vpop.f32.mrf.mxu0
      %v3966 = vpop.f32.mrf.mxu0
      %v3967 = vadd.f32 0.0, %v3966
      %v3968 = vpop.f32.mrf.mxu0
      %3969 = vmatprep.mubr.bf16.mxu0 0
      %3970 = vmatmul.mubr.bf16.gmra.mxu0 %v3921
      %v3971 = vpop.f32.mrf.mxu0
      %v3972 = vadd.f32 0.0, %v3971
      %v3973 = vpop.f32.mrf.mxu0
      %v3974 = vpop.f32.mrf.mxu0
      %v3975 = vadd.f32 0.0, %v3974
      %v3976 = vpop.f32.mrf.mxu0
      %3977 = vmatprep.mubr.bf16.mxu0 0
      %3978 = vmatmul.mubr.bf16.gmra.mxu0 %v3924
      %v3979 = vpop.f32.mrf.mxu0
      %v3980 = vadd.f32 0.0, %v3979
      %v3981 = vpop.f32.mrf.mxu0
      %v3982 = vpop.f32.mrf.mxu0
      %v3983 = vadd.f32 0.0, %v3982
      %v3984 = vpop.f32.mrf.mxu0
      %3985 = vmatprep.mubr.bf16.mxu0 0
      %3986 = vmatmul.mubr.bf16.gmra.mxu0 %v3927
      %v3987 = vpop.f32.mrf.mxu0
      %v3988 = vadd.f32 0.0, %v3987
      %v3989 = vpop.f32.mrf.mxu0
      %v3990 = vpop.f32.mrf.mxu0
      %v3991 = vadd.f32 0.0, %v3990
      %v3992 = vpop.f32.mrf.mxu0
      %3993 = vdwg.mxu0
      %v3994 = vadd.f32 %v3849, %v3964
      %v3995 = vadd.f32 %v3850, %v3967
      %v3996 = vadd.f32 %v3851, %v3972
      %v3997 = vadd.f32 %v3852, %v3975
      %v3998 = vadd.f32 %v3853, %v3980
      %v3999 = vadd.f32 %v3854, %v3983
      %v4000 = vadd.f32 %v3855, %v3988
      %v4001 = vadd.f32 %v3856, %v3991
      %v4002 = vld [vmem:[%s6] sm:$0x1]
      %v4004 = vlaneseq
      %v4005 = vshrl.u32 %v4004, 7
      %v4006 = vsub.s32 0, %v4005
      %v4007 = vrot.slane %v4002, %v4006
      %v4009 = vadd.f32 %v3994, %v4007
      %v4010 = vadd.f32 %v3995, %v4007
      %v4011 = vadd.f32 %v3996, %v4007
      %v4012 = vadd.f32 %v3997, %v4007
      %v4013 = vadd.f32 %v3998, %v4007
      %v4014 = vadd.f32 %v3999, %v4007
      %v4015 = vadd.f32 %v4000, %v4007
      %v4016 = vadd.f32 %v4001, %v4007
      %s4017 = sld [smem:[#allocation4 + $0x1]]
      %v4018 = vstv %s4017
      %v4019 = vmax.f32 %v4009, %v4018
      %v4020 = vmax.f32 %v4010, %v4018
      %v4021 = vmax.f32 %v4011, %v4018
      %v4022 = vmax.f32 %v4012, %v4018
      %v4023 = vmax.f32 %v4013, %v4018
      %v4024 = vmax.f32 %v4014, %v4018
      %v4025 = vmax.f32 %v4015, %v4018
      %v4026 = vmax.f32 %v4016, %v4018
      %4027 = vst.msk [vmem:[%s258] sm:$0xff] %vm338, %v4019
      %4028 = vst.msk [vmem:[%s258 + $0x8] sm:$0xff] %vm338, %v4020
      %4029 = vst.msk [vmem:[%s258 + $0x10] sm:$0xff] %vm338, %v4021
      %4030 = vst.msk [vmem:[%s258 + $0x18] sm:$0xff] %vm338, %v4022
      %4031 = vst.msk [vmem:[%s258 + $0x20] sm:$0xff] %vm338, %v4023
      %4032 = vst.msk [vmem:[%s258 + $0x28] sm:$0xff] %vm338, %v4024
      %4033 = vst.msk [vmem:[%s258 + $0x30] sm:$0xff] %vm338, %v4025
      %4034 = vst.msk [vmem:[%s258 + $0x38] sm:$0xff] %vm338, %v4026
      %p4035 = scmp.lt.s32.totalorder %s24, 1
      %s4036 = scalar_select %p4035, %s24, 1
      %s4037 = smul.addr %s4036, 8
      %s4038 = smul.addr %s4037, 8
      %s4039 = scalar_lea.vmem %s7, %s4038
      // Predicated region
      $region45: #{fwd.2} parent=43 // pred_check
        %p4040 = pneg %p173
      $region46: #{fwd.2} parent=43 // pred_check_branch
        %4042 = sbr.rel (%p4040) target = $region48
      $region47: #{fwd.2} parent=43 // pred_region
        _
      $region48: #{fwd.2} parent=43 // pred_fallthru
        _
    $region44: #{fwd.2} parent=5 // pred_fallthru
      _
    %p4043 = scmp.le.s32.totalorder 2, %s19
    // Predicated region
    $region49: #{fwd.2} parent=5 // pred_check
      %p4044 = pneg %p4043
    $region50: #{fwd.2} parent=5 // pred_check_branch
      %4046 = sbr.rel (%p4044) target = $region52
    $region51: #{fwd.2} parent=5 // pred_region
      %s4047 = ssub.s32 %s19, 2
      // Predicated region
      $region53: #{fwd.2} parent=51 // pred_check
        %p4048 = pneg %p179
      $region54: #{fwd.2} parent=51 // pred_check_branch
        %4050 = sbr.rel (%p4048) target = $region56
      $region55: #{fwd.2} parent=51 // pred_region
        %p4051 = scmp.lt.s32.totalorder %s25, 1
        %s4052 = scalar_select %p4051, %s25, 1
        %s4053 = smul.addr %s4052, 8
        %s4054 = smul.addr %s4053, 8
        %s4055 = scalar_lea.vmem %s7, %s4054
      $region56: #{fwd.2} parent=51 // pred_fallthru
        _
    $region52: #{fwd.2} parent=5 // pred_fallthru
      _
  $region6: #{fwd.2} parent=0 // loop_footer
    %s23 = sadd.s32 1, %s19
  $region7: #{fwd.2} parent=0 // loop_footer_branch
    %18 = sbr.rel target = $region3
  $region8: #{fwd.2} parent=0 // loop_exit
    _

</llo_original>
